<compile_context>
chip_gen: v7x
topology: tpu7x:2x2x1
jax: 0.10.0
libtpu: 0.0.40
codegen_flags: <defaults>
</compile_context>

<pallas_src>
import jax
import jax.numpy as jnp
from jax import lax
from jax.experimental import pallas as pl
from jax.experimental.pallas import tpu as pltpu

# ---- static configuration (TSTNN_Decoder(n_basis=16, in_channels=4)) -------
N_BASIS = 16                 # n_basis
IN_CH   = 4                  # in_channels
HIDDEN  = 2 * N_BASIS        # TCN hidden channels
KSIZE   = 16                 # ConvTranspose1d kernel_size
STRIDE  = 8                  # ConvTranspose1d stride
EPS_GLN = 1e-12              # gLN eps (Conv-TasNet convention)
EPS_GN  = 1e-5               # nn.GroupNorm default eps
PADL    = 128                # lane-aligned start column of the depthwise staging scratch
PADR    = 8                  # right guard of the staging scratch

PARAM_SHAPES = [
    # TCN layer 0 (dilation 1, dual_head=True)
    ("bn0_w", (HIDDEN, N_BASIS)), ("bn0_b", (HIDDEN, 1)), ("a_bn0", (1, 1)),
    ("g0a_g", (HIDDEN, 1)), ("g0a_b", (HIDDEN, 1)),
    ("dw0_w", (HIDDEN, 3)), ("dw0_b", (HIDDEN, 1)), ("a_dw0", (1, 1)),
    ("g0b_g", (HIDDEN, 1)), ("g0b_b", (HIDDEN, 1)),
    ("res0_w", (N_BASIS, HIDDEN)), ("res0_b", (N_BASIS, 1)),
    ("skip0_w", (N_BASIS, HIDDEN)), ("skip0_b", (N_BASIS, 1)),
    # TCN layer 1 (dilation 2, dual_head=False -> skip only)
    ("bn1_w", (HIDDEN, N_BASIS)), ("bn1_b", (HIDDEN, 1)), ("a_bn1", (1, 1)),
    ("g1a_g", (HIDDEN, 1)), ("g1a_b", (HIDDEN, 1)),
    ("dw1_w", (HIDDEN, 3)), ("dw1_b", (HIDDEN, 1)), ("a_dw1", (1, 1)),
    ("g1b_g", (HIDDEN, 1)), ("g1b_b", (HIDDEN, 1)),
    ("skip1_w", (N_BASIS, HIDDEN)), ("skip1_b", (N_BASIS, 1)),
    # decoder head: ConvTranspose1d weight pre-transposed to (K, out, in)
    ("dect_w", (KSIZE, N_BASIS, N_BASIS)),
    ("gn_g", (N_BASIS, 1)), ("gn_b", (N_BASIS, 1)), ("a_dec", (1, 1)),
    ("out_w", (IN_CH, N_BASIS)),
]

_GAMMAS = {"g0a_g", "g0b_g", "g1a_g", "g1b_g", "gn_g"}
_NBETAS = {"g0a_b", "g0b_b", "g1a_b", "g1b_b", "gn_b"}


def init_params(key):
    params = {}
    keys = jax.random.split(key, len(PARAM_SHAPES))
    for (name, shape), k in zip(PARAM_SHAPES, keys):
        if name.startswith("a_"):                       # PReLU slopes
            params[name] = jnp.full(shape, 0.25, jnp.float32)
        elif name in _GAMMAS:                           # norm gammas ~1
            params[name] = (1.0 + 0.1 * jax.random.normal(k, shape)).astype(jnp.float32)
        elif name in _NBETAS:                           # norm betas ~0
            params[name] = (0.1 * jax.random.normal(k, shape)).astype(jnp.float32)
        else:                                           # conv weights / biases
            params[name] = (0.2 * jax.random.normal(k, shape)).astype(jnp.float32)
    return params


# ------------------------------ parameter packing ----------------------------
def pack_params(p):
    # All (HIDDEN, .) tensors -> one (32, 50) slab; 25 columns per TCN layer:
    #   [0:16) bn_w | 16 bn_b | 17 gA_g | 18 gA_b | [19:22) dw_w | 22 dw_b | 23 gB_g | 24 gB_b
    h_slab = jnp.concatenate([
        p["bn0_w"], p["bn0_b"], p["g0a_g"], p["g0a_b"],
        p["dw0_w"], p["dw0_b"], p["g0b_g"], p["g0b_b"],
        p["bn1_w"], p["bn1_b"], p["g1a_g"], p["g1a_b"],
        p["dw1_w"], p["dw1_b"], p["g1b_g"], p["g1b_b"],
    ], axis=1)                                                      # (32, 50)
    # res0 and skip0 fused into one (2N, H+1) weight|bias slab (one dot on h0).
    rs_slab = jnp.concatenate([
        jnp.concatenate([p["res0_w"], p["res0_b"]], axis=1),
        jnp.concatenate([p["skip0_w"], p["skip0_b"]], axis=1),
    ], axis=0)                                                      # (32, 33)
    sk1_slab = jnp.concatenate([p["skip1_w"], p["skip1_b"]], axis=1)  # (16, 33)
    # ConvTranspose: k = 8*q + r decomposition.  Wq[q][r*N + n, m] = dect_w[8q+r, n, m].
    wq0 = p["dect_w"][:STRIDE].reshape(STRIDE * N_BASIS, N_BASIS)   # (128, 16)
    wq1 = p["dect_w"][STRIDE:].reshape(STRIDE * N_BASIS, N_BASIS)   # (128, 16)
    # GroupNorm affine tiled into the interleaved (8*N) row layout.
    dec_slab = jnp.concatenate([
        wq0, wq1, jnp.tile(p["gn_g"], (STRIDE, 1)), jnp.tile(p["gn_b"], (STRIDE, 1)),
    ], axis=1)                                                      # (128, 34)
    # Block-diagonal 1x1 output conv acting on the interleaved layout.
    out_bd = jnp.kron(jnp.eye(STRIDE, dtype=jnp.float32), p["out_w"])   # (32, 128)
    # PReLU slopes -> one small SMEM vector.
    slopes = jnp.concatenate([p["a_bn0"].ravel(), p["a_dw0"].ravel(),
                              p["a_bn1"].ravel(), p["a_dw1"].ravel(),
                              p["a_dec"].ravel()])                  # (5,)
    return slopes, h_slab, rs_slab, sk1_slab, dec_slab, out_bd


# ----------------------------- Pallas kernel --------------------------------
def _make_kernel(T, Bt):
    N, H = N_BASIS, HIDDEN
    BT = Bt * T
    Tp1 = T + 1
    HC = 25                                   # columns per TCN layer in h_slab
    inv_tcn = 1.0 / float(H * T)              # per-sample element count, TCN gLN
    inv_head = 1.0 / float(STRIDE * N * Tp1)  # per-sample element count, head GN (= N*L)

    def kernel(x_ref, slopes_ref, dwm_ref, sf_ref, sb_ref, s2f_ref, s2b_ref,
               ctm_ref, h_ref, rs_ref, sk1_ref, dec_ref, bd_ref,
               y_ref, pad_ref, ct_ref):
        x = x_ref[0]                                     # (N, Bt*T)   lane-folded batch
        dwm = dwm_ref[...]                               # (4, Bt*T)   depthwise boundary masks
        sf = sf_ref[...]                                 # (Bt, Bt*T)  broadcast per-sample -> cols
        sb = sb_ref[...]                                 # (Bt*T, Bt)  segment-sum cols -> per-sample
        s2f = s2f_ref[...]                               # (Bt, Bt*Tp1)
        s2b = s2b_ref[...]                               # (Bt*Tp1, Bt)
        ctm = ctm_ref[...]                               # (2N, Bt*Tp1) guard-column mask
        hp = h_ref[...]                                  # (32, 50)
        rs = rs_ref[...]                                 # (32, 33)
        sk1 = sk1_ref[...]                               # (16, 33)
        dec = dec_ref[...]                               # (128, 34)
        bd = bd_ref[...]                                 # (32, 128)

        # Hoisted PReLU slopes (scalar SMEM reads, read once).
        a_bn0 = slopes_ref[0]
        a_dw0 = slopes_ref[1]
        a_bn1 = slopes_ref[2]
        a_dw1 = slopes_ref[3]
        a_dec = slopes_ref[4]

        def prelu(v, a):
            return jnp.maximum(v, 0.0) + a * jnp.minimum(v, 0.0)

        def seg_norm(v, s_fwd, s_bwd, inv_n, eps):
            # Per-sample (column-segment) zero-mean / unit-variance normalization.
            # One-pass sum / sum-of-squares; segment reduce + broadcast-back are
            # tiny matmuls routed onto the MXU (full precision: they carry stats).
            colsum = jnp.sum(v, axis=0, keepdims=True)               # (1, W)
            colsq = jnp.sum(v * v, axis=0, keepdims=True)            # (1, W)
            m = jnp.dot(colsum, s_bwd, precision=lax.Precision.HIGHEST,
                        preferred_element_type=jnp.float32) * inv_n  # (1, Bt)
            msq = jnp.dot(colsq, s_bwd, precision=lax.Precision.HIGHEST,
                          preferred_element_type=jnp.float32) * inv_n
            var = jnp.maximum(msq - m * m, 0.0)                      # clamp: no NaN from rsqrt
            rstd = lax.rsqrt(var + eps)
            m_row = jnp.dot(m, s_fwd, precision=lax.Precision.HIGHEST,
                            preferred_element_type=jnp.float32)      # (1, W)
            r_row = jnp.dot(rstd, s_fwd, precision=lax.Precision.HIGHEST,
                            preferred_element_type=jnp.float32)      # (1, W)
            return (v - m_row) * r_row

        def tcn_layer(v, layer, a_bn, a_dw, d):
            c = layer * HC
            bn_w, bn_b = hp[:, c:c + 16], hp[:, c + 16:c + 17]
            ga_g, ga_b = hp[:, c + 17:c + 18], hp[:, c + 18:c + 19]
            dw_w, dw_b = hp[:, c + 19:c + 22], hp[:, c + 22:c + 23]
            gb_g, gb_b = hp[:, c + 23:c + 24], hp[:, c + 24:c + 25]
            h = jnp.dot(bn_w, v, preferred_element_type=jnp.float32) + bn_b
            h = ga_g * seg_norm(prelu(h, a_bn), sf, sb, inv_tcn, EPS_GLN) + ga_b
            # Depthwise conv (k=3, dilation d, 'same' zero padding per sample):
            # lane-aligned staging store + two shifted window loads; per-sample
            # boundaries (and the never-initialized guard columns) are handled
            # by a NaN-safe select against the precomputed masks.
            pad_ref[:, PADL:PADL + BT] = h
            mlo = dwm[2 * (d - 1):2 * (d - 1) + 1, :]        # valid for v[:, t-d]
            mhi = dwm[2 * d - 1:2 * d, :]                    # valid for v[:, t+d]
            left = jnp.where(mlo > 0.5, pad_ref[:, PADL - d:PADL - d + BT], 0.0)
            right = jnp.where(mhi > 0.5, pad_ref[:, PADL + d:PADL + d + BT], 0.0)
            h = dw_w[:, 0:1] * left + dw_w[:, 1:2] * h + dw_w[:, 2:3] * right + dw_b
            return gb_g * seg_norm(prelu(h, a_dw), sf, sb, inv_tcn, EPS_GLN) + gb_b

        # ---- TemporalConvNet: 1 block x 2 dilated separable layers ----
        h0 = tcn_layer(x, 0, a_bn0, a_dw0, 1)
        rs0 = jnp.dot(rs[:, 0:H], h0, preferred_element_type=jnp.float32) + rs[:, H:H + 1]
        out0 = rs0[0:N, :] + x                          # residual head
        skip0 = rs0[N:2 * N, :]                         # skip head (fused dot with res0)
        h1 = tcn_layer(out0, 1, a_bn1, a_dw1, 2)
        skip1 = jnp.dot(sk1[:, 0:H], h1, preferred_element_type=jnp.float32) + sk1[:, H:H + 1]
        tcn = skip0 + skip1                             # (N, Bt*T)

        # ---- ConvTranspose1d(N, N, K=16, stride=8), fused K=32 dot.
        # Per sample, stack [tcn[:, s]; tcn[:, s-1]] as a (2N, T+1) column block
        # (guard columns, never written, are zeroed by the select below).
        for i in range(Bt):
            blk = tcn[:, i * T:(i + 1) * T]
            ct_ref[0:N, i * Tp1:i * Tp1 + T] = blk
            ct_ref[N:2 * N, i * Tp1 + 1:i * Tp1 + 1 + T] = blk
        rhs = jnp.where(ctm > 0.5, ct_ref[...], 0.0)    # (2N, Bt*Tp1)
        # Y[r*N + n, i*Tp1 + s] = y_sample_i[n, 8*s + r]
        y = jnp.dot(dec[:, 0:2 * N], rhs, preferred_element_type=jnp.float32)  # (8N, Bt*Tp1)

        # ---- GroupNorm(1, N) + PReLU + 1x1 out conv, all in interleaved layout.
        y = dec[:, 2 * N:2 * N + 1] * seg_norm(y, s2f, s2b, inv_head, EPS_GN) \
            + dec[:, 2 * N + 1:2 * N + 2]
        y = prelu(y, a_dec)
        y_ref[0] = jnp.dot(bd, y, preferred_element_type=jnp.float32)   # (8*IN_CH, Bt*Tp1)

    return kernel


def _choose_bt(B, T):
    # Fold as many samples per grid step as a modest lane/VMEM budget allows
    # (amortizes the ~0.35us per-step overhead; keeps folded slabs <= ~1024 lanes).
    cap = max(1, 1024 // max(T, 1))
    bt = 1
    for d in range(1, B + 1):
        if B % d == 0 and d <= cap:
            bt = d
    return bt


def _tstnn_decoder_impl(x, params):
    B, N, T = x.shape
    assert N == N_BASIS and T >= 3
    Tp1 = T + 1
    L = STRIDE * Tp1                                    # == (T-1)*STRIDE + KSIZE
    Bt = _choose_bt(B, T)
    G = B // Bt
    BT = Bt * T
    BTp1 = Bt * Tp1

    slopes, h_slab, rs_slab, sk1_slab, dec_slab, out_bd = pack_params(params)

    # Static per-column selector / boundary-mask constants (built once by XLA).
    col = jnp.arange(BT)
    t_in, samp = col % T, col // T
    dwmask = jnp.stack([t_in >= 1, t_in <= T - 2,
                        t_in >= 2, t_in <= T - 3]).astype(jnp.float32)       # (4, BT)
    sel_f = (samp[None, :] == jnp.arange(Bt)[:, None]).astype(jnp.float32)   # (Bt, BT)
    sel_b = sel_f.T                                                          # (BT, Bt)
    col2 = jnp.arange(BTp1)
    pos2, samp2 = col2 % Tp1, col2 // Tp1
    sel2_f = (samp2[None, :] == jnp.arange(Bt)[:, None]).astype(jnp.float32)  # (Bt, BTp1)
    sel2_b = sel2_f.T                                                         # (BTp1, Bt)
    ct_mask = jnp.concatenate([
        jnp.broadcast_to((pos2 < T)[None, :], (N_BASIS, BTp1)),    # top band: tcn[:, s], 0 at s=T
        jnp.broadcast_to((pos2 >= 1)[None, :], (N_BASIS, BTp1)),   # bottom:   tcn[:, s-1], 0 at s=0
    ], axis=0).astype(jnp.float32)                                            # (2N, BTp1)

    # Fold the batch into the lane axis (layout plumbing only).
    x_f = x.reshape(G, Bt, N, T).transpose(0, 2, 1, 3).reshape(G, N, BT)

    kernel = _make_kernel(T, Bt)
    grid_spec = pltpu.PrefetchScalarGridSpec(
        num_scalar_prefetch=0,
        grid=(G,),
        in_specs=[
            pl.BlockSpec((1, N, BT), lambda g: (g, 0, 0)),                 # x (folded)
            pl.BlockSpec(memory_space=pltpu.MemorySpace.SMEM),             # PReLU slopes
            pl.BlockSpec(dwmask.shape, lambda g: (0, 0)),
            pl.BlockSpec(sel_f.shape, lambda g: (0, 0)),
            pl.BlockSpec(sel_b.shape, lambda g: (0, 0)),
            pl.BlockSpec(sel2_f.shape, lambda g: (0, 0)),
            pl.BlockSpec(sel2_b.shape, lambda g: (0, 0)),
            pl.BlockSpec(ct_mask.shape, lambda g: (0, 0)),
            pl.BlockSpec(h_slab.shape, lambda g: (0, 0)),                  # (32, 50)
            pl.BlockSpec(rs_slab.shape, lambda g: (0, 0)),                 # (32, 33)
            pl.BlockSpec(sk1_slab.shape, lambda g: (0, 0)),                # (16, 33)
            pl.BlockSpec(dec_slab.shape, lambda g: (0, 0)),                # (128, 34)
            pl.BlockSpec(out_bd.shape, lambda g: (0, 0)),                  # (32, 128)
        ],
        out_specs=pl.BlockSpec((1, STRIDE * IN_CH, BTp1), lambda g: (g, 0, 0)),
        scratch_shapes=[
            pltpu.VMEM((HIDDEN, PADL + BT + PADR), jnp.float32),   # depthwise staging
            pltpu.VMEM((2 * N_BASIS, BTp1), jnp.float32),          # stacked ConvTranspose RHS
        ],
    )
    fn = pl.pallas_call(
        kernel,
        out_shape=jax.ShapeDtypeStruct((G, STRIDE * IN_CH, BTp1), jnp.float32),
        grid_spec=grid_spec,
        compiler_params=pltpu.CompilerParams(dimension_semantics=("parallel",)),
    )
    y = fn(x_f, slopes, dwmask, sel_f, sel_b, sel2_f, sel2_b, ct_mask,
           h_slab, rs_slab, sk1_slab, dec_slab, out_bd)      # (G, 8*IN_CH, Bt*Tp1)
    # De-interleave (layout plumbing only):
    # y[g, r*IN_CH + c, i*Tp1 + s] -> out[g*Bt + i, c, 8*s + r]
    out = (y.reshape(G, STRIDE, IN_CH, Bt, Tp1)
             .transpose(0, 3, 2, 4, 1)
             .reshape(B, IN_CH, L))
    return out


tstnn_decoder = jax.jit(_tstnn_decoder_impl)


# ----------------------------- pure-JAX reference ---------------------------
def ref_forward(x, params):
    p = params

    def prelu(v, a):
        return jnp.maximum(v, 0.0) + a * jnp.minimum(v, 0.0)

    def gln(v, g, b, eps):
        m = jnp.mean(v)
        var = jnp.mean((v - m) ** 2)
        return g * (v - m) / jnp.sqrt(var + eps) + b

    def c11(v, w, b):
        return w @ v + b

    def dw(v, w, b, d):
        T = v.shape[1]
        vp = jnp.pad(v, ((0, 0), (d, d)))
        return (w[:, 0:1] * vp[:, 0:T] + w[:, 1:2] * vp[:, d:d + T]
                + w[:, 2:3] * vp[:, 2 * d:2 * d + T] + b)

    def single(xb):
        h = gln(prelu(c11(xb, p["bn0_w"], p["bn0_b"]), p["a_bn0"]), p["g0a_g"], p["g0a_b"], EPS_GLN)
        h = gln(prelu(dw(h, p["dw0_w"], p["dw0_b"], 1), p["a_dw0"]), p["g0b_g"], p["g0b_b"], EPS_GLN)
        out0 = c11(h, p["res0_w"], p["res0_b"]) + xb
        skip0 = c11(h, p["skip0_w"], p["skip0_b"])
        h = gln(prelu(c11(out0, p["bn1_w"], p["bn1_b"]), p["a_bn1"]), p["g1a_g"], p["g1a_b"], EPS_GLN)
        h = gln(prelu(dw(h, p["dw1_w"], p["dw1_b"], 2), p["a_dw1"]), p["g1b_g"], p["g1b_b"], EPS_GLN)
        tcn = skip0 + c11(h, p["skip1_w"], p["skip1_b"])

        T = xb.shape[1]
        L = (T - 1) * STRIDE + KSIZE
        y = jnp.zeros((N_BASIS, L), jnp.float32)
        for k in range(KSIZE):
            ck = p["dect_w"][k] @ tcn
            y = y.at[:, k:k + (T - 1) * STRIDE + 1:STRIDE].add(ck)

        y = gln(y, p["gn_g"], p["gn_b"], EPS_GN)
        y = prelu(y, p["a_dec"])
        return p["out_w"] @ y

    return jax.vmap(single)(x)


if __name__ == "__main__":
    key = jax.random.PRNGKey(0)
    kp, kx = jax.random.split(key)
    params = init_params(kp)

    B, T = 2, 16
    x = jax.random.normal(kx, (B, N_BASIS, T), jnp.float32)

    out = jax.block_until_ready(tstnn_decoder(x, params))

    L = (T - 1) * STRIDE + KSIZE
    assert out.shape == (B, IN_CH, L), out.shape

    ref = ref_forward(x, params)
    err = float(jnp.max(jnp.abs(out - ref)))
    # Main dots use default (bf16-pass) MXU precision on both sides; the
    # normalization statistics inside the kernel run at HIGHEST precision.
    if not (err < 5e-2):
        raise AssertionError(f"kernel/reference mismatch, max abs err = {err}")

    print("KERNEL_OK")
</pallas_src>

<mosaic_0001>
module attributes {stable_mosaic.version = 11 : i64} {
  func.func @kernel(%arg0: i32, %arg1: memref<1x16x32xf32, #tpu.memory_space<vmem>>, %arg2: memref<5xf32, #tpu.memory_space<smem>>, %arg3: memref<4x32xf32, #tpu.memory_space<vmem>>, %arg4: memref<2x32xf32, #tpu.memory_space<vmem>>, %arg5: memref<32x2xf32, #tpu.memory_space<vmem>>, %arg6: memref<2x34xf32, #tpu.memory_space<vmem>>, %arg7: memref<34x2xf32, #tpu.memory_space<vmem>>, %arg8: memref<32x34xf32, #tpu.memory_space<vmem>>, %arg9: memref<32x50xf32, #tpu.memory_space<vmem>>, %arg10: memref<32x33xf32, #tpu.memory_space<vmem>>, %arg11: memref<16x33xf32, #tpu.memory_space<vmem>>, %arg12: memref<128x34xf32, #tpu.memory_space<vmem>>, %arg13: memref<32x128xf32, #tpu.memory_space<vmem>>, %arg14: memref<1x32x34xf32, #tpu.memory_space<vmem>>, %arg15: memref<32x168xf32, #tpu.memory_space<vmem>>, %arg16: memref<32x34xf32, #tpu.memory_space<vmem>>) attributes {dimension_semantics = [#tpu.dimension_semantics<parallel>], iteration_bounds = array<i64: 1>, scalar_prefetch = 0 : i64, scratch_operands = 2 : i64, tpu.core_type = #tpu.core_type<tc>, window_params = [{transform_indices = @transform_0, window_bounds = array<i64: 1, 16, 32>}, {transform_indices = @transform_1, window_bounds = array<i64: 5>}, {pipeline_mode = #tpu.pipeline_mode<synchronous>, transform_indices = @transform_2, window_bounds = array<i64: 4, 32>}, {pipeline_mode = #tpu.pipeline_mode<synchronous>, transform_indices = @transform_3, window_bounds = array<i64: 2, 32>}, {pipeline_mode = #tpu.pipeline_mode<synchronous>, transform_indices = @transform_4, window_bounds = array<i64: 32, 2>}, {pipeline_mode = #tpu.pipeline_mode<synchronous>, transform_indices = @transform_5, window_bounds = array<i64: 2, 34>}, {pipeline_mode = #tpu.pipeline_mode<synchronous>, transform_indices = @transform_6, window_bounds = array<i64: 34, 2>}, {pipeline_mode = #tpu.pipeline_mode<synchronous>, transform_indices = @transform_7, window_bounds = array<i64: 32, 34>}, {pipeline_mode = #tpu.pipeline_mode<synchronous>, transform_indices = @transform_8, window_bounds = array<i64: 32, 50>}, {pipeline_mode = #tpu.pipeline_mode<synchronous>, transform_indices = @transform_9, window_bounds = array<i64: 32, 33>}, {pipeline_mode = #tpu.pipeline_mode<synchronous>, transform_indices = @transform_10, window_bounds = array<i64: 16, 33>}, {pipeline_mode = #tpu.pipeline_mode<synchronous>, transform_indices = @transform_11, window_bounds = array<i64: 128, 34>}, {pipeline_mode = #tpu.pipeline_mode<synchronous>, transform_indices = @transform_12, window_bounds = array<i64: 32, 128>}, {transform_indices = @transform_13, window_bounds = array<i64: 1, 32, 34>}]} {
    %c0 = arith.constant 0 : index
    %c0_0 = arith.constant 0 : index
    %c0_1 = arith.constant 0 : index
    %0 = vector.load %arg1[%c0, %c0_0, %c0_1] : memref<1x16x32xf32, #tpu.memory_space<vmem>>, vector<1x16x32xf32>
    %1 = vector.shape_cast %0 : vector<1x16x32xf32> to vector<16x32xf32>
    %c0_2 = arith.constant 0 : index
    %c0_3 = arith.constant 0 : index
    %2 = vector.load %arg3[%c0_2, %c0_3] : memref<4x32xf32, #tpu.memory_space<vmem>>, vector<4x32xf32>
    %c0_4 = arith.constant 0 : index
    %c0_5 = arith.constant 0 : index
    %3 = vector.load %arg4[%c0_4, %c0_5] : memref<2x32xf32, #tpu.memory_space<vmem>>, vector<2x32xf32>
    %c0_6 = arith.constant 0 : index
    %c0_7 = arith.constant 0 : index
    %4 = vector.load %arg5[%c0_6, %c0_7] : memref<32x2xf32, #tpu.memory_space<vmem>>, vector<32x2xf32>
    %c0_8 = arith.constant 0 : index
    %c0_9 = arith.constant 0 : index
    %5 = vector.load %arg6[%c0_8, %c0_9] : memref<2x34xf32, #tpu.memory_space<vmem>>, vector<2x34xf32>
    %c0_10 = arith.constant 0 : index
    %c0_11 = arith.constant 0 : index
    %6 = vector.load %arg7[%c0_10, %c0_11] : memref<34x2xf32, #tpu.memory_space<vmem>>, vector<34x2xf32>
    %c0_12 = arith.constant 0 : index
    %c0_13 = arith.constant 0 : index
    %7 = vector.load %arg8[%c0_12, %c0_13] : memref<32x34xf32, #tpu.memory_space<vmem>>, vector<32x34xf32>
    %c0_14 = arith.constant 0 : index
    %c0_15 = arith.constant 0 : index
    %8 = vector.load %arg9[%c0_14, %c0_15] : memref<32x50xf32, #tpu.memory_space<vmem>>, vector<32x50xf32>
    %c0_16 = arith.constant 0 : index
    %c0_17 = arith.constant 0 : index
    %9 = vector.load %arg10[%c0_16, %c0_17] : memref<32x33xf32, #tpu.memory_space<vmem>>, vector<32x33xf32>
    %c0_18 = arith.constant 0 : index
    %c0_19 = arith.constant 0 : index
    %10 = vector.load %arg11[%c0_18, %c0_19] : memref<16x33xf32, #tpu.memory_space<vmem>>, vector<16x33xf32>
    %c0_20 = arith.constant 0 : index
    %c0_21 = arith.constant 0 : index
    %11 = vector.load %arg12[%c0_20, %c0_21] : memref<128x34xf32, #tpu.memory_space<vmem>>, vector<128x34xf32>
    %c0_22 = arith.constant 0 : index
    %c0_23 = arith.constant 0 : index
    %12 = vector.load %arg13[%c0_22, %c0_23] : memref<32x128xf32, #tpu.memory_space<vmem>>, vector<32x128xf32>
    %c0_24 = arith.constant 0 : index
    %13 = memref.load %arg2[%c0_24] : memref<5xf32, #tpu.memory_space<smem>>
    %c1 = arith.constant 1 : index
    %14 = memref.load %arg2[%c1] : memref<5xf32, #tpu.memory_space<smem>>
    %c2 = arith.constant 2 : index
    %15 = memref.load %arg2[%c2] : memref<5xf32, #tpu.memory_space<smem>>
    %c3 = arith.constant 3 : index
    %16 = memref.load %arg2[%c3] : memref<5xf32, #tpu.memory_space<smem>>
    %c4 = arith.constant 4 : index
    %17 = memref.load %arg2[%c4] : memref<5xf32, #tpu.memory_space<smem>>
    %18 = vector.extract_strided_slice %8 {offsets = [0, 0], sizes = [32, 16], strides = [1, 1]} : vector<32x50xf32> to vector<32x16xf32>
    %19 = vector.extract_strided_slice %8 {offsets = [0, 16], sizes = [32, 1], strides = [1, 1]} : vector<32x50xf32> to vector<32x1xf32>
    %20 = vector.extract_strided_slice %8 {offsets = [0, 17], sizes = [32, 1], strides = [1, 1]} : vector<32x50xf32> to vector<32x1xf32>
    %21 = vector.extract_strided_slice %8 {offsets = [0, 18], sizes = [32, 1], strides = [1, 1]} : vector<32x50xf32> to vector<32x1xf32>
    %22 = vector.extract_strided_slice %8 {offsets = [0, 19], sizes = [32, 3], strides = [1, 1]} : vector<32x50xf32> to vector<32x3xf32>
    %23 = vector.extract_strided_slice %8 {offsets = [0, 22], sizes = [32, 1], strides = [1, 1]} : vector<32x50xf32> to vector<32x1xf32>
    %24 = vector.extract_strided_slice %8 {offsets = [0, 23], sizes = [32, 1], strides = [1, 1]} : vector<32x50xf32> to vector<32x1xf32>
    %25 = vector.extract_strided_slice %8 {offsets = [0, 24], sizes = [32, 1], strides = [1, 1]} : vector<32x50xf32> to vector<32x1xf32>
    %cst = arith.constant dense<0.000000e+00> : vector<32x32xf32>
    %26 = tpu.matmul %18, %1, %cst {dimension_numbers = #tpu.dot_dimension_numbers<[1], [0], [0], [1], [0, 0, 1, 1], [], []>} : vector<32x16xf32>, vector<16x32xf32>, vector<32x32xf32> -> vector<32x32xf32>
    %27 = vector.broadcast %19 : vector<32x1xf32> to vector<32x32xf32>
    %28 = arith.addf %26, %27 : vector<32x32xf32>
    %cst_25 = arith.constant 0.000000e+00 : f32
    %29 = vector.broadcast %cst_25 : f32 to vector<32x32xf32>
    %30 = arith.maximumf %28, %29 : vector<32x32xf32>
    %cst_26 = arith.constant 0.000000e+00 : f32
    %31 = vector.broadcast %cst_26 : f32 to vector<32x32xf32>
    %32 = arith.minimumf %28, %31 : vector<32x32xf32>
    %33 = vector.broadcast %13 : f32 to vector<32x32xf32>
    %34 = arith.mulf %33, %32 : vector<32x32xf32>
    %35 = arith.addf %30, %34 : vector<32x32xf32>
    %cst_27 = arith.constant dense<0.000000e+00> : vector<32xf32>
    %36 = vector.multi_reduction <add>, %35, %cst_27 [0] : vector<32x32xf32> to vector<32xf32>
    %37 = vector.shape_cast %36 : vector<32xf32> to vector<1x32xf32>
    %38 = arith.mulf %35, %35 : vector<32x32xf32>
    %cst_28 = arith.constant dense<0.000000e+00> : vector<32xf32>
    %39 = vector.multi_reduction <add>, %38, %cst_28 [0] : vector<32x32xf32> to vector<32xf32>
    %40 = vector.shape_cast %39 : vector<32xf32> to vector<1x32xf32>
    %cst_29 = arith.constant dense<0.000000e+00> : vector<1x2xf32>
    %41 = tpu.matmul %37, %4, %cst_29 {dimension_numbers = #tpu.dot_dimension_numbers<[1], [0], [0], [1], [0, 0, 1, 1], [], []>, precision = #tpu.contract_precision<fp32>} : vector<1x32xf32>, vector<32x2xf32>, vector<1x2xf32> -> vector<1x2xf32>
    %cst_30 = arith.constant 0.001953125 : f32
    %42 = vector.broadcast %cst_30 : f32 to vector<1x2xf32>
    %43 = arith.mulf %41, %42 : vector<1x2xf32>
    %cst_31 = arith.constant dense<0.000000e+00> : vector<1x2xf32>
    %44 = tpu.matmul %40, %4, %cst_31 {dimension_numbers = #tpu.dot_dimension_numbers<[1], [0], [0], [1], [0, 0, 1, 1], [], []>, precision = #tpu.contract_precision<fp32>} : vector<1x32xf32>, vector<32x2xf32>, vector<1x2xf32> -> vector<1x2xf32>
    %cst_32 = arith.constant 0.001953125 : f32
    %45 = vector.broadcast %cst_32 : f32 to vector<1x2xf32>
    %46 = arith.mulf %44, %45 : vector<1x2xf32>
    %47 = arith.mulf %43, %43 : vector<1x2xf32>
    %48 = arith.subf %46, %47 : vector<1x2xf32>
    %cst_33 = arith.constant 0.000000e+00 : f32
    %49 = vector.broadcast %cst_33 : f32 to vector<1x2xf32>
    %50 = arith.maximumf %48, %49 : vector<1x2xf32>
    %cst_34 = arith.constant 9.99999996E-13 : f32
    %51 = vector.broadcast %cst_34 : f32 to vector<1x2xf32>
    %52 = arith.addf %50, %51 : vector<1x2xf32>
    %53 = math.rsqrt %52 : vector<1x2xf32>
    %cst_35 = arith.constant dense<0.000000e+00> : vector<1x32xf32>
    %54 = tpu.matmul %43, %3, %cst_35 {dimension_numbers = #tpu.dot_dimension_numbers<[1], [0], [0], [1], [0, 0, 1, 1], [], []>, precision = #tpu.contract_precision<fp32>} : vector<1x2xf32>, vector<2x32xf32>, vector<1x32xf32> -> vector<1x32xf32>
    %cst_36 = arith.constant dense<0.000000e+00> : vector<1x32xf32>
    %55 = tpu.matmul %53, %3, %cst_36 {dimension_numbers = #tpu.dot_dimension_numbers<[1], [0], [0], [1], [0, 0, 1, 1], [], []>, precision = #tpu.contract_precision<fp32>} : vector<1x2xf32>, vector<2x32xf32>, vector<1x32xf32> -> vector<1x32xf32>
    %56 = vector.broadcast %54 : vector<1x32xf32> to vector<32x32xf32>
    %57 = arith.subf %35, %56 : vector<32x32xf32>
    %58 = vector.broadcast %55 : vector<1x32xf32> to vector<32x32xf32>
    %59 = arith.mulf %57, %58 : vector<32x32xf32>
    %60 = vector.broadcast %20 : vector<32x1xf32> to vector<32x32xf32>
    %61 = arith.mulf %60, %59 : vector<32x32xf32>
    %62 = vector.broadcast %21 : vector<32x1xf32> to vector<32x32xf32>
    %63 = arith.addf %61, %62 : vector<32x32xf32>
    %c0_37 = arith.constant 0 : index
    %c128 = arith.constant 128 : index
    %64 = vector.load %arg15[%c0_37, %c128] : memref<32x168xf32, #tpu.memory_space<vmem>>, vector<32x32xf32>
    tpu.vector_store %arg15[%c0_37, %c128], %63 {strides = array<i32>} : memref<32x168xf32, #tpu.memory_space<vmem>>, vector<32x32xf32>,
    %65 = vector.extract_strided_slice %2 {offsets = [0, 0], sizes = [1, 32], strides = [1, 1]} : vector<4x32xf32> to vector<1x32xf32>
    %66 = vector.extract_strided_slice %2 {offsets = [1, 0], sizes = [1, 32], strides = [1, 1]} : vector<4x32xf32> to vector<1x32xf32>
    %cst_38 = arith.constant 5.000000e-01 : f32
    %67 = vector.broadcast %cst_38 : f32 to vector<1x32xf32>
    %68 = arith.cmpf ogt, %65, %67 : vector<1x32xf32>
    %c0_39 = arith.constant 0 : index
    %c127 = arith.constant 127 : index
    %69 = vector.load %arg15[%c0_39, %c127] : memref<32x168xf32, #tpu.memory_space<vmem>>, vector<32x32xf32>
    %cst_40 = arith.constant 0.000000e+00 : f32
    %70 = vector.shape_cast %68 : vector<1x32xi1> to vector<1x32xi1>
    %71 = vector.broadcast %70 : vector<1x32xi1> to vector<32x32xi1>
    %72 = vector.broadcast %cst_40 : f32 to vector<32x32xf32>
    %73 = arith.select %71, %69, %72 : vector<32x32xi1>, vector<32x32xf32>
    %cst_41 = arith.constant 5.000000e-01 : f32
    %74 = vector.broadcast %cst_41 : f32 to vector<1x32xf32>
    %75 = arith.cmpf ogt, %66, %74 : vector<1x32xf32>
    %c0_42 = arith.constant 0 : index
    %c129 = arith.constant 129 : index
    %76 = vector.load %arg15[%c0_42, %c129] : memref<32x168xf32, #tpu.memory_space<vmem>>, vector<32x32xf32>
    %cst_43 = arith.constant 0.000000e+00 : f32
    %77 = vector.shape_cast %75 : vector<1x32xi1> to vector<1x32xi1>
    %78 = vector.broadcast %77 : vector<1x32xi1> to vector<32x32xi1>
    %79 = vector.broadcast %cst_43 : f32 to vector<32x32xf32>
    %80 = arith.select %78, %76, %79 : vector<32x32xi1>, vector<32x32xf32>
    %81 = vector.extract_strided_slice %22 {offsets = [0, 0], sizes = [32, 1], strides = [1, 1]} : vector<32x3xf32> to vector<32x1xf32>
    %82 = vector.broadcast %81 : vector<32x1xf32> to vector<32x32xf32>
    %83 = arith.mulf %82, %73 : vector<32x32xf32>
    %84 = vector.extract_strided_slice %22 {offsets = [0, 1], sizes = [32, 1], strides = [1, 1]} : vector<32x3xf32> to vector<32x1xf32>
    %85 = vector.broadcast %84 : vector<32x1xf32> to vector<32x32xf32>
    %86 = arith.mulf %85, %63 : vector<32x32xf32>
    %87 = arith.addf %83, %86 : vector<32x32xf32>
    %88 = vector.extract_strided_slice %22 {offsets = [0, 2], sizes = [32, 1], strides = [1, 1]} : vector<32x3xf32> to vector<32x1xf32>
    %89 = vector.broadcast %88 : vector<32x1xf32> to vector<32x32xf32>
    %90 = arith.mulf %89, %80 : vector<32x32xf32>
    %91 = arith.addf %87, %90 : vector<32x32xf32>
    %92 = vector.broadcast %23 : vector<32x1xf32> to vector<32x32xf32>
    %93 = arith.addf %91, %92 : vector<32x32xf32>
    %cst_44 = arith.constant 0.000000e+00 : f32
    %94 = vector.broadcast %cst_44 : f32 to vector<32x32xf32>
    %95 = arith.maximumf %93, %94 : vector<32x32xf32>
    %cst_45 = arith.constant 0.000000e+00 : f32
    %96 = vector.broadcast %cst_45 : f32 to vector<32x32xf32>
    %97 = arith.minimumf %93, %96 : vector<32x32xf32>
    %98 = vector.broadcast %14 : f32 to vector<32x32xf32>
    %99 = arith.mulf %98, %97 : vector<32x32xf32>
    %100 = arith.addf %95, %99 : vector<32x32xf32>
    %cst_46 = arith.constant dense<0.000000e+00> : vector<32xf32>
    %101 = vector.multi_reduction <add>, %100, %cst_46 [0] : vector<32x32xf32> to vector<32xf32>
    %102 = vector.shape_cast %101 : vector<32xf32> to vector<1x32xf32>
    %103 = arith.mulf %100, %100 : vector<32x32xf32>
    %cst_47 = arith.constant dense<0.000000e+00> : vector<32xf32>
    %104 = vector.multi_reduction <add>, %103, %cst_47 [0] : vector<32x32xf32> to vector<32xf32>
    %105 = vector.shape_cast %104 : vector<32xf32> to vector<1x32xf32>
    %cst_48 = arith.constant dense<0.000000e+00> : vector<1x2xf32>
    %106 = tpu.matmul %102, %4, %cst_48 {dimension_numbers = #tpu.dot_dimension_numbers<[1], [0], [0], [1], [0, 0, 1, 1], [], []>, precision = #tpu.contract_precision<fp32>} : vector<1x32xf32>, vector<32x2xf32>, vector<1x2xf32> -> vector<1x2xf32>
    %cst_49 = arith.constant 0.001953125 : f32
    %107 = vector.broadcast %cst_49 : f32 to vector<1x2xf32>
    %108 = arith.mulf %106, %107 : vector<1x2xf32>
    %cst_50 = arith.constant dense<0.000000e+00> : vector<1x2xf32>
    %109 = tpu.matmul %105, %4, %cst_50 {dimension_numbers = #tpu.dot_dimension_numbers<[1], [0], [0], [1], [0, 0, 1, 1], [], []>, precision = #tpu.contract_precision<fp32>} : vector<1x32xf32>, vector<32x2xf32>, vector<1x2xf32> -> vector<1x2xf32>
    %cst_51 = arith.constant 0.001953125 : f32
    %110 = vector.broadcast %cst_51 : f32 to vector<1x2xf32>
    %111 = arith.mulf %109, %110 : vector<1x2xf32>
    %112 = arith.mulf %108, %108 : vector<1x2xf32>
    %113 = arith.subf %111, %112 : vector<1x2xf32>
    %cst_52 = arith.constant 0.000000e+00 : f32
    %114 = vector.broadcast %cst_52 : f32 to vector<1x2xf32>
    %115 = arith.maximumf %113, %114 : vector<1x2xf32>
    %cst_53 = arith.constant 9.99999996E-13 : f32
    %116 = vector.broadcast %cst_53 : f32 to vector<1x2xf32>
    %117 = arith.addf %115, %116 : vector<1x2xf32>
    %118 = math.rsqrt %117 : vector<1x2xf32>
    %cst_54 = arith.constant dense<0.000000e+00> : vector<1x32xf32>
    %119 = tpu.matmul %108, %3, %cst_54 {dimension_numbers = #tpu.dot_dimension_numbers<[1], [0], [0], [1], [0, 0, 1, 1], [], []>, precision = #tpu.contract_precision<fp32>} : vector<1x2xf32>, vector<2x32xf32>, vector<1x32xf32> -> vector<1x32xf32>
    %cst_55 = arith.constant dense<0.000000e+00> : vector<1x32xf32>
    %120 = tpu.matmul %118, %3, %cst_55 {dimension_numbers = #tpu.dot_dimension_numbers<[1], [0], [0], [1], [0, 0, 1, 1], [], []>, precision = #tpu.contract_precision<fp32>} : vector<1x2xf32>, vector<2x32xf32>, vector<1x32xf32> -> vector<1x32xf32>
    %121 = vector.broadcast %119 : vector<1x32xf32> to vector<32x32xf32>
    %122 = arith.subf %100, %121 : vector<32x32xf32>
    %123 = vector.broadcast %120 : vector<1x32xf32> to vector<32x32xf32>
    %124 = arith.mulf %122, %123 : vector<32x32xf32>
    %125 = vector.broadcast %24 : vector<32x1xf32> to vector<32x32xf32>
    %126 = arith.mulf %125, %124 : vector<32x32xf32>
    %127 = vector.broadcast %25 : vector<32x1xf32> to vector<32x32xf32>
    %128 = arith.addf %126, %127 : vector<32x32xf32>
    %129 = vector.extract_strided_slice %9 {offsets = [0, 0], sizes = [32, 32], strides = [1, 1]} : vector<32x33xf32> to vector<32x32xf32>
    %cst_56 = arith.constant dense<0.000000e+00> : vector<32x32xf32>
    %130 = tpu.matmul %129, %128, %cst_56 {dimension_numbers = #tpu.dot_dimension_numbers<[1], [0], [0], [1], [0, 0, 1, 1], [], []>} : vector<32x32xf32>, vector<32x32xf32>, vector<32x32xf32> -> vector<32x32xf32>
    %131 = vector.extract_strided_slice %9 {offsets = [0, 32], sizes = [32, 1], strides = [1, 1]} : vector<32x33xf32> to vector<32x1xf32>
    %132 = vector.broadcast %131 : vector<32x1xf32> to vector<32x32xf32>
    %133 = arith.addf %130, %132 : vector<32x32xf32>
    %134 = vector.extract_strided_slice %133 {offsets = [0, 0], sizes = [16, 32], strides = [1, 1]} : vector<32x32xf32> to vector<16x32xf32>
    %135 = arith.addf %134, %1 : vector<16x32xf32>
    %136 = vector.extract_strided_slice %133 {offsets = [16, 0], sizes = [16, 32], strides = [1, 1]} : vector<32x32xf32> to vector<16x32xf32>
    %137 = vector.extract_strided_slice %8 {offsets = [0, 25], sizes = [32, 16], strides = [1, 1]} : vector<32x50xf32> to vector<32x16xf32>
    %138 = vector.extract_strided_slice %8 {offsets = [0, 41], sizes = [32, 1], strides = [1, 1]} : vector<32x50xf32> to vector<32x1xf32>
    %139 = vector.extract_strided_slice %8 {offsets = [0, 42], sizes = [32, 1], strides = [1, 1]} : vector<32x50xf32> to vector<32x1xf32>
    %140 = vector.extract_strided_slice %8 {offsets = [0, 43], sizes = [32, 1], strides = [1, 1]} : vector<32x50xf32> to vector<32x1xf32>
    %141 = vector.extract_strided_slice %8 {offsets = [0, 44], sizes = [32, 3], strides = [1, 1]} : vector<32x50xf32> to vector<32x3xf32>
    %142 = vector.extract_strided_slice %8 {offsets = [0, 47], sizes = [32, 1], strides = [1, 1]} : vector<32x50xf32> to vector<32x1xf32>
    %143 = vector.extract_strided_slice %8 {offsets = [0, 48], sizes = [32, 1], strides = [1, 1]} : vector<32x50xf32> to vector<32x1xf32>
    %144 = vector.extract_strided_slice %8 {offsets = [0, 49], sizes = [32, 1], strides = [1, 1]} : vector<32x50xf32> to vector<32x1xf32>
    %cst_57 = arith.constant dense<0.000000e+00> : vector<32x32xf32>
    %145 = tpu.matmul %137, %135, %cst_57 {dimension_numbers = #tpu.dot_dimension_numbers<[1], [0], [0], [1], [0, 0, 1, 1], [], []>} : vector<32x16xf32>, vector<16x32xf32>, vector<32x32xf32> -> vector<32x32xf32>
    %146 = vector.broadcast %138 : vector<32x1xf32> to vector<32x32xf32>
    %147 = arith.addf %145, %146 : vector<32x32xf32>
    %cst_58 = arith.constant 0.000000e+00 : f32
    %148 = vector.broadcast %cst_58 : f32 to vector<32x32xf32>
    %149 = arith.maximumf %147, %148 : vector<32x32xf32>
    %cst_59 = arith.constant 0.000000e+00 : f32
    %150 = vector.broadcast %cst_59 : f32 to vector<32x32xf32>
    %151 = arith.minimumf %147, %150 : vector<32x32xf32>
    %152 = vector.broadcast %15 : f32 to vector<32x32xf32>
    %153 = arith.mulf %152, %151 : vector<32x32xf32>
    %154 = arith.addf %149, %153 : vector<32x32xf32>
    %cst_60 = arith.constant dense<0.000000e+00> : vector<32xf32>
    %155 = vector.multi_reduction <add>, %154, %cst_60 [0] : vector<32x32xf32> to vector<32xf32>
    %156 = vector.shape_cast %155 : vector<32xf32> to vector<1x32xf32>
    %157 = arith.mulf %154, %154 : vector<32x32xf32>
    %cst_61 = arith.constant dense<0.000000e+00> : vector<32xf32>
    %158 = vector.multi_reduction <add>, %157, %cst_61 [0] : vector<32x32xf32> to vector<32xf32>
    %159 = vector.shape_cast %158 : vector<32xf32> to vector<1x32xf32>
    %cst_62 = arith.constant dense<0.000000e+00> : vector<1x2xf32>
    %160 = tpu.matmul %156, %4, %cst_62 {dimension_numbers = #tpu.dot_dimension_numbers<[1], [0], [0], [1], [0, 0, 1, 1], [], []>, precision = #tpu.contract_precision<fp32>} : vector<1x32xf32>, vector<32x2xf32>, vector<1x2xf32> -> vector<1x2xf32>
    %cst_63 = arith.constant 0.001953125 : f32
    %161 = vector.broadcast %cst_63 : f32 to vector<1x2xf32>
    %162 = arith.mulf %160, %161 : vector<1x2xf32>
    %cst_64 = arith.constant dense<0.000000e+00> : vector<1x2xf32>
    %163 = tpu.matmul %159, %4, %cst_64 {dimension_numbers = #tpu.dot_dimension_numbers<[1], [0], [0], [1], [0, 0, 1, 1], [], []>, precision = #tpu.contract_precision<fp32>} : vector<1x32xf32>, vector<32x2xf32>, vector<1x2xf32> -> vector<1x2xf32>
    %cst_65 = arith.constant 0.001953125 : f32
    %164 = vector.broadcast %cst_65 : f32 to vector<1x2xf32>
    %165 = arith.mulf %163, %164 : vector<1x2xf32>
    %166 = arith.mulf %162, %162 : vector<1x2xf32>
    %167 = arith.subf %165, %166 : vector<1x2xf32>
    %cst_66 = arith.constant 0.000000e+00 : f32
    %168 = vector.broadcast %cst_66 : f32 to vector<1x2xf32>
    %169 = arith.maximumf %167, %168 : vector<1x2xf32>
    %cst_67 = arith.constant 9.99999996E-13 : f32
    %170 = vector.broadcast %cst_67 : f32 to vector<1x2xf32>
    %171 = arith.addf %169, %170 : vector<1x2xf32>
    %172 = math.rsqrt %171 : vector<1x2xf32>
    %cst_68 = arith.constant dense<0.000000e+00> : vector<1x32xf32>
    %173 = tpu.matmul %162, %3, %cst_68 {dimension_numbers = #tpu.dot_dimension_numbers<[1], [0], [0], [1], [0, 0, 1, 1], [], []>, precision = #tpu.contract_precision<fp32>} : vector<1x2xf32>, vector<2x32xf32>, vector<1x32xf32> -> vector<1x32xf32>
    %cst_69 = arith.constant dense<0.000000e+00> : vector<1x32xf32>
    %174 = tpu.matmul %172, %3, %cst_69 {dimension_numbers = #tpu.dot_dimension_numbers<[1], [0], [0], [1], [0, 0, 1, 1], [], []>, precision = #tpu.contract_precision<fp32>} : vector<1x2xf32>, vector<2x32xf32>, vector<1x32xf32> -> vector<1x32xf32>
    %175 = vector.broadcast %173 : vector<1x32xf32> to vector<32x32xf32>
    %176 = arith.subf %154, %175 : vector<32x32xf32>
    %177 = vector.broadcast %174 : vector<1x32xf32> to vector<32x32xf32>
    %178 = arith.mulf %176, %177 : vector<32x32xf32>
    %179 = vector.broadcast %139 : vector<32x1xf32> to vector<32x32xf32>
    %180 = arith.mulf %179, %178 : vector<32x32xf32>
    %181 = vector.broadcast %140 : vector<32x1xf32> to vector<32x32xf32>
    %182 = arith.addf %180, %181 : vector<32x32xf32>
    %c0_70 = arith.constant 0 : index
    %c128_71 = arith.constant 128 : index
    %183 = vector.load %arg15[%c0_70, %c128_71] : memref<32x168xf32, #tpu.memory_space<vmem>>, vector<32x32xf32>
    tpu.vector_store %arg15[%c0_70, %c128_71], %182 {strides = array<i32>} : memref<32x168xf32, #tpu.memory_space<vmem>>, vector<32x32xf32>,
    %184 = vector.extract_strided_slice %2 {offsets = [2, 0], sizes = [1, 32], strides = [1, 1]} : vector<4x32xf32> to vector<1x32xf32>
    %185 = vector.extract_strided_slice %2 {offsets = [3, 0], sizes = [1, 32], strides = [1, 1]} : vector<4x32xf32> to vector<1x32xf32>
    %cst_72 = arith.constant 5.000000e-01 : f32
    %186 = vector.broadcast %cst_72 : f32 to vector<1x32xf32>
    %187 = arith.cmpf ogt, %184, %186 : vector<1x32xf32>
    %c0_73 = arith.constant 0 : index
    %c126 = arith.constant 126 : index
    %188 = vector.load %arg15[%c0_73, %c126] : memref<32x168xf32, #tpu.memory_space<vmem>>, vector<32x32xf32>
    %cst_74 = arith.constant 0.000000e+00 : f32
    %189 = vector.shape_cast %187 : vector<1x32xi1> to vector<1x32xi1>
    %190 = vector.broadcast %189 : vector<1x32xi1> to vector<32x32xi1>
    %191 = vector.broadcast %cst_74 : f32 to vector<32x32xf32>
    %192 = arith.select %190, %188, %191 : vector<32x32xi1>, vector<32x32xf32>
    %cst_75 = arith.constant 5.000000e-01 : f32
    %193 = vector.broadcast %cst_75 : f32 to vector<1x32xf32>
    %194 = arith.cmpf ogt, %185, %193 : vector<1x32xf32>
    %c0_76 = arith.constant 0 : index
    %c130 = arith.constant 130 : index
    %195 = vector.load %arg15[%c0_76, %c130] : memref<32x168xf32, #tpu.memory_space<vmem>>, vector<32x32xf32>
    %cst_77 = arith.constant 0.000000e+00 : f32
    %196 = vector.shape_cast %194 : vector<1x32xi1> to vector<1x32xi1>
    %197 = vector.broadcast %196 : vector<1x32xi1> to vector<32x32xi1>
    %198 = vector.broadcast %cst_77 : f32 to vector<32x32xf32>
    %199 = arith.select %197, %195, %198 : vector<32x32xi1>, vector<32x32xf32>
    %200 = vector.extract_strided_slice %141 {offsets = [0, 0], sizes = [32, 1], strides = [1, 1]} : vector<32x3xf32> to vector<32x1xf32>
    %201 = vector.broadcast %200 : vector<32x1xf32> to vector<32x32xf32>
    %202 = arith.mulf %201, %192 : vector<32x32xf32>
    %203 = vector.extract_strided_slice %141 {offsets = [0, 1], sizes = [32, 1], strides = [1, 1]} : vector<32x3xf32> to vector<32x1xf32>
    %204 = vector.broadcast %203 : vector<32x1xf32> to vector<32x32xf32>
    %205 = arith.mulf %204, %182 : vector<32x32xf32>
    %206 = arith.addf %202, %205 : vector<32x32xf32>
    %207 = vector.extract_strided_slice %141 {offsets = [0, 2], sizes = [32, 1], strides = [1, 1]} : vector<32x3xf32> to vector<32x1xf32>
    %208 = vector.broadcast %207 : vector<32x1xf32> to vector<32x32xf32>
    %209 = arith.mulf %208, %199 : vector<32x32xf32>
    %210 = arith.addf %206, %209 : vector<32x32xf32>
    %211 = vector.broadcast %142 : vector<32x1xf32> to vector<32x32xf32>
    %212 = arith.addf %210, %211 : vector<32x32xf32>
    %cst_78 = arith.constant 0.000000e+00 : f32
    %213 = vector.broadcast %cst_78 : f32 to vector<32x32xf32>
    %214 = arith.maximumf %212, %213 : vector<32x32xf32>
    %cst_79 = arith.constant 0.000000e+00 : f32
    %215 = vector.broadcast %cst_79 : f32 to vector<32x32xf32>
    %216 = arith.minimumf %212, %215 : vector<32x32xf32>
    %217 = vector.broadcast %16 : f32 to vector<32x32xf32>
    %218 = arith.mulf %217, %216 : vector<32x32xf32>
    %219 = arith.addf %214, %218 : vector<32x32xf32>
    %cst_80 = arith.constant dense<0.000000e+00> : vector<32xf32>
    %220 = vector.multi_reduction <add>, %219, %cst_80 [0] : vector<32x32xf32> to vector<32xf32>
    %221 = vector.shape_cast %220 : vector<32xf32> to vector<1x32xf32>
    %222 = arith.mulf %219, %219 : vector<32x32xf32>
    %cst_81 = arith.constant dense<0.000000e+00> : vector<32xf32>
    %223 = vector.multi_reduction <add>, %222, %cst_81 [0] : vector<32x32xf32> to vector<32xf32>
    %224 = vector.shape_cast %223 : vector<32xf32> to vector<1x32xf32>
    %cst_82 = arith.constant dense<0.000000e+00> : vector<1x2xf32>
    %225 = tpu.matmul %221, %4, %cst_82 {dimension_numbers = #tpu.dot_dimension_numbers<[1], [0], [0], [1], [0, 0, 1, 1], [], []>, precision = #tpu.contract_precision<fp32>} : vector<1x32xf32>, vector<32x2xf32>, vector<1x2xf32> -> vector<1x2xf32>
    %cst_83 = arith.constant 0.001953125 : f32
    %226 = vector.broadcast %cst_83 : f32 to vector<1x2xf32>
    %227 = arith.mulf %225, %226 : vector<1x2xf32>
    %cst_84 = arith.constant dense<0.000000e+00> : vector<1x2xf32>
    %228 = tpu.matmul %224, %4, %cst_84 {dimension_numbers = #tpu.dot_dimension_numbers<[1], [0], [0], [1], [0, 0, 1, 1], [], []>, precision = #tpu.contract_precision<fp32>} : vector<1x32xf32>, vector<32x2xf32>, vector<1x2xf32> -> vector<1x2xf32>
    %cst_85 = arith.constant 0.001953125 : f32
    %229 = vector.broadcast %cst_85 : f32 to vector<1x2xf32>
    %230 = arith.mulf %228, %229 : vector<1x2xf32>
    %231 = arith.mulf %227, %227 : vector<1x2xf32>
    %232 = arith.subf %230, %231 : vector<1x2xf32>
    %cst_86 = arith.constant 0.000000e+00 : f32
    %233 = vector.broadcast %cst_86 : f32 to vector<1x2xf32>
    %234 = arith.maximumf %232, %233 : vector<1x2xf32>
    %cst_87 = arith.constant 9.99999996E-13 : f32
    %235 = vector.broadcast %cst_87 : f32 to vector<1x2xf32>
    %236 = arith.addf %234, %235 : vector<1x2xf32>
    %237 = math.rsqrt %236 : vector<1x2xf32>
    %cst_88 = arith.constant dense<0.000000e+00> : vector<1x32xf32>
    %238 = tpu.matmul %227, %3, %cst_88 {dimension_numbers = #tpu.dot_dimension_numbers<[1], [0], [0], [1], [0, 0, 1, 1], [], []>, precision = #tpu.contract_precision<fp32>} : vector<1x2xf32>, vector<2x32xf32>, vector<1x32xf32> -> vector<1x32xf32>
    %cst_89 = arith.constant dense<0.000000e+00> : vector<1x32xf32>
    %239 = tpu.matmul %237, %3, %cst_89 {dimension_numbers = #tpu.dot_dimension_numbers<[1], [0], [0], [1], [0, 0, 1, 1], [], []>, precision = #tpu.contract_precision<fp32>} : vector<1x2xf32>, vector<2x32xf32>, vector<1x32xf32> -> vector<1x32xf32>
    %240 = vector.broadcast %238 : vector<1x32xf32> to vector<32x32xf32>
    %241 = arith.subf %219, %240 : vector<32x32xf32>
    %242 = vector.broadcast %239 : vector<1x32xf32> to vector<32x32xf32>
    %243 = arith.mulf %241, %242 : vector<32x32xf32>
    %244 = vector.broadcast %143 : vector<32x1xf32> to vector<32x32xf32>
    %245 = arith.mulf %244, %243 : vector<32x32xf32>
    %246 = vector.broadcast %144 : vector<32x1xf32> to vector<32x32xf32>
    %247 = arith.addf %245, %246 : vector<32x32xf32>
    %248 = vector.extract_strided_slice %10 {offsets = [0, 0], sizes = [16, 32], strides = [1, 1]} : vector<16x33xf32> to vector<16x32xf32>
    %cst_90 = arith.constant dense<0.000000e+00> : vector<16x32xf32>
    %249 = tpu.matmul %248, %247, %cst_90 {dimension_numbers = #tpu.dot_dimension_numbers<[1], [0], [0], [1], [0, 0, 1, 1], [], []>} : vector<16x32xf32>, vector<32x32xf32>, vector<16x32xf32> -> vector<16x32xf32>
    %250 = vector.extract_strided_slice %10 {offsets = [0, 32], sizes = [16, 1], strides = [1, 1]} : vector<16x33xf32> to vector<16x1xf32>
    %251 = vector.broadcast %250 : vector<16x1xf32> to vector<16x32xf32>
    %252 = arith.addf %249, %251 : vector<16x32xf32>
    %253 = arith.addf %136, %252 : vector<16x32xf32>
    %254 = vector.extract_strided_slice %253 {offsets = [0, 0], sizes = [16, 16], strides = [1, 1]} : vector<16x32xf32> to vector<16x16xf32>
    %c0_91 = arith.constant 0 : index
    %c0_92 = arith.constant 0 : index
    %255 = vector.load %arg16[%c0_91, %c0_92] : memref<32x34xf32, #tpu.memory_space<vmem>>, vector<16x16xf32>
    tpu.vector_store %arg16[%c0_91, %c0_92], %254 {strides = array<i32>} : memref<32x34xf32, #tpu.memory_space<vmem>>, vector<16x16xf32>,
    %c16 = arith.constant 16 : index
    %c1_93 = arith.constant 1 : index
    %256 = vector.load %arg16[%c16, %c1_93] : memref<32x34xf32, #tpu.memory_space<vmem>>, vector<16x16xf32>
    tpu.vector_store %arg16[%c16, %c1_93], %254 {strides = array<i32>} : memref<32x34xf32, #tpu.memory_space<vmem>>, vector<16x16xf32>,
    %257 = vector.extract_strided_slice %253 {offsets = [0, 16], sizes = [16, 16], strides = [1, 1]} : vector<16x32xf32> to vector<16x16xf32>
    %c0_94 = arith.constant 0 : index
    %c17 = arith.constant 17 : index
    %258 = vector.load %arg16[%c0_94, %c17] : memref<32x34xf32, #tpu.memory_space<vmem>>, vector<16x16xf32>
    tpu.vector_store %arg16[%c0_94, %c17], %257 {strides = array<i32>} : memref<32x34xf32, #tpu.memory_space<vmem>>, vector<16x16xf32>,
    %c16_95 = arith.constant 16 : index
    %c18 = arith.constant 18 : index
    %259 = vector.load %arg16[%c16_95, %c18] : memref<32x34xf32, #tpu.memory_space<vmem>>, vector<16x16xf32>
    tpu.vector_store %arg16[%c16_95, %c18], %257 {strides = array<i32>} : memref<32x34xf32, #tpu.memory_space<vmem>>, vector<16x16xf32>,
    %cst_96 = arith.constant 5.000000e-01 : f32
    %260 = vector.broadcast %cst_96 : f32 to vector<32x34xf32>
    %261 = arith.cmpf ogt, %7, %260 : vector<32x34xf32>
    %c0_97 = arith.constant 0 : index
    %c0_98 = arith.constant 0 : index
    %262 = vector.load %arg16[%c0_97, %c0_98] : memref<32x34xf32, #tpu.memory_space<vmem>>, vector<32x34xf32>
    %cst_99 = arith.constant 0.000000e+00 : f32
    %263 = vector.broadcast %cst_99 : f32 to vector<32x34xf32>
    %264 = arith.select %261, %262, %263 : vector<32x34xi1>, vector<32x34xf32>
    %265 = vector.extract_strided_slice %11 {offsets = [0, 0], sizes = [128, 32], strides = [1, 1]} : vector<128x34xf32> to vector<128x32xf32>
    %cst_100 = arith.constant dense<0.000000e+00> : vector<128x34xf32>
    %266 = tpu.matmul %265, %264, %cst_100 {dimension_numbers = #tpu.dot_dimension_numbers<[1], [0], [0], [1], [0, 0, 1, 1], [], []>} : vector<128x32xf32>, vector<32x34xf32>, vector<128x34xf32> -> vector<128x34xf32>
    %267 = vector.extract_strided_slice %11 {offsets = [0, 32], sizes = [128, 1], strides = [1, 1]} : vector<128x34xf32> to vector<128x1xf32>
    %cst_101 = arith.constant dense<0.000000e+00> : vector<34xf32>
    %268 = vector.multi_reduction <add>, %266, %cst_101 [0] : vector<128x34xf32> to vector<34xf32>
    %269 = vector.shape_cast %268 : vector<34xf32> to vector<1x34xf32>
    %270 = arith.mulf %266, %266 : vector<128x34xf32>
    %cst_102 = arith.constant dense<0.000000e+00> : vector<34xf32>
    %271 = vector.multi_reduction <add>, %270, %cst_102 [0] : vector<128x34xf32> to vector<34xf32>
    %272 = vector.shape_cast %271 : vector<34xf32> to vector<1x34xf32>
    %cst_103 = arith.constant dense<0.000000e+00> : vector<1x2xf32>
    %273 = tpu.matmul %269, %6, %cst_103 {dimension_numbers = #tpu.dot_dimension_numbers<[1], [0], [0], [1], [0, 0, 1, 1], [], []>, precision = #tpu.contract_precision<fp32>} : vector<1x34xf32>, vector<34x2xf32>, vector<1x2xf32> -> vector<1x2xf32>
    %cst_104 = arith.constant 4.59558825E-4 : f32
    %274 = vector.broadcast %cst_104 : f32 to vector<1x2xf32>
    %275 = arith.mulf %273, %274 : vector<1x2xf32>
    %cst_105 = arith.constant dense<0.000000e+00> : vector<1x2xf32>
    %276 = tpu.matmul %272, %6, %cst_105 {dimension_numbers = #tpu.dot_dimension_numbers<[1], [0], [0], [1], [0, 0, 1, 1], [], []>, precision = #tpu.contract_precision<fp32>} : vector<1x34xf32>, vector<34x2xf32>, vector<1x2xf32> -> vector<1x2xf32>
    %cst_106 = arith.constant 4.59558825E-4 : f32
    %277 = vector.broadcast %cst_106 : f32 to vector<1x2xf32>
    %278 = arith.mulf %276, %277 : vector<1x2xf32>
    %279 = arith.mulf %275, %275 : vector<1x2xf32>
    %280 = arith.subf %278, %279 : vector<1x2xf32>
    %cst_107 = arith.constant 0.000000e+00 : f32
    %281 = vector.broadcast %cst_107 : f32 to vector<1x2xf32>
    %282 = arith.maximumf %280, %281 : vector<1x2xf32>
    %cst_108 = arith.constant 9.99999974E-6 : f32
    %283 = vector.broadcast %cst_108 : f32 to vector<1x2xf32>
    %284 = arith.addf %282, %283 : vector<1x2xf32>
    %285 = math.rsqrt %284 : vector<1x2xf32>
    %cst_109 = arith.constant dense<0.000000e+00> : vector<1x34xf32>
    %286 = tpu.matmul %275, %5, %cst_109 {dimension_numbers = #tpu.dot_dimension_numbers<[1], [0], [0], [1], [0, 0, 1, 1], [], []>, precision = #tpu.contract_precision<fp32>} : vector<1x2xf32>, vector<2x34xf32>, vector<1x34xf32> -> vector<1x34xf32>
    %cst_110 = arith.constant dense<0.000000e+00> : vector<1x34xf32>
    %287 = tpu.matmul %285, %5, %cst_110 {dimension_numbers = #tpu.dot_dimension_numbers<[1], [0], [0], [1], [0, 0, 1, 1], [], []>, precision = #tpu.contract_precision<fp32>} : vector<1x2xf32>, vector<2x34xf32>, vector<1x34xf32> -> vector<1x34xf32>
    %288 = vector.broadcast %286 : vector<1x34xf32> to vector<128x34xf32>
    %289 = arith.subf %266, %288 : vector<128x34xf32>
    %290 = vector.broadcast %287 : vector<1x34xf32> to vector<128x34xf32>
    %291 = arith.mulf %289, %290 : vector<128x34xf32>
    %292 = vector.broadcast %267 : vector<128x1xf32> to vector<128x34xf32>
    %293 = arith.mulf %292, %291 : vector<128x34xf32>
    %294 = vector.extract_strided_slice %11 {offsets = [0, 33], sizes = [128, 1], strides = [1, 1]} : vector<128x34xf32> to vector<128x1xf32>
    %295 = vector.broadcast %294 : vector<128x1xf32> to vector<128x34xf32>
    %296 = arith.addf %293, %295 : vector<128x34xf32>
    %cst_111 = arith.constant 0.000000e+00 : f32
    %297 = vector.broadcast %cst_111 : f32 to vector<128x34xf32>
    %298 = arith.maximumf %296, %297 : vector<128x34xf32>
    %cst_112 = arith.constant 0.000000e+00 : f32
    %299 = vector.broadcast %cst_112 : f32 to vector<128x34xf32>
    %300 = arith.minimumf %296, %299 : vector<128x34xf32>
    %301 = vector.broadcast %17 : f32 to vector<128x34xf32>
    %302 = arith.mulf %301, %300 : vector<128x34xf32>
    %303 = arith.addf %298, %302 : vector<128x34xf32>
    %cst_113 = arith.constant dense<0.000000e+00> : vector<32x34xf32>
    %304 = tpu.matmul %12, %303, %cst_113 {dimension_numbers = #tpu.dot_dimension_numbers<[1], [0], [0], [1], [0, 0, 1, 1], [], []>} : vector<32x128xf32>, vector<128x34xf32>, vector<32x34xf32> -> vector<32x34xf32>
    %c0_114 = arith.constant 0 : index
    %c0_115 = arith.constant 0 : index
    %c0_116 = arith.constant 0 : index
    %305 = vector.load %arg14[%c0_114, %c0_115, %c0_116] : memref<1x32x34xf32, #tpu.memory_space<vmem>>, vector<1x32x34xf32>
    %306 = vector.shape_cast %305 : vector<1x32x34xf32> to vector<32x34xf32>
    %307 = vector.shape_cast %304 : vector<32x34xf32> to vector<1x32x34xf32>
    tpu.vector_store %arg14[%c0_114, %c0_115, %c0_116], %307 {strides = array<i32>} : memref<1x32x34xf32, #tpu.memory_space<vmem>>, vector<1x32x34xf32>,
    return
  }
  func.func @transform_0(%arg0: i32) -> (i32, i32, i32) {
    %c0_i32 = arith.constant 0 : i32
    %c0_i32_0 = arith.constant 0 : i32
    %c0_i32_1 = arith.constant 0 : i32
    return %arg0, %c0_i32, %c0_i32_0 : i32, i32, i32
  }
  func.func @transform_1(%arg0: i32) -> i32 {
    %c0_i32 = arith.constant 0 : i32
    %c0_i32_0 = arith.constant 0 : i32
    return %c0_i32 : i32
  }
  func.func @transform_2(%arg0: i32) -> (i32, i32) {
    %c0_i32 = arith.constant 0 : i32
    %c0_i32_0 = arith.constant 0 : i32
    %c0_i32_1 = arith.constant 0 : i32
    return %c0_i32, %c0_i32_0 : i32, i32
  }
  func.func @transform_3(%arg0: i32) -> (i32, i32) {
    %c0_i32 = arith.constant 0 : i32
    %c0_i32_0 = arith.constant 0 : i32
    %c0_i32_1 = arith.constant 0 : i32
    return %c0_i32, %c0_i32_0 : i32, i32
  }
  func.func @transform_4(%arg0: i32) -> (i32, i32) {
    %c0_i32 = arith.constant 0 : i32
    %c0_i32_0 = arith.constant 0 : i32
    %c0_i32_1 = arith.constant 0 : i32
    return %c0_i32, %c0_i32_0 : i32, i32
  }
  func.func @transform_5(%arg0: i32) -> (i32, i32) {
    %c0_i32 = arith.constant 0 : i32
    %c0_i32_0 = arith.constant 0 : i32
    %c0_i32_1 = arith.constant 0 : i32
    return %c0_i32, %c0_i32_0 : i32, i32
  }
  func.func @transform_6(%arg0: i32) -> (i32, i32) {
    %c0_i32 = arith.constant 0 : i32
    %c0_i32_0 = arith.constant 0 : i32
    %c0_i32_1 = arith.constant 0 : i32
    return %c0_i32, %c0_i32_0 : i32, i32
  }
  func.func @transform_7(%arg0: i32) -> (i32, i32) {
    %c0_i32 = arith.constant 0 : i32
    %c0_i32_0 = arith.constant 0 : i32
    %c0_i32_1 = arith.constant 0 : i32
    return %c0_i32, %c0_i32_0 : i32, i32
  }
  func.func @transform_8(%arg0: i32) -> (i32, i32) {
    %c0_i32 = arith.constant 0 : i32
    %c0_i32_0 = arith.constant 0 : i32
    %c0_i32_1 = arith.constant 0 : i32
    return %c0_i32, %c0_i32_0 : i32, i32
  }
  func.func @transform_9(%arg0: i32) -> (i32, i32) {
    %c0_i32 = arith.constant 0 : i32
    %c0_i32_0 = arith.constant 0 : i32
    %c0_i32_1 = arith.constant 0 : i32
    return %c0_i32, %c0_i32_0 : i32, i32
  }
  func.func @transform_10(%arg0: i32) -> (i32, i32) {
    %c0_i32 = arith.constant 0 : i32
    %c0_i32_0 = arith.constant 0 : i32
    %c0_i32_1 = arith.constant 0 : i32
    return %c0_i32, %c0_i32_0 : i32, i32
  }
  func.func @transform_11(%arg0: i32) -> (i32, i32) {
    %c0_i32 = arith.constant 0 : i32
    %c0_i32_0 = arith.constant 0 : i32
    %c0_i32_1 = arith.constant 0 : i32
    return %c0_i32, %c0_i32_0 : i32, i32
  }
  func.func @transform_12(%arg0: i32) -> (i32, i32) {
    %c0_i32 = arith.constant 0 : i32
    %c0_i32_0 = arith.constant 0 : i32
    %c0_i32_1 = arith.constant 0 : i32
    return %c0_i32, %c0_i32_0 : i32, i32
  }
  func.func @transform_13(%arg0: i32) -> (i32, i32, i32) {
    %c0_i32 = arith.constant 0 : i32
    %c0_i32_0 = arith.constant 0 : i32
    %c0_i32_1 = arith.constant 0 : i32
    return %arg0, %c0_i32, %c0_i32_0 : i32, i32, i32
  }
}

</mosaic_0001>

<llo_original>
// kernel: _tstnn_decoder_impl.1
$region0: #{_tstnn_decoder_impl.1}
  #allocation0 [shape = 'u32[]', space=smem, size = 0x4, offset = 0x4, fixed_abs, tag = 'smem constant byte address 0x4 - core index']
  #allocation1 [shape = 'u32[144,128]{1,0:T(1,128)}', space=vmem, size = 0x12000, scoped, tag = 'internal scratch']
  #allocation2 [shape = 'f32[32,168]{1,0:T(8,128)}', space=vmem, size = 0x8000, scoped, tag = 'scratch operand']
  #allocation3 [shape = 'f32[32,34]{1,0:T(8,128)}', space=vmem, size = 0x4000, scoped, tag = 'scratch operand']
  %s0 = inlined_call_operand.vmem [shape: f32[1,16,32], index: 0, kind: input, shape index: {}]
  %s1 = inlined_call_operand.vmem [shape: f32[5], index: 1, kind: input, shape index: {}]
  %s2 = inlined_call_operand.vmem [shape: f32[4,32], index: 2, kind: input, shape index: {}]
  %s3 = inlined_call_operand.vmem [shape: f32[2,32], index: 3, kind: input, shape index: {}]
  %s4 = inlined_call_operand.vmem [shape: f32[32,2], index: 4, kind: input, shape index: {}]
  %s5 = inlined_call_operand.vmem [shape: f32[2,34], index: 5, kind: input, shape index: {}]
  %s6 = inlined_call_operand.vmem [shape: f32[34,2], index: 6, kind: input, shape index: {}]
  %s7 = inlined_call_operand.vmem [shape: f32[32,34], index: 7, kind: input, shape index: {}]
  %s8 = inlined_call_operand.vmem [shape: f32[32,50], index: 8, kind: input, shape index: {}]
  %s9 = inlined_call_operand.vmem [shape: f32[32,33], index: 9, kind: input, shape index: {}]
  %s10 = inlined_call_operand.vmem [shape: f32[16,33], index: 10, kind: input, shape index: {}]
  %s11 = inlined_call_operand.vmem [shape: f32[128,34], index: 11, kind: input, shape index: {}]
  %s12 = inlined_call_operand.vmem [shape: f32[32,128], index: 12, kind: input, shape index: {}]
  %s13 = inlined_call_operand.vmem [shape: f32[1,32,34], index: 13, kind: output, shape index: {}]
  %s14 = sld [smem:[#allocation0]]
  $region66: #{_tstnn_decoder_impl.1} parent=0
    _
  %s16 = ssub.s32 1, %s14
  %s17 = scalar_select 0, %s16, %s14
  $region1: #{_tstnn_decoder_impl.1} parent=0
    #allocation4 [shape = 'u8[512]{0}', space=smem, size = 0x200, scoped, tag = 'input window, operand 1, single buffered']
    #allocation5 [shape = 's32[1]{0}', space=sflag, size = 0x4, scoped, tag = 'scoped memory for _tstnn_decoder_impl.1']
    %18 = vsyncpa [#allocation5], 0
    // Predicated region
    $region2: #{_tstnn_decoder_impl.1} parent=1 // pred_check
      _
    $region3: #{_tstnn_decoder_impl.1} parent=1 // pred_check_branch
      %20 = sbr.rel (0) target = $region5
    $region4: #{_tstnn_decoder_impl.1} parent=1 // pred_region
      _
    $region5: #{_tstnn_decoder_impl.1} parent=1 // pred_fallthru
      _
    // Predicated region
    $region6: #{_tstnn_decoder_impl.1} parent=1 // pred_check
      _
    $region7: #{_tstnn_decoder_impl.1} parent=1 // pred_check_branch
      %22 = sbr.rel (0) target = $region9
    $region8: #{_tstnn_decoder_impl.1} parent=1 // pred_region
      %s24 = ssub.s32 16, 16
      %25 = vsyncadd [#allocation5], %s24
      %s27 = sshll.u32 %s1, 4
      %s28 = int_to_ptr.vmem [resolvable:$true] %s27
      %30 = dma.vmem_to_smem %s28, 16, [#allocation4], [#allocation5]
    $region9: #{_tstnn_decoder_impl.1} parent=1 // pred_fallthru
      _
    // Predicated region
    $region10: #{_tstnn_decoder_impl.1} parent=1 // pred_check
      _
    $region11: #{_tstnn_decoder_impl.1} parent=1 // pred_check_branch
      %32 = sbr.rel (0) target = $region13
    $region12: #{_tstnn_decoder_impl.1} parent=1 // pred_region
      _
    $region13: #{_tstnn_decoder_impl.1} parent=1 // pred_fallthru
      _
    // Predicated region
    $region14: #{_tstnn_decoder_impl.1} parent=1 // pred_check
      _
    $region15: #{_tstnn_decoder_impl.1} parent=1 // pred_check_branch
      %34 = sbr.rel (0) target = $region17
    $region16: #{_tstnn_decoder_impl.1} parent=1 // pred_region
      _
    $region17: #{_tstnn_decoder_impl.1} parent=1 // pred_fallthru
      _
    // Predicated region
    $region18: #{_tstnn_decoder_impl.1} parent=1 // pred_check
      _
    $region19: #{_tstnn_decoder_impl.1} parent=1 // pred_check_branch
      %36 = sbr.rel (0) target = $region21
    $region20: #{_tstnn_decoder_impl.1} parent=1 // pred_region
      _
    $region21: #{_tstnn_decoder_impl.1} parent=1 // pred_fallthru
      _
    // Predicated region
    $region22: #{_tstnn_decoder_impl.1} parent=1 // pred_check
      _
    $region23: #{_tstnn_decoder_impl.1} parent=1 // pred_check_branch
      %38 = sbr.rel (0) target = $region25
    $region24: #{_tstnn_decoder_impl.1} parent=1 // pred_region
      _
    $region25: #{_tstnn_decoder_impl.1} parent=1 // pred_fallthru
      _
    // Predicated region
    $region26: #{_tstnn_decoder_impl.1} parent=1 // pred_check
      _
    $region27: #{_tstnn_decoder_impl.1} parent=1 // pred_check_branch
      %40 = sbr.rel (0) target = $region29
    $region28: #{_tstnn_decoder_impl.1} parent=1 // pred_region
      _
    $region29: #{_tstnn_decoder_impl.1} parent=1 // pred_fallthru
      _
    // Predicated region
    $region30: #{_tstnn_decoder_impl.1} parent=1 // pred_check
      _
    $region31: #{_tstnn_decoder_impl.1} parent=1 // pred_check_branch
      %42 = sbr.rel (0) target = $region33
    $region32: #{_tstnn_decoder_impl.1} parent=1 // pred_region
      _
    $region33: #{_tstnn_decoder_impl.1} parent=1 // pred_fallthru
      _
    // Predicated region
    $region34: #{_tstnn_decoder_impl.1} parent=1 // pred_check
      _
    $region35: #{_tstnn_decoder_impl.1} parent=1 // pred_check_branch
      %44 = sbr.rel (0) target = $region37
    $region36: #{_tstnn_decoder_impl.1} parent=1 // pred_region
      _
    $region37: #{_tstnn_decoder_impl.1} parent=1 // pred_fallthru
      _
    // Predicated region
    $region38: #{_tstnn_decoder_impl.1} parent=1 // pred_check
      _
    $region39: #{_tstnn_decoder_impl.1} parent=1 // pred_check_branch
      %46 = sbr.rel (0) target = $region41
    $region40: #{_tstnn_decoder_impl.1} parent=1 // pred_region
      _
    $region41: #{_tstnn_decoder_impl.1} parent=1 // pred_fallthru
      _
    // Predicated region
    $region42: #{_tstnn_decoder_impl.1} parent=1 // pred_check
      _
    $region43: #{_tstnn_decoder_impl.1} parent=1 // pred_check_branch
      %48 = sbr.rel (0) target = $region45
    $region44: #{_tstnn_decoder_impl.1} parent=1 // pred_region
      _
    $region45: #{_tstnn_decoder_impl.1} parent=1 // pred_fallthru
      _
    // Predicated region
    $region46: #{_tstnn_decoder_impl.1} parent=1 // pred_check
      _
    $region47: #{_tstnn_decoder_impl.1} parent=1 // pred_check_branch
      %50 = sbr.rel (0) target = $region49
    $region48: #{_tstnn_decoder_impl.1} parent=1 // pred_region
      _
    $region49: #{_tstnn_decoder_impl.1} parent=1 // pred_fallthru
      _
    // Predicated region
    $region50: #{_tstnn_decoder_impl.1} parent=1 // pred_check
      _
    $region51: #{_tstnn_decoder_impl.1} parent=1 // pred_check_branch
      %52 = sbr.rel (0) target = $region53
    $region52: #{_tstnn_decoder_impl.1} parent=1 // pred_region
      _
    $region53: #{_tstnn_decoder_impl.1} parent=1 // pred_fallthru
      _
    // Predicated region
    $region54: #{_tstnn_decoder_impl.1} parent=1 // pred_check
      _
    $region55: #{_tstnn_decoder_impl.1} parent=1 // pred_check_branch
      %54 = sbr.rel (0) target = $region57
    $region56: #{_tstnn_decoder_impl.1} parent=1 // pred_region
      %55 = dma.done [#allocation5], 16
    $region57: #{_tstnn_decoder_impl.1} parent=1 // pred_fallthru
      _
    %56 = sfence
    %v57 = vld [vmem:[%s0] sm:$0xff]
    %v58 = vld [vmem:[%s0 + $0x8] sm:$0xff]
    %v59 = vld [vmem:[%s2] sm:$0xf]
    %v60 = vld [vmem:[%s3] sm:$0x3]
    %v61 = vld [vmem:[%s4] sm:$0xff]
    %v62 = vld [vmem:[%s4 + $0x8] sm:$0xff]
    %v63 = vld [vmem:[%s4 + $0x10] sm:$0xff]
    %v64 = vld [vmem:[%s4 + $0x18] sm:$0xff]
    %v65 = vld [vmem:[%s5] sm:$0x3]
    %v66 = vld [vmem:[%s6] sm:$0xff]
    %v67 = vld [vmem:[%s6 + $0x8] sm:$0xff]
    %v68 = vld [vmem:[%s6 + $0x10] sm:$0xff]
    %v69 = vld [vmem:[%s6 + $0x18] sm:$0xff]
    %v70 = vld [vmem:[%s6 + $0x20] sm:$0x3]
    %v71 = vld [vmem:[%s7] sm:$0xff]
    %v72 = vld [vmem:[%s7 + $0x8] sm:$0xff]
    %v73 = vld [vmem:[%s7 + $0x10] sm:$0xff]
    %v74 = vld [vmem:[%s7 + $0x18] sm:$0xff]
    %v75 = vld [vmem:[%s8] sm:$0xff]
    %v76 = vld [vmem:[%s8 + $0x8] sm:$0xff]
    %v77 = vld [vmem:[%s8 + $0x10] sm:$0xff]
    %v78 = vld [vmem:[%s8 + $0x18] sm:$0xff]
    %v79 = vld [vmem:[%s9] sm:$0xff]
    %v80 = vld [vmem:[%s9 + $0x8] sm:$0xff]
    %v81 = vld [vmem:[%s9 + $0x10] sm:$0xff]
    %v82 = vld [vmem:[%s9 + $0x18] sm:$0xff]
    %v83 = vld [vmem:[%s10] sm:$0xff]
    %v84 = vld [vmem:[%s10 + $0x8] sm:$0xff]
    %v85 = vld [vmem:[%s11] sm:$0xff]
    %v86 = vld [vmem:[%s11 + $0x8] sm:$0xff]
    %v87 = vld [vmem:[%s11 + $0x10] sm:$0xff]
    %v88 = vld [vmem:[%s11 + $0x18] sm:$0xff]
    %v89 = vld [vmem:[%s11 + $0x20] sm:$0xff]
    %v90 = vld [vmem:[%s11 + $0x28] sm:$0xff]
    %v91 = vld [vmem:[%s11 + $0x30] sm:$0xff]
    %v92 = vld [vmem:[%s11 + $0x38] sm:$0xff]
    %v93 = vld [vmem:[%s11 + $0x40] sm:$0xff]
    %v94 = vld [vmem:[%s11 + $0x48] sm:$0xff]
    %v95 = vld [vmem:[%s11 + $0x50] sm:$0xff]
    %v96 = vld [vmem:[%s11 + $0x58] sm:$0xff]
    %v97 = vld [vmem:[%s11 + $0x60] sm:$0xff]
    %v98 = vld [vmem:[%s11 + $0x68] sm:$0xff]
    %v99 = vld [vmem:[%s11 + $0x70] sm:$0xff]
    %v100 = vld [vmem:[%s11 + $0x78] sm:$0xff]
    %v101 = vld [vmem:[%s12] sm:$0xff]
    %v102 = vld [vmem:[%s12 + $0x8] sm:$0xff]
    %v103 = vld [vmem:[%s12 + $0x10] sm:$0xff]
    %v104 = vld [vmem:[%s12 + $0x18] sm:$0xff]
    %s105 = sld [smem:[#allocation4]]
    %s106 = sld [smem:[#allocation4 + $0x1]]
    %s107 = sld [smem:[#allocation4 + $0x2]]
    %s108 = sld [smem:[#allocation4 + $0x3]]
    %s109 = sld [smem:[#allocation4 + $0x4]]
    %111 = vset.pattern.permute.xlu0 16
    %112 = vperm.xlu0 %111, %v75
    %v113 = vpop.permute.xlu0 %112
    %116 = vset.pattern.permute.xlu0 16
    %117 = vperm.xlu0 %116, %v76
    %v118 = vpop.permute.xlu0 %117
    %121 = vset.pattern.permute.xlu0 16
    %122 = vperm.xlu0 %121, %v77
    %v123 = vpop.permute.xlu0 %122
    %126 = vset.pattern.permute.xlu0 16
    %127 = vperm.xlu0 %126, %v78
    %v128 = vpop.permute.xlu0 %127
    %vm130 = vcmask 130048
    %v131 = vsel %vm130, %v75, 0
    %v133 = vsel %vm130, %v76, 0
    %v135 = vsel %vm130, %v77, 0
    %v137 = vsel %vm130, %v78, 0
    %139 = vmatprep.subr.mxu0 0.0
    %140 = vmatpush1.msra.mxu0 %v57
    %141 = vmatprep.subr.mxu0 0.0
    %142 = vmatpush1.msra.mxu0 %v58
    %143 = vmatprep.subr.mxu0 0.0
    %144 = vmatpush1.msra.mxu0 0.0
    %145 = vmatprep.subr.mxu0 0.0
    %146 = vmatpush1.msra.mxu0 0.0
    %147 = vmatprep.subr.mxu0 0.0
    %148 = vmatpush1.msra.mxu0 0.0
    %149 = vmatprep.subr.mxu0 0.0
    %150 = vmatpush1.msra.mxu0 0.0
    %151 = vmatprep.subr.mxu0 0.0
    %152 = vmatpush1.msra.mxu0 0.0
    %153 = vmatprep.subr.mxu0 0.0
    %154 = vmatpush1.msra.mxu0 0.0
    %155 = vmatprep.subr.mxu0 0.0
    %156 = vmatpush1.msra.mxu0 0.0
    %157 = vmatprep.subr.mxu0 0.0
    %158 = vmatpush1.msra.mxu0 0.0
    %159 = vmatprep.subr.mxu0 0.0
    %160 = vmatpush1.msra.mxu0 0.0
    %161 = vmatprep.subr.mxu0 0.0
    %162 = vmatpush1.msra.mxu0 0.0
    %163 = vmatprep.subr.mxu0 0.0
    %164 = vmatpush1.msra.mxu0 0.0
    %165 = vmatprep.subr.mxu0 0.0
    %166 = vmatpush1.msra.mxu0 0.0
    %167 = vmatprep.subr.mxu0 0.0
    %168 = vmatpush1.msra.mxu0 0.0
    %169 = vmatprep.subr.mxu0 0.0
    %170 = vmatpush1.msra.mxu0 0.0
    %171 = vmatprep.subr.mxu0 0.0
    %172 = vmatpush1.msra.mxu0 0.0
    %173 = vmatprep.subr.mxu0 0.0
    %174 = vmatpush1.msra.mxu0 0.0
    %175 = vmatprep.subr.mxu0 0.0
    %176 = vmatpush1.msra.mxu0 0.0
    %177 = vmatprep.subr.mxu0 0.0
    %178 = vmatpush1.msra.mxu0 0.0
    %179 = vmatprep.subr.mxu0 0.0
    %180 = vmatpush1.msra.mxu0 0.0
    %181 = vmatprep.subr.mxu0 0.0
    %182 = vmatpush1.msra.mxu0 0.0
    %183 = vmatprep.subr.mxu0 0.0
    %184 = vmatpush1.msra.mxu0 0.0
    %185 = vmatprep.subr.mxu0 0.0
    %186 = vmatpush1.msra.mxu0 0.0
    %187 = vmatprep.subr.mxu0 0.0
    %188 = vmatpush1.msra.mxu0 0.0
    %189 = vmatprep.subr.mxu0 0.0
    %190 = vmatpush1.msra.mxu0 0.0
    %191 = vmatprep.subr.mxu0 0.0
    %192 = vmatpush1.msra.mxu0 0.0
    %193 = vmatprep.subr.mxu0 0.0
    %194 = vmatpush1.msra.mxu0 0.0
    %195 = vmatprep.subr.mxu0 0.0
    %196 = vmatpush1.msra.mxu0 0.0
    %197 = vmatprep.subr.mxu0 0.0
    %198 = vmatpush1.msra.mxu0 0.0
    %199 = vmatprep.subr.mxu0 0.0
    %200 = vmatpush1.msra.mxu0 0.0
    %201 = vmatprep.subr.mxu0 0.0
    %202 = vmatpush1.msra.mxu0 0.0
    %203 = vmatprep.mubr.f32.mxu0 0.0
    %204 = vmatmul.mubr.f32.gmra.mrb[0].mxu0 %v131
    %v205 = vpop.f32.mrb[0].mxu0
    %v206 = vadd.f32 %v113, %v205
    %v207 = vpop.f32.mrb[0].mxu0
    %208 = vmatprep.mubr.f32.mxu0 0.0
    %209 = vmatmul.mubr.f32.gmra.mrb[0].mxu0 %v133
    %v210 = vpop.f32.mrb[0].mxu0
    %v211 = vadd.f32 %v118, %v210
    %v212 = vpop.f32.mrb[0].mxu0
    %213 = vmatprep.mubr.f32.mxu0 0.0
    %214 = vmatmul.mubr.f32.gmra.mrb[0].mxu0 %v135
    %v215 = vpop.f32.mrb[0].mxu0
    %v216 = vadd.f32 %v123, %v215
    %v217 = vpop.f32.mrb[0].mxu0
    %218 = vmatprep.mubr.f32.mxu0 0.0
    %219 = vmatmul.mubr.f32.gmra.mrb[0].mxu0 %v137
    %v220 = vpop.f32.mrb[0].mxu0
    %v221 = vadd.f32 %v128, %v220
    %v222 = vpop.f32.mrb[0].mxu0
    %223 = vdwg.mxu0
    %v224 = vmax.f32 %v206, 0.0
    %v225 = vmax.f32 %v211, 0.0
    %v226 = vmax.f32 %v216, 0.0
    %v227 = vmax.f32 %v221, 0.0
    %v228 = vmin.f32 %v206, 0.0
    %v229 = vmin.f32 %v211, 0.0
    %v230 = vmin.f32 %v216, 0.0
    %v231 = vmin.f32 %v221, 0.0
    %v232 = vstv %s105
    %v233 = vmul.f32 %v232, %v228
    %v234 = vmul.f32 %v232, %v229
    %v235 = vmul.f32 %v232, %v230
    %v236 = vmul.f32 %v232, %v231
    %v237 = vadd.f32 %v224, %v233
    %v238 = vadd.f32 %v225, %v234
    %v239 = vadd.f32 %v226, %v235
    %v240 = vadd.f32 %v227, %v236
    %vm241 = vcmask 261120
    %v242 = vsel %vm241, %v237, 0.0
    %v243 = vsel %vm241, %v238, 0.0
    %v244 = vadd.f32 %v242, %v243
    %v245 = vsel %vm241, %v239, 0.0
    %v246 = vadd.f32 %v244, %v245
    %v247 = vsel %vm241, %v240, 0.0
    %v248 = vadd.f32 %v246, %v247
    %v249 = vrot.slane %v248, 4
    %v250 = vadd.f32 %v248, %v249
    %v251 = vrot.slane %v250, 2
    %v252 = vadd.f32 %v250, %v251
    %v253 = vrot.slane %v252, 1
    %v254 = vadd.f32 %v252, %v253
    %v255 = vmul.f32 %v237, %v237
    %v256 = vmul.f32 %v238, %v238
    %v257 = vmul.f32 %v239, %v239
    %v258 = vmul.f32 %v240, %v240
    %v259 = vsel %vm241, %v255, 0.0
    %v260 = vsel %vm241, %v256, 0.0
    %v261 = vadd.f32 %v259, %v260
    %v262 = vsel %vm241, %v257, 0.0
    %v263 = vadd.f32 %v261, %v262
    %v264 = vsel %vm241, %v258, 0.0
    %v265 = vadd.f32 %v263, %v264
    %v266 = vrot.slane %v265, 4
    %v267 = vadd.f32 %v265, %v266
    %v268 = vrot.slane %v267, 2
    %v269 = vadd.f32 %v267, %v268
    %v270 = vrot.slane %v269, 1
    %v271 = vadd.f32 %v269, %v270
    %v273 = vsel %vm241, %v254, 0
    %275 = vmatprep.subr.mxu0 0.0
    %v276 = vand.u32 %v61, 4294901760
    %277 = vmatpush1.msra.mxu0 %v276
    %278 = vmatprep.subr.mxu0 0.0
    %v279 = vand.u32 %v62, 4294901760
    %280 = vmatpush1.msra.mxu0 %v279
    %281 = vmatprep.subr.mxu0 0.0
    %v282 = vand.u32 %v63, 4294901760
    %283 = vmatpush1.msra.mxu0 %v282
    %284 = vmatprep.subr.mxu0 0.0
    %v285 = vand.u32 %v64, 4294901760
    %286 = vmatpush1.msra.mxu0 %v285
    %287 = vmatprep.subr.mxu0 0.0
    %288 = vmatpush1.msra.mxu0 0.0
    %289 = vmatprep.subr.mxu0 0.0
    %290 = vmatpush1.msra.mxu0 0.0
    %291 = vmatprep.subr.mxu0 0.0
    %292 = vmatpush1.msra.mxu0 0.0
    %293 = vmatprep.subr.mxu0 0.0
    %294 = vmatpush1.msra.mxu0 0.0
    %295 = vmatprep.subr.mxu0 0.0
    %296 = vmatpush1.msra.mxu0 0.0
    %297 = vmatprep.subr.mxu0 0.0
    %298 = vmatpush1.msra.mxu0 0.0
    %299 = vmatprep.subr.mxu0 0.0
    %300 = vmatpush1.msra.mxu0 0.0
    %301 = vmatprep.subr.mxu0 0.0
    %302 = vmatpush1.msra.mxu0 0.0
    %303 = vmatprep.subr.mxu0 0.0
    %304 = vmatpush1.msra.mxu0 0.0
    %305 = vmatprep.subr.mxu0 0.0
    %306 = vmatpush1.msra.mxu0 0.0
    %307 = vmatprep.subr.mxu0 0.0
    %308 = vmatpush1.msra.mxu0 0.0
    %309 = vmatprep.subr.mxu0 0.0
    %310 = vmatpush1.msra.mxu0 0.0
    %311 = vmatprep.subr.mxu0 0.0
    %312 = vmatpush1.msra.mxu0 0.0
    %313 = vmatprep.subr.mxu0 0.0
    %314 = vmatpush1.msra.mxu0 0.0
    %315 = vmatprep.subr.mxu0 0.0
    %316 = vmatpush1.msra.mxu0 0.0
    %317 = vmatprep.subr.mxu0 0.0
    %318 = vmatpush1.msra.mxu0 0.0
    %319 = vmatprep.subr.mxu0 0.0
    %320 = vmatpush1.msra.mxu0 0.0
    %321 = vmatprep.subr.mxu0 0.0
    %322 = vmatpush1.msra.mxu0 0.0
    %323 = vmatprep.subr.mxu0 0.0
    %324 = vmatpush1.msra.mxu0 0.0
    %325 = vmatprep.subr.mxu0 0.0
    %326 = vmatpush1.msra.mxu0 0.0
    %327 = vmatprep.subr.mxu0 0.0
    %328 = vmatpush1.msra.mxu0 0.0
    %329 = vmatprep.subr.mxu0 0.0
    %330 = vmatpush1.msra.mxu0 0.0
    %331 = vmatprep.subr.mxu0 0.0
    %332 = vmatpush1.msra.mxu0 0.0
    %333 = vmatprep.subr.mxu0 0.0
    %334 = vmatpush1.msra.mxu0 0.0
    %335 = vmatprep.subr.mxu0 0.0
    %336 = vmatpush1.msra.mxu0 0.0
    %337 = vmatprep.subr.mxu0 0.0
    %338 = vmatpush1.msra.mxu0 0.0
    %339 = vmatprep.subr.mxu0 0.0
    %340 = vmatpush1.msra.mxu0 0.0
    %341 = vmatprep.subr.mxu0 0.0
    %342 = vmatpush1.msra.mxu0 0.0
    %343 = vmatprep.mubr.f32.mxu0 0.0
    %v344 = vand.u32 %v273, 4294901760
    %v345 = vsub.f32 %v273, %v344
    %v346 = vand.u32 %v345, 4294901760
    %v347 = vsub.f32 %v345, %v346
    %v348 = vand.u32 %v347, 4294901760
    %349 = vmatmul.mubr.f32.gmra.mrb[0].mxu0 %v348
    %v350 = vpop.f32.mrb[0].mxu0
    %v351 = vadd.f32 0.0, %v350
    %v352 = vpop.f32.mrb[0].mxu0
    %353 = vdwg.mxu0
    %354 = vmatprep.subr.mxu0 0.0
    %v355 = vand.u32 %v61, 4294901760
    %v356 = vsub.f32 %v61, %v355
    %v357 = vand.u32 %v356, 4294901760
    %v358 = vsub.f32 %v356, %v357
    %v359 = vand.u32 %v358, 4294901760
    %360 = vmatpush1.msra.mxu0 %v359
    %361 = vmatprep.subr.mxu0 0.0
    %v362 = vand.u32 %v62, 4294901760
    %v363 = vsub.f32 %v62, %v362
    %v364 = vand.u32 %v363, 4294901760
    %v365 = vsub.f32 %v363, %v364
    %v366 = vand.u32 %v365, 4294901760
    %367 = vmatpush1.msra.mxu0 %v366
    %368 = vmatprep.subr.mxu0 0.0
    %v369 = vand.u32 %v63, 4294901760
    %v370 = vsub.f32 %v63, %v369
    %v371 = vand.u32 %v370, 4294901760
    %v372 = vsub.f32 %v370, %v371
    %v373 = vand.u32 %v372, 4294901760
    %374 = vmatpush1.msra.mxu0 %v373
    %375 = vmatprep.subr.mxu0 0.0
    %v376 = vand.u32 %v64, 4294901760
    %v377 = vsub.f32 %v64, %v376
    %v378 = vand.u32 %v377, 4294901760
    %v379 = vsub.f32 %v377, %v378
    %v380 = vand.u32 %v379, 4294901760
    %381 = vmatpush1.msra.mxu0 %v380
    %382 = vmatprep.subr.mxu0 0.0
    %383 = vmatpush1.msra.mxu0 0.0
    %384 = vmatprep.subr.mxu0 0.0
    %385 = vmatpush1.msra.mxu0 0.0
    %386 = vmatprep.subr.mxu0 0.0
    %387 = vmatpush1.msra.mxu0 0.0
    %388 = vmatprep.subr.mxu0 0.0
    %389 = vmatpush1.msra.mxu0 0.0
    %390 = vmatprep.subr.mxu0 0.0
    %391 = vmatpush1.msra.mxu0 0.0
    %392 = vmatprep.subr.mxu0 0.0
    %393 = vmatpush1.msra.mxu0 0.0
    %394 = vmatprep.subr.mxu0 0.0
    %395 = vmatpush1.msra.mxu0 0.0
    %396 = vmatprep.subr.mxu0 0.0
    %397 = vmatpush1.msra.mxu0 0.0
    %398 = vmatprep.subr.mxu0 0.0
    %399 = vmatpush1.msra.mxu0 0.0
    %400 = vmatprep.subr.mxu0 0.0
    %401 = vmatpush1.msra.mxu0 0.0
    %402 = vmatprep.subr.mxu0 0.0
    %403 = vmatpush1.msra.mxu0 0.0
    %404 = vmatprep.subr.mxu0 0.0
    %405 = vmatpush1.msra.mxu0 0.0
    %406 = vmatprep.subr.mxu0 0.0
    %407 = vmatpush1.msra.mxu0 0.0
    %408 = vmatprep.subr.mxu0 0.0
    %409 = vmatpush1.msra.mxu0 0.0
    %410 = vmatprep.subr.mxu0 0.0
    %411 = vmatpush1.msra.mxu0 0.0
    %412 = vmatprep.subr.mxu0 0.0
    %413 = vmatpush1.msra.mxu0 0.0
    %414 = vmatprep.subr.mxu0 0.0
    %415 = vmatpush1.msra.mxu0 0.0
    %416 = vmatprep.subr.mxu0 0.0
    %417 = vmatpush1.msra.mxu0 0.0
    %418 = vmatprep.subr.mxu0 0.0
    %419 = vmatpush1.msra.mxu0 0.0
    %420 = vmatprep.subr.mxu0 0.0
    %421 = vmatpush1.msra.mxu0 0.0
    %422 = vmatprep.subr.mxu0 0.0
    %423 = vmatpush1.msra.mxu0 0.0
    %424 = vmatprep.subr.mxu0 0.0
    %425 = vmatpush1.msra.mxu0 0.0
    %426 = vmatprep.subr.mxu0 0.0
    %427 = vmatpush1.msra.mxu0 0.0
    %428 = vmatprep.subr.mxu0 0.0
    %429 = vmatpush1.msra.mxu0 0.0
    %430 = vmatprep.subr.mxu0 0.0
    %431 = vmatpush1.msra.mxu0 0.0
    %432 = vmatprep.subr.mxu0 0.0
    %433 = vmatpush1.msra.mxu0 0.0
    %434 = vmatprep.subr.mxu0 0.0
    %435 = vmatpush1.msra.mxu0 0.0
    %436 = vmatprep.subr.mxu0 0.0
    %437 = vmatpush1.msra.mxu0 0.0
    %438 = vmatprep.mubr.f32.mxu0 0.0
    %v439 = vand.u32 %v273, 4294901760
    %440 = vmatmul.mubr.f32.gmra.mrb[0].mxu0 %v439
    %v441 = vpop.f32.mrb[0].mxu0
    %v442 = vadd.f32 %v351, %v441
    %v443 = vpop.f32.mrb[0].mxu0
    %444 = vdwg.mxu0
    %445 = vmatprep.subr.mxu0 0.0
    %v446 = vand.u32 %v61, 4294901760
    %v447 = vsub.f32 %v61, %v446
    %448 = vmatpush1.msra.mxu0 %v447
    %449 = vmatprep.subr.mxu0 0.0
    %v450 = vand.u32 %v62, 4294901760
    %v451 = vsub.f32 %v62, %v450
    %452 = vmatpush1.msra.mxu0 %v451
    %453 = vmatprep.subr.mxu0 0.0
    %v454 = vand.u32 %v63, 4294901760
    %v455 = vsub.f32 %v63, %v454
    %456 = vmatpush1.msra.mxu0 %v455
    %457 = vmatprep.subr.mxu0 0.0
    %v458 = vand.u32 %v64, 4294901760
    %v459 = vsub.f32 %v64, %v458
    %460 = vmatpush1.msra.mxu0 %v459
    %461 = vmatprep.subr.mxu0 0.0
    %462 = vmatpush1.msra.mxu0 0.0
    %463 = vmatprep.subr.mxu0 0.0
    %464 = vmatpush1.msra.mxu0 0.0
    %465 = vmatprep.subr.mxu0 0.0
    %466 = vmatpush1.msra.mxu0 0.0
    %467 = vmatprep.subr.mxu0 0.0
    %468 = vmatpush1.msra.mxu0 0.0
    %469 = vmatprep.subr.mxu0 0.0
    %470 = vmatpush1.msra.mxu0 0.0
    %471 = vmatprep.subr.mxu0 0.0
    %472 = vmatpush1.msra.mxu0 0.0
    %473 = vmatprep.subr.mxu0 0.0
    %474 = vmatpush1.msra.mxu0 0.0
    %475 = vmatprep.subr.mxu0 0.0
    %476 = vmatpush1.msra.mxu0 0.0
    %477 = vmatprep.subr.mxu0 0.0
    %478 = vmatpush1.msra.mxu0 0.0
    %479 = vmatprep.subr.mxu0 0.0
    %480 = vmatpush1.msra.mxu0 0.0
    %481 = vmatprep.subr.mxu0 0.0
    %482 = vmatpush1.msra.mxu0 0.0
    %483 = vmatprep.subr.mxu0 0.0
    %484 = vmatpush1.msra.mxu0 0.0
    %485 = vmatprep.subr.mxu0 0.0
    %486 = vmatpush1.msra.mxu0 0.0
    %487 = vmatprep.subr.mxu0 0.0
    %488 = vmatpush1.msra.mxu0 0.0
    %489 = vmatprep.subr.mxu0 0.0
    %490 = vmatpush1.msra.mxu0 0.0
    %491 = vmatprep.subr.mxu0 0.0
    %492 = vmatpush1.msra.mxu0 0.0
    %493 = vmatprep.subr.mxu0 0.0
    %494 = vmatpush1.msra.mxu0 0.0
    %495 = vmatprep.subr.mxu0 0.0
    %496 = vmatpush1.msra.mxu0 0.0
    %497 = vmatprep.subr.mxu0 0.0
    %498 = vmatpush1.msra.mxu0 0.0
    %499 = vmatprep.subr.mxu0 0.0
    %500 = vmatpush1.msra.mxu0 0.0
    %501 = vmatprep.subr.mxu0 0.0
    %502 = vmatpush1.msra.mxu0 0.0
    %503 = vmatprep.subr.mxu0 0.0
    %504 = vmatpush1.msra.mxu0 0.0
    %505 = vmatprep.subr.mxu0 0.0
    %506 = vmatpush1.msra.mxu0 0.0
    %507 = vmatprep.subr.mxu0 0.0
    %508 = vmatpush1.msra.mxu0 0.0
    %509 = vmatprep.subr.mxu0 0.0
    %510 = vmatpush1.msra.mxu0 0.0
    %511 = vmatprep.subr.mxu0 0.0
    %512 = vmatpush1.msra.mxu0 0.0
    %513 = vmatprep.subr.mxu0 0.0
    %514 = vmatpush1.msra.mxu0 0.0
    %515 = vmatprep.subr.mxu0 0.0
    %516 = vmatpush1.msra.mxu0 0.0
    %517 = vmatprep.mubr.f32.mxu0 0.0
    %v518 = vand.u32 %v273, 4294901760
    %v519 = vsub.f32 %v273, %v518
    %520 = vmatmul.mubr.f32.gmra.mrb[0].mxu0 %v519
    %v521 = vpop.f32.mrb[0].mxu0
    %v522 = vadd.f32 %v442, %v521
    %v523 = vpop.f32.mrb[0].mxu0
    %524 = vdwg.mxu0
    %525 = vmatprep.subr.mxu0 0.0
    %v526 = vand.u32 %v61, 4294901760
    %527 = vmatpush1.msra.mxu0 %v526
    %528 = vmatprep.subr.mxu0 0.0
    %v529 = vand.u32 %v62, 4294901760
    %530 = vmatpush1.msra.mxu0 %v529
    %531 = vmatprep.subr.mxu0 0.0
    %v532 = vand.u32 %v63, 4294901760
    %533 = vmatpush1.msra.mxu0 %v532
    %534 = vmatprep.subr.mxu0 0.0
    %v535 = vand.u32 %v64, 4294901760
    %536 = vmatpush1.msra.mxu0 %v535
    %537 = vmatprep.subr.mxu0 0.0
    %538 = vmatpush1.msra.mxu0 0.0
    %539 = vmatprep.subr.mxu0 0.0
    %540 = vmatpush1.msra.mxu0 0.0
    %541 = vmatprep.subr.mxu0 0.0
    %542 = vmatpush1.msra.mxu0 0.0
    %543 = vmatprep.subr.mxu0 0.0
    %544 = vmatpush1.msra.mxu0 0.0
    %545 = vmatprep.subr.mxu0 0.0
    %546 = vmatpush1.msra.mxu0 0.0
    %547 = vmatprep.subr.mxu0 0.0
    %548 = vmatpush1.msra.mxu0 0.0
    %549 = vmatprep.subr.mxu0 0.0
    %550 = vmatpush1.msra.mxu0 0.0
    %551 = vmatprep.subr.mxu0 0.0
    %552 = vmatpush1.msra.mxu0 0.0
    %553 = vmatprep.subr.mxu0 0.0
    %554 = vmatpush1.msra.mxu0 0.0
    %555 = vmatprep.subr.mxu0 0.0
    %556 = vmatpush1.msra.mxu0 0.0
    %557 = vmatprep.subr.mxu0 0.0
    %558 = vmatpush1.msra.mxu0 0.0
    %559 = vmatprep.subr.mxu0 0.0
    %560 = vmatpush1.msra.mxu0 0.0
    %561 = vmatprep.subr.mxu0 0.0
    %562 = vmatpush1.msra.mxu0 0.0
    %563 = vmatprep.subr.mxu0 0.0
    %564 = vmatpush1.msra.mxu0 0.0
    %565 = vmatprep.subr.mxu0 0.0
    %566 = vmatpush1.msra.mxu0 0.0
    %567 = vmatprep.subr.mxu0 0.0
    %568 = vmatpush1.msra.mxu0 0.0
    %569 = vmatprep.subr.mxu0 0.0
    %570 = vmatpush1.msra.mxu0 0.0
    %571 = vmatprep.subr.mxu0 0.0
    %572 = vmatpush1.msra.mxu0 0.0
    %573 = vmatprep.subr.mxu0 0.0
    %574 = vmatpush1.msra.mxu0 0.0
    %575 = vmatprep.subr.mxu0 0.0
    %576 = vmatpush1.msra.mxu0 0.0
    %577 = vmatprep.subr.mxu0 0.0
    %578 = vmatpush1.msra.mxu0 0.0
    %579 = vmatprep.subr.mxu0 0.0
    %580 = vmatpush1.msra.mxu0 0.0
    %581 = vmatprep.subr.mxu0 0.0
    %582 = vmatpush1.msra.mxu0 0.0
    %583 = vmatprep.subr.mxu0 0.0
    %584 = vmatpush1.msra.mxu0 0.0
    %585 = vmatprep.subr.mxu0 0.0
    %586 = vmatpush1.msra.mxu0 0.0
    %587 = vmatprep.subr.mxu0 0.0
    %588 = vmatpush1.msra.mxu0 0.0
    %589 = vmatprep.subr.mxu0 0.0
    %590 = vmatpush1.msra.mxu0 0.0
    %591 = vmatprep.subr.mxu0 0.0
    %592 = vmatpush1.msra.mxu0 0.0
    %593 = vmatprep.mubr.f32.mxu0 0.0
    %v594 = vand.u32 %v273, 4294901760
    %v595 = vsub.f32 %v273, %v594
    %v596 = vand.u32 %v595, 4294901760
    %597 = vmatmul.mubr.f32.gmra.mrb[0].mxu0 %v596
    %v598 = vpop.f32.mrb[0].mxu0
    %v599 = vadd.f32 %v522, %v598
    %v600 = vpop.f32.mrb[0].mxu0
    %601 = vdwg.mxu0
    %602 = vmatprep.subr.mxu0 0.0
    %v603 = vand.u32 %v61, 4294901760
    %v604 = vsub.f32 %v61, %v603
    %v605 = vand.u32 %v604, 4294901760
    %606 = vmatpush1.msra.mxu0 %v605
    %607 = vmatprep.subr.mxu0 0.0
    %v608 = vand.u32 %v62, 4294901760
    %v609 = vsub.f32 %v62, %v608
    %v610 = vand.u32 %v609, 4294901760
    %611 = vmatpush1.msra.mxu0 %v610
    %612 = vmatprep.subr.mxu0 0.0
    %v613 = vand.u32 %v63, 4294901760
    %v614 = vsub.f32 %v63, %v613
    %v615 = vand.u32 %v614, 4294901760
    %616 = vmatpush1.msra.mxu0 %v615
    %617 = vmatprep.subr.mxu0 0.0
    %v618 = vand.u32 %v64, 4294901760
    %v619 = vsub.f32 %v64, %v618
    %v620 = vand.u32 %v619, 4294901760
    %621 = vmatpush1.msra.mxu0 %v620
    %622 = vmatprep.subr.mxu0 0.0
    %623 = vmatpush1.msra.mxu0 0.0
    %624 = vmatprep.subr.mxu0 0.0
    %625 = vmatpush1.msra.mxu0 0.0
    %626 = vmatprep.subr.mxu0 0.0
    %627 = vmatpush1.msra.mxu0 0.0
    %628 = vmatprep.subr.mxu0 0.0
    %629 = vmatpush1.msra.mxu0 0.0
    %630 = vmatprep.subr.mxu0 0.0
    %631 = vmatpush1.msra.mxu0 0.0
    %632 = vmatprep.subr.mxu0 0.0
    %633 = vmatpush1.msra.mxu0 0.0
    %634 = vmatprep.subr.mxu0 0.0
    %635 = vmatpush1.msra.mxu0 0.0
    %636 = vmatprep.subr.mxu0 0.0
    %637 = vmatpush1.msra.mxu0 0.0
    %638 = vmatprep.subr.mxu0 0.0
    %639 = vmatpush1.msra.mxu0 0.0
    %640 = vmatprep.subr.mxu0 0.0
    %641 = vmatpush1.msra.mxu0 0.0
    %642 = vmatprep.subr.mxu0 0.0
    %643 = vmatpush1.msra.mxu0 0.0
    %644 = vmatprep.subr.mxu0 0.0
    %645 = vmatpush1.msra.mxu0 0.0
    %646 = vmatprep.subr.mxu0 0.0
    %647 = vmatpush1.msra.mxu0 0.0
    %648 = vmatprep.subr.mxu0 0.0
    %649 = vmatpush1.msra.mxu0 0.0
    %650 = vmatprep.subr.mxu0 0.0
    %651 = vmatpush1.msra.mxu0 0.0
    %652 = vmatprep.subr.mxu0 0.0
    %653 = vmatpush1.msra.mxu0 0.0
    %654 = vmatprep.subr.mxu0 0.0
    %655 = vmatpush1.msra.mxu0 0.0
    %656 = vmatprep.subr.mxu0 0.0
    %657 = vmatpush1.msra.mxu0 0.0
    %658 = vmatprep.subr.mxu0 0.0
    %659 = vmatpush1.msra.mxu0 0.0
    %660 = vmatprep.subr.mxu0 0.0
    %661 = vmatpush1.msra.mxu0 0.0
    %662 = vmatprep.subr.mxu0 0.0
    %663 = vmatpush1.msra.mxu0 0.0
    %664 = vmatprep.subr.mxu0 0.0
    %665 = vmatpush1.msra.mxu0 0.0
    %666 = vmatprep.subr.mxu0 0.0
    %667 = vmatpush1.msra.mxu0 0.0
    %668 = vmatprep.subr.mxu0 0.0
    %669 = vmatpush1.msra.mxu0 0.0
    %670 = vmatprep.subr.mxu0 0.0
    %671 = vmatpush1.msra.mxu0 0.0
    %672 = vmatprep.subr.mxu0 0.0
    %673 = vmatpush1.msra.mxu0 0.0
    %674 = vmatprep.subr.mxu0 0.0
    %675 = vmatpush1.msra.mxu0 0.0
    %676 = vmatprep.subr.mxu0 0.0
    %677 = vmatpush1.msra.mxu0 0.0
    %678 = vmatprep.mubr.f32.mxu0 0.0
    %v679 = vand.u32 %v273, 4294901760
    %680 = vmatmul.mubr.f32.gmra.mrb[0].mxu0 %v679
    %v681 = vpop.f32.mrb[0].mxu0
    %v682 = vadd.f32 %v599, %v681
    %v683 = vpop.f32.mrb[0].mxu0
    %684 = vdwg.mxu0
    %685 = vmatprep.subr.mxu0 0.0
    %v686 = vand.u32 %v61, 4294901760
    %687 = vmatpush1.msra.mxu0 %v686
    %688 = vmatprep.subr.mxu0 0.0
    %v689 = vand.u32 %v62, 4294901760
    %690 = vmatpush1.msra.mxu0 %v689
    %691 = vmatprep.subr.mxu0 0.0
    %v692 = vand.u32 %v63, 4294901760
    %693 = vmatpush1.msra.mxu0 %v692
    %694 = vmatprep.subr.mxu0 0.0
    %v695 = vand.u32 %v64, 4294901760
    %696 = vmatpush1.msra.mxu0 %v695
    %697 = vmatprep.subr.mxu0 0.0
    %698 = vmatpush1.msra.mxu0 0.0
    %699 = vmatprep.subr.mxu0 0.0
    %700 = vmatpush1.msra.mxu0 0.0
    %701 = vmatprep.subr.mxu0 0.0
    %702 = vmatpush1.msra.mxu0 0.0
    %703 = vmatprep.subr.mxu0 0.0
    %704 = vmatpush1.msra.mxu0 0.0
    %705 = vmatprep.subr.mxu0 0.0
    %706 = vmatpush1.msra.mxu0 0.0
    %707 = vmatprep.subr.mxu0 0.0
    %708 = vmatpush1.msra.mxu0 0.0
    %709 = vmatprep.subr.mxu0 0.0
    %710 = vmatpush1.msra.mxu0 0.0
    %711 = vmatprep.subr.mxu0 0.0
    %712 = vmatpush1.msra.mxu0 0.0
    %713 = vmatprep.subr.mxu0 0.0
    %714 = vmatpush1.msra.mxu0 0.0
    %715 = vmatprep.subr.mxu0 0.0
    %716 = vmatpush1.msra.mxu0 0.0
    %717 = vmatprep.subr.mxu0 0.0
    %718 = vmatpush1.msra.mxu0 0.0
    %719 = vmatprep.subr.mxu0 0.0
    %720 = vmatpush1.msra.mxu0 0.0
    %721 = vmatprep.subr.mxu0 0.0
    %722 = vmatpush1.msra.mxu0 0.0
    %723 = vmatprep.subr.mxu0 0.0
    %724 = vmatpush1.msra.mxu0 0.0
    %725 = vmatprep.subr.mxu0 0.0
    %726 = vmatpush1.msra.mxu0 0.0
    %727 = vmatprep.subr.mxu0 0.0
    %728 = vmatpush1.msra.mxu0 0.0
    %729 = vmatprep.subr.mxu0 0.0
    %730 = vmatpush1.msra.mxu0 0.0
    %731 = vmatprep.subr.mxu0 0.0
    %732 = vmatpush1.msra.mxu0 0.0
    %733 = vmatprep.subr.mxu0 0.0
    %734 = vmatpush1.msra.mxu0 0.0
    %735 = vmatprep.subr.mxu0 0.0
    %736 = vmatpush1.msra.mxu0 0.0
    %737 = vmatprep.subr.mxu0 0.0
    %738 = vmatpush1.msra.mxu0 0.0
    %739 = vmatprep.subr.mxu0 0.0
    %740 = vmatpush1.msra.mxu0 0.0
    %741 = vmatprep.subr.mxu0 0.0
    %742 = vmatpush1.msra.mxu0 0.0
    %743 = vmatprep.subr.mxu0 0.0
    %744 = vmatpush1.msra.mxu0 0.0
    %745 = vmatprep.subr.mxu0 0.0
    %746 = vmatpush1.msra.mxu0 0.0
    %747 = vmatprep.subr.mxu0 0.0
    %748 = vmatpush1.msra.mxu0 0.0
    %749 = vmatprep.subr.mxu0 0.0
    %750 = vmatpush1.msra.mxu0 0.0
    %751 = vmatprep.subr.mxu0 0.0
    %752 = vmatpush1.msra.mxu0 0.0
    %753 = vmatprep.mubr.f32.mxu0 0.0
    %v754 = vand.u32 %v273, 4294901760
    %755 = vmatmul.mubr.f32.gmra.mrb[0].mxu0 %v754
    %v756 = vpop.f32.mrb[0].mxu0
    %v757 = vadd.f32 %v682, %v756
    %v758 = vpop.f32.mrb[0].mxu0
    %759 = vdwg.mxu0
    %v760 = vmul.f32 %v757, 0.001953125
    %v762 = vsel %vm241, %v271, 0
    %764 = vmatprep.subr.mxu0 0.0
    %v765 = vand.u32 %v61, 4294901760
    %766 = vmatpush1.msra.mxu0 %v765
    %767 = vmatprep.subr.mxu0 0.0
    %v768 = vand.u32 %v62, 4294901760
    %769 = vmatpush1.msra.mxu0 %v768
    %770 = vmatprep.subr.mxu0 0.0
    %v771 = vand.u32 %v63, 4294901760
    %772 = vmatpush1.msra.mxu0 %v771
    %773 = vmatprep.subr.mxu0 0.0
    %v774 = vand.u32 %v64, 4294901760
    %775 = vmatpush1.msra.mxu0 %v774
    %776 = vmatprep.subr.mxu0 0.0
    %777 = vmatpush1.msra.mxu0 0.0
    %778 = vmatprep.subr.mxu0 0.0
    %779 = vmatpush1.msra.mxu0 0.0
    %780 = vmatprep.subr.mxu0 0.0
    %781 = vmatpush1.msra.mxu0 0.0
    %782 = vmatprep.subr.mxu0 0.0
    %783 = vmatpush1.msra.mxu0 0.0
    %784 = vmatprep.subr.mxu0 0.0
    %785 = vmatpush1.msra.mxu0 0.0
    %786 = vmatprep.subr.mxu0 0.0
    %787 = vmatpush1.msra.mxu0 0.0
    %788 = vmatprep.subr.mxu0 0.0
    %789 = vmatpush1.msra.mxu0 0.0
    %790 = vmatprep.subr.mxu0 0.0
    %791 = vmatpush1.msra.mxu0 0.0
    %792 = vmatprep.subr.mxu0 0.0
    %793 = vmatpush1.msra.mxu0 0.0
    %794 = vmatprep.subr.mxu0 0.0
    %795 = vmatpush1.msra.mxu0 0.0
    %796 = vmatprep.subr.mxu0 0.0
    %797 = vmatpush1.msra.mxu0 0.0
    %798 = vmatprep.subr.mxu0 0.0
    %799 = vmatpush1.msra.mxu0 0.0
    %800 = vmatprep.subr.mxu0 0.0
    %801 = vmatpush1.msra.mxu0 0.0
    %802 = vmatprep.subr.mxu0 0.0
    %803 = vmatpush1.msra.mxu0 0.0
    %804 = vmatprep.subr.mxu0 0.0
    %805 = vmatpush1.msra.mxu0 0.0
    %806 = vmatprep.subr.mxu0 0.0
    %807 = vmatpush1.msra.mxu0 0.0
    %808 = vmatprep.subr.mxu0 0.0
    %809 = vmatpush1.msra.mxu0 0.0
    %810 = vmatprep.subr.mxu0 0.0
    %811 = vmatpush1.msra.mxu0 0.0
    %812 = vmatprep.subr.mxu0 0.0
    %813 = vmatpush1.msra.mxu0 0.0
    %814 = vmatprep.subr.mxu0 0.0
    %815 = vmatpush1.msra.mxu0 0.0
    %816 = vmatprep.subr.mxu0 0.0
    %817 = vmatpush1.msra.mxu0 0.0
    %818 = vmatprep.subr.mxu0 0.0
    %819 = vmatpush1.msra.mxu0 0.0
    %820 = vmatprep.subr.mxu0 0.0
    %821 = vmatpush1.msra.mxu0 0.0
    %822 = vmatprep.subr.mxu0 0.0
    %823 = vmatpush1.msra.mxu0 0.0
    %824 = vmatprep.subr.mxu0 0.0
    %825 = vmatpush1.msra.mxu0 0.0
    %826 = vmatprep.subr.mxu0 0.0
    %827 = vmatpush1.msra.mxu0 0.0
    %828 = vmatprep.subr.mxu0 0.0
    %829 = vmatpush1.msra.mxu0 0.0
    %830 = vmatprep.subr.mxu0 0.0
    %831 = vmatpush1.msra.mxu0 0.0
    %832 = vmatprep.mubr.f32.mxu0 0.0
    %v833 = vand.u32 %v762, 4294901760
    %v834 = vsub.f32 %v762, %v833
    %v835 = vand.u32 %v834, 4294901760
    %v836 = vsub.f32 %v834, %v835
    %v837 = vand.u32 %v836, 4294901760
    %838 = vmatmul.mubr.f32.gmra.mrb[0].mxu0 %v837
    %v839 = vpop.f32.mrb[0].mxu0
    %v840 = vadd.f32 0.0, %v839
    %v841 = vpop.f32.mrb[0].mxu0
    %842 = vdwg.mxu0
    %843 = vmatprep.subr.mxu0 0.0
    %v844 = vand.u32 %v61, 4294901760
    %v845 = vsub.f32 %v61, %v844
    %v846 = vand.u32 %v845, 4294901760
    %v847 = vsub.f32 %v845, %v846
    %v848 = vand.u32 %v847, 4294901760
    %849 = vmatpush1.msra.mxu0 %v848
    %850 = vmatprep.subr.mxu0 0.0
    %v851 = vand.u32 %v62, 4294901760
    %v852 = vsub.f32 %v62, %v851
    %v853 = vand.u32 %v852, 4294901760
    %v854 = vsub.f32 %v852, %v853
    %v855 = vand.u32 %v854, 4294901760
    %856 = vmatpush1.msra.mxu0 %v855
    %857 = vmatprep.subr.mxu0 0.0
    %v858 = vand.u32 %v63, 4294901760
    %v859 = vsub.f32 %v63, %v858
    %v860 = vand.u32 %v859, 4294901760
    %v861 = vsub.f32 %v859, %v860
    %v862 = vand.u32 %v861, 4294901760
    %863 = vmatpush1.msra.mxu0 %v862
    %864 = vmatprep.subr.mxu0 0.0
    %v865 = vand.u32 %v64, 4294901760
    %v866 = vsub.f32 %v64, %v865
    %v867 = vand.u32 %v866, 4294901760
    %v868 = vsub.f32 %v866, %v867
    %v869 = vand.u32 %v868, 4294901760
    %870 = vmatpush1.msra.mxu0 %v869
    %871 = vmatprep.subr.mxu0 0.0
    %872 = vmatpush1.msra.mxu0 0.0
    %873 = vmatprep.subr.mxu0 0.0
    %874 = vmatpush1.msra.mxu0 0.0
    %875 = vmatprep.subr.mxu0 0.0
    %876 = vmatpush1.msra.mxu0 0.0
    %877 = vmatprep.subr.mxu0 0.0
    %878 = vmatpush1.msra.mxu0 0.0
    %879 = vmatprep.subr.mxu0 0.0
    %880 = vmatpush1.msra.mxu0 0.0
    %881 = vmatprep.subr.mxu0 0.0
    %882 = vmatpush1.msra.mxu0 0.0
    %883 = vmatprep.subr.mxu0 0.0
    %884 = vmatpush1.msra.mxu0 0.0
    %885 = vmatprep.subr.mxu0 0.0
    %886 = vmatpush1.msra.mxu0 0.0
    %887 = vmatprep.subr.mxu0 0.0
    %888 = vmatpush1.msra.mxu0 0.0
    %889 = vmatprep.subr.mxu0 0.0
    %890 = vmatpush1.msra.mxu0 0.0
    %891 = vmatprep.subr.mxu0 0.0
    %892 = vmatpush1.msra.mxu0 0.0
    %893 = vmatprep.subr.mxu0 0.0
    %894 = vmatpush1.msra.mxu0 0.0
    %895 = vmatprep.subr.mxu0 0.0
    %896 = vmatpush1.msra.mxu0 0.0
    %897 = vmatprep.subr.mxu0 0.0
    %898 = vmatpush1.msra.mxu0 0.0
    %899 = vmatprep.subr.mxu0 0.0
    %900 = vmatpush1.msra.mxu0 0.0
    %901 = vmatprep.subr.mxu0 0.0
    %902 = vmatpush1.msra.mxu0 0.0
    %903 = vmatprep.subr.mxu0 0.0
    %904 = vmatpush1.msra.mxu0 0.0
    %905 = vmatprep.subr.mxu0 0.0
    %906 = vmatpush1.msra.mxu0 0.0
    %907 = vmatprep.subr.mxu0 0.0
    %908 = vmatpush1.msra.mxu0 0.0
    %909 = vmatprep.subr.mxu0 0.0
    %910 = vmatpush1.msra.mxu0 0.0
    %911 = vmatprep.subr.mxu0 0.0
    %912 = vmatpush1.msra.mxu0 0.0
    %913 = vmatprep.subr.mxu0 0.0
    %914 = vmatpush1.msra.mxu0 0.0
    %915 = vmatprep.subr.mxu0 0.0
    %916 = vmatpush1.msra.mxu0 0.0
    %917 = vmatprep.subr.mxu0 0.0
    %918 = vmatpush1.msra.mxu0 0.0
    %919 = vmatprep.subr.mxu0 0.0
    %920 = vmatpush1.msra.mxu0 0.0
    %921 = vmatprep.subr.mxu0 0.0
    %922 = vmatpush1.msra.mxu0 0.0
    %923 = vmatprep.subr.mxu0 0.0
    %924 = vmatpush1.msra.mxu0 0.0
    %925 = vmatprep.subr.mxu0 0.0
    %926 = vmatpush1.msra.mxu0 0.0
    %927 = vmatprep.mubr.f32.mxu0 0.0
    %v928 = vand.u32 %v762, 4294901760
    %929 = vmatmul.mubr.f32.gmra.mrb[0].mxu0 %v928
    %v930 = vpop.f32.mrb[0].mxu0
    %v931 = vadd.f32 %v840, %v930
    %v932 = vpop.f32.mrb[0].mxu0
    %933 = vdwg.mxu0
    %934 = vmatprep.subr.mxu0 0.0
    %v935 = vand.u32 %v61, 4294901760
    %v936 = vsub.f32 %v61, %v935
    %937 = vmatpush1.msra.mxu0 %v936
    %938 = vmatprep.subr.mxu0 0.0
    %v939 = vand.u32 %v62, 4294901760
    %v940 = vsub.f32 %v62, %v939
    %941 = vmatpush1.msra.mxu0 %v940
    %942 = vmatprep.subr.mxu0 0.0
    %v943 = vand.u32 %v63, 4294901760
    %v944 = vsub.f32 %v63, %v943
    %945 = vmatpush1.msra.mxu0 %v944
    %946 = vmatprep.subr.mxu0 0.0
    %v947 = vand.u32 %v64, 4294901760
    %v948 = vsub.f32 %v64, %v947
    %949 = vmatpush1.msra.mxu0 %v948
    %950 = vmatprep.subr.mxu0 0.0
    %951 = vmatpush1.msra.mxu0 0.0
    %952 = vmatprep.subr.mxu0 0.0
    %953 = vmatpush1.msra.mxu0 0.0
    %954 = vmatprep.subr.mxu0 0.0
    %955 = vmatpush1.msra.mxu0 0.0
    %956 = vmatprep.subr.mxu0 0.0
    %957 = vmatpush1.msra.mxu0 0.0
    %958 = vmatprep.subr.mxu0 0.0
    %959 = vmatpush1.msra.mxu0 0.0
    %960 = vmatprep.subr.mxu0 0.0
    %961 = vmatpush1.msra.mxu0 0.0
    %962 = vmatprep.subr.mxu0 0.0
    %963 = vmatpush1.msra.mxu0 0.0
    %964 = vmatprep.subr.mxu0 0.0
    %965 = vmatpush1.msra.mxu0 0.0
    %966 = vmatprep.subr.mxu0 0.0
    %967 = vmatpush1.msra.mxu0 0.0
    %968 = vmatprep.subr.mxu0 0.0
    %969 = vmatpush1.msra.mxu0 0.0
    %970 = vmatprep.subr.mxu0 0.0
    %971 = vmatpush1.msra.mxu0 0.0
    %972 = vmatprep.subr.mxu0 0.0
    %973 = vmatpush1.msra.mxu0 0.0
    %974 = vmatprep.subr.mxu0 0.0
    %975 = vmatpush1.msra.mxu0 0.0
    %976 = vmatprep.subr.mxu0 0.0
    %977 = vmatpush1.msra.mxu0 0.0
    %978 = vmatprep.subr.mxu0 0.0
    %979 = vmatpush1.msra.mxu0 0.0
    %980 = vmatprep.subr.mxu0 0.0
    %981 = vmatpush1.msra.mxu0 0.0
    %982 = vmatprep.subr.mxu0 0.0
    %983 = vmatpush1.msra.mxu0 0.0
    %984 = vmatprep.subr.mxu0 0.0
    %985 = vmatpush1.msra.mxu0 0.0
    %986 = vmatprep.subr.mxu0 0.0
    %987 = vmatpush1.msra.mxu0 0.0
    %988 = vmatprep.subr.mxu0 0.0
    %989 = vmatpush1.msra.mxu0 0.0
    %990 = vmatprep.subr.mxu0 0.0
    %991 = vmatpush1.msra.mxu0 0.0
    %992 = vmatprep.subr.mxu0 0.0
    %993 = vmatpush1.msra.mxu0 0.0
    %994 = vmatprep.subr.mxu0 0.0
    %995 = vmatpush1.msra.mxu0 0.0
    %996 = vmatprep.subr.mxu0 0.0
    %997 = vmatpush1.msra.mxu0 0.0
    %998 = vmatprep.subr.mxu0 0.0
    %999 = vmatpush1.msra.mxu0 0.0
    %1000 = vmatprep.subr.mxu0 0.0
    %1001 = vmatpush1.msra.mxu0 0.0
    %1002 = vmatprep.subr.mxu0 0.0
    %1003 = vmatpush1.msra.mxu0 0.0
    %1004 = vmatprep.subr.mxu0 0.0
    %1005 = vmatpush1.msra.mxu0 0.0
    %1006 = vmatprep.mubr.f32.mxu0 0.0
    %v1007 = vand.u32 %v762, 4294901760
    %v1008 = vsub.f32 %v762, %v1007
    %1009 = vmatmul.mubr.f32.gmra.mrb[0].mxu0 %v1008
    %v1010 = vpop.f32.mrb[0].mxu0
    %v1011 = vadd.f32 %v931, %v1010
    %v1012 = vpop.f32.mrb[0].mxu0
    %1013 = vdwg.mxu0
    %1014 = vmatprep.subr.mxu0 0.0
    %v1015 = vand.u32 %v61, 4294901760
    %1016 = vmatpush1.msra.mxu0 %v1015
    %1017 = vmatprep.subr.mxu0 0.0
    %v1018 = vand.u32 %v62, 4294901760
    %1019 = vmatpush1.msra.mxu0 %v1018
    %1020 = vmatprep.subr.mxu0 0.0
    %v1021 = vand.u32 %v63, 4294901760
    %1022 = vmatpush1.msra.mxu0 %v1021
    %1023 = vmatprep.subr.mxu0 0.0
    %v1024 = vand.u32 %v64, 4294901760
    %1025 = vmatpush1.msra.mxu0 %v1024
    %1026 = vmatprep.subr.mxu0 0.0
    %1027 = vmatpush1.msra.mxu0 0.0
    %1028 = vmatprep.subr.mxu0 0.0
    %1029 = vmatpush1.msra.mxu0 0.0
    %1030 = vmatprep.subr.mxu0 0.0
    %1031 = vmatpush1.msra.mxu0 0.0
    %1032 = vmatprep.subr.mxu0 0.0
    %1033 = vmatpush1.msra.mxu0 0.0
    %1034 = vmatprep.subr.mxu0 0.0
    %1035 = vmatpush1.msra.mxu0 0.0
    %1036 = vmatprep.subr.mxu0 0.0
    %1037 = vmatpush1.msra.mxu0 0.0
    %1038 = vmatprep.subr.mxu0 0.0
    %1039 = vmatpush1.msra.mxu0 0.0
    %1040 = vmatprep.subr.mxu0 0.0
    %1041 = vmatpush1.msra.mxu0 0.0
    %1042 = vmatprep.subr.mxu0 0.0
    %1043 = vmatpush1.msra.mxu0 0.0
    %1044 = vmatprep.subr.mxu0 0.0
    %1045 = vmatpush1.msra.mxu0 0.0
    %1046 = vmatprep.subr.mxu0 0.0
    %1047 = vmatpush1.msra.mxu0 0.0
    %1048 = vmatprep.subr.mxu0 0.0
    %1049 = vmatpush1.msra.mxu0 0.0
    %1050 = vmatprep.subr.mxu0 0.0
    %1051 = vmatpush1.msra.mxu0 0.0
    %1052 = vmatprep.subr.mxu0 0.0
    %1053 = vmatpush1.msra.mxu0 0.0
    %1054 = vmatprep.subr.mxu0 0.0
    %1055 = vmatpush1.msra.mxu0 0.0
    %1056 = vmatprep.subr.mxu0 0.0
    %1057 = vmatpush1.msra.mxu0 0.0
    %1058 = vmatprep.subr.mxu0 0.0
    %1059 = vmatpush1.msra.mxu0 0.0
    %1060 = vmatprep.subr.mxu0 0.0
    %1061 = vmatpush1.msra.mxu0 0.0
    %1062 = vmatprep.subr.mxu0 0.0
    %1063 = vmatpush1.msra.mxu0 0.0
    %1064 = vmatprep.subr.mxu0 0.0
    %1065 = vmatpush1.msra.mxu0 0.0
    %1066 = vmatprep.subr.mxu0 0.0
    %1067 = vmatpush1.msra.mxu0 0.0
    %1068 = vmatprep.subr.mxu0 0.0
    %1069 = vmatpush1.msra.mxu0 0.0
    %1070 = vmatprep.subr.mxu0 0.0
    %1071 = vmatpush1.msra.mxu0 0.0
    %1072 = vmatprep.subr.mxu0 0.0
    %1073 = vmatpush1.msra.mxu0 0.0
    %1074 = vmatprep.subr.mxu0 0.0
    %1075 = vmatpush1.msra.mxu0 0.0
    %1076 = vmatprep.subr.mxu0 0.0
    %1077 = vmatpush1.msra.mxu0 0.0
    %1078 = vmatprep.subr.mxu0 0.0
    %1079 = vmatpush1.msra.mxu0 0.0
    %1080 = vmatprep.subr.mxu0 0.0
    %1081 = vmatpush1.msra.mxu0 0.0
    %1082 = vmatprep.mubr.f32.mxu0 0.0
    %v1083 = vand.u32 %v762, 4294901760
    %v1084 = vsub.f32 %v762, %v1083
    %v1085 = vand.u32 %v1084, 4294901760
    %1086 = vmatmul.mubr.f32.gmra.mrb[0].mxu0 %v1085
    %v1087 = vpop.f32.mrb[0].mxu0
    %v1088 = vadd.f32 %v1011, %v1087
    %v1089 = vpop.f32.mrb[0].mxu0
    %1090 = vdwg.mxu0
    %1091 = vmatprep.subr.mxu0 0.0
    %v1092 = vand.u32 %v61, 4294901760
    %v1093 = vsub.f32 %v61, %v1092
    %v1094 = vand.u32 %v1093, 4294901760
    %1095 = vmatpush1.msra.mxu0 %v1094
    %1096 = vmatprep.subr.mxu0 0.0
    %v1097 = vand.u32 %v62, 4294901760
    %v1098 = vsub.f32 %v62, %v1097
    %v1099 = vand.u32 %v1098, 4294901760
    %1100 = vmatpush1.msra.mxu0 %v1099
    %1101 = vmatprep.subr.mxu0 0.0
    %v1102 = vand.u32 %v63, 4294901760
    %v1103 = vsub.f32 %v63, %v1102
    %v1104 = vand.u32 %v1103, 4294901760
    %1105 = vmatpush1.msra.mxu0 %v1104
    %1106 = vmatprep.subr.mxu0 0.0
    %v1107 = vand.u32 %v64, 4294901760
    %v1108 = vsub.f32 %v64, %v1107
    %v1109 = vand.u32 %v1108, 4294901760
    %1110 = vmatpush1.msra.mxu0 %v1109
    %1111 = vmatprep.subr.mxu0 0.0
    %1112 = vmatpush1.msra.mxu0 0.0
    %1113 = vmatprep.subr.mxu0 0.0
    %1114 = vmatpush1.msra.mxu0 0.0
    %1115 = vmatprep.subr.mxu0 0.0
    %1116 = vmatpush1.msra.mxu0 0.0
    %1117 = vmatprep.subr.mxu0 0.0
    %1118 = vmatpush1.msra.mxu0 0.0
    %1119 = vmatprep.subr.mxu0 0.0
    %1120 = vmatpush1.msra.mxu0 0.0
    %1121 = vmatprep.subr.mxu0 0.0
    %1122 = vmatpush1.msra.mxu0 0.0
    %1123 = vmatprep.subr.mxu0 0.0
    %1124 = vmatpush1.msra.mxu0 0.0
    %1125 = vmatprep.subr.mxu0 0.0
    %1126 = vmatpush1.msra.mxu0 0.0
    %1127 = vmatprep.subr.mxu0 0.0
    %1128 = vmatpush1.msra.mxu0 0.0
    %1129 = vmatprep.subr.mxu0 0.0
    %1130 = vmatpush1.msra.mxu0 0.0
    %1131 = vmatprep.subr.mxu0 0.0
    %1132 = vmatpush1.msra.mxu0 0.0
    %1133 = vmatprep.subr.mxu0 0.0
    %1134 = vmatpush1.msra.mxu0 0.0
    %1135 = vmatprep.subr.mxu0 0.0
    %1136 = vmatpush1.msra.mxu0 0.0
    %1137 = vmatprep.subr.mxu0 0.0
    %1138 = vmatpush1.msra.mxu0 0.0
    %1139 = vmatprep.subr.mxu0 0.0
    %1140 = vmatpush1.msra.mxu0 0.0
    %1141 = vmatprep.subr.mxu0 0.0
    %1142 = vmatpush1.msra.mxu0 0.0
    %1143 = vmatprep.subr.mxu0 0.0
    %1144 = vmatpush1.msra.mxu0 0.0
    %1145 = vmatprep.subr.mxu0 0.0
    %1146 = vmatpush1.msra.mxu0 0.0
    %1147 = vmatprep.subr.mxu0 0.0
    %1148 = vmatpush1.msra.mxu0 0.0
    %1149 = vmatprep.subr.mxu0 0.0
    %1150 = vmatpush1.msra.mxu0 0.0
    %1151 = vmatprep.subr.mxu0 0.0
    %1152 = vmatpush1.msra.mxu0 0.0
    %1153 = vmatprep.subr.mxu0 0.0
    %1154 = vmatpush1.msra.mxu0 0.0
    %1155 = vmatprep.subr.mxu0 0.0
    %1156 = vmatpush1.msra.mxu0 0.0
    %1157 = vmatprep.subr.mxu0 0.0
    %1158 = vmatpush1.msra.mxu0 0.0
    %1159 = vmatprep.subr.mxu0 0.0
    %1160 = vmatpush1.msra.mxu0 0.0
    %1161 = vmatprep.subr.mxu0 0.0
    %1162 = vmatpush1.msra.mxu0 0.0
    %1163 = vmatprep.subr.mxu0 0.0
    %1164 = vmatpush1.msra.mxu0 0.0
    %1165 = vmatprep.subr.mxu0 0.0
    %1166 = vmatpush1.msra.mxu0 0.0
    %1167 = vmatprep.mubr.f32.mxu0 0.0
    %v1168 = vand.u32 %v762, 4294901760
    %1169 = vmatmul.mubr.f32.gmra.mrb[0].mxu0 %v1168
    %v1170 = vpop.f32.mrb[0].mxu0
    %v1171 = vadd.f32 %v1088, %v1170
    %v1172 = vpop.f32.mrb[0].mxu0
    %1173 = vdwg.mxu0
    %1174 = vmatprep.subr.mxu0 0.0
    %v1175 = vand.u32 %v61, 4294901760
    %1176 = vmatpush1.msra.mxu0 %v1175
    %1177 = vmatprep.subr.mxu0 0.0
    %v1178 = vand.u32 %v62, 4294901760
    %1179 = vmatpush1.msra.mxu0 %v1178
    %1180 = vmatprep.subr.mxu0 0.0
    %v1181 = vand.u32 %v63, 4294901760
    %1182 = vmatpush1.msra.mxu0 %v1181
    %1183 = vmatprep.subr.mxu0 0.0
    %v1184 = vand.u32 %v64, 4294901760
    %1185 = vmatpush1.msra.mxu0 %v1184
    %1186 = vmatprep.subr.mxu0 0.0
    %1187 = vmatpush1.msra.mxu0 0.0
    %1188 = vmatprep.subr.mxu0 0.0
    %1189 = vmatpush1.msra.mxu0 0.0
    %1190 = vmatprep.subr.mxu0 0.0
    %1191 = vmatpush1.msra.mxu0 0.0
    %1192 = vmatprep.subr.mxu0 0.0
    %1193 = vmatpush1.msra.mxu0 0.0
    %1194 = vmatprep.subr.mxu0 0.0
    %1195 = vmatpush1.msra.mxu0 0.0
    %1196 = vmatprep.subr.mxu0 0.0
    %1197 = vmatpush1.msra.mxu0 0.0
    %1198 = vmatprep.subr.mxu0 0.0
    %1199 = vmatpush1.msra.mxu0 0.0
    %1200 = vmatprep.subr.mxu0 0.0
    %1201 = vmatpush1.msra.mxu0 0.0
    %1202 = vmatprep.subr.mxu0 0.0
    %1203 = vmatpush1.msra.mxu0 0.0
    %1204 = vmatprep.subr.mxu0 0.0
    %1205 = vmatpush1.msra.mxu0 0.0
    %1206 = vmatprep.subr.mxu0 0.0
    %1207 = vmatpush1.msra.mxu0 0.0
    %1208 = vmatprep.subr.mxu0 0.0
    %1209 = vmatpush1.msra.mxu0 0.0
    %1210 = vmatprep.subr.mxu0 0.0
    %1211 = vmatpush1.msra.mxu0 0.0
    %1212 = vmatprep.subr.mxu0 0.0
    %1213 = vmatpush1.msra.mxu0 0.0
    %1214 = vmatprep.subr.mxu0 0.0
    %1215 = vmatpush1.msra.mxu0 0.0
    %1216 = vmatprep.subr.mxu0 0.0
    %1217 = vmatpush1.msra.mxu0 0.0
    %1218 = vmatprep.subr.mxu0 0.0
    %1219 = vmatpush1.msra.mxu0 0.0
    %1220 = vmatprep.subr.mxu0 0.0
    %1221 = vmatpush1.msra.mxu0 0.0
    %1222 = vmatprep.subr.mxu0 0.0
    %1223 = vmatpush1.msra.mxu0 0.0
    %1224 = vmatprep.subr.mxu0 0.0
    %1225 = vmatpush1.msra.mxu0 0.0
    %1226 = vmatprep.subr.mxu0 0.0
    %1227 = vmatpush1.msra.mxu0 0.0
    %1228 = vmatprep.subr.mxu0 0.0
    %1229 = vmatpush1.msra.mxu0 0.0
    %1230 = vmatprep.subr.mxu0 0.0
    %1231 = vmatpush1.msra.mxu0 0.0
    %1232 = vmatprep.subr.mxu0 0.0
    %1233 = vmatpush1.msra.mxu0 0.0
    %1234 = vmatprep.subr.mxu0 0.0
    %1235 = vmatpush1.msra.mxu0 0.0
    %1236 = vmatprep.subr.mxu0 0.0
    %1237 = vmatpush1.msra.mxu0 0.0
    %1238 = vmatprep.subr.mxu0 0.0
    %1239 = vmatpush1.msra.mxu0 0.0
    %1240 = vmatprep.subr.mxu0 0.0
    %1241 = vmatpush1.msra.mxu0 0.0
    %1242 = vmatprep.mubr.f32.mxu0 0.0
    %v1243 = vand.u32 %v762, 4294901760
    %1244 = vmatmul.mubr.f32.gmra.mrb[0].mxu0 %v1243
    %v1245 = vpop.f32.mrb[0].mxu0
    %v1246 = vadd.f32 %v1171, %v1245
    %v1247 = vpop.f32.mrb[0].mxu0
    %1248 = vdwg.mxu0
    %v1249 = vmul.f32 %v1246, 0.001953125
    %v1250 = vmul.f32 %v760, %v760
    %v1251 = vsub.f32 %v1249, %v1250
    %v1252 = vmax.f32 %v1251, 0.0
    %v1253 = vadd.f32 %v1252, 1e-12
    %v1254 = vrsqrt.pop %v1253
    %vm1255 = vcmask 15360
    %v1257 = vsel %vm1255, %v760, 0
    %vm1259 = vcmask 1041408
    %v1261 = vsel %vm1259, %v60, 0
    %1263 = vmatprep.subr.mxu0 0.0
    %v1264 = vand.u32 %v1261, 4294901760
    %1265 = vmatpush1.msra.mxu0 %v1264
    %1266 = vmatprep.subr.mxu0 0.0
    %1267 = vmatpush1.msra.mxu0 0.0
    %1268 = vmatprep.subr.mxu0 0.0
    %1269 = vmatpush1.msra.mxu0 0.0
    %1270 = vmatprep.subr.mxu0 0.0
    %1271 = vmatpush1.msra.mxu0 0.0
    %1272 = vmatprep.subr.mxu0 0.0
    %1273 = vmatpush1.msra.mxu0 0.0
    %1274 = vmatprep.subr.mxu0 0.0
    %1275 = vmatpush1.msra.mxu0 0.0
    %1276 = vmatprep.subr.mxu0 0.0
    %1277 = vmatpush1.msra.mxu0 0.0
    %1278 = vmatprep.subr.mxu0 0.0
    %1279 = vmatpush1.msra.mxu0 0.0
    %1280 = vmatprep.subr.mxu0 0.0
    %1281 = vmatpush1.msra.mxu0 0.0
    %1282 = vmatprep.subr.mxu0 0.0
    %1283 = vmatpush1.msra.mxu0 0.0
    %1284 = vmatprep.subr.mxu0 0.0
    %1285 = vmatpush1.msra.mxu0 0.0
    %1286 = vmatprep.subr.mxu0 0.0
    %1287 = vmatpush1.msra.mxu0 0.0
    %1288 = vmatprep.subr.mxu0 0.0
    %1289 = vmatpush1.msra.mxu0 0.0
    %1290 = vmatprep.subr.mxu0 0.0
    %1291 = vmatpush1.msra.mxu0 0.0
    %1292 = vmatprep.subr.mxu0 0.0
    %1293 = vmatpush1.msra.mxu0 0.0
    %1294 = vmatprep.subr.mxu0 0.0
    %1295 = vmatpush1.msra.mxu0 0.0
    %1296 = vmatprep.subr.mxu0 0.0
    %1297 = vmatpush1.msra.mxu0 0.0
    %1298 = vmatprep.subr.mxu0 0.0
    %1299 = vmatpush1.msra.mxu0 0.0
    %1300 = vmatprep.subr.mxu0 0.0
    %1301 = vmatpush1.msra.mxu0 0.0
    %1302 = vmatprep.subr.mxu0 0.0
    %1303 = vmatpush1.msra.mxu0 0.0
    %1304 = vmatprep.subr.mxu0 0.0
    %1305 = vmatpush1.msra.mxu0 0.0
    %1306 = vmatprep.subr.mxu0 0.0
    %1307 = vmatpush1.msra.mxu0 0.0
    %1308 = vmatprep.subr.mxu0 0.0
    %1309 = vmatpush1.msra.mxu0 0.0
    %1310 = vmatprep.subr.mxu0 0.0
    %1311 = vmatpush1.msra.mxu0 0.0
    %1312 = vmatprep.subr.mxu0 0.0
    %1313 = vmatpush1.msra.mxu0 0.0
    %1314 = vmatprep.subr.mxu0 0.0
    %1315 = vmatpush1.msra.mxu0 0.0
    %1316 = vmatprep.subr.mxu0 0.0
    %1317 = vmatpush1.msra.mxu0 0.0
    %1318 = vmatprep.subr.mxu0 0.0
    %1319 = vmatpush1.msra.mxu0 0.0
    %1320 = vmatprep.subr.mxu0 0.0
    %1321 = vmatpush1.msra.mxu0 0.0
    %1322 = vmatprep.subr.mxu0 0.0
    %1323 = vmatpush1.msra.mxu0 0.0
    %1324 = vmatprep.subr.mxu0 0.0
    %1325 = vmatpush1.msra.mxu0 0.0
    %1326 = vmatprep.subr.mxu0 0.0
    %1327 = vmatpush1.msra.mxu0 0.0
    %1328 = vmatprep.mubr.f32.mxu0 0.0
    %v1329 = vand.u32 %v1257, 4294901760
    %v1330 = vsub.f32 %v1257, %v1329
    %v1331 = vand.u32 %v1330, 4294901760
    %v1332 = vsub.f32 %v1330, %v1331
    %v1333 = vand.u32 %v1332, 4294901760
    %1334 = vmatmul.mubr.f32.gmra.mrb[0].mxu0 %v1333
    %v1335 = vpop.f32.mrb[0].mxu0
    %v1336 = vadd.f32 0.0, %v1335
    %v1337 = vpop.f32.mrb[0].mxu0
    %1338 = vdwg.mxu0
    %1339 = vmatprep.subr.mxu0 0.0
    %v1340 = vand.u32 %v1261, 4294901760
    %v1341 = vsub.f32 %v1261, %v1340
    %v1342 = vand.u32 %v1341, 4294901760
    %v1343 = vsub.f32 %v1341, %v1342
    %v1344 = vand.u32 %v1343, 4294901760
    %1345 = vmatpush1.msra.mxu0 %v1344
    %1346 = vmatprep.subr.mxu0 0.0
    %1347 = vmatpush1.msra.mxu0 0.0
    %1348 = vmatprep.subr.mxu0 0.0
    %1349 = vmatpush1.msra.mxu0 0.0
    %1350 = vmatprep.subr.mxu0 0.0
    %1351 = vmatpush1.msra.mxu0 0.0
    %1352 = vmatprep.subr.mxu0 0.0
    %1353 = vmatpush1.msra.mxu0 0.0
    %1354 = vmatprep.subr.mxu0 0.0
    %1355 = vmatpush1.msra.mxu0 0.0
    %1356 = vmatprep.subr.mxu0 0.0
    %1357 = vmatpush1.msra.mxu0 0.0
    %1358 = vmatprep.subr.mxu0 0.0
    %1359 = vmatpush1.msra.mxu0 0.0
    %1360 = vmatprep.subr.mxu0 0.0
    %1361 = vmatpush1.msra.mxu0 0.0
    %1362 = vmatprep.subr.mxu0 0.0
    %1363 = vmatpush1.msra.mxu0 0.0
    %1364 = vmatprep.subr.mxu0 0.0
    %1365 = vmatpush1.msra.mxu0 0.0
    %1366 = vmatprep.subr.mxu0 0.0
    %1367 = vmatpush1.msra.mxu0 0.0
    %1368 = vmatprep.subr.mxu0 0.0
    %1369 = vmatpush1.msra.mxu0 0.0
    %1370 = vmatprep.subr.mxu0 0.0
    %1371 = vmatpush1.msra.mxu0 0.0
    %1372 = vmatprep.subr.mxu0 0.0
    %1373 = vmatpush1.msra.mxu0 0.0
    %1374 = vmatprep.subr.mxu0 0.0
    %1375 = vmatpush1.msra.mxu0 0.0
    %1376 = vmatprep.subr.mxu0 0.0
    %1377 = vmatpush1.msra.mxu0 0.0
    %1378 = vmatprep.subr.mxu0 0.0
    %1379 = vmatpush1.msra.mxu0 0.0
    %1380 = vmatprep.subr.mxu0 0.0
    %1381 = vmatpush1.msra.mxu0 0.0
    %1382 = vmatprep.subr.mxu0 0.0
    %1383 = vmatpush1.msra.mxu0 0.0
    %1384 = vmatprep.subr.mxu0 0.0
    %1385 = vmatpush1.msra.mxu0 0.0
    %1386 = vmatprep.subr.mxu0 0.0
    %1387 = vmatpush1.msra.mxu0 0.0
    %1388 = vmatprep.subr.mxu0 0.0
    %1389 = vmatpush1.msra.mxu0 0.0
    %1390 = vmatprep.subr.mxu0 0.0
    %1391 = vmatpush1.msra.mxu0 0.0
    %1392 = vmatprep.subr.mxu0 0.0
    %1393 = vmatpush1.msra.mxu0 0.0
    %1394 = vmatprep.subr.mxu0 0.0
    %1395 = vmatpush1.msra.mxu0 0.0
    %1396 = vmatprep.subr.mxu0 0.0
    %1397 = vmatpush1.msra.mxu0 0.0
    %1398 = vmatprep.subr.mxu0 0.0
    %1399 = vmatpush1.msra.mxu0 0.0
    %1400 = vmatprep.subr.mxu0 0.0
    %1401 = vmatpush1.msra.mxu0 0.0
    %1402 = vmatprep.subr.mxu0 0.0
    %1403 = vmatpush1.msra.mxu0 0.0
    %1404 = vmatprep.subr.mxu0 0.0
    %1405 = vmatpush1.msra.mxu0 0.0
    %1406 = vmatprep.subr.mxu0 0.0
    %1407 = vmatpush1.msra.mxu0 0.0
    %1408 = vmatprep.mubr.f32.mxu0 0.0
    %v1409 = vand.u32 %v1257, 4294901760
    %1410 = vmatmul.mubr.f32.gmra.mrb[0].mxu0 %v1409
    %v1411 = vpop.f32.mrb[0].mxu0
    %v1412 = vadd.f32 %v1336, %v1411
    %v1413 = vpop.f32.mrb[0].mxu0
    %1414 = vdwg.mxu0
    %1415 = vmatprep.subr.mxu0 0.0
    %v1416 = vand.u32 %v1261, 4294901760
    %v1417 = vsub.f32 %v1261, %v1416
    %1418 = vmatpush1.msra.mxu0 %v1417
    %1419 = vmatprep.subr.mxu0 0.0
    %1420 = vmatpush1.msra.mxu0 0.0
    %1421 = vmatprep.subr.mxu0 0.0
    %1422 = vmatpush1.msra.mxu0 0.0
    %1423 = vmatprep.subr.mxu0 0.0
    %1424 = vmatpush1.msra.mxu0 0.0
    %1425 = vmatprep.subr.mxu0 0.0
    %1426 = vmatpush1.msra.mxu0 0.0
    %1427 = vmatprep.subr.mxu0 0.0
    %1428 = vmatpush1.msra.mxu0 0.0
    %1429 = vmatprep.subr.mxu0 0.0
    %1430 = vmatpush1.msra.mxu0 0.0
    %1431 = vmatprep.subr.mxu0 0.0
    %1432 = vmatpush1.msra.mxu0 0.0
    %1433 = vmatprep.subr.mxu0 0.0
    %1434 = vmatpush1.msra.mxu0 0.0
    %1435 = vmatprep.subr.mxu0 0.0
    %1436 = vmatpush1.msra.mxu0 0.0
    %1437 = vmatprep.subr.mxu0 0.0
    %1438 = vmatpush1.msra.mxu0 0.0
    %1439 = vmatprep.subr.mxu0 0.0
    %1440 = vmatpush1.msra.mxu0 0.0
    %1441 = vmatprep.subr.mxu0 0.0
    %1442 = vmatpush1.msra.mxu0 0.0
    %1443 = vmatprep.subr.mxu0 0.0
    %1444 = vmatpush1.msra.mxu0 0.0
    %1445 = vmatprep.subr.mxu0 0.0
    %1446 = vmatpush1.msra.mxu0 0.0
    %1447 = vmatprep.subr.mxu0 0.0
    %1448 = vmatpush1.msra.mxu0 0.0
    %1449 = vmatprep.subr.mxu0 0.0
    %1450 = vmatpush1.msra.mxu0 0.0
    %1451 = vmatprep.subr.mxu0 0.0
    %1452 = vmatpush1.msra.mxu0 0.0
    %1453 = vmatprep.subr.mxu0 0.0
    %1454 = vmatpush1.msra.mxu0 0.0
    %1455 = vmatprep.subr.mxu0 0.0
    %1456 = vmatpush1.msra.mxu0 0.0
    %1457 = vmatprep.subr.mxu0 0.0
    %1458 = vmatpush1.msra.mxu0 0.0
    %1459 = vmatprep.subr.mxu0 0.0
    %1460 = vmatpush1.msra.mxu0 0.0
    %1461 = vmatprep.subr.mxu0 0.0
    %1462 = vmatpush1.msra.mxu0 0.0
    %1463 = vmatprep.subr.mxu0 0.0
    %1464 = vmatpush1.msra.mxu0 0.0
    %1465 = vmatprep.subr.mxu0 0.0
    %1466 = vmatpush1.msra.mxu0 0.0
    %1467 = vmatprep.subr.mxu0 0.0
    %1468 = vmatpush1.msra.mxu0 0.0
    %1469 = vmatprep.subr.mxu0 0.0
    %1470 = vmatpush1.msra.mxu0 0.0
    %1471 = vmatprep.subr.mxu0 0.0
    %1472 = vmatpush1.msra.mxu0 0.0
    %1473 = vmatprep.subr.mxu0 0.0
    %1474 = vmatpush1.msra.mxu0 0.0
    %1475 = vmatprep.subr.mxu0 0.0
    %1476 = vmatpush1.msra.mxu0 0.0
    %1477 = vmatprep.subr.mxu0 0.0
    %1478 = vmatpush1.msra.mxu0 0.0
    %1479 = vmatprep.subr.mxu0 0.0
    %1480 = vmatpush1.msra.mxu0 0.0
    %1481 = vmatprep.mubr.f32.mxu0 0.0
    %v1482 = vand.u32 %v1257, 4294901760
    %v1483 = vsub.f32 %v1257, %v1482
    %1484 = vmatmul.mubr.f32.gmra.mrb[0].mxu0 %v1483
    %v1485 = vpop.f32.mrb[0].mxu0
    %v1486 = vadd.f32 %v1412, %v1485
    %v1487 = vpop.f32.mrb[0].mxu0
    %1488 = vdwg.mxu0
    %1489 = vmatprep.subr.mxu0 0.0
    %v1490 = vand.u32 %v1261, 4294901760
    %1491 = vmatpush1.msra.mxu0 %v1490
    %1492 = vmatprep.subr.mxu0 0.0
    %1493 = vmatpush1.msra.mxu0 0.0
    %1494 = vmatprep.subr.mxu0 0.0
    %1495 = vmatpush1.msra.mxu0 0.0
    %1496 = vmatprep.subr.mxu0 0.0
    %1497 = vmatpush1.msra.mxu0 0.0
    %1498 = vmatprep.subr.mxu0 0.0
    %1499 = vmatpush1.msra.mxu0 0.0
    %1500 = vmatprep.subr.mxu0 0.0
    %1501 = vmatpush1.msra.mxu0 0.0
    %1502 = vmatprep.subr.mxu0 0.0
    %1503 = vmatpush1.msra.mxu0 0.0
    %1504 = vmatprep.subr.mxu0 0.0
    %1505 = vmatpush1.msra.mxu0 0.0
    %1506 = vmatprep.subr.mxu0 0.0
    %1507 = vmatpush1.msra.mxu0 0.0
    %1508 = vmatprep.subr.mxu0 0.0
    %1509 = vmatpush1.msra.mxu0 0.0
    %1510 = vmatprep.subr.mxu0 0.0
    %1511 = vmatpush1.msra.mxu0 0.0
    %1512 = vmatprep.subr.mxu0 0.0
    %1513 = vmatpush1.msra.mxu0 0.0
    %1514 = vmatprep.subr.mxu0 0.0
    %1515 = vmatpush1.msra.mxu0 0.0
    %1516 = vmatprep.subr.mxu0 0.0
    %1517 = vmatpush1.msra.mxu0 0.0
    %1518 = vmatprep.subr.mxu0 0.0
    %1519 = vmatpush1.msra.mxu0 0.0
    %1520 = vmatprep.subr.mxu0 0.0
    %1521 = vmatpush1.msra.mxu0 0.0
    %1522 = vmatprep.subr.mxu0 0.0
    %1523 = vmatpush1.msra.mxu0 0.0
    %1524 = vmatprep.subr.mxu0 0.0
    %1525 = vmatpush1.msra.mxu0 0.0
    %1526 = vmatprep.subr.mxu0 0.0
    %1527 = vmatpush1.msra.mxu0 0.0
    %1528 = vmatprep.subr.mxu0 0.0
    %1529 = vmatpush1.msra.mxu0 0.0
    %1530 = vmatprep.subr.mxu0 0.0
    %1531 = vmatpush1.msra.mxu0 0.0
    %1532 = vmatprep.subr.mxu0 0.0
    %1533 = vmatpush1.msra.mxu0 0.0
    %1534 = vmatprep.subr.mxu0 0.0
    %1535 = vmatpush1.msra.mxu0 0.0
    %1536 = vmatprep.subr.mxu0 0.0
    %1537 = vmatpush1.msra.mxu0 0.0
    %1538 = vmatprep.subr.mxu0 0.0
    %1539 = vmatpush1.msra.mxu0 0.0
    %1540 = vmatprep.subr.mxu0 0.0
    %1541 = vmatpush1.msra.mxu0 0.0
    %1542 = vmatprep.subr.mxu0 0.0
    %1543 = vmatpush1.msra.mxu0 0.0
    %1544 = vmatprep.subr.mxu0 0.0
    %1545 = vmatpush1.msra.mxu0 0.0
    %1546 = vmatprep.subr.mxu0 0.0
    %1547 = vmatpush1.msra.mxu0 0.0
    %1548 = vmatprep.subr.mxu0 0.0
    %1549 = vmatpush1.msra.mxu0 0.0
    %1550 = vmatprep.subr.mxu0 0.0
    %1551 = vmatpush1.msra.mxu0 0.0
    %1552 = vmatprep.subr.mxu0 0.0
    %1553 = vmatpush1.msra.mxu0 0.0
    %1554 = vmatprep.mubr.f32.mxu0 0.0
    %v1555 = vand.u32 %v1257, 4294901760
    %v1556 = vsub.f32 %v1257, %v1555
    %v1557 = vand.u32 %v1556, 4294901760
    %1558 = vmatmul.mubr.f32.gmra.mrb[0].mxu0 %v1557
    %v1559 = vpop.f32.mrb[0].mxu0
    %v1560 = vadd.f32 %v1486, %v1559
    %v1561 = vpop.f32.mrb[0].mxu0
    %1562 = vdwg.mxu0
    %1563 = vmatprep.subr.mxu0 0.0
    %v1564 = vand.u32 %v1261, 4294901760
    %v1565 = vsub.f32 %v1261, %v1564
    %v1566 = vand.u32 %v1565, 4294901760
    %1567 = vmatpush1.msra.mxu0 %v1566
    %1568 = vmatprep.subr.mxu0 0.0
    %1569 = vmatpush1.msra.mxu0 0.0
    %1570 = vmatprep.subr.mxu0 0.0
    %1571 = vmatpush1.msra.mxu0 0.0
    %1572 = vmatprep.subr.mxu0 0.0
    %1573 = vmatpush1.msra.mxu0 0.0
    %1574 = vmatprep.subr.mxu0 0.0
    %1575 = vmatpush1.msra.mxu0 0.0
    %1576 = vmatprep.subr.mxu0 0.0
    %1577 = vmatpush1.msra.mxu0 0.0
    %1578 = vmatprep.subr.mxu0 0.0
    %1579 = vmatpush1.msra.mxu0 0.0
    %1580 = vmatprep.subr.mxu0 0.0
    %1581 = vmatpush1.msra.mxu0 0.0
    %1582 = vmatprep.subr.mxu0 0.0
    %1583 = vmatpush1.msra.mxu0 0.0
    %1584 = vmatprep.subr.mxu0 0.0
    %1585 = vmatpush1.msra.mxu0 0.0
    %1586 = vmatprep.subr.mxu0 0.0
    %1587 = vmatpush1.msra.mxu0 0.0
    %1588 = vmatprep.subr.mxu0 0.0
    %1589 = vmatpush1.msra.mxu0 0.0
    %1590 = vmatprep.subr.mxu0 0.0
    %1591 = vmatpush1.msra.mxu0 0.0
    %1592 = vmatprep.subr.mxu0 0.0
    %1593 = vmatpush1.msra.mxu0 0.0
    %1594 = vmatprep.subr.mxu0 0.0
    %1595 = vmatpush1.msra.mxu0 0.0
    %1596 = vmatprep.subr.mxu0 0.0
    %1597 = vmatpush1.msra.mxu0 0.0
    %1598 = vmatprep.subr.mxu0 0.0
    %1599 = vmatpush1.msra.mxu0 0.0
    %1600 = vmatprep.subr.mxu0 0.0
    %1601 = vmatpush1.msra.mxu0 0.0
    %1602 = vmatprep.subr.mxu0 0.0
    %1603 = vmatpush1.msra.mxu0 0.0
    %1604 = vmatprep.subr.mxu0 0.0
    %1605 = vmatpush1.msra.mxu0 0.0
    %1606 = vmatprep.subr.mxu0 0.0
    %1607 = vmatpush1.msra.mxu0 0.0
    %1608 = vmatprep.subr.mxu0 0.0
    %1609 = vmatpush1.msra.mxu0 0.0
    %1610 = vmatprep.subr.mxu0 0.0
    %1611 = vmatpush1.msra.mxu0 0.0
    %1612 = vmatprep.subr.mxu0 0.0
    %1613 = vmatpush1.msra.mxu0 0.0
    %1614 = vmatprep.subr.mxu0 0.0
    %1615 = vmatpush1.msra.mxu0 0.0
    %1616 = vmatprep.subr.mxu0 0.0
    %1617 = vmatpush1.msra.mxu0 0.0
    %1618 = vmatprep.subr.mxu0 0.0
    %1619 = vmatpush1.msra.mxu0 0.0
    %1620 = vmatprep.subr.mxu0 0.0
    %1621 = vmatpush1.msra.mxu0 0.0
    %1622 = vmatprep.subr.mxu0 0.0
    %1623 = vmatpush1.msra.mxu0 0.0
    %1624 = vmatprep.subr.mxu0 0.0
    %1625 = vmatpush1.msra.mxu0 0.0
    %1626 = vmatprep.subr.mxu0 0.0
    %1627 = vmatpush1.msra.mxu0 0.0
    %1628 = vmatprep.subr.mxu0 0.0
    %1629 = vmatpush1.msra.mxu0 0.0
    %1630 = vmatprep.mubr.f32.mxu0 0.0
    %v1631 = vand.u32 %v1257, 4294901760
    %1632 = vmatmul.mubr.f32.gmra.mrb[0].mxu0 %v1631
    %v1633 = vpop.f32.mrb[0].mxu0
    %v1634 = vadd.f32 %v1560, %v1633
    %v1635 = vpop.f32.mrb[0].mxu0
    %1636 = vdwg.mxu0
    %1637 = vmatprep.subr.mxu0 0.0
    %v1638 = vand.u32 %v1261, 4294901760
    %1639 = vmatpush1.msra.mxu0 %v1638
    %1640 = vmatprep.subr.mxu0 0.0
    %1641 = vmatpush1.msra.mxu0 0.0
    %1642 = vmatprep.subr.mxu0 0.0
    %1643 = vmatpush1.msra.mxu0 0.0
    %1644 = vmatprep.subr.mxu0 0.0
    %1645 = vmatpush1.msra.mxu0 0.0
    %1646 = vmatprep.subr.mxu0 0.0
    %1647 = vmatpush1.msra.mxu0 0.0
    %1648 = vmatprep.subr.mxu0 0.0
    %1649 = vmatpush1.msra.mxu0 0.0
    %1650 = vmatprep.subr.mxu0 0.0
    %1651 = vmatpush1.msra.mxu0 0.0
    %1652 = vmatprep.subr.mxu0 0.0
    %1653 = vmatpush1.msra.mxu0 0.0
    %1654 = vmatprep.subr.mxu0 0.0
    %1655 = vmatpush1.msra.mxu0 0.0
    %1656 = vmatprep.subr.mxu0 0.0
    %1657 = vmatpush1.msra.mxu0 0.0
    %1658 = vmatprep.subr.mxu0 0.0
    %1659 = vmatpush1.msra.mxu0 0.0
    %1660 = vmatprep.subr.mxu0 0.0
    %1661 = vmatpush1.msra.mxu0 0.0
    %1662 = vmatprep.subr.mxu0 0.0
    %1663 = vmatpush1.msra.mxu0 0.0
    %1664 = vmatprep.subr.mxu0 0.0
    %1665 = vmatpush1.msra.mxu0 0.0
    %1666 = vmatprep.subr.mxu0 0.0
    %1667 = vmatpush1.msra.mxu0 0.0
    %1668 = vmatprep.subr.mxu0 0.0
    %1669 = vmatpush1.msra.mxu0 0.0
    %1670 = vmatprep.subr.mxu0 0.0
    %1671 = vmatpush1.msra.mxu0 0.0
    %1672 = vmatprep.subr.mxu0 0.0
    %1673 = vmatpush1.msra.mxu0 0.0
    %1674 = vmatprep.subr.mxu0 0.0
    %1675 = vmatpush1.msra.mxu0 0.0
    %1676 = vmatprep.subr.mxu0 0.0
    %1677 = vmatpush1.msra.mxu0 0.0
    %1678 = vmatprep.subr.mxu0 0.0
    %1679 = vmatpush1.msra.mxu0 0.0
    %1680 = vmatprep.subr.mxu0 0.0
    %1681 = vmatpush1.msra.mxu0 0.0
    %1682 = vmatprep.subr.mxu0 0.0
    %1683 = vmatpush1.msra.mxu0 0.0
    %1684 = vmatprep.subr.mxu0 0.0
    %1685 = vmatpush1.msra.mxu0 0.0
    %1686 = vmatprep.subr.mxu0 0.0
    %1687 = vmatpush1.msra.mxu0 0.0
    %1688 = vmatprep.subr.mxu0 0.0
    %1689 = vmatpush1.msra.mxu0 0.0
    %1690 = vmatprep.subr.mxu0 0.0
    %1691 = vmatpush1.msra.mxu0 0.0
    %1692 = vmatprep.subr.mxu0 0.0
    %1693 = vmatpush1.msra.mxu0 0.0
    %1694 = vmatprep.subr.mxu0 0.0
    %1695 = vmatpush1.msra.mxu0 0.0
    %1696 = vmatprep.subr.mxu0 0.0
    %1697 = vmatpush1.msra.mxu0 0.0
    %1698 = vmatprep.subr.mxu0 0.0
    %1699 = vmatpush1.msra.mxu0 0.0
    %1700 = vmatprep.subr.mxu0 0.0
    %1701 = vmatpush1.msra.mxu0 0.0
    %1702 = vmatprep.mubr.f32.mxu0 0.0
    %v1703 = vand.u32 %v1257, 4294901760
    %1704 = vmatmul.mubr.f32.gmra.mrb[0].mxu0 %v1703
    %v1705 = vpop.f32.mrb[0].mxu0
    %v1706 = vadd.f32 %v1634, %v1705
    %v1707 = vpop.f32.mrb[0].mxu0
    %1708 = vdwg.mxu0
    %v1710 = vsel %vm1255, %v1254, 0
    %1712 = vmatprep.subr.mxu0 0.0
    %v1713 = vand.u32 %v1261, 4294901760
    %1714 = vmatpush1.msra.mxu0 %v1713
    %1715 = vmatprep.subr.mxu0 0.0
    %1716 = vmatpush1.msra.mxu0 0.0
    %1717 = vmatprep.subr.mxu0 0.0
    %1718 = vmatpush1.msra.mxu0 0.0
    %1719 = vmatprep.subr.mxu0 0.0
    %1720 = vmatpush1.msra.mxu0 0.0
    %1721 = vmatprep.subr.mxu0 0.0
    %1722 = vmatpush1.msra.mxu0 0.0
    %1723 = vmatprep.subr.mxu0 0.0
    %1724 = vmatpush1.msra.mxu0 0.0
    %1725 = vmatprep.subr.mxu0 0.0
    %1726 = vmatpush1.msra.mxu0 0.0
    %1727 = vmatprep.subr.mxu0 0.0
    %1728 = vmatpush1.msra.mxu0 0.0
    %1729 = vmatprep.subr.mxu0 0.0
    %1730 = vmatpush1.msra.mxu0 0.0
    %1731 = vmatprep.subr.mxu0 0.0
    %1732 = vmatpush1.msra.mxu0 0.0
    %1733 = vmatprep.subr.mxu0 0.0
    %1734 = vmatpush1.msra.mxu0 0.0
    %1735 = vmatprep.subr.mxu0 0.0
    %1736 = vmatpush1.msra.mxu0 0.0
    %1737 = vmatprep.subr.mxu0 0.0
    %1738 = vmatpush1.msra.mxu0 0.0
    %1739 = vmatprep.subr.mxu0 0.0
    %1740 = vmatpush1.msra.mxu0 0.0
    %1741 = vmatprep.subr.mxu0 0.0
    %1742 = vmatpush1.msra.mxu0 0.0
    %1743 = vmatprep.subr.mxu0 0.0
    %1744 = vmatpush1.msra.mxu0 0.0
    %1745 = vmatprep.subr.mxu0 0.0
    %1746 = vmatpush1.msra.mxu0 0.0
    %1747 = vmatprep.subr.mxu0 0.0
    %1748 = vmatpush1.msra.mxu0 0.0
    %1749 = vmatprep.subr.mxu0 0.0
    %1750 = vmatpush1.msra.mxu0 0.0
    %1751 = vmatprep.subr.mxu0 0.0
    %1752 = vmatpush1.msra.mxu0 0.0
    %1753 = vmatprep.subr.mxu0 0.0
    %1754 = vmatpush1.msra.mxu0 0.0
    %1755 = vmatprep.subr.mxu0 0.0
    %1756 = vmatpush1.msra.mxu0 0.0
    %1757 = vmatprep.subr.mxu0 0.0
    %1758 = vmatpush1.msra.mxu0 0.0
    %1759 = vmatprep.subr.mxu0 0.0
    %1760 = vmatpush1.msra.mxu0 0.0
    %1761 = vmatprep.subr.mxu0 0.0
    %1762 = vmatpush1.msra.mxu0 0.0
    %1763 = vmatprep.subr.mxu0 0.0
    %1764 = vmatpush1.msra.mxu0 0.0
    %1765 = vmatprep.subr.mxu0 0.0
    %1766 = vmatpush1.msra.mxu0 0.0
    %1767 = vmatprep.subr.mxu0 0.0
    %1768 = vmatpush1.msra.mxu0 0.0
    %1769 = vmatprep.subr.mxu0 0.0
    %1770 = vmatpush1.msra.mxu0 0.0
    %1771 = vmatprep.subr.mxu0 0.0
    %1772 = vmatpush1.msra.mxu0 0.0
    %1773 = vmatprep.subr.mxu0 0.0
    %1774 = vmatpush1.msra.mxu0 0.0
    %1775 = vmatprep.subr.mxu0 0.0
    %1776 = vmatpush1.msra.mxu0 0.0
    %1777 = vmatprep.mubr.f32.mxu0 0.0
    %v1778 = vand.u32 %v1710, 4294901760
    %v1779 = vsub.f32 %v1710, %v1778
    %v1780 = vand.u32 %v1779, 4294901760
    %v1781 = vsub.f32 %v1779, %v1780
    %v1782 = vand.u32 %v1781, 4294901760
    %1783 = vmatmul.mubr.f32.gmra.mrb[0].mxu0 %v1782
    %v1784 = vpop.f32.mrb[0].mxu0
    %v1785 = vadd.f32 0.0, %v1784
    %v1786 = vpop.f32.mrb[0].mxu0
    %1787 = vdwg.mxu0
    %1788 = vmatprep.subr.mxu0 0.0
    %v1789 = vand.u32 %v1261, 4294901760
    %v1790 = vsub.f32 %v1261, %v1789
    %v1791 = vand.u32 %v1790, 4294901760
    %v1792 = vsub.f32 %v1790, %v1791
    %v1793 = vand.u32 %v1792, 4294901760
    %1794 = vmatpush1.msra.mxu0 %v1793
    %1795 = vmatprep.subr.mxu0 0.0
    %1796 = vmatpush1.msra.mxu0 0.0
    %1797 = vmatprep.subr.mxu0 0.0
    %1798 = vmatpush1.msra.mxu0 0.0
    %1799 = vmatprep.subr.mxu0 0.0
    %1800 = vmatpush1.msra.mxu0 0.0
    %1801 = vmatprep.subr.mxu0 0.0
    %1802 = vmatpush1.msra.mxu0 0.0
    %1803 = vmatprep.subr.mxu0 0.0
    %1804 = vmatpush1.msra.mxu0 0.0
    %1805 = vmatprep.subr.mxu0 0.0
    %1806 = vmatpush1.msra.mxu0 0.0
    %1807 = vmatprep.subr.mxu0 0.0
    %1808 = vmatpush1.msra.mxu0 0.0
    %1809 = vmatprep.subr.mxu0 0.0
    %1810 = vmatpush1.msra.mxu0 0.0
    %1811 = vmatprep.subr.mxu0 0.0
    %1812 = vmatpush1.msra.mxu0 0.0
    %1813 = vmatprep.subr.mxu0 0.0
    %1814 = vmatpush1.msra.mxu0 0.0
    %1815 = vmatprep.subr.mxu0 0.0
    %1816 = vmatpush1.msra.mxu0 0.0
    %1817 = vmatprep.subr.mxu0 0.0
    %1818 = vmatpush1.msra.mxu0 0.0
    %1819 = vmatprep.subr.mxu0 0.0
    %1820 = vmatpush1.msra.mxu0 0.0
    %1821 = vmatprep.subr.mxu0 0.0
    %1822 = vmatpush1.msra.mxu0 0.0
    %1823 = vmatprep.subr.mxu0 0.0
    %1824 = vmatpush1.msra.mxu0 0.0
    %1825 = vmatprep.subr.mxu0 0.0
    %1826 = vmatpush1.msra.mxu0 0.0
    %1827 = vmatprep.subr.mxu0 0.0
    %1828 = vmatpush1.msra.mxu0 0.0
    %1829 = vmatprep.subr.mxu0 0.0
    %1830 = vmatpush1.msra.mxu0 0.0
    %1831 = vmatprep.subr.mxu0 0.0
    %1832 = vmatpush1.msra.mxu0 0.0
    %1833 = vmatprep.subr.mxu0 0.0
    %1834 = vmatpush1.msra.mxu0 0.0
    %1835 = vmatprep.subr.mxu0 0.0
    %1836 = vmatpush1.msra.mxu0 0.0
    %1837 = vmatprep.subr.mxu0 0.0
    %1838 = vmatpush1.msra.mxu0 0.0
    %1839 = vmatprep.subr.mxu0 0.0
    %1840 = vmatpush1.msra.mxu0 0.0
    %1841 = vmatprep.subr.mxu0 0.0
    %1842 = vmatpush1.msra.mxu0 0.0
    %1843 = vmatprep.subr.mxu0 0.0
    %1844 = vmatpush1.msra.mxu0 0.0
    %1845 = vmatprep.subr.mxu0 0.0
    %1846 = vmatpush1.msra.mxu0 0.0
    %1847 = vmatprep.subr.mxu0 0.0
    %1848 = vmatpush1.msra.mxu0 0.0
    %1849 = vmatprep.subr.mxu0 0.0
    %1850 = vmatpush1.msra.mxu0 0.0
    %1851 = vmatprep.subr.mxu0 0.0
    %1852 = vmatpush1.msra.mxu0 0.0
    %1853 = vmatprep.subr.mxu0 0.0
    %1854 = vmatpush1.msra.mxu0 0.0
    %1855 = vmatprep.subr.mxu0 0.0
    %1856 = vmatpush1.msra.mxu0 0.0
    %1857 = vmatprep.mubr.f32.mxu0 0.0
    %v1858 = vand.u32 %v1710, 4294901760
    %1859 = vmatmul.mubr.f32.gmra.mrb[0].mxu0 %v1858
    %v1860 = vpop.f32.mrb[0].mxu0
    %v1861 = vadd.f32 %v1785, %v1860
    %v1862 = vpop.f32.mrb[0].mxu0
    %1863 = vdwg.mxu0
    %1864 = vmatprep.subr.mxu0 0.0
    %v1865 = vand.u32 %v1261, 4294901760
    %v1866 = vsub.f32 %v1261, %v1865
    %1867 = vmatpush1.msra.mxu0 %v1866
    %1868 = vmatprep.subr.mxu0 0.0
    %1869 = vmatpush1.msra.mxu0 0.0
    %1870 = vmatprep.subr.mxu0 0.0
    %1871 = vmatpush1.msra.mxu0 0.0
    %1872 = vmatprep.subr.mxu0 0.0
    %1873 = vmatpush1.msra.mxu0 0.0
    %1874 = vmatprep.subr.mxu0 0.0
    %1875 = vmatpush1.msra.mxu0 0.0
    %1876 = vmatprep.subr.mxu0 0.0
    %1877 = vmatpush1.msra.mxu0 0.0
    %1878 = vmatprep.subr.mxu0 0.0
    %1879 = vmatpush1.msra.mxu0 0.0
    %1880 = vmatprep.subr.mxu0 0.0
    %1881 = vmatpush1.msra.mxu0 0.0
    %1882 = vmatprep.subr.mxu0 0.0
    %1883 = vmatpush1.msra.mxu0 0.0
    %1884 = vmatprep.subr.mxu0 0.0
    %1885 = vmatpush1.msra.mxu0 0.0
    %1886 = vmatprep.subr.mxu0 0.0
    %1887 = vmatpush1.msra.mxu0 0.0
    %1888 = vmatprep.subr.mxu0 0.0
    %1889 = vmatpush1.msra.mxu0 0.0
    %1890 = vmatprep.subr.mxu0 0.0
    %1891 = vmatpush1.msra.mxu0 0.0
    %1892 = vmatprep.subr.mxu0 0.0
    %1893 = vmatpush1.msra.mxu0 0.0
    %1894 = vmatprep.subr.mxu0 0.0
    %1895 = vmatpush1.msra.mxu0 0.0
    %1896 = vmatprep.subr.mxu0 0.0
    %1897 = vmatpush1.msra.mxu0 0.0
    %1898 = vmatprep.subr.mxu0 0.0
    %1899 = vmatpush1.msra.mxu0 0.0
    %1900 = vmatprep.subr.mxu0 0.0
    %1901 = vmatpush1.msra.mxu0 0.0
    %1902 = vmatprep.subr.mxu0 0.0
    %1903 = vmatpush1.msra.mxu0 0.0
    %1904 = vmatprep.subr.mxu0 0.0
    %1905 = vmatpush1.msra.mxu0 0.0
    %1906 = vmatprep.subr.mxu0 0.0
    %1907 = vmatpush1.msra.mxu0 0.0
    %1908 = vmatprep.subr.mxu0 0.0
    %1909 = vmatpush1.msra.mxu0 0.0
    %1910 = vmatprep.subr.mxu0 0.0
    %1911 = vmatpush1.msra.mxu0 0.0
    %1912 = vmatprep.subr.mxu0 0.0
    %1913 = vmatpush1.msra.mxu0 0.0
    %1914 = vmatprep.subr.mxu0 0.0
    %1915 = vmatpush1.msra.mxu0 0.0
    %1916 = vmatprep.subr.mxu0 0.0
    %1917 = vmatpush1.msra.mxu0 0.0
    %1918 = vmatprep.subr.mxu0 0.0
    %1919 = vmatpush1.msra.mxu0 0.0
    %1920 = vmatprep.subr.mxu0 0.0
    %1921 = vmatpush1.msra.mxu0 0.0
    %1922 = vmatprep.subr.mxu0 0.0
    %1923 = vmatpush1.msra.mxu0 0.0
    %1924 = vmatprep.subr.mxu0 0.0
    %1925 = vmatpush1.msra.mxu0 0.0
    %1926 = vmatprep.subr.mxu0 0.0
    %1927 = vmatpush1.msra.mxu0 0.0
    %1928 = vmatprep.subr.mxu0 0.0
    %1929 = vmatpush1.msra.mxu0 0.0
    %1930 = vmatprep.mubr.f32.mxu0 0.0
    %v1931 = vand.u32 %v1710, 4294901760
    %v1932 = vsub.f32 %v1710, %v1931
    %1933 = vmatmul.mubr.f32.gmra.mrb[0].mxu0 %v1932
    %v1934 = vpop.f32.mrb[0].mxu0
    %v1935 = vadd.f32 %v1861, %v1934
    %v1936 = vpop.f32.mrb[0].mxu0
    %1937 = vdwg.mxu0
    %1938 = vmatprep.subr.mxu0 0.0
    %v1939 = vand.u32 %v1261, 4294901760
    %1940 = vmatpush1.msra.mxu0 %v1939
    %1941 = vmatprep.subr.mxu0 0.0
    %1942 = vmatpush1.msra.mxu0 0.0
    %1943 = vmatprep.subr.mxu0 0.0
    %1944 = vmatpush1.msra.mxu0 0.0
    %1945 = vmatprep.subr.mxu0 0.0
    %1946 = vmatpush1.msra.mxu0 0.0
    %1947 = vmatprep.subr.mxu0 0.0
    %1948 = vmatpush1.msra.mxu0 0.0
    %1949 = vmatprep.subr.mxu0 0.0
    %1950 = vmatpush1.msra.mxu0 0.0
    %1951 = vmatprep.subr.mxu0 0.0
    %1952 = vmatpush1.msra.mxu0 0.0
    %1953 = vmatprep.subr.mxu0 0.0
    %1954 = vmatpush1.msra.mxu0 0.0
    %1955 = vmatprep.subr.mxu0 0.0
    %1956 = vmatpush1.msra.mxu0 0.0
    %1957 = vmatprep.subr.mxu0 0.0
    %1958 = vmatpush1.msra.mxu0 0.0
    %1959 = vmatprep.subr.mxu0 0.0
    %1960 = vmatpush1.msra.mxu0 0.0
    %1961 = vmatprep.subr.mxu0 0.0
    %1962 = vmatpush1.msra.mxu0 0.0
    %1963 = vmatprep.subr.mxu0 0.0
    %1964 = vmatpush1.msra.mxu0 0.0
    %1965 = vmatprep.subr.mxu0 0.0
    %1966 = vmatpush1.msra.mxu0 0.0
    %1967 = vmatprep.subr.mxu0 0.0
    %1968 = vmatpush1.msra.mxu0 0.0
    %1969 = vmatprep.subr.mxu0 0.0
    %1970 = vmatpush1.msra.mxu0 0.0
    %1971 = vmatprep.subr.mxu0 0.0
    %1972 = vmatpush1.msra.mxu0 0.0
    %1973 = vmatprep.subr.mxu0 0.0
    %1974 = vmatpush1.msra.mxu0 0.0
    %1975 = vmatprep.subr.mxu0 0.0
    %1976 = vmatpush1.msra.mxu0 0.0
    %1977 = vmatprep.subr.mxu0 0.0
    %1978 = vmatpush1.msra.mxu0 0.0
    %1979 = vmatprep.subr.mxu0 0.0
    %1980 = vmatpush1.msra.mxu0 0.0
    %1981 = vmatprep.subr.mxu0 0.0
    %1982 = vmatpush1.msra.mxu0 0.0
    %1983 = vmatprep.subr.mxu0 0.0
    %1984 = vmatpush1.msra.mxu0 0.0
    %1985 = vmatprep.subr.mxu0 0.0
    %1986 = vmatpush1.msra.mxu0 0.0
    %1987 = vmatprep.subr.mxu0 0.0
    %1988 = vmatpush1.msra.mxu0 0.0
    %1989 = vmatprep.subr.mxu0 0.0
    %1990 = vmatpush1.msra.mxu0 0.0
    %1991 = vmatprep.subr.mxu0 0.0
    %1992 = vmatpush1.msra.mxu0 0.0
    %1993 = vmatprep.subr.mxu0 0.0
    %1994 = vmatpush1.msra.mxu0 0.0
    %1995 = vmatprep.subr.mxu0 0.0
    %1996 = vmatpush1.msra.mxu0 0.0
    %1997 = vmatprep.subr.mxu0 0.0
    %1998 = vmatpush1.msra.mxu0 0.0
    %1999 = vmatprep.subr.mxu0 0.0
    %2000 = vmatpush1.msra.mxu0 0.0
    %2001 = vmatprep.subr.mxu0 0.0
    %2002 = vmatpush1.msra.mxu0 0.0
    %2003 = vmatprep.mubr.f32.mxu0 0.0
    %v2004 = vand.u32 %v1710, 4294901760
    %v2005 = vsub.f32 %v1710, %v2004
    %v2006 = vand.u32 %v2005, 4294901760
    %2007 = vmatmul.mubr.f32.gmra.mrb[0].mxu0 %v2006
    %v2008 = vpop.f32.mrb[0].mxu0
    %v2009 = vadd.f32 %v1935, %v2008
    %v2010 = vpop.f32.mrb[0].mxu0
    %2011 = vdwg.mxu0
    %2012 = vmatprep.subr.mxu0 0.0
    %v2013 = vand.u32 %v1261, 4294901760
    %v2014 = vsub.f32 %v1261, %v2013
    %v2015 = vand.u32 %v2014, 4294901760
    %2016 = vmatpush1.msra.mxu0 %v2015
    %2017 = vmatprep.subr.mxu0 0.0
    %2018 = vmatpush1.msra.mxu0 0.0
    %2019 = vmatprep.subr.mxu0 0.0
    %2020 = vmatpush1.msra.mxu0 0.0
    %2021 = vmatprep.subr.mxu0 0.0
    %2022 = vmatpush1.msra.mxu0 0.0
    %2023 = vmatprep.subr.mxu0 0.0
    %2024 = vmatpush1.msra.mxu0 0.0
    %2025 = vmatprep.subr.mxu0 0.0
    %2026 = vmatpush1.msra.mxu0 0.0
    %2027 = vmatprep.subr.mxu0 0.0
    %2028 = vmatpush1.msra.mxu0 0.0
    %2029 = vmatprep.subr.mxu0 0.0
    %2030 = vmatpush1.msra.mxu0 0.0
    %2031 = vmatprep.subr.mxu0 0.0
    %2032 = vmatpush1.msra.mxu0 0.0
    %2033 = vmatprep.subr.mxu0 0.0
    %2034 = vmatpush1.msra.mxu0 0.0
    %2035 = vmatprep.subr.mxu0 0.0
    %2036 = vmatpush1.msra.mxu0 0.0
    %2037 = vmatprep.subr.mxu0 0.0
    %2038 = vmatpush1.msra.mxu0 0.0
    %2039 = vmatprep.subr.mxu0 0.0
    %2040 = vmatpush1.msra.mxu0 0.0
    %2041 = vmatprep.subr.mxu0 0.0
    %2042 = vmatpush1.msra.mxu0 0.0
    %2043 = vmatprep.subr.mxu0 0.0
    %2044 = vmatpush1.msra.mxu0 0.0
    %2045 = vmatprep.subr.mxu0 0.0
    %2046 = vmatpush1.msra.mxu0 0.0
    %2047 = vmatprep.subr.mxu0 0.0
    %2048 = vmatpush1.msra.mxu0 0.0
    %2049 = vmatprep.subr.mxu0 0.0
    %2050 = vmatpush1.msra.mxu0 0.0
    %2051 = vmatprep.subr.mxu0 0.0
    %2052 = vmatpush1.msra.mxu0 0.0
    %2053 = vmatprep.subr.mxu0 0.0
    %2054 = vmatpush1.msra.mxu0 0.0
    %2055 = vmatprep.subr.mxu0 0.0
    %2056 = vmatpush1.msra.mxu0 0.0
    %2057 = vmatprep.subr.mxu0 0.0
    %2058 = vmatpush1.msra.mxu0 0.0
    %2059 = vmatprep.subr.mxu0 0.0
    %2060 = vmatpush1.msra.mxu0 0.0
    %2061 = vmatprep.subr.mxu0 0.0
    %2062 = vmatpush1.msra.mxu0 0.0
    %2063 = vmatprep.subr.mxu0 0.0
    %2064 = vmatpush1.msra.mxu0 0.0
    %2065 = vmatprep.subr.mxu0 0.0
    %2066 = vmatpush1.msra.mxu0 0.0
    %2067 = vmatprep.subr.mxu0 0.0
    %2068 = vmatpush1.msra.mxu0 0.0
    %2069 = vmatprep.subr.mxu0 0.0
    %2070 = vmatpush1.msra.mxu0 0.0
    %2071 = vmatprep.subr.mxu0 0.0
    %2072 = vmatpush1.msra.mxu0 0.0
    %2073 = vmatprep.subr.mxu0 0.0
    %2074 = vmatpush1.msra.mxu0 0.0
    %2075 = vmatprep.subr.mxu0 0.0
    %2076 = vmatpush1.msra.mxu0 0.0
    %2077 = vmatprep.subr.mxu0 0.0
    %2078 = vmatpush1.msra.mxu0 0.0
    %2079 = vmatprep.mubr.f32.mxu0 0.0
    %v2080 = vand.u32 %v1710, 4294901760
    %2081 = vmatmul.mubr.f32.gmra.mrb[0].mxu0 %v2080
    %v2082 = vpop.f32.mrb[0].mxu0
    %v2083 = vadd.f32 %v2009, %v2082
    %v2084 = vpop.f32.mrb[0].mxu0
    %2085 = vdwg.mxu0
    %2086 = vmatprep.subr.mxu0 0.0
    %v2087 = vand.u32 %v1261, 4294901760
    %2088 = vmatpush1.msra.mxu0 %v2087
    %2089 = vmatprep.subr.mxu0 0.0
    %2090 = vmatpush1.msra.mxu0 0.0
    %2091 = vmatprep.subr.mxu0 0.0
    %2092 = vmatpush1.msra.mxu0 0.0
    %2093 = vmatprep.subr.mxu0 0.0
    %2094 = vmatpush1.msra.mxu0 0.0
    %2095 = vmatprep.subr.mxu0 0.0
    %2096 = vmatpush1.msra.mxu0 0.0
    %2097 = vmatprep.subr.mxu0 0.0
    %2098 = vmatpush1.msra.mxu0 0.0
    %2099 = vmatprep.subr.mxu0 0.0
    %2100 = vmatpush1.msra.mxu0 0.0
    %2101 = vmatprep.subr.mxu0 0.0
    %2102 = vmatpush1.msra.mxu0 0.0
    %2103 = vmatprep.subr.mxu0 0.0
    %2104 = vmatpush1.msra.mxu0 0.0
    %2105 = vmatprep.subr.mxu0 0.0
    %2106 = vmatpush1.msra.mxu0 0.0
    %2107 = vmatprep.subr.mxu0 0.0
    %2108 = vmatpush1.msra.mxu0 0.0
    %2109 = vmatprep.subr.mxu0 0.0
    %2110 = vmatpush1.msra.mxu0 0.0
    %2111 = vmatprep.subr.mxu0 0.0
    %2112 = vmatpush1.msra.mxu0 0.0
    %2113 = vmatprep.subr.mxu0 0.0
    %2114 = vmatpush1.msra.mxu0 0.0
    %2115 = vmatprep.subr.mxu0 0.0
    %2116 = vmatpush1.msra.mxu0 0.0
    %2117 = vmatprep.subr.mxu0 0.0
    %2118 = vmatpush1.msra.mxu0 0.0
    %2119 = vmatprep.subr.mxu0 0.0
    %2120 = vmatpush1.msra.mxu0 0.0
    %2121 = vmatprep.subr.mxu0 0.0
    %2122 = vmatpush1.msra.mxu0 0.0
    %2123 = vmatprep.subr.mxu0 0.0
    %2124 = vmatpush1.msra.mxu0 0.0
    %2125 = vmatprep.subr.mxu0 0.0
    %2126 = vmatpush1.msra.mxu0 0.0
    %2127 = vmatprep.subr.mxu0 0.0
    %2128 = vmatpush1.msra.mxu0 0.0
    %2129 = vmatprep.subr.mxu0 0.0
    %2130 = vmatpush1.msra.mxu0 0.0
    %2131 = vmatprep.subr.mxu0 0.0
    %2132 = vmatpush1.msra.mxu0 0.0
    %2133 = vmatprep.subr.mxu0 0.0
    %2134 = vmatpush1.msra.mxu0 0.0
    %2135 = vmatprep.subr.mxu0 0.0
    %2136 = vmatpush1.msra.mxu0 0.0
    %2137 = vmatprep.subr.mxu0 0.0
    %2138 = vmatpush1.msra.mxu0 0.0
    %2139 = vmatprep.subr.mxu0 0.0
    %2140 = vmatpush1.msra.mxu0 0.0
    %2141 = vmatprep.subr.mxu0 0.0
    %2142 = vmatpush1.msra.mxu0 0.0
    %2143 = vmatprep.subr.mxu0 0.0
    %2144 = vmatpush1.msra.mxu0 0.0
    %2145 = vmatprep.subr.mxu0 0.0
    %2146 = vmatpush1.msra.mxu0 0.0
    %2147 = vmatprep.subr.mxu0 0.0
    %2148 = vmatpush1.msra.mxu0 0.0
    %2149 = vmatprep.subr.mxu0 0.0
    %2150 = vmatpush1.msra.mxu0 0.0
    %2151 = vmatprep.mubr.f32.mxu0 0.0
    %v2152 = vand.u32 %v1710, 4294901760
    %2153 = vmatmul.mubr.f32.gmra.mrb[0].mxu0 %v2152
    %v2154 = vpop.f32.mrb[0].mxu0
    %v2155 = vadd.f32 %v2083, %v2154
    %v2156 = vpop.f32.mrb[0].mxu0
    %2157 = vdwg.mxu0
    %v2158 = vlaneseq
    %v2159 = vshrl.u32 %v2158, 7
    %v2160 = vsub.s32 0, %v2159
    %v2161 = vrot.slane %v1706, %v2160
    %v2162 = vsub.f32 %v237, %v2161
    %v2163 = vsub.f32 %v238, %v2161
    %v2164 = vsub.f32 %v239, %v2161
    %v2165 = vsub.f32 %v240, %v2161
    %v2166 = vlaneseq
    %v2167 = vshrl.u32 %v2166, 7
    %v2168 = vsub.s32 0, %v2167
    %v2169 = vrot.slane %v2155, %v2168
    %v2170 = vmul.f32 %v2162, %v2169
    %v2171 = vmul.f32 %v2163, %v2169
    %v2172 = vmul.f32 %v2164, %v2169
    %v2173 = vmul.f32 %v2165, %v2169
    %2174 = vset.pattern.permute.xlu0 17
    %2175 = vperm.xlu0 %2174, %v75
    %v2176 = vpop.permute.xlu0 %2175
    %2178 = vset.pattern.permute.xlu0 17
    %2179 = vperm.xlu0 %2178, %v76
    %v2180 = vpop.permute.xlu0 %2179
    %2182 = vset.pattern.permute.xlu0 17
    %2183 = vperm.xlu0 %2182, %v77
    %v2184 = vpop.permute.xlu0 %2183
    %2186 = vset.pattern.permute.xlu0 17
    %2187 = vperm.xlu0 %2186, %v78
    %v2188 = vpop.permute.xlu0 %2187
    %v2190 = vmul.f32 %v2176, %v2170
    %v2191 = vmul.f32 %v2180, %v2171
    %v2192 = vmul.f32 %v2184, %v2172
    %v2193 = vmul.f32 %v2188, %v2173
    %2194 = vset.pattern.permute.xlu0 18
    %2195 = vperm.xlu0 %2194, %v75
    %v2196 = vpop.permute.xlu0 %2195
    %2198 = vset.pattern.permute.xlu0 18
    %2199 = vperm.xlu0 %2198, %v76
    %v2200 = vpop.permute.xlu0 %2199
    %2202 = vset.pattern.permute.xlu0 18
    %2203 = vperm.xlu0 %2202, %v77
    %v2204 = vpop.permute.xlu0 %2203
    %2206 = vset.pattern.permute.xlu0 18
    %2207 = vperm.xlu0 %2206, %v78
    %v2208 = vpop.permute.xlu0 %2207
    %v2210 = vadd.f32 %v2190, %v2196
    %v2211 = vadd.f32 %v2191, %v2200
    %v2212 = vadd.f32 %v2192, %v2204
    %v2213 = vadd.f32 %v2193, %v2208
    %2214 = vst.msk [vmem:[#allocation2 + $0x8] sm:$0xff] %vm241, %v2210
    %2215 = vst.msk [vmem:[#allocation2 + $0x18] sm:$0xff] %vm241, %v2211
    %2216 = vst.msk [vmem:[#allocation2 + $0x28] sm:$0xff] %vm241, %v2212
    %2217 = vst.msk [vmem:[#allocation2 + $0x38] sm:$0xff] %vm241, %v2213
    %vm2218 = vcmp.gt.f32.partialorder %v59, 0.5
    %v2219 = vld [vmem:[#allocation2] sm:$0xff]
    %v2220 = vld [vmem:[#allocation2 + $0x8] sm:$0xff]
    %v2221 = vld [vmem:[#allocation2 + $0x10] sm:$0xff]
    %v2222 = vld [vmem:[#allocation2 + $0x18] sm:$0xff]
    %v2223 = vld [vmem:[#allocation2 + $0x20] sm:$0xff]
    %v2224 = vld [vmem:[#allocation2 + $0x28] sm:$0xff]
    %v2225 = vld [vmem:[#allocation2 + $0x30] sm:$0xff]
    %v2226 = vld [vmem:[#allocation2 + $0x38] sm:$0xff]
    %v2227 = vsel %vm2218, 1, 0
    %v2228 = vlaneseq
    %v2229 = vshrl.u32 %v2228, 7
    %v2230 = vsub.s32 0, %v2229
    %v2231 = vrot.slane %v2227, %v2230
    %vm2232 = vcmp.eq.s32.totalorder %v2231, 1
    %2241 = vrot.lane.b32.xlu0 %v2219, 1
    %v2242 = vpop.permute.xlu0 %2241
    %2243 = vrot.lane.b32.xlu0 %v2220, 1
    %v2244 = vpop.permute.xlu0 %2243
    %2245 = vrot.lane.b32.xlu0 %v2221, 1
    %v2246 = vpop.permute.xlu0 %2245
    %2247 = vrot.lane.b32.xlu0 %v2222, 1
    %v2248 = vpop.permute.xlu0 %2247
    %2249 = vrot.lane.b32.xlu0 %v2223, 1
    %v2250 = vpop.permute.xlu0 %2249
    %2251 = vrot.lane.b32.xlu0 %v2224, 1
    %v2252 = vpop.permute.xlu0 %2251
    %2253 = vrot.lane.b32.xlu0 %v2225, 1
    %v2254 = vpop.permute.xlu0 %2253
    %2255 = vrot.lane.b32.xlu0 %v2226, 1
    %v2256 = vpop.permute.xlu0 %2255
    %vm2257 = vcmask 7168
    %v2258 = vsel %vm2257, %v2242, %v2244
    %v2259 = vsel %vm2257, %v2246, %v2248
    %v2260 = vsel %vm2257, %v2250, %v2252
    %v2261 = vsel %vm2257, %v2254, %v2256
    %v2266 = vsel %vm2232, %v2258, 0.0
    %v2267 = vsel %vm2232, %v2259, 0.0
    %v2268 = vsel %vm2232, %v2260, 0.0
    %v2269 = vsel %vm2232, %v2261, 0.0
    %v2270 = vlaneseq
    %v2271 = vshrl.u32 %v2270, 7
    %v2272 = vsub.s32 1, %v2271
    %v2273 = vrot.slane %v2227, %v2272
    %vm2274 = vcmp.eq.s32.totalorder %v2273, 1
    %2275 = vrot.lane.b32.xlu0 %v2220, 127
    %v2276 = vpop.permute.xlu0 %2275
    %2277 = vrot.lane.b32.xlu0 %v2222, 127
    %v2278 = vpop.permute.xlu0 %2277
    %2279 = vrot.lane.b32.xlu0 %v2224, 127
    %v2280 = vpop.permute.xlu0 %2279
    %2281 = vrot.lane.b32.xlu0 %v2226, 127
    %v2282 = vpop.permute.xlu0 %2281
    %v2287 = vsel %vm2274, %v2276, 0.0
    %v2288 = vsel %vm2274, %v2278, 0.0
    %v2289 = vsel %vm2274, %v2280, 0.0
    %v2290 = vsel %vm2274, %v2282, 0.0
    %2291 = vset.pattern.permute.xlu0 19
    %2292 = vperm.xlu0 %2291, %v75
    %v2293 = vpop.permute.xlu0 %2292
    %2295 = vset.pattern.permute.xlu0 19
    %2296 = vperm.xlu0 %2295, %v76
    %v2297 = vpop.permute.xlu0 %2296
    %2299 = vset.pattern.permute.xlu0 19
    %2300 = vperm.xlu0 %2299, %v77
    %v2301 = vpop.permute.xlu0 %2300
    %2303 = vset.pattern.permute.xlu0 19
    %2304 = vperm.xlu0 %2303, %v78
    %v2305 = vpop.permute.xlu0 %2304
    %v2307 = vmul.f32 %v2293, %v2266
    %v2308 = vmul.f32 %v2297, %v2267
    %v2309 = vmul.f32 %v2301, %v2268
    %v2310 = vmul.f32 %v2305, %v2269
    %2311 = vset.pattern.permute.xlu0 20
    %2312 = vperm.xlu0 %2311, %v75
    %v2313 = vpop.permute.xlu0 %2312
    %2315 = vset.pattern.permute.xlu0 20
    %2316 = vperm.xlu0 %2315, %v76
    %v2317 = vpop.permute.xlu0 %2316
    %2319 = vset.pattern.permute.xlu0 20
    %2320 = vperm.xlu0 %2319, %v77
    %v2321 = vpop.permute.xlu0 %2320
    %2323 = vset.pattern.permute.xlu0 20
    %2324 = vperm.xlu0 %2323, %v78
    %v2325 = vpop.permute.xlu0 %2324
    %v2327 = vmul.f32 %v2313, %v2210
    %v2328 = vmul.f32 %v2317, %v2211
    %v2329 = vmul.f32 %v2321, %v2212
    %v2330 = vmul.f32 %v2325, %v2213
    %v2331 = vadd.f32 %v2307, %v2327
    %v2332 = vadd.f32 %v2308, %v2328
    %v2333 = vadd.f32 %v2309, %v2329
    %v2334 = vadd.f32 %v2310, %v2330
    %2335 = vset.pattern.permute.xlu0 21
    %2336 = vperm.xlu0 %2335, %v75
    %v2337 = vpop.permute.xlu0 %2336
    %2339 = vset.pattern.permute.xlu0 21
    %2340 = vperm.xlu0 %2339, %v76
    %v2341 = vpop.permute.xlu0 %2340
    %2343 = vset.pattern.permute.xlu0 21
    %2344 = vperm.xlu0 %2343, %v77
    %v2345 = vpop.permute.xlu0 %2344
    %2347 = vset.pattern.permute.xlu0 21
    %2348 = vperm.xlu0 %2347, %v78
    %v2349 = vpop.permute.xlu0 %2348
    %v2351 = vmul.f32 %v2337, %v2287
    %v2352 = vmul.f32 %v2341, %v2288
    %v2353 = vmul.f32 %v2345, %v2289
    %v2354 = vmul.f32 %v2349, %v2290
    %v2355 = vadd.f32 %v2331, %v2351
    %v2356 = vadd.f32 %v2332, %v2352
    %v2357 = vadd.f32 %v2333, %v2353
    %v2358 = vadd.f32 %v2334, %v2354
    %2359 = vset.pattern.permute.xlu0 22
    %2360 = vperm.xlu0 %2359, %v75
    %v2361 = vpop.permute.xlu0 %2360
    %2363 = vset.pattern.permute.xlu0 22
    %2364 = vperm.xlu0 %2363, %v76
    %v2365 = vpop.permute.xlu0 %2364
    %2367 = vset.pattern.permute.xlu0 22
    %2368 = vperm.xlu0 %2367, %v77
    %v2369 = vpop.permute.xlu0 %2368
    %2371 = vset.pattern.permute.xlu0 22
    %2372 = vperm.xlu0 %2371, %v78
    %v2373 = vpop.permute.xlu0 %2372
    %v2375 = vadd.f32 %v2355, %v2361
    %v2376 = vadd.f32 %v2356, %v2365
    %v2377 = vadd.f32 %v2357, %v2369
    %v2378 = vadd.f32 %v2358, %v2373
    %v2379 = vmax.f32 %v2375, 0.0
    %v2380 = vmax.f32 %v2376, 0.0
    %v2381 = vmax.f32 %v2377, 0.0
    %v2382 = vmax.f32 %v2378, 0.0
    %v2383 = vmin.f32 %v2375, 0.0
    %v2384 = vmin.f32 %v2376, 0.0
    %v2385 = vmin.f32 %v2377, 0.0
    %v2386 = vmin.f32 %v2378, 0.0
    %v2387 = vstv %s106
    %v2388 = vmul.f32 %v2387, %v2383
    %v2389 = vmul.f32 %v2387, %v2384
    %v2390 = vmul.f32 %v2387, %v2385
    %v2391 = vmul.f32 %v2387, %v2386
    %v2392 = vadd.f32 %v2379, %v2388
    %v2393 = vadd.f32 %v2380, %v2389
    %v2394 = vadd.f32 %v2381, %v2390
    %v2395 = vadd.f32 %v2382, %v2391
    %v2396 = vsel %vm241, %v2392, 0.0
    %v2397 = vsel %vm241, %v2393, 0.0
    %v2398 = vadd.f32 %v2396, %v2397
    %v2399 = vsel %vm241, %v2394, 0.0
    %v2400 = vadd.f32 %v2398, %v2399
    %v2401 = vsel %vm241, %v2395, 0.0
    %v2402 = vadd.f32 %v2400, %v2401
    %v2403 = vrot.slane %v2402, 4
    %v2404 = vadd.f32 %v2402, %v2403
    %v2405 = vrot.slane %v2404, 2
    %v2406 = vadd.f32 %v2404, %v2405
    %v2407 = vrot.slane %v2406, 1
    %v2408 = vadd.f32 %v2406, %v2407
    %v2409 = vmul.f32 %v2392, %v2392
    %v2410 = vmul.f32 %v2393, %v2393
    %v2411 = vmul.f32 %v2394, %v2394
    %v2412 = vmul.f32 %v2395, %v2395
    %v2413 = vsel %vm241, %v2409, 0.0
    %v2414 = vsel %vm241, %v2410, 0.0
    %v2415 = vadd.f32 %v2413, %v2414
    %v2416 = vsel %vm241, %v2411, 0.0
    %v2417 = vadd.f32 %v2415, %v2416
    %v2418 = vsel %vm241, %v2412, 0.0
    %v2419 = vadd.f32 %v2417, %v2418
    %v2420 = vrot.slane %v2419, 4
    %v2421 = vadd.f32 %v2419, %v2420
    %v2422 = vrot.slane %v2421, 2
    %v2423 = vadd.f32 %v2421, %v2422
    %v2424 = vrot.slane %v2423, 1
    %v2425 = vadd.f32 %v2423, %v2424
    %v2427 = vsel %vm241, %v2408, 0
    %2429 = vmatprep.subr.mxu0 0.0
    %v2430 = vand.u32 %v61, 4294901760
    %2431 = vmatpush1.msra.mxu0 %v2430
    %2432 = vmatprep.subr.mxu0 0.0
    %v2433 = vand.u32 %v62, 4294901760
    %2434 = vmatpush1.msra.mxu0 %v2433
    %2435 = vmatprep.subr.mxu0 0.0
    %v2436 = vand.u32 %v63, 4294901760
    %2437 = vmatpush1.msra.mxu0 %v2436
    %2438 = vmatprep.subr.mxu0 0.0
    %v2439 = vand.u32 %v64, 4294901760
    %2440 = vmatpush1.msra.mxu0 %v2439
    %2441 = vmatprep.subr.mxu0 0.0
    %2442 = vmatpush1.msra.mxu0 0.0
    %2443 = vmatprep.subr.mxu0 0.0
    %2444 = vmatpush1.msra.mxu0 0.0
    %2445 = vmatprep.subr.mxu0 0.0
    %2446 = vmatpush1.msra.mxu0 0.0
    %2447 = vmatprep.subr.mxu0 0.0
    %2448 = vmatpush1.msra.mxu0 0.0
    %2449 = vmatprep.subr.mxu0 0.0
    %2450 = vmatpush1.msra.mxu0 0.0
    %2451 = vmatprep.subr.mxu0 0.0
    %2452 = vmatpush1.msra.mxu0 0.0
    %2453 = vmatprep.subr.mxu0 0.0
    %2454 = vmatpush1.msra.mxu0 0.0
    %2455 = vmatprep.subr.mxu0 0.0
    %2456 = vmatpush1.msra.mxu0 0.0
    %2457 = vmatprep.subr.mxu0 0.0
    %2458 = vmatpush1.msra.mxu0 0.0
    %2459 = vmatprep.subr.mxu0 0.0
    %2460 = vmatpush1.msra.mxu0 0.0
    %2461 = vmatprep.subr.mxu0 0.0
    %2462 = vmatpush1.msra.mxu0 0.0
    %2463 = vmatprep.subr.mxu0 0.0
    %2464 = vmatpush1.msra.mxu0 0.0
    %2465 = vmatprep.subr.mxu0 0.0
    %2466 = vmatpush1.msra.mxu0 0.0
    %2467 = vmatprep.subr.mxu0 0.0
    %2468 = vmatpush1.msra.mxu0 0.0
    %2469 = vmatprep.subr.mxu0 0.0
    %2470 = vmatpush1.msra.mxu0 0.0
    %2471 = vmatprep.subr.mxu0 0.0
    %2472 = vmatpush1.msra.mxu0 0.0
    %2473 = vmatprep.subr.mxu0 0.0
    %2474 = vmatpush1.msra.mxu0 0.0
    %2475 = vmatprep.subr.mxu0 0.0
    %2476 = vmatpush1.msra.mxu0 0.0
    %2477 = vmatprep.subr.mxu0 0.0
    %2478 = vmatpush1.msra.mxu0 0.0
    %2479 = vmatprep.subr.mxu0 0.0
    %2480 = vmatpush1.msra.mxu0 0.0
    %2481 = vmatprep.subr.mxu0 0.0
    %2482 = vmatpush1.msra.mxu0 0.0
    %2483 = vmatprep.subr.mxu0 0.0
    %2484 = vmatpush1.msra.mxu0 0.0
    %2485 = vmatprep.subr.mxu0 0.0
    %2486 = vmatpush1.msra.mxu0 0.0
    %2487 = vmatprep.subr.mxu0 0.0
    %2488 = vmatpush1.msra.mxu0 0.0
    %2489 = vmatprep.subr.mxu0 0.0
    %2490 = vmatpush1.msra.mxu0 0.0
    %2491 = vmatprep.subr.mxu0 0.0
    %2492 = vmatpush1.msra.mxu0 0.0
    %2493 = vmatprep.subr.mxu0 0.0
    %2494 = vmatpush1.msra.mxu0 0.0
    %2495 = vmatprep.subr.mxu0 0.0
    %2496 = vmatpush1.msra.mxu0 0.0
    %2497 = vmatprep.mubr.f32.mxu0 0.0
    %v2498 = vand.u32 %v2427, 4294901760
    %v2499 = vsub.f32 %v2427, %v2498
    %v2500 = vand.u32 %v2499, 4294901760
    %v2501 = vsub.f32 %v2499, %v2500
    %v2502 = vand.u32 %v2501, 4294901760
    %2503 = vmatmul.mubr.f32.gmra.mrb[0].mxu0 %v2502
    %v2504 = vpop.f32.mrb[0].mxu0
    %v2505 = vadd.f32 0.0, %v2504
    %v2506 = vpop.f32.mrb[0].mxu0
    %2507 = vdwg.mxu0
    %2508 = vmatprep.subr.mxu0 0.0
    %v2509 = vand.u32 %v61, 4294901760
    %v2510 = vsub.f32 %v61, %v2509
    %v2511 = vand.u32 %v2510, 4294901760
    %v2512 = vsub.f32 %v2510, %v2511
    %v2513 = vand.u32 %v2512, 4294901760
    %2514 = vmatpush1.msra.mxu0 %v2513
    %2515 = vmatprep.subr.mxu0 0.0
    %v2516 = vand.u32 %v62, 4294901760
    %v2517 = vsub.f32 %v62, %v2516
    %v2518 = vand.u32 %v2517, 4294901760
    %v2519 = vsub.f32 %v2517, %v2518
    %v2520 = vand.u32 %v2519, 4294901760
    %2521 = vmatpush1.msra.mxu0 %v2520
    %2522 = vmatprep.subr.mxu0 0.0
    %v2523 = vand.u32 %v63, 4294901760
    %v2524 = vsub.f32 %v63, %v2523
    %v2525 = vand.u32 %v2524, 4294901760
    %v2526 = vsub.f32 %v2524, %v2525
    %v2527 = vand.u32 %v2526, 4294901760
    %2528 = vmatpush1.msra.mxu0 %v2527
    %2529 = vmatprep.subr.mxu0 0.0
    %v2530 = vand.u32 %v64, 4294901760
    %v2531 = vsub.f32 %v64, %v2530
    %v2532 = vand.u32 %v2531, 4294901760
    %v2533 = vsub.f32 %v2531, %v2532
    %v2534 = vand.u32 %v2533, 4294901760
    %2535 = vmatpush1.msra.mxu0 %v2534
    %2536 = vmatprep.subr.mxu0 0.0
    %2537 = vmatpush1.msra.mxu0 0.0
    %2538 = vmatprep.subr.mxu0 0.0
    %2539 = vmatpush1.msra.mxu0 0.0
    %2540 = vmatprep.subr.mxu0 0.0
    %2541 = vmatpush1.msra.mxu0 0.0
    %2542 = vmatprep.subr.mxu0 0.0
    %2543 = vmatpush1.msra.mxu0 0.0
    %2544 = vmatprep.subr.mxu0 0.0
    %2545 = vmatpush1.msra.mxu0 0.0
    %2546 = vmatprep.subr.mxu0 0.0
    %2547 = vmatpush1.msra.mxu0 0.0
    %2548 = vmatprep.subr.mxu0 0.0
    %2549 = vmatpush1.msra.mxu0 0.0
    %2550 = vmatprep.subr.mxu0 0.0
    %2551 = vmatpush1.msra.mxu0 0.0
    %2552 = vmatprep.subr.mxu0 0.0
    %2553 = vmatpush1.msra.mxu0 0.0
    %2554 = vmatprep.subr.mxu0 0.0
    %2555 = vmatpush1.msra.mxu0 0.0
    %2556 = vmatprep.subr.mxu0 0.0
    %2557 = vmatpush1.msra.mxu0 0.0
    %2558 = vmatprep.subr.mxu0 0.0
    %2559 = vmatpush1.msra.mxu0 0.0
    %2560 = vmatprep.subr.mxu0 0.0
    %2561 = vmatpush1.msra.mxu0 0.0
    %2562 = vmatprep.subr.mxu0 0.0
    %2563 = vmatpush1.msra.mxu0 0.0
    %2564 = vmatprep.subr.mxu0 0.0
    %2565 = vmatpush1.msra.mxu0 0.0
    %2566 = vmatprep.subr.mxu0 0.0
    %2567 = vmatpush1.msra.mxu0 0.0
    %2568 = vmatprep.subr.mxu0 0.0
    %2569 = vmatpush1.msra.mxu0 0.0
    %2570 = vmatprep.subr.mxu0 0.0
    %2571 = vmatpush1.msra.mxu0 0.0
    %2572 = vmatprep.subr.mxu0 0.0
    %2573 = vmatpush1.msra.mxu0 0.0
    %2574 = vmatprep.subr.mxu0 0.0
    %2575 = vmatpush1.msra.mxu0 0.0
    %2576 = vmatprep.subr.mxu0 0.0
    %2577 = vmatpush1.msra.mxu0 0.0
    %2578 = vmatprep.subr.mxu0 0.0
    %2579 = vmatpush1.msra.mxu0 0.0
    %2580 = vmatprep.subr.mxu0 0.0
    %2581 = vmatpush1.msra.mxu0 0.0
    %2582 = vmatprep.subr.mxu0 0.0
    %2583 = vmatpush1.msra.mxu0 0.0
    %2584 = vmatprep.subr.mxu0 0.0
    %2585 = vmatpush1.msra.mxu0 0.0
    %2586 = vmatprep.subr.mxu0 0.0
    %2587 = vmatpush1.msra.mxu0 0.0
    %2588 = vmatprep.subr.mxu0 0.0
    %2589 = vmatpush1.msra.mxu0 0.0
    %2590 = vmatprep.subr.mxu0 0.0
    %2591 = vmatpush1.msra.mxu0 0.0
    %2592 = vmatprep.mubr.f32.mxu0 0.0
    %v2593 = vand.u32 %v2427, 4294901760
    %2594 = vmatmul.mubr.f32.gmra.mrb[0].mxu0 %v2593
    %v2595 = vpop.f32.mrb[0].mxu0
    %v2596 = vadd.f32 %v2505, %v2595
    %v2597 = vpop.f32.mrb[0].mxu0
    %2598 = vdwg.mxu0
    %2599 = vmatprep.subr.mxu0 0.0
    %v2600 = vand.u32 %v61, 4294901760
    %v2601 = vsub.f32 %v61, %v2600
    %2602 = vmatpush1.msra.mxu0 %v2601
    %2603 = vmatprep.subr.mxu0 0.0
    %v2604 = vand.u32 %v62, 4294901760
    %v2605 = vsub.f32 %v62, %v2604
    %2606 = vmatpush1.msra.mxu0 %v2605
    %2607 = vmatprep.subr.mxu0 0.0
    %v2608 = vand.u32 %v63, 4294901760
    %v2609 = vsub.f32 %v63, %v2608
    %2610 = vmatpush1.msra.mxu0 %v2609
    %2611 = vmatprep.subr.mxu0 0.0
    %v2612 = vand.u32 %v64, 4294901760
    %v2613 = vsub.f32 %v64, %v2612
    %2614 = vmatpush1.msra.mxu0 %v2613
    %2615 = vmatprep.subr.mxu0 0.0
    %2616 = vmatpush1.msra.mxu0 0.0
    %2617 = vmatprep.subr.mxu0 0.0
    %2618 = vmatpush1.msra.mxu0 0.0
    %2619 = vmatprep.subr.mxu0 0.0
    %2620 = vmatpush1.msra.mxu0 0.0
    %2621 = vmatprep.subr.mxu0 0.0
    %2622 = vmatpush1.msra.mxu0 0.0
    %2623 = vmatprep.subr.mxu0 0.0
    %2624 = vmatpush1.msra.mxu0 0.0
    %2625 = vmatprep.subr.mxu0 0.0
    %2626 = vmatpush1.msra.mxu0 0.0
    %2627 = vmatprep.subr.mxu0 0.0
    %2628 = vmatpush1.msra.mxu0 0.0
    %2629 = vmatprep.subr.mxu0 0.0
    %2630 = vmatpush1.msra.mxu0 0.0
    %2631 = vmatprep.subr.mxu0 0.0
    %2632 = vmatpush1.msra.mxu0 0.0
    %2633 = vmatprep.subr.mxu0 0.0
    %2634 = vmatpush1.msra.mxu0 0.0
    %2635 = vmatprep.subr.mxu0 0.0
    %2636 = vmatpush1.msra.mxu0 0.0
    %2637 = vmatprep.subr.mxu0 0.0
    %2638 = vmatpush1.msra.mxu0 0.0
    %2639 = vmatprep.subr.mxu0 0.0
    %2640 = vmatpush1.msra.mxu0 0.0
    %2641 = vmatprep.subr.mxu0 0.0
    %2642 = vmatpush1.msra.mxu0 0.0
    %2643 = vmatprep.subr.mxu0 0.0
    %2644 = vmatpush1.msra.mxu0 0.0
    %2645 = vmatprep.subr.mxu0 0.0
    %2646 = vmatpush1.msra.mxu0 0.0
    %2647 = vmatprep.subr.mxu0 0.0
    %2648 = vmatpush1.msra.mxu0 0.0
    %2649 = vmatprep.subr.mxu0 0.0
    %2650 = vmatpush1.msra.mxu0 0.0
    %2651 = vmatprep.subr.mxu0 0.0
    %2652 = vmatpush1.msra.mxu0 0.0
    %2653 = vmatprep.subr.mxu0 0.0
    %2654 = vmatpush1.msra.mxu0 0.0
    %2655 = vmatprep.subr.mxu0 0.0
    %2656 = vmatpush1.msra.mxu0 0.0
    %2657 = vmatprep.subr.mxu0 0.0
    %2658 = vmatpush1.msra.mxu0 0.0
    %2659 = vmatprep.subr.mxu0 0.0
    %2660 = vmatpush1.msra.mxu0 0.0
    %2661 = vmatprep.subr.mxu0 0.0
    %2662 = vmatpush1.msra.mxu0 0.0
    %2663 = vmatprep.subr.mxu0 0.0
    %2664 = vmatpush1.msra.mxu0 0.0
    %2665 = vmatprep.subr.mxu0 0.0
    %2666 = vmatpush1.msra.mxu0 0.0
    %2667 = vmatprep.subr.mxu0 0.0
    %2668 = vmatpush1.msra.mxu0 0.0
    %2669 = vmatprep.subr.mxu0 0.0
    %2670 = vmatpush1.msra.mxu0 0.0
    %2671 = vmatprep.mubr.f32.mxu0 0.0
    %v2672 = vand.u32 %v2427, 4294901760
    %v2673 = vsub.f32 %v2427, %v2672
    %2674 = vmatmul.mubr.f32.gmra.mrb[0].mxu0 %v2673
    %v2675 = vpop.f32.mrb[0].mxu0
    %v2676 = vadd.f32 %v2596, %v2675
    %v2677 = vpop.f32.mrb[0].mxu0
    %2678 = vdwg.mxu0
    %2679 = vmatprep.subr.mxu0 0.0
    %v2680 = vand.u32 %v61, 4294901760
    %2681 = vmatpush1.msra.mxu0 %v2680
    %2682 = vmatprep.subr.mxu0 0.0
    %v2683 = vand.u32 %v62, 4294901760
    %2684 = vmatpush1.msra.mxu0 %v2683
    %2685 = vmatprep.subr.mxu0 0.0
    %v2686 = vand.u32 %v63, 4294901760
    %2687 = vmatpush1.msra.mxu0 %v2686
    %2688 = vmatprep.subr.mxu0 0.0
    %v2689 = vand.u32 %v64, 4294901760
    %2690 = vmatpush1.msra.mxu0 %v2689
    %2691 = vmatprep.subr.mxu0 0.0
    %2692 = vmatpush1.msra.mxu0 0.0
    %2693 = vmatprep.subr.mxu0 0.0
    %2694 = vmatpush1.msra.mxu0 0.0
    %2695 = vmatprep.subr.mxu0 0.0
    %2696 = vmatpush1.msra.mxu0 0.0
    %2697 = vmatprep.subr.mxu0 0.0
    %2698 = vmatpush1.msra.mxu0 0.0
    %2699 = vmatprep.subr.mxu0 0.0
    %2700 = vmatpush1.msra.mxu0 0.0
    %2701 = vmatprep.subr.mxu0 0.0
    %2702 = vmatpush1.msra.mxu0 0.0
    %2703 = vmatprep.subr.mxu0 0.0
    %2704 = vmatpush1.msra.mxu0 0.0
    %2705 = vmatprep.subr.mxu0 0.0
    %2706 = vmatpush1.msra.mxu0 0.0
    %2707 = vmatprep.subr.mxu0 0.0
    %2708 = vmatpush1.msra.mxu0 0.0
    %2709 = vmatprep.subr.mxu0 0.0
    %2710 = vmatpush1.msra.mxu0 0.0
    %2711 = vmatprep.subr.mxu0 0.0
    %2712 = vmatpush1.msra.mxu0 0.0
    %2713 = vmatprep.subr.mxu0 0.0
    %2714 = vmatpush1.msra.mxu0 0.0
    %2715 = vmatprep.subr.mxu0 0.0
    %2716 = vmatpush1.msra.mxu0 0.0
    %2717 = vmatprep.subr.mxu0 0.0
    %2718 = vmatpush1.msra.mxu0 0.0
    %2719 = vmatprep.subr.mxu0 0.0
    %2720 = vmatpush1.msra.mxu0 0.0
    %2721 = vmatprep.subr.mxu0 0.0
    %2722 = vmatpush1.msra.mxu0 0.0
    %2723 = vmatprep.subr.mxu0 0.0
    %2724 = vmatpush1.msra.mxu0 0.0
    %2725 = vmatprep.subr.mxu0 0.0
    %2726 = vmatpush1.msra.mxu0 0.0
    %2727 = vmatprep.subr.mxu0 0.0
    %2728 = vmatpush1.msra.mxu0 0.0
    %2729 = vmatprep.subr.mxu0 0.0
    %2730 = vmatpush1.msra.mxu0 0.0
    %2731 = vmatprep.subr.mxu0 0.0
    %2732 = vmatpush1.msra.mxu0 0.0
    %2733 = vmatprep.subr.mxu0 0.0
    %2734 = vmatpush1.msra.mxu0 0.0
    %2735 = vmatprep.subr.mxu0 0.0
    %2736 = vmatpush1.msra.mxu0 0.0
    %2737 = vmatprep.subr.mxu0 0.0
    %2738 = vmatpush1.msra.mxu0 0.0
    %2739 = vmatprep.subr.mxu0 0.0
    %2740 = vmatpush1.msra.mxu0 0.0
    %2741 = vmatprep.subr.mxu0 0.0
    %2742 = vmatpush1.msra.mxu0 0.0
    %2743 = vmatprep.subr.mxu0 0.0
    %2744 = vmatpush1.msra.mxu0 0.0
    %2745 = vmatprep.subr.mxu0 0.0
    %2746 = vmatpush1.msra.mxu0 0.0
    %2747 = vmatprep.mubr.f32.mxu0 0.0
    %v2748 = vand.u32 %v2427, 4294901760
    %v2749 = vsub.f32 %v2427, %v2748
    %v2750 = vand.u32 %v2749, 4294901760
    %2751 = vmatmul.mubr.f32.gmra.mrb[0].mxu0 %v2750
    %v2752 = vpop.f32.mrb[0].mxu0
    %v2753 = vadd.f32 %v2676, %v2752
    %v2754 = vpop.f32.mrb[0].mxu0
    %2755 = vdwg.mxu0
    %2756 = vmatprep.subr.mxu0 0.0
    %v2757 = vand.u32 %v61, 4294901760
    %v2758 = vsub.f32 %v61, %v2757
    %v2759 = vand.u32 %v2758, 4294901760
    %2760 = vmatpush1.msra.mxu0 %v2759
    %2761 = vmatprep.subr.mxu0 0.0
    %v2762 = vand.u32 %v62, 4294901760
    %v2763 = vsub.f32 %v62, %v2762
    %v2764 = vand.u32 %v2763, 4294901760
    %2765 = vmatpush1.msra.mxu0 %v2764
    %2766 = vmatprep.subr.mxu0 0.0
    %v2767 = vand.u32 %v63, 4294901760
    %v2768 = vsub.f32 %v63, %v2767
    %v2769 = vand.u32 %v2768, 4294901760
    %2770 = vmatpush1.msra.mxu0 %v2769
    %2771 = vmatprep.subr.mxu0 0.0
    %v2772 = vand.u32 %v64, 4294901760
    %v2773 = vsub.f32 %v64, %v2772
    %v2774 = vand.u32 %v2773, 4294901760
    %2775 = vmatpush1.msra.mxu0 %v2774
    %2776 = vmatprep.subr.mxu0 0.0
    %2777 = vmatpush1.msra.mxu0 0.0
    %2778 = vmatprep.subr.mxu0 0.0
    %2779 = vmatpush1.msra.mxu0 0.0
    %2780 = vmatprep.subr.mxu0 0.0
    %2781 = vmatpush1.msra.mxu0 0.0
    %2782 = vmatprep.subr.mxu0 0.0
    %2783 = vmatpush1.msra.mxu0 0.0
    %2784 = vmatprep.subr.mxu0 0.0
    %2785 = vmatpush1.msra.mxu0 0.0
    %2786 = vmatprep.subr.mxu0 0.0
    %2787 = vmatpush1.msra.mxu0 0.0
    %2788 = vmatprep.subr.mxu0 0.0
    %2789 = vmatpush1.msra.mxu0 0.0
    %2790 = vmatprep.subr.mxu0 0.0
    %2791 = vmatpush1.msra.mxu0 0.0
    %2792 = vmatprep.subr.mxu0 0.0
    %2793 = vmatpush1.msra.mxu0 0.0
    %2794 = vmatprep.subr.mxu0 0.0
    %2795 = vmatpush1.msra.mxu0 0.0
    %2796 = vmatprep.subr.mxu0 0.0
    %2797 = vmatpush1.msra.mxu0 0.0
    %2798 = vmatprep.subr.mxu0 0.0
    %2799 = vmatpush1.msra.mxu0 0.0
    %2800 = vmatprep.subr.mxu0 0.0
    %2801 = vmatpush1.msra.mxu0 0.0
    %2802 = vmatprep.subr.mxu0 0.0
    %2803 = vmatpush1.msra.mxu0 0.0
    %2804 = vmatprep.subr.mxu0 0.0
    %2805 = vmatpush1.msra.mxu0 0.0
    %2806 = vmatprep.subr.mxu0 0.0
    %2807 = vmatpush1.msra.mxu0 0.0
    %2808 = vmatprep.subr.mxu0 0.0
    %2809 = vmatpush1.msra.mxu0 0.0
    %2810 = vmatprep.subr.mxu0 0.0
    %2811 = vmatpush1.msra.mxu0 0.0
    %2812 = vmatprep.subr.mxu0 0.0
    %2813 = vmatpush1.msra.mxu0 0.0
    %2814 = vmatprep.subr.mxu0 0.0
    %2815 = vmatpush1.msra.mxu0 0.0
    %2816 = vmatprep.subr.mxu0 0.0
    %2817 = vmatpush1.msra.mxu0 0.0
    %2818 = vmatprep.subr.mxu0 0.0
    %2819 = vmatpush1.msra.mxu0 0.0
    %2820 = vmatprep.subr.mxu0 0.0
    %2821 = vmatpush1.msra.mxu0 0.0
    %2822 = vmatprep.subr.mxu0 0.0
    %2823 = vmatpush1.msra.mxu0 0.0
    %2824 = vmatprep.subr.mxu0 0.0
    %2825 = vmatpush1.msra.mxu0 0.0
    %2826 = vmatprep.subr.mxu0 0.0
    %2827 = vmatpush1.msra.mxu0 0.0
    %2828 = vmatprep.subr.mxu0 0.0
    %2829 = vmatpush1.msra.mxu0 0.0
    %2830 = vmatprep.subr.mxu0 0.0
    %2831 = vmatpush1.msra.mxu0 0.0
    %2832 = vmatprep.mubr.f32.mxu0 0.0
    %v2833 = vand.u32 %v2427, 4294901760
    %2834 = vmatmul.mubr.f32.gmra.mrb[0].mxu0 %v2833
    %v2835 = vpop.f32.mrb[0].mxu0
    %v2836 = vadd.f32 %v2753, %v2835
    %v2837 = vpop.f32.mrb[0].mxu0
    %2838 = vdwg.mxu0
    %2839 = vmatprep.subr.mxu0 0.0
    %v2840 = vand.u32 %v61, 4294901760
    %2841 = vmatpush1.msra.mxu0 %v2840
    %2842 = vmatprep.subr.mxu0 0.0
    %v2843 = vand.u32 %v62, 4294901760
    %2844 = vmatpush1.msra.mxu0 %v2843
    %2845 = vmatprep.subr.mxu0 0.0
    %v2846 = vand.u32 %v63, 4294901760
    %2847 = vmatpush1.msra.mxu0 %v2846
    %2848 = vmatprep.subr.mxu0 0.0
    %v2849 = vand.u32 %v64, 4294901760
    %2850 = vmatpush1.msra.mxu0 %v2849
    %2851 = vmatprep.subr.mxu0 0.0
    %2852 = vmatpush1.msra.mxu0 0.0
    %2853 = vmatprep.subr.mxu0 0.0
    %2854 = vmatpush1.msra.mxu0 0.0
    %2855 = vmatprep.subr.mxu0 0.0
    %2856 = vmatpush1.msra.mxu0 0.0
    %2857 = vmatprep.subr.mxu0 0.0
    %2858 = vmatpush1.msra.mxu0 0.0
    %2859 = vmatprep.subr.mxu0 0.0
    %2860 = vmatpush1.msra.mxu0 0.0
    %2861 = vmatprep.subr.mxu0 0.0
    %2862 = vmatpush1.msra.mxu0 0.0
    %2863 = vmatprep.subr.mxu0 0.0
    %2864 = vmatpush1.msra.mxu0 0.0
    %2865 = vmatprep.subr.mxu0 0.0
    %2866 = vmatpush1.msra.mxu0 0.0
    %2867 = vmatprep.subr.mxu0 0.0
    %2868 = vmatpush1.msra.mxu0 0.0
    %2869 = vmatprep.subr.mxu0 0.0
    %2870 = vmatpush1.msra.mxu0 0.0
    %2871 = vmatprep.subr.mxu0 0.0
    %2872 = vmatpush1.msra.mxu0 0.0
    %2873 = vmatprep.subr.mxu0 0.0
    %2874 = vmatpush1.msra.mxu0 0.0
    %2875 = vmatprep.subr.mxu0 0.0
    %2876 = vmatpush1.msra.mxu0 0.0
    %2877 = vmatprep.subr.mxu0 0.0
    %2878 = vmatpush1.msra.mxu0 0.0
    %2879 = vmatprep.subr.mxu0 0.0
    %2880 = vmatpush1.msra.mxu0 0.0
    %2881 = vmatprep.subr.mxu0 0.0
    %2882 = vmatpush1.msra.mxu0 0.0
    %2883 = vmatprep.subr.mxu0 0.0
    %2884 = vmatpush1.msra.mxu0 0.0
    %2885 = vmatprep.subr.mxu0 0.0
    %2886 = vmatpush1.msra.mxu0 0.0
    %2887 = vmatprep.subr.mxu0 0.0
    %2888 = vmatpush1.msra.mxu0 0.0
    %2889 = vmatprep.subr.mxu0 0.0
    %2890 = vmatpush1.msra.mxu0 0.0
    %2891 = vmatprep.subr.mxu0 0.0
    %2892 = vmatpush1.msra.mxu0 0.0
    %2893 = vmatprep.subr.mxu0 0.0
    %2894 = vmatpush1.msra.mxu0 0.0
    %2895 = vmatprep.subr.mxu0 0.0
    %2896 = vmatpush1.msra.mxu0 0.0
    %2897 = vmatprep.subr.mxu0 0.0
    %2898 = vmatpush1.msra.mxu0 0.0
    %2899 = vmatprep.subr.mxu0 0.0
    %2900 = vmatpush1.msra.mxu0 0.0
    %2901 = vmatprep.subr.mxu0 0.0
    %2902 = vmatpush1.msra.mxu0 0.0
    %2903 = vmatprep.subr.mxu0 0.0
    %2904 = vmatpush1.msra.mxu0 0.0
    %2905 = vmatprep.subr.mxu0 0.0
    %2906 = vmatpush1.msra.mxu0 0.0
    %2907 = vmatprep.mubr.f32.mxu0 0.0
    %v2908 = vand.u32 %v2427, 4294901760
    %2909 = vmatmul.mubr.f32.gmra.mrb[0].mxu0 %v2908
    %v2910 = vpop.f32.mrb[0].mxu0
    %v2911 = vadd.f32 %v2836, %v2910
    %v2912 = vpop.f32.mrb[0].mxu0
    %2913 = vdwg.mxu0
    %v2914 = vmul.f32 %v2911, 0.001953125
    %v2916 = vsel %vm241, %v2425, 0
    %2918 = vmatprep.subr.mxu0 0.0
    %v2919 = vand.u32 %v61, 4294901760
    %2920 = vmatpush1.msra.mxu0 %v2919
    %2921 = vmatprep.subr.mxu0 0.0
    %v2922 = vand.u32 %v62, 4294901760
    %2923 = vmatpush1.msra.mxu0 %v2922
    %2924 = vmatprep.subr.mxu0 0.0
    %v2925 = vand.u32 %v63, 4294901760
    %2926 = vmatpush1.msra.mxu0 %v2925
    %2927 = vmatprep.subr.mxu0 0.0
    %v2928 = vand.u32 %v64, 4294901760
    %2929 = vmatpush1.msra.mxu0 %v2928
    %2930 = vmatprep.subr.mxu0 0.0
    %2931 = vmatpush1.msra.mxu0 0.0
    %2932 = vmatprep.subr.mxu0 0.0
    %2933 = vmatpush1.msra.mxu0 0.0
    %2934 = vmatprep.subr.mxu0 0.0
    %2935 = vmatpush1.msra.mxu0 0.0
    %2936 = vmatprep.subr.mxu0 0.0
    %2937 = vmatpush1.msra.mxu0 0.0
    %2938 = vmatprep.subr.mxu0 0.0
    %2939 = vmatpush1.msra.mxu0 0.0
    %2940 = vmatprep.subr.mxu0 0.0
    %2941 = vmatpush1.msra.mxu0 0.0
    %2942 = vmatprep.subr.mxu0 0.0
    %2943 = vmatpush1.msra.mxu0 0.0
    %2944 = vmatprep.subr.mxu0 0.0
    %2945 = vmatpush1.msra.mxu0 0.0
    %2946 = vmatprep.subr.mxu0 0.0
    %2947 = vmatpush1.msra.mxu0 0.0
    %2948 = vmatprep.subr.mxu0 0.0
    %2949 = vmatpush1.msra.mxu0 0.0
    %2950 = vmatprep.subr.mxu0 0.0
    %2951 = vmatpush1.msra.mxu0 0.0
    %2952 = vmatprep.subr.mxu0 0.0
    %2953 = vmatpush1.msra.mxu0 0.0
    %2954 = vmatprep.subr.mxu0 0.0
    %2955 = vmatpush1.msra.mxu0 0.0
    %2956 = vmatprep.subr.mxu0 0.0
    %2957 = vmatpush1.msra.mxu0 0.0
    %2958 = vmatprep.subr.mxu0 0.0
    %2959 = vmatpush1.msra.mxu0 0.0
    %2960 = vmatprep.subr.mxu0 0.0
    %2961 = vmatpush1.msra.mxu0 0.0
    %2962 = vmatprep.subr.mxu0 0.0
    %2963 = vmatpush1.msra.mxu0 0.0
    %2964 = vmatprep.subr.mxu0 0.0
    %2965 = vmatpush1.msra.mxu0 0.0
    %2966 = vmatprep.subr.mxu0 0.0
    %2967 = vmatpush1.msra.mxu0 0.0
    %2968 = vmatprep.subr.mxu0 0.0
    %2969 = vmatpush1.msra.mxu0 0.0
    %2970 = vmatprep.subr.mxu0 0.0
    %2971 = vmatpush1.msra.mxu0 0.0
    %2972 = vmatprep.subr.mxu0 0.0
    %2973 = vmatpush1.msra.mxu0 0.0
    %2974 = vmatprep.subr.mxu0 0.0
    %2975 = vmatpush1.msra.mxu0 0.0
    %2976 = vmatprep.subr.mxu0 0.0
    %2977 = vmatpush1.msra.mxu0 0.0
    %2978 = vmatprep.subr.mxu0 0.0
    %2979 = vmatpush1.msra.mxu0 0.0
    %2980 = vmatprep.subr.mxu0 0.0
    %2981 = vmatpush1.msra.mxu0 0.0
    %2982 = vmatprep.subr.mxu0 0.0
    %2983 = vmatpush1.msra.mxu0 0.0
    %2984 = vmatprep.subr.mxu0 0.0
    %2985 = vmatpush1.msra.mxu0 0.0
    %2986 = vmatprep.mubr.f32.mxu0 0.0
    %v2987 = vand.u32 %v2916, 4294901760
    %v2988 = vsub.f32 %v2916, %v2987
    %v2989 = vand.u32 %v2988, 4294901760
    %v2990 = vsub.f32 %v2988, %v2989
    %v2991 = vand.u32 %v2990, 4294901760
    %2992 = vmatmul.mubr.f32.gmra.mrb[0].mxu0 %v2991
    %v2993 = vpop.f32.mrb[0].mxu0
    %v2994 = vadd.f32 0.0, %v2993
    %v2995 = vpop.f32.mrb[0].mxu0
    %2996 = vdwg.mxu0
    %2997 = vmatprep.subr.mxu0 0.0
    %v2998 = vand.u32 %v61, 4294901760
    %v2999 = vsub.f32 %v61, %v2998
    %v3000 = vand.u32 %v2999, 4294901760
    %v3001 = vsub.f32 %v2999, %v3000
    %v3002 = vand.u32 %v3001, 4294901760
    %3003 = vmatpush1.msra.mxu0 %v3002
    %3004 = vmatprep.subr.mxu0 0.0
    %v3005 = vand.u32 %v62, 4294901760
    %v3006 = vsub.f32 %v62, %v3005
    %v3007 = vand.u32 %v3006, 4294901760
    %v3008 = vsub.f32 %v3006, %v3007
    %v3009 = vand.u32 %v3008, 4294901760
    %3010 = vmatpush1.msra.mxu0 %v3009
    %3011 = vmatprep.subr.mxu0 0.0
    %v3012 = vand.u32 %v63, 4294901760
    %v3013 = vsub.f32 %v63, %v3012
    %v3014 = vand.u32 %v3013, 4294901760
    %v3015 = vsub.f32 %v3013, %v3014
    %v3016 = vand.u32 %v3015, 4294901760
    %3017 = vmatpush1.msra.mxu0 %v3016
    %3018 = vmatprep.subr.mxu0 0.0
    %v3019 = vand.u32 %v64, 4294901760
    %v3020 = vsub.f32 %v64, %v3019
    %v3021 = vand.u32 %v3020, 4294901760
    %v3022 = vsub.f32 %v3020, %v3021
    %v3023 = vand.u32 %v3022, 4294901760
    %3024 = vmatpush1.msra.mxu0 %v3023
    %3025 = vmatprep.subr.mxu0 0.0
    %3026 = vmatpush1.msra.mxu0 0.0
    %3027 = vmatprep.subr.mxu0 0.0
    %3028 = vmatpush1.msra.mxu0 0.0
    %3029 = vmatprep.subr.mxu0 0.0
    %3030 = vmatpush1.msra.mxu0 0.0
    %3031 = vmatprep.subr.mxu0 0.0
    %3032 = vmatpush1.msra.mxu0 0.0
    %3033 = vmatprep.subr.mxu0 0.0
    %3034 = vmatpush1.msra.mxu0 0.0
    %3035 = vmatprep.subr.mxu0 0.0
    %3036 = vmatpush1.msra.mxu0 0.0
    %3037 = vmatprep.subr.mxu0 0.0
    %3038 = vmatpush1.msra.mxu0 0.0
    %3039 = vmatprep.subr.mxu0 0.0
    %3040 = vmatpush1.msra.mxu0 0.0
    %3041 = vmatprep.subr.mxu0 0.0
    %3042 = vmatpush1.msra.mxu0 0.0
    %3043 = vmatprep.subr.mxu0 0.0
    %3044 = vmatpush1.msra.mxu0 0.0
    %3045 = vmatprep.subr.mxu0 0.0
    %3046 = vmatpush1.msra.mxu0 0.0
    %3047 = vmatprep.subr.mxu0 0.0
    %3048 = vmatpush1.msra.mxu0 0.0
    %3049 = vmatprep.subr.mxu0 0.0
    %3050 = vmatpush1.msra.mxu0 0.0
    %3051 = vmatprep.subr.mxu0 0.0
    %3052 = vmatpush1.msra.mxu0 0.0
    %3053 = vmatprep.subr.mxu0 0.0
    %3054 = vmatpush1.msra.mxu0 0.0
    %3055 = vmatprep.subr.mxu0 0.0
    %3056 = vmatpush1.msra.mxu0 0.0
    %3057 = vmatprep.subr.mxu0 0.0
    %3058 = vmatpush1.msra.mxu0 0.0
    %3059 = vmatprep.subr.mxu0 0.0
    %3060 = vmatpush1.msra.mxu0 0.0
    %3061 = vmatprep.subr.mxu0 0.0
    %3062 = vmatpush1.msra.mxu0 0.0
    %3063 = vmatprep.subr.mxu0 0.0
    %3064 = vmatpush1.msra.mxu0 0.0
    %3065 = vmatprep.subr.mxu0 0.0
    %3066 = vmatpush1.msra.mxu0 0.0
    %3067 = vmatprep.subr.mxu0 0.0
    %3068 = vmatpush1.msra.mxu0 0.0
    %3069 = vmatprep.subr.mxu0 0.0
    %3070 = vmatpush1.msra.mxu0 0.0
    %3071 = vmatprep.subr.mxu0 0.0
    %3072 = vmatpush1.msra.mxu0 0.0
    %3073 = vmatprep.subr.mxu0 0.0
    %3074 = vmatpush1.msra.mxu0 0.0
    %3075 = vmatprep.subr.mxu0 0.0
    %3076 = vmatpush1.msra.mxu0 0.0
    %3077 = vmatprep.subr.mxu0 0.0
    %3078 = vmatpush1.msra.mxu0 0.0
    %3079 = vmatprep.subr.mxu0 0.0
    %3080 = vmatpush1.msra.mxu0 0.0
    %3081 = vmatprep.mubr.f32.mxu0 0.0
    %v3082 = vand.u32 %v2916, 4294901760
    %3083 = vmatmul.mubr.f32.gmra.mrb[0].mxu0 %v3082
    %v3084 = vpop.f32.mrb[0].mxu0
    %v3085 = vadd.f32 %v2994, %v3084
    %v3086 = vpop.f32.mrb[0].mxu0
    %3087 = vdwg.mxu0
    %3088 = vmatprep.subr.mxu0 0.0
    %v3089 = vand.u32 %v61, 4294901760
    %v3090 = vsub.f32 %v61, %v3089
    %3091 = vmatpush1.msra.mxu0 %v3090
    %3092 = vmatprep.subr.mxu0 0.0
    %v3093 = vand.u32 %v62, 4294901760
    %v3094 = vsub.f32 %v62, %v3093
    %3095 = vmatpush1.msra.mxu0 %v3094
    %3096 = vmatprep.subr.mxu0 0.0
    %v3097 = vand.u32 %v63, 4294901760
    %v3098 = vsub.f32 %v63, %v3097
    %3099 = vmatpush1.msra.mxu0 %v3098
    %3100 = vmatprep.subr.mxu0 0.0
    %v3101 = vand.u32 %v64, 4294901760
    %v3102 = vsub.f32 %v64, %v3101
    %3103 = vmatpush1.msra.mxu0 %v3102
    %3104 = vmatprep.subr.mxu0 0.0
    %3105 = vmatpush1.msra.mxu0 0.0
    %3106 = vmatprep.subr.mxu0 0.0
    %3107 = vmatpush1.msra.mxu0 0.0
    %3108 = vmatprep.subr.mxu0 0.0
    %3109 = vmatpush1.msra.mxu0 0.0
    %3110 = vmatprep.subr.mxu0 0.0
    %3111 = vmatpush1.msra.mxu0 0.0
    %3112 = vmatprep.subr.mxu0 0.0
    %3113 = vmatpush1.msra.mxu0 0.0
    %3114 = vmatprep.subr.mxu0 0.0
    %3115 = vmatpush1.msra.mxu0 0.0
    %3116 = vmatprep.subr.mxu0 0.0
    %3117 = vmatpush1.msra.mxu0 0.0
    %3118 = vmatprep.subr.mxu0 0.0
    %3119 = vmatpush1.msra.mxu0 0.0
    %3120 = vmatprep.subr.mxu0 0.0
    %3121 = vmatpush1.msra.mxu0 0.0
    %3122 = vmatprep.subr.mxu0 0.0
    %3123 = vmatpush1.msra.mxu0 0.0
    %3124 = vmatprep.subr.mxu0 0.0
    %3125 = vmatpush1.msra.mxu0 0.0
    %3126 = vmatprep.subr.mxu0 0.0
    %3127 = vmatpush1.msra.mxu0 0.0
    %3128 = vmatprep.subr.mxu0 0.0
    %3129 = vmatpush1.msra.mxu0 0.0
    %3130 = vmatprep.subr.mxu0 0.0
    %3131 = vmatpush1.msra.mxu0 0.0
    %3132 = vmatprep.subr.mxu0 0.0
    %3133 = vmatpush1.msra.mxu0 0.0
    %3134 = vmatprep.subr.mxu0 0.0
    %3135 = vmatpush1.msra.mxu0 0.0
    %3136 = vmatprep.subr.mxu0 0.0
    %3137 = vmatpush1.msra.mxu0 0.0
    %3138 = vmatprep.subr.mxu0 0.0
    %3139 = vmatpush1.msra.mxu0 0.0
    %3140 = vmatprep.subr.mxu0 0.0
    %3141 = vmatpush1.msra.mxu0 0.0
    %3142 = vmatprep.subr.mxu0 0.0
    %3143 = vmatpush1.msra.mxu0 0.0
    %3144 = vmatprep.subr.mxu0 0.0
    %3145 = vmatpush1.msra.mxu0 0.0
    %3146 = vmatprep.subr.mxu0 0.0
    %3147 = vmatpush1.msra.mxu0 0.0
    %3148 = vmatprep.subr.mxu0 0.0
    %3149 = vmatpush1.msra.mxu0 0.0
    %3150 = vmatprep.subr.mxu0 0.0
    %3151 = vmatpush1.msra.mxu0 0.0
    %3152 = vmatprep.subr.mxu0 0.0
    %3153 = vmatpush1.msra.mxu0 0.0
    %3154 = vmatprep.subr.mxu0 0.0
    %3155 = vmatpush1.msra.mxu0 0.0
    %3156 = vmatprep.subr.mxu0 0.0
    %3157 = vmatpush1.msra.mxu0 0.0
    %3158 = vmatprep.subr.mxu0 0.0
    %3159 = vmatpush1.msra.mxu0 0.0
    %3160 = vmatprep.mubr.f32.mxu0 0.0
    %v3161 = vand.u32 %v2916, 4294901760
    %v3162 = vsub.f32 %v2916, %v3161
    %3163 = vmatmul.mubr.f32.gmra.mrb[0].mxu0 %v3162
    %v3164 = vpop.f32.mrb[0].mxu0
    %v3165 = vadd.f32 %v3085, %v3164
    %v3166 = vpop.f32.mrb[0].mxu0
    %3167 = vdwg.mxu0
    %3168 = vmatprep.subr.mxu0 0.0
    %v3169 = vand.u32 %v61, 4294901760
    %3170 = vmatpush1.msra.mxu0 %v3169
    %3171 = vmatprep.subr.mxu0 0.0
    %v3172 = vand.u32 %v62, 4294901760
    %3173 = vmatpush1.msra.mxu0 %v3172
    %3174 = vmatprep.subr.mxu0 0.0
    %v3175 = vand.u32 %v63, 4294901760
    %3176 = vmatpush1.msra.mxu0 %v3175
    %3177 = vmatprep.subr.mxu0 0.0
    %v3178 = vand.u32 %v64, 4294901760
    %3179 = vmatpush1.msra.mxu0 %v3178
    %3180 = vmatprep.subr.mxu0 0.0
    %3181 = vmatpush1.msra.mxu0 0.0
    %3182 = vmatprep.subr.mxu0 0.0
    %3183 = vmatpush1.msra.mxu0 0.0
    %3184 = vmatprep.subr.mxu0 0.0
    %3185 = vmatpush1.msra.mxu0 0.0
    %3186 = vmatprep.subr.mxu0 0.0
    %3187 = vmatpush1.msra.mxu0 0.0
    %3188 = vmatprep.subr.mxu0 0.0
    %3189 = vmatpush1.msra.mxu0 0.0
    %3190 = vmatprep.subr.mxu0 0.0
    %3191 = vmatpush1.msra.mxu0 0.0
    %3192 = vmatprep.subr.mxu0 0.0
    %3193 = vmatpush1.msra.mxu0 0.0
    %3194 = vmatprep.subr.mxu0 0.0
    %3195 = vmatpush1.msra.mxu0 0.0
    %3196 = vmatprep.subr.mxu0 0.0
    %3197 = vmatpush1.msra.mxu0 0.0
    %3198 = vmatprep.subr.mxu0 0.0
    %3199 = vmatpush1.msra.mxu0 0.0
    %3200 = vmatprep.subr.mxu0 0.0
    %3201 = vmatpush1.msra.mxu0 0.0
    %3202 = vmatprep.subr.mxu0 0.0
    %3203 = vmatpush1.msra.mxu0 0.0
    %3204 = vmatprep.subr.mxu0 0.0
    %3205 = vmatpush1.msra.mxu0 0.0
    %3206 = vmatprep.subr.mxu0 0.0
    %3207 = vmatpush1.msra.mxu0 0.0
    %3208 = vmatprep.subr.mxu0 0.0
    %3209 = vmatpush1.msra.mxu0 0.0
    %3210 = vmatprep.subr.mxu0 0.0
    %3211 = vmatpush1.msra.mxu0 0.0
    %3212 = vmatprep.subr.mxu0 0.0
    %3213 = vmatpush1.msra.mxu0 0.0
    %3214 = vmatprep.subr.mxu0 0.0
    %3215 = vmatpush1.msra.mxu0 0.0
    %3216 = vmatprep.subr.mxu0 0.0
    %3217 = vmatpush1.msra.mxu0 0.0
    %3218 = vmatprep.subr.mxu0 0.0
    %3219 = vmatpush1.msra.mxu0 0.0
    %3220 = vmatprep.subr.mxu0 0.0
    %3221 = vmatpush1.msra.mxu0 0.0
    %3222 = vmatprep.subr.mxu0 0.0
    %3223 = vmatpush1.msra.mxu0 0.0
    %3224 = vmatprep.subr.mxu0 0.0
    %3225 = vmatpush1.msra.mxu0 0.0
    %3226 = vmatprep.subr.mxu0 0.0
    %3227 = vmatpush1.msra.mxu0 0.0
    %3228 = vmatprep.subr.mxu0 0.0
    %3229 = vmatpush1.msra.mxu0 0.0
    %3230 = vmatprep.subr.mxu0 0.0
    %3231 = vmatpush1.msra.mxu0 0.0
    %3232 = vmatprep.subr.mxu0 0.0
    %3233 = vmatpush1.msra.mxu0 0.0
    %3234 = vmatprep.subr.mxu0 0.0
    %3235 = vmatpush1.msra.mxu0 0.0
    %3236 = vmatprep.mubr.f32.mxu0 0.0
    %v3237 = vand.u32 %v2916, 4294901760
    %v3238 = vsub.f32 %v2916, %v3237
    %v3239 = vand.u32 %v3238, 4294901760
    %3240 = vmatmul.mubr.f32.gmra.mrb[0].mxu0 %v3239
    %v3241 = vpop.f32.mrb[0].mxu0
    %v3242 = vadd.f32 %v3165, %v3241
    %v3243 = vpop.f32.mrb[0].mxu0
    %3244 = vdwg.mxu0
    %3245 = vmatprep.subr.mxu0 0.0
    %v3246 = vand.u32 %v61, 4294901760
    %v3247 = vsub.f32 %v61, %v3246
    %v3248 = vand.u32 %v3247, 4294901760
    %3249 = vmatpush1.msra.mxu0 %v3248
    %3250 = vmatprep.subr.mxu0 0.0
    %v3251 = vand.u32 %v62, 4294901760
    %v3252 = vsub.f32 %v62, %v3251
    %v3253 = vand.u32 %v3252, 4294901760
    %3254 = vmatpush1.msra.mxu0 %v3253
    %3255 = vmatprep.subr.mxu0 0.0
    %v3256 = vand.u32 %v63, 4294901760
    %v3257 = vsub.f32 %v63, %v3256
    %v3258 = vand.u32 %v3257, 4294901760
    %3259 = vmatpush1.msra.mxu0 %v3258
    %3260 = vmatprep.subr.mxu0 0.0
    %v3261 = vand.u32 %v64, 4294901760
    %v3262 = vsub.f32 %v64, %v3261
    %v3263 = vand.u32 %v3262, 4294901760
    %3264 = vmatpush1.msra.mxu0 %v3263
    %3265 = vmatprep.subr.mxu0 0.0
    %3266 = vmatpush1.msra.mxu0 0.0
    %3267 = vmatprep.subr.mxu0 0.0
    %3268 = vmatpush1.msra.mxu0 0.0
    %3269 = vmatprep.subr.mxu0 0.0
    %3270 = vmatpush1.msra.mxu0 0.0
    %3271 = vmatprep.subr.mxu0 0.0
    %3272 = vmatpush1.msra.mxu0 0.0
    %3273 = vmatprep.subr.mxu0 0.0
    %3274 = vmatpush1.msra.mxu0 0.0
    %3275 = vmatprep.subr.mxu0 0.0
    %3276 = vmatpush1.msra.mxu0 0.0
    %3277 = vmatprep.subr.mxu0 0.0
    %3278 = vmatpush1.msra.mxu0 0.0
    %3279 = vmatprep.subr.mxu0 0.0
    %3280 = vmatpush1.msra.mxu0 0.0
    %3281 = vmatprep.subr.mxu0 0.0
    %3282 = vmatpush1.msra.mxu0 0.0
    %3283 = vmatprep.subr.mxu0 0.0
    %3284 = vmatpush1.msra.mxu0 0.0
    %3285 = vmatprep.subr.mxu0 0.0
    %3286 = vmatpush1.msra.mxu0 0.0
    %3287 = vmatprep.subr.mxu0 0.0
    %3288 = vmatpush1.msra.mxu0 0.0
    %3289 = vmatprep.subr.mxu0 0.0
    %3290 = vmatpush1.msra.mxu0 0.0
    %3291 = vmatprep.subr.mxu0 0.0
    %3292 = vmatpush1.msra.mxu0 0.0
    %3293 = vmatprep.subr.mxu0 0.0
    %3294 = vmatpush1.msra.mxu0 0.0
    %3295 = vmatprep.subr.mxu0 0.0
    %3296 = vmatpush1.msra.mxu0 0.0
    %3297 = vmatprep.subr.mxu0 0.0
    %3298 = vmatpush1.msra.mxu0 0.0
    %3299 = vmatprep.subr.mxu0 0.0
    %3300 = vmatpush1.msra.mxu0 0.0
    %3301 = vmatprep.subr.mxu0 0.0
    %3302 = vmatpush1.msra.mxu0 0.0
    %3303 = vmatprep.subr.mxu0 0.0
    %3304 = vmatpush1.msra.mxu0 0.0
    %3305 = vmatprep.subr.mxu0 0.0
    %3306 = vmatpush1.msra.mxu0 0.0
    %3307 = vmatprep.subr.mxu0 0.0
    %3308 = vmatpush1.msra.mxu0 0.0
    %3309 = vmatprep.subr.mxu0 0.0
    %3310 = vmatpush1.msra.mxu0 0.0
    %3311 = vmatprep.subr.mxu0 0.0
    %3312 = vmatpush1.msra.mxu0 0.0
    %3313 = vmatprep.subr.mxu0 0.0
    %3314 = vmatpush1.msra.mxu0 0.0
    %3315 = vmatprep.subr.mxu0 0.0
    %3316 = vmatpush1.msra.mxu0 0.0
    %3317 = vmatprep.subr.mxu0 0.0
    %3318 = vmatpush1.msra.mxu0 0.0
    %3319 = vmatprep.subr.mxu0 0.0
    %3320 = vmatpush1.msra.mxu0 0.0
    %3321 = vmatprep.mubr.f32.mxu0 0.0
    %v3322 = vand.u32 %v2916, 4294901760
    %3323 = vmatmul.mubr.f32.gmra.mrb[0].mxu0 %v3322
    %v3324 = vpop.f32.mrb[0].mxu0
    %v3325 = vadd.f32 %v3242, %v3324
    %v3326 = vpop.f32.mrb[0].mxu0
    %3327 = vdwg.mxu0
    %3328 = vmatprep.subr.mxu0 0.0
    %v3329 = vand.u32 %v61, 4294901760
    %3330 = vmatpush1.msra.mxu0 %v3329
    %3331 = vmatprep.subr.mxu0 0.0
    %v3332 = vand.u32 %v62, 4294901760
    %3333 = vmatpush1.msra.mxu0 %v3332
    %3334 = vmatprep.subr.mxu0 0.0
    %v3335 = vand.u32 %v63, 4294901760
    %3336 = vmatpush1.msra.mxu0 %v3335
    %3337 = vmatprep.subr.mxu0 0.0
    %v3338 = vand.u32 %v64, 4294901760
    %3339 = vmatpush1.msra.mxu0 %v3338
    %3340 = vmatprep.subr.mxu0 0.0
    %3341 = vmatpush1.msra.mxu0 0.0
    %3342 = vmatprep.subr.mxu0 0.0
    %3343 = vmatpush1.msra.mxu0 0.0
    %3344 = vmatprep.subr.mxu0 0.0
    %3345 = vmatpush1.msra.mxu0 0.0
    %3346 = vmatprep.subr.mxu0 0.0
    %3347 = vmatpush1.msra.mxu0 0.0
    %3348 = vmatprep.subr.mxu0 0.0
    %3349 = vmatpush1.msra.mxu0 0.0
    %3350 = vmatprep.subr.mxu0 0.0
    %3351 = vmatpush1.msra.mxu0 0.0
    %3352 = vmatprep.subr.mxu0 0.0
    %3353 = vmatpush1.msra.mxu0 0.0
    %3354 = vmatprep.subr.mxu0 0.0
    %3355 = vmatpush1.msra.mxu0 0.0
    %3356 = vmatprep.subr.mxu0 0.0
    %3357 = vmatpush1.msra.mxu0 0.0
    %3358 = vmatprep.subr.mxu0 0.0
    %3359 = vmatpush1.msra.mxu0 0.0
    %3360 = vmatprep.subr.mxu0 0.0
    %3361 = vmatpush1.msra.mxu0 0.0
    %3362 = vmatprep.subr.mxu0 0.0
    %3363 = vmatpush1.msra.mxu0 0.0
    %3364 = vmatprep.subr.mxu0 0.0
    %3365 = vmatpush1.msra.mxu0 0.0
    %3366 = vmatprep.subr.mxu0 0.0
    %3367 = vmatpush1.msra.mxu0 0.0
    %3368 = vmatprep.subr.mxu0 0.0
    %3369 = vmatpush1.msra.mxu0 0.0
    %3370 = vmatprep.subr.mxu0 0.0
    %3371 = vmatpush1.msra.mxu0 0.0
    %3372 = vmatprep.subr.mxu0 0.0
    %3373 = vmatpush1.msra.mxu0 0.0
    %3374 = vmatprep.subr.mxu0 0.0
    %3375 = vmatpush1.msra.mxu0 0.0
    %3376 = vmatprep.subr.mxu0 0.0
    %3377 = vmatpush1.msra.mxu0 0.0
    %3378 = vmatprep.subr.mxu0 0.0
    %3379 = vmatpush1.msra.mxu0 0.0
    %3380 = vmatprep.subr.mxu0 0.0
    %3381 = vmatpush1.msra.mxu0 0.0
    %3382 = vmatprep.subr.mxu0 0.0
    %3383 = vmatpush1.msra.mxu0 0.0
    %3384 = vmatprep.subr.mxu0 0.0
    %3385 = vmatpush1.msra.mxu0 0.0
    %3386 = vmatprep.subr.mxu0 0.0
    %3387 = vmatpush1.msra.mxu0 0.0
    %3388 = vmatprep.subr.mxu0 0.0
    %3389 = vmatpush1.msra.mxu0 0.0
    %3390 = vmatprep.subr.mxu0 0.0
    %3391 = vmatpush1.msra.mxu0 0.0
    %3392 = vmatprep.subr.mxu0 0.0
    %3393 = vmatpush1.msra.mxu0 0.0
    %3394 = vmatprep.subr.mxu0 0.0
    %3395 = vmatpush1.msra.mxu0 0.0
    %3396 = vmatprep.mubr.f32.mxu0 0.0
    %v3397 = vand.u32 %v2916, 4294901760
    %3398 = vmatmul.mubr.f32.gmra.mrb[0].mxu0 %v3397
    %v3399 = vpop.f32.mrb[0].mxu0
    %v3400 = vadd.f32 %v3325, %v3399
    %v3401 = vpop.f32.mrb[0].mxu0
    %3402 = vdwg.mxu0
    %v3403 = vmul.f32 %v3400, 0.001953125
    %v3404 = vmul.f32 %v2914, %v2914
    %v3405 = vsub.f32 %v3403, %v3404
    %v3406 = vmax.f32 %v3405, 0.0
    %v3407 = vadd.f32 %v3406, 1e-12
    %v3408 = vrsqrt.pop %v3407
    %v3410 = vsel %vm1255, %v2914, 0
    %3412 = vmatprep.subr.mxu0 0.0
    %v3413 = vand.u32 %v1261, 4294901760
    %3414 = vmatpush1.msra.mxu0 %v3413
    %3415 = vmatprep.subr.mxu0 0.0
    %3416 = vmatpush1.msra.mxu0 0.0
    %3417 = vmatprep.subr.mxu0 0.0
    %3418 = vmatpush1.msra.mxu0 0.0
    %3419 = vmatprep.subr.mxu0 0.0
    %3420 = vmatpush1.msra.mxu0 0.0
    %3421 = vmatprep.subr.mxu0 0.0
    %3422 = vmatpush1.msra.mxu0 0.0
    %3423 = vmatprep.subr.mxu0 0.0
    %3424 = vmatpush1.msra.mxu0 0.0
    %3425 = vmatprep.subr.mxu0 0.0
    %3426 = vmatpush1.msra.mxu0 0.0
    %3427 = vmatprep.subr.mxu0 0.0
    %3428 = vmatpush1.msra.mxu0 0.0
    %3429 = vmatprep.subr.mxu0 0.0
    %3430 = vmatpush1.msra.mxu0 0.0
    %3431 = vmatprep.subr.mxu0 0.0
    %3432 = vmatpush1.msra.mxu0 0.0
    %3433 = vmatprep.subr.mxu0 0.0
    %3434 = vmatpush1.msra.mxu0 0.0
    %3435 = vmatprep.subr.mxu0 0.0
    %3436 = vmatpush1.msra.mxu0 0.0
    %3437 = vmatprep.subr.mxu0 0.0
    %3438 = vmatpush1.msra.mxu0 0.0
    %3439 = vmatprep.subr.mxu0 0.0
    %3440 = vmatpush1.msra.mxu0 0.0
    %3441 = vmatprep.subr.mxu0 0.0
    %3442 = vmatpush1.msra.mxu0 0.0
    %3443 = vmatprep.subr.mxu0 0.0
    %3444 = vmatpush1.msra.mxu0 0.0
    %3445 = vmatprep.subr.mxu0 0.0
    %3446 = vmatpush1.msra.mxu0 0.0
    %3447 = vmatprep.subr.mxu0 0.0
    %3448 = vmatpush1.msra.mxu0 0.0
    %3449 = vmatprep.subr.mxu0 0.0
    %3450 = vmatpush1.msra.mxu0 0.0
    %3451 = vmatprep.subr.mxu0 0.0
    %3452 = vmatpush1.msra.mxu0 0.0
    %3453 = vmatprep.subr.mxu0 0.0
    %3454 = vmatpush1.msra.mxu0 0.0
    %3455 = vmatprep.subr.mxu0 0.0
    %3456 = vmatpush1.msra.mxu0 0.0
    %3457 = vmatprep.subr.mxu0 0.0
    %3458 = vmatpush1.msra.mxu0 0.0
    %3459 = vmatprep.subr.mxu0 0.0
    %3460 = vmatpush1.msra.mxu0 0.0
    %3461 = vmatprep.subr.mxu0 0.0
    %3462 = vmatpush1.msra.mxu0 0.0
    %3463 = vmatprep.subr.mxu0 0.0
    %3464 = vmatpush1.msra.mxu0 0.0
    %3465 = vmatprep.subr.mxu0 0.0
    %3466 = vmatpush1.msra.mxu0 0.0
    %3467 = vmatprep.subr.mxu0 0.0
    %3468 = vmatpush1.msra.mxu0 0.0
    %3469 = vmatprep.subr.mxu0 0.0
    %3470 = vmatpush1.msra.mxu0 0.0
    %3471 = vmatprep.subr.mxu0 0.0
    %3472 = vmatpush1.msra.mxu0 0.0
    %3473 = vmatprep.subr.mxu0 0.0
    %3474 = vmatpush1.msra.mxu0 0.0
    %3475 = vmatprep.subr.mxu0 0.0
    %3476 = vmatpush1.msra.mxu0 0.0
    %3477 = vmatprep.mubr.f32.mxu0 0.0
    %v3478 = vand.u32 %v3410, 4294901760
    %v3479 = vsub.f32 %v3410, %v3478
    %v3480 = vand.u32 %v3479, 4294901760
    %v3481 = vsub.f32 %v3479, %v3480
    %v3482 = vand.u32 %v3481, 4294901760
    %3483 = vmatmul.mubr.f32.gmra.mrb[0].mxu0 %v3482
    %v3484 = vpop.f32.mrb[0].mxu0
    %v3485 = vadd.f32 0.0, %v3484
    %v3486 = vpop.f32.mrb[0].mxu0
    %3487 = vdwg.mxu0
    %3488 = vmatprep.subr.mxu0 0.0
    %v3489 = vand.u32 %v1261, 4294901760
    %v3490 = vsub.f32 %v1261, %v3489
    %v3491 = vand.u32 %v3490, 4294901760
    %v3492 = vsub.f32 %v3490, %v3491
    %v3493 = vand.u32 %v3492, 4294901760
    %3494 = vmatpush1.msra.mxu0 %v3493
    %3495 = vmatprep.subr.mxu0 0.0
    %3496 = vmatpush1.msra.mxu0 0.0
    %3497 = vmatprep.subr.mxu0 0.0
    %3498 = vmatpush1.msra.mxu0 0.0
    %3499 = vmatprep.subr.mxu0 0.0
    %3500 = vmatpush1.msra.mxu0 0.0
    %3501 = vmatprep.subr.mxu0 0.0
    %3502 = vmatpush1.msra.mxu0 0.0
    %3503 = vmatprep.subr.mxu0 0.0
    %3504 = vmatpush1.msra.mxu0 0.0
    %3505 = vmatprep.subr.mxu0 0.0
    %3506 = vmatpush1.msra.mxu0 0.0
    %3507 = vmatprep.subr.mxu0 0.0
    %3508 = vmatpush1.msra.mxu0 0.0
    %3509 = vmatprep.subr.mxu0 0.0
    %3510 = vmatpush1.msra.mxu0 0.0
    %3511 = vmatprep.subr.mxu0 0.0
    %3512 = vmatpush1.msra.mxu0 0.0
    %3513 = vmatprep.subr.mxu0 0.0
    %3514 = vmatpush1.msra.mxu0 0.0
    %3515 = vmatprep.subr.mxu0 0.0
    %3516 = vmatpush1.msra.mxu0 0.0
    %3517 = vmatprep.subr.mxu0 0.0
    %3518 = vmatpush1.msra.mxu0 0.0
    %3519 = vmatprep.subr.mxu0 0.0
    %3520 = vmatpush1.msra.mxu0 0.0
    %3521 = vmatprep.subr.mxu0 0.0
    %3522 = vmatpush1.msra.mxu0 0.0
    %3523 = vmatprep.subr.mxu0 0.0
    %3524 = vmatpush1.msra.mxu0 0.0
    %3525 = vmatprep.subr.mxu0 0.0
    %3526 = vmatpush1.msra.mxu0 0.0
    %3527 = vmatprep.subr.mxu0 0.0
    %3528 = vmatpush1.msra.mxu0 0.0
    %3529 = vmatprep.subr.mxu0 0.0
    %3530 = vmatpush1.msra.mxu0 0.0
    %3531 = vmatprep.subr.mxu0 0.0
    %3532 = vmatpush1.msra.mxu0 0.0
    %3533 = vmatprep.subr.mxu0 0.0
    %3534 = vmatpush1.msra.mxu0 0.0
    %3535 = vmatprep.subr.mxu0 0.0
    %3536 = vmatpush1.msra.mxu0 0.0
    %3537 = vmatprep.subr.mxu0 0.0
    %3538 = vmatpush1.msra.mxu0 0.0
    %3539 = vmatprep.subr.mxu0 0.0
    %3540 = vmatpush1.msra.mxu0 0.0
    %3541 = vmatprep.subr.mxu0 0.0
    %3542 = vmatpush1.msra.mxu0 0.0
    %3543 = vmatprep.subr.mxu0 0.0
    %3544 = vmatpush1.msra.mxu0 0.0
    %3545 = vmatprep.subr.mxu0 0.0
    %3546 = vmatpush1.msra.mxu0 0.0
    %3547 = vmatprep.subr.mxu0 0.0
    %3548 = vmatpush1.msra.mxu0 0.0
    %3549 = vmatprep.subr.mxu0 0.0
    %3550 = vmatpush1.msra.mxu0 0.0
    %3551 = vmatprep.subr.mxu0 0.0
    %3552 = vmatpush1.msra.mxu0 0.0
    %3553 = vmatprep.subr.mxu0 0.0
    %3554 = vmatpush1.msra.mxu0 0.0
    %3555 = vmatprep.subr.mxu0 0.0
    %3556 = vmatpush1.msra.mxu0 0.0
    %3557 = vmatprep.mubr.f32.mxu0 0.0
    %v3558 = vand.u32 %v3410, 4294901760
    %3559 = vmatmul.mubr.f32.gmra.mrb[0].mxu0 %v3558
    %v3560 = vpop.f32.mrb[0].mxu0
    %v3561 = vadd.f32 %v3485, %v3560
    %v3562 = vpop.f32.mrb[0].mxu0
    %3563 = vdwg.mxu0
    %3564 = vmatprep.subr.mxu0 0.0
    %v3565 = vand.u32 %v1261, 4294901760
    %v3566 = vsub.f32 %v1261, %v3565
    %3567 = vmatpush1.msra.mxu0 %v3566
    %3568 = vmatprep.subr.mxu0 0.0
    %3569 = vmatpush1.msra.mxu0 0.0
    %3570 = vmatprep.subr.mxu0 0.0
    %3571 = vmatpush1.msra.mxu0 0.0
    %3572 = vmatprep.subr.mxu0 0.0
    %3573 = vmatpush1.msra.mxu0 0.0
    %3574 = vmatprep.subr.mxu0 0.0
    %3575 = vmatpush1.msra.mxu0 0.0
    %3576 = vmatprep.subr.mxu0 0.0
    %3577 = vmatpush1.msra.mxu0 0.0
    %3578 = vmatprep.subr.mxu0 0.0
    %3579 = vmatpush1.msra.mxu0 0.0
    %3580 = vmatprep.subr.mxu0 0.0
    %3581 = vmatpush1.msra.mxu0 0.0
    %3582 = vmatprep.subr.mxu0 0.0
    %3583 = vmatpush1.msra.mxu0 0.0
    %3584 = vmatprep.subr.mxu0 0.0
    %3585 = vmatpush1.msra.mxu0 0.0
    %3586 = vmatprep.subr.mxu0 0.0
    %3587 = vmatpush1.msra.mxu0 0.0
    %3588 = vmatprep.subr.mxu0 0.0
    %3589 = vmatpush1.msra.mxu0 0.0
    %3590 = vmatprep.subr.mxu0 0.0
    %3591 = vmatpush1.msra.mxu0 0.0
    %3592 = vmatprep.subr.mxu0 0.0
    %3593 = vmatpush1.msra.mxu0 0.0
    %3594 = vmatprep.subr.mxu0 0.0
    %3595 = vmatpush1.msra.mxu0 0.0
    %3596 = vmatprep.subr.mxu0 0.0
    %3597 = vmatpush1.msra.mxu0 0.0
    %3598 = vmatprep.subr.mxu0 0.0
    %3599 = vmatpush1.msra.mxu0 0.0
    %3600 = vmatprep.subr.mxu0 0.0
    %3601 = vmatpush1.msra.mxu0 0.0
    %3602 = vmatprep.subr.mxu0 0.0
    %3603 = vmatpush1.msra.mxu0 0.0
    %3604 = vmatprep.subr.mxu0 0.0
    %3605 = vmatpush1.msra.mxu0 0.0
    %3606 = vmatprep.subr.mxu0 0.0
    %3607 = vmatpush1.msra.mxu0 0.0
    %3608 = vmatprep.subr.mxu0 0.0
    %3609 = vmatpush1.msra.mxu0 0.0
    %3610 = vmatprep.subr.mxu0 0.0
    %3611 = vmatpush1.msra.mxu0 0.0
    %3612 = vmatprep.subr.mxu0 0.0
    %3613 = vmatpush1.msra.mxu0 0.0
    %3614 = vmatprep.subr.mxu0 0.0
    %3615 = vmatpush1.msra.mxu0 0.0
    %3616 = vmatprep.subr.mxu0 0.0
    %3617 = vmatpush1.msra.mxu0 0.0
    %3618 = vmatprep.subr.mxu0 0.0
    %3619 = vmatpush1.msra.mxu0 0.0
    %3620 = vmatprep.subr.mxu0 0.0
    %3621 = vmatpush1.msra.mxu0 0.0
    %3622 = vmatprep.subr.mxu0 0.0
    %3623 = vmatpush1.msra.mxu0 0.0
    %3624 = vmatprep.subr.mxu0 0.0
    %3625 = vmatpush1.msra.mxu0 0.0
    %3626 = vmatprep.subr.mxu0 0.0
    %3627 = vmatpush1.msra.mxu0 0.0
    %3628 = vmatprep.subr.mxu0 0.0
    %3629 = vmatpush1.msra.mxu0 0.0
    %3630 = vmatprep.mubr.f32.mxu0 0.0
    %v3631 = vand.u32 %v3410, 4294901760
    %v3632 = vsub.f32 %v3410, %v3631
    %3633 = vmatmul.mubr.f32.gmra.mrb[0].mxu0 %v3632
    %v3634 = vpop.f32.mrb[0].mxu0
    %v3635 = vadd.f32 %v3561, %v3634
    %v3636 = vpop.f32.mrb[0].mxu0
    %3637 = vdwg.mxu0
    %3638 = vmatprep.subr.mxu0 0.0
    %v3639 = vand.u32 %v1261, 4294901760
    %3640 = vmatpush1.msra.mxu0 %v3639
    %3641 = vmatprep.subr.mxu0 0.0
    %3642 = vmatpush1.msra.mxu0 0.0
    %3643 = vmatprep.subr.mxu0 0.0
    %3644 = vmatpush1.msra.mxu0 0.0
    %3645 = vmatprep.subr.mxu0 0.0
    %3646 = vmatpush1.msra.mxu0 0.0
    %3647 = vmatprep.subr.mxu0 0.0
    %3648 = vmatpush1.msra.mxu0 0.0
    %3649 = vmatprep.subr.mxu0 0.0
    %3650 = vmatpush1.msra.mxu0 0.0
    %3651 = vmatprep.subr.mxu0 0.0
    %3652 = vmatpush1.msra.mxu0 0.0
    %3653 = vmatprep.subr.mxu0 0.0
    %3654 = vmatpush1.msra.mxu0 0.0
    %3655 = vmatprep.subr.mxu0 0.0
    %3656 = vmatpush1.msra.mxu0 0.0
    %3657 = vmatprep.subr.mxu0 0.0
    %3658 = vmatpush1.msra.mxu0 0.0
    %3659 = vmatprep.subr.mxu0 0.0
    %3660 = vmatpush1.msra.mxu0 0.0
    %3661 = vmatprep.subr.mxu0 0.0
    %3662 = vmatpush1.msra.mxu0 0.0
    %3663 = vmatprep.subr.mxu0 0.0
    %3664 = vmatpush1.msra.mxu0 0.0
    %3665 = vmatprep.subr.mxu0 0.0
    %3666 = vmatpush1.msra.mxu0 0.0
    %3667 = vmatprep.subr.mxu0 0.0
    %3668 = vmatpush1.msra.mxu0 0.0
    %3669 = vmatprep.subr.mxu0 0.0
    %3670 = vmatpush1.msra.mxu0 0.0
    %3671 = vmatprep.subr.mxu0 0.0
    %3672 = vmatpush1.msra.mxu0 0.0
    %3673 = vmatprep.subr.mxu0 0.0
    %3674 = vmatpush1.msra.mxu0 0.0
    %3675 = vmatprep.subr.mxu0 0.0
    %3676 = vmatpush1.msra.mxu0 0.0
    %3677 = vmatprep.subr.mxu0 0.0
    %3678 = vmatpush1.msra.mxu0 0.0
    %3679 = vmatprep.subr.mxu0 0.0
    %3680 = vmatpush1.msra.mxu0 0.0
    %3681 = vmatprep.subr.mxu0 0.0
    %3682 = vmatpush1.msra.mxu0 0.0
    %3683 = vmatprep.subr.mxu0 0.0
    %3684 = vmatpush1.msra.mxu0 0.0
    %3685 = vmatprep.subr.mxu0 0.0
    %3686 = vmatpush1.msra.mxu0 0.0
    %3687 = vmatprep.subr.mxu0 0.0
    %3688 = vmatpush1.msra.mxu0 0.0
    %3689 = vmatprep.subr.mxu0 0.0
    %3690 = vmatpush1.msra.mxu0 0.0
    %3691 = vmatprep.subr.mxu0 0.0
    %3692 = vmatpush1.msra.mxu0 0.0
    %3693 = vmatprep.subr.mxu0 0.0
    %3694 = vmatpush1.msra.mxu0 0.0
    %3695 = vmatprep.subr.mxu0 0.0
    %3696 = vmatpush1.msra.mxu0 0.0
    %3697 = vmatprep.subr.mxu0 0.0
    %3698 = vmatpush1.msra.mxu0 0.0
    %3699 = vmatprep.subr.mxu0 0.0
    %3700 = vmatpush1.msra.mxu0 0.0
    %3701 = vmatprep.subr.mxu0 0.0
    %3702 = vmatpush1.msra.mxu0 0.0
    %3703 = vmatprep.mubr.f32.mxu0 0.0
    %v3704 = vand.u32 %v3410, 4294901760
    %v3705 = vsub.f32 %v3410, %v3704
    %v3706 = vand.u32 %v3705, 4294901760
    %3707 = vmatmul.mubr.f32.gmra.mrb[0].mxu0 %v3706
    %v3708 = vpop.f32.mrb[0].mxu0
    %v3709 = vadd.f32 %v3635, %v3708
    %v3710 = vpop.f32.mrb[0].mxu0
    %3711 = vdwg.mxu0
    %3712 = vmatprep.subr.mxu0 0.0
    %v3713 = vand.u32 %v1261, 4294901760
    %v3714 = vsub.f32 %v1261, %v3713
    %v3715 = vand.u32 %v3714, 4294901760
    %3716 = vmatpush1.msra.mxu0 %v3715
    %3717 = vmatprep.subr.mxu0 0.0
    %3718 = vmatpush1.msra.mxu0 0.0
    %3719 = vmatprep.subr.mxu0 0.0
    %3720 = vmatpush1.msra.mxu0 0.0
    %3721 = vmatprep.subr.mxu0 0.0
    %3722 = vmatpush1.msra.mxu0 0.0
    %3723 = vmatprep.subr.mxu0 0.0
    %3724 = vmatpush1.msra.mxu0 0.0
    %3725 = vmatprep.subr.mxu0 0.0
    %3726 = vmatpush1.msra.mxu0 0.0
    %3727 = vmatprep.subr.mxu0 0.0
    %3728 = vmatpush1.msra.mxu0 0.0
    %3729 = vmatprep.subr.mxu0 0.0
    %3730 = vmatpush1.msra.mxu0 0.0
    %3731 = vmatprep.subr.mxu0 0.0
    %3732 = vmatpush1.msra.mxu0 0.0
    %3733 = vmatprep.subr.mxu0 0.0
    %3734 = vmatpush1.msra.mxu0 0.0
    %3735 = vmatprep.subr.mxu0 0.0
    %3736 = vmatpush1.msra.mxu0 0.0
    %3737 = vmatprep.subr.mxu0 0.0
    %3738 = vmatpush1.msra.mxu0 0.0
    %3739 = vmatprep.subr.mxu0 0.0
    %3740 = vmatpush1.msra.mxu0 0.0
    %3741 = vmatprep.subr.mxu0 0.0
    %3742 = vmatpush1.msra.mxu0 0.0
    %3743 = vmatprep.subr.mxu0 0.0
    %3744 = vmatpush1.msra.mxu0 0.0
    %3745 = vmatprep.subr.mxu0 0.0
    %3746 = vmatpush1.msra.mxu0 0.0
    %3747 = vmatprep.subr.mxu0 0.0
    %3748 = vmatpush1.msra.mxu0 0.0
    %3749 = vmatprep.subr.mxu0 0.0
    %3750 = vmatpush1.msra.mxu0 0.0
    %3751 = vmatprep.subr.mxu0 0.0
    %3752 = vmatpush1.msra.mxu0 0.0
    %3753 = vmatprep.subr.mxu0 0.0
    %3754 = vmatpush1.msra.mxu0 0.0
    %3755 = vmatprep.subr.mxu0 0.0
    %3756 = vmatpush1.msra.mxu0 0.0
    %3757 = vmatprep.subr.mxu0 0.0
    %3758 = vmatpush1.msra.mxu0 0.0
    %3759 = vmatprep.subr.mxu0 0.0
    %3760 = vmatpush1.msra.mxu0 0.0
    %3761 = vmatprep.subr.mxu0 0.0
    %3762 = vmatpush1.msra.mxu0 0.0
    %3763 = vmatprep.subr.mxu0 0.0
    %3764 = vmatpush1.msra.mxu0 0.0
    %3765 = vmatprep.subr.mxu0 0.0
    %3766 = vmatpush1.msra.mxu0 0.0
    %3767 = vmatprep.subr.mxu0 0.0
    %3768 = vmatpush1.msra.mxu0 0.0
    %3769 = vmatprep.subr.mxu0 0.0
    %3770 = vmatpush1.msra.mxu0 0.0
    %3771 = vmatprep.subr.mxu0 0.0
    %3772 = vmatpush1.msra.mxu0 0.0
    %3773 = vmatprep.subr.mxu0 0.0
    %3774 = vmatpush1.msra.mxu0 0.0
    %3775 = vmatprep.subr.mxu0 0.0
    %3776 = vmatpush1.msra.mxu0 0.0
    %3777 = vmatprep.subr.mxu0 0.0
    %3778 = vmatpush1.msra.mxu0 0.0
    %3779 = vmatprep.mubr.f32.mxu0 0.0
    %v3780 = vand.u32 %v3410, 4294901760
    %3781 = vmatmul.mubr.f32.gmra.mrb[0].mxu0 %v3780
    %v3782 = vpop.f32.mrb[0].mxu0
    %v3783 = vadd.f32 %v3709, %v3782
    %v3784 = vpop.f32.mrb[0].mxu0
    %3785 = vdwg.mxu0
    %3786 = vmatprep.subr.mxu0 0.0
    %v3787 = vand.u32 %v1261, 4294901760
    %3788 = vmatpush1.msra.mxu0 %v3787
    %3789 = vmatprep.subr.mxu0 0.0
    %3790 = vmatpush1.msra.mxu0 0.0
    %3791 = vmatprep.subr.mxu0 0.0
    %3792 = vmatpush1.msra.mxu0 0.0
    %3793 = vmatprep.subr.mxu0 0.0
    %3794 = vmatpush1.msra.mxu0 0.0
    %3795 = vmatprep.subr.mxu0 0.0
    %3796 = vmatpush1.msra.mxu0 0.0
    %3797 = vmatprep.subr.mxu0 0.0
    %3798 = vmatpush1.msra.mxu0 0.0
    %3799 = vmatprep.subr.mxu0 0.0
    %3800 = vmatpush1.msra.mxu0 0.0
    %3801 = vmatprep.subr.mxu0 0.0
    %3802 = vmatpush1.msra.mxu0 0.0
    %3803 = vmatprep.subr.mxu0 0.0
    %3804 = vmatpush1.msra.mxu0 0.0
    %3805 = vmatprep.subr.mxu0 0.0
    %3806 = vmatpush1.msra.mxu0 0.0
    %3807 = vmatprep.subr.mxu0 0.0
    %3808 = vmatpush1.msra.mxu0 0.0
    %3809 = vmatprep.subr.mxu0 0.0
    %3810 = vmatpush1.msra.mxu0 0.0
    %3811 = vmatprep.subr.mxu0 0.0
    %3812 = vmatpush1.msra.mxu0 0.0
    %3813 = vmatprep.subr.mxu0 0.0
    %3814 = vmatpush1.msra.mxu0 0.0
    %3815 = vmatprep.subr.mxu0 0.0
    %3816 = vmatpush1.msra.mxu0 0.0
    %3817 = vmatprep.subr.mxu0 0.0
    %3818 = vmatpush1.msra.mxu0 0.0
    %3819 = vmatprep.subr.mxu0 0.0
    %3820 = vmatpush1.msra.mxu0 0.0
    %3821 = vmatprep.subr.mxu0 0.0
    %3822 = vmatpush1.msra.mxu0 0.0
    %3823 = vmatprep.subr.mxu0 0.0
    %3824 = vmatpush1.msra.mxu0 0.0
    %3825 = vmatprep.subr.mxu0 0.0
    %3826 = vmatpush1.msra.mxu0 0.0
    %3827 = vmatprep.subr.mxu0 0.0
    %3828 = vmatpush1.msra.mxu0 0.0
    %3829 = vmatprep.subr.mxu0 0.0
    %3830 = vmatpush1.msra.mxu0 0.0
    %3831 = vmatprep.subr.mxu0 0.0
    %3832 = vmatpush1.msra.mxu0 0.0
    %3833 = vmatprep.subr.mxu0 0.0
    %3834 = vmatpush1.msra.mxu0 0.0
    %3835 = vmatprep.subr.mxu0 0.0
    %3836 = vmatpush1.msra.mxu0 0.0
    %3837 = vmatprep.subr.mxu0 0.0
    %3838 = vmatpush1.msra.mxu0 0.0
    %3839 = vmatprep.subr.mxu0 0.0
    %3840 = vmatpush1.msra.mxu0 0.0
    %3841 = vmatprep.subr.mxu0 0.0
    %3842 = vmatpush1.msra.mxu0 0.0
    %3843 = vmatprep.subr.mxu0 0.0
    %3844 = vmatpush1.msra.mxu0 0.0
    %3845 = vmatprep.subr.mxu0 0.0
    %3846 = vmatpush1.msra.mxu0 0.0
    %3847 = vmatprep.subr.mxu0 0.0
    %3848 = vmatpush1.msra.mxu0 0.0
    %3849 = vmatprep.subr.mxu0 0.0
    %3850 = vmatpush1.msra.mxu0 0.0
    %3851 = vmatprep.mubr.f32.mxu0 0.0
    %v3852 = vand.u32 %v3410, 4294901760
    %3853 = vmatmul.mubr.f32.gmra.mrb[0].mxu0 %v3852
    %v3854 = vpop.f32.mrb[0].mxu0
    %v3855 = vadd.f32 %v3783, %v3854
    %v3856 = vpop.f32.mrb[0].mxu0
    %3857 = vdwg.mxu0
    %v3859 = vsel %vm1255, %v3408, 0
    %3861 = vmatprep.subr.mxu0 0.0
    %v3862 = vand.u32 %v1261, 4294901760
    %3863 = vmatpush1.msra.mxu0 %v3862
    %3864 = vmatprep.subr.mxu0 0.0
    %3865 = vmatpush1.msra.mxu0 0.0
    %3866 = vmatprep.subr.mxu0 0.0
    %3867 = vmatpush1.msra.mxu0 0.0
    %3868 = vmatprep.subr.mxu0 0.0
    %3869 = vmatpush1.msra.mxu0 0.0
    %3870 = vmatprep.subr.mxu0 0.0
    %3871 = vmatpush1.msra.mxu0 0.0
    %3872 = vmatprep.subr.mxu0 0.0
    %3873 = vmatpush1.msra.mxu0 0.0
    %3874 = vmatprep.subr.mxu0 0.0
    %3875 = vmatpush1.msra.mxu0 0.0
    %3876 = vmatprep.subr.mxu0 0.0
    %3877 = vmatpush1.msra.mxu0 0.0
    %3878 = vmatprep.subr.mxu0 0.0
    %3879 = vmatpush1.msra.mxu0 0.0
    %3880 = vmatprep.subr.mxu0 0.0
    %3881 = vmatpush1.msra.mxu0 0.0
    %3882 = vmatprep.subr.mxu0 0.0
    %3883 = vmatpush1.msra.mxu0 0.0
    %3884 = vmatprep.subr.mxu0 0.0
    %3885 = vmatpush1.msra.mxu0 0.0
    %3886 = vmatprep.subr.mxu0 0.0
    %3887 = vmatpush1.msra.mxu0 0.0
    %3888 = vmatprep.subr.mxu0 0.0
    %3889 = vmatpush1.msra.mxu0 0.0
    %3890 = vmatprep.subr.mxu0 0.0
    %3891 = vmatpush1.msra.mxu0 0.0
    %3892 = vmatprep.subr.mxu0 0.0
    %3893 = vmatpush1.msra.mxu0 0.0
    %3894 = vmatprep.subr.mxu0 0.0
    %3895 = vmatpush1.msra.mxu0 0.0
    %3896 = vmatprep.subr.mxu0 0.0
    %3897 = vmatpush1.msra.mxu0 0.0
    %3898 = vmatprep.subr.mxu0 0.0
    %3899 = vmatpush1.msra.mxu0 0.0
    %3900 = vmatprep.subr.mxu0 0.0
    %3901 = vmatpush1.msra.mxu0 0.0
    %3902 = vmatprep.subr.mxu0 0.0
    %3903 = vmatpush1.msra.mxu0 0.0
    %3904 = vmatprep.subr.mxu0 0.0
    %3905 = vmatpush1.msra.mxu0 0.0
    %3906 = vmatprep.subr.mxu0 0.0
    %3907 = vmatpush1.msra.mxu0 0.0
    %3908 = vmatprep.subr.mxu0 0.0
    %3909 = vmatpush1.msra.mxu0 0.0
    %3910 = vmatprep.subr.mxu0 0.0
    %3911 = vmatpush1.msra.mxu0 0.0
    %3912 = vmatprep.subr.mxu0 0.0
    %3913 = vmatpush1.msra.mxu0 0.0
    %3914 = vmatprep.subr.mxu0 0.0
    %3915 = vmatpush1.msra.mxu0 0.0
    %3916 = vmatprep.subr.mxu0 0.0
    %3917 = vmatpush1.msra.mxu0 0.0
    %3918 = vmatprep.subr.mxu0 0.0
    %3919 = vmatpush1.msra.mxu0 0.0
    %3920 = vmatprep.subr.mxu0 0.0
    %3921 = vmatpush1.msra.mxu0 0.0
    %3922 = vmatprep.subr.mxu0 0.0
    %3923 = vmatpush1.msra.mxu0 0.0
    %3924 = vmatprep.subr.mxu0 0.0
    %3925 = vmatpush1.msra.mxu0 0.0
    %3926 = vmatprep.mubr.f32.mxu0 0.0
    %v3927 = vand.u32 %v3859, 4294901760
    %v3928 = vsub.f32 %v3859, %v3927
    %v3929 = vand.u32 %v3928, 4294901760
    %v3930 = vsub.f32 %v3928, %v3929
    %v3931 = vand.u32 %v3930, 4294901760
    %3932 = vmatmul.mubr.f32.gmra.mrb[0].mxu0 %v3931
    %v3933 = vpop.f32.mrb[0].mxu0
    %v3934 = vadd.f32 0.0, %v3933
    %v3935 = vpop.f32.mrb[0].mxu0
    %3936 = vdwg.mxu0
    %3937 = vmatprep.subr.mxu0 0.0
    %v3938 = vand.u32 %v1261, 4294901760
    %v3939 = vsub.f32 %v1261, %v3938
    %v3940 = vand.u32 %v3939, 4294901760
    %v3941 = vsub.f32 %v3939, %v3940
    %v3942 = vand.u32 %v3941, 4294901760
    %3943 = vmatpush1.msra.mxu0 %v3942
    %3944 = vmatprep.subr.mxu0 0.0
    %3945 = vmatpush1.msra.mxu0 0.0
    %3946 = vmatprep.subr.mxu0 0.0
    %3947 = vmatpush1.msra.mxu0 0.0
    %3948 = vmatprep.subr.mxu0 0.0
    %3949 = vmatpush1.msra.mxu0 0.0
    %3950 = vmatprep.subr.mxu0 0.0
    %3951 = vmatpush1.msra.mxu0 0.0
    %3952 = vmatprep.subr.mxu0 0.0
    %3953 = vmatpush1.msra.mxu0 0.0
    %3954 = vmatprep.subr.mxu0 0.0
    %3955 = vmatpush1.msra.mxu0 0.0
    %3956 = vmatprep.subr.mxu0 0.0
    %3957 = vmatpush1.msra.mxu0 0.0
    %3958 = vmatprep.subr.mxu0 0.0
    %3959 = vmatpush1.msra.mxu0 0.0
    %3960 = vmatprep.subr.mxu0 0.0
    %3961 = vmatpush1.msra.mxu0 0.0
    %3962 = vmatprep.subr.mxu0 0.0
    %3963 = vmatpush1.msra.mxu0 0.0
    %3964 = vmatprep.subr.mxu0 0.0
    %3965 = vmatpush1.msra.mxu0 0.0
    %3966 = vmatprep.subr.mxu0 0.0
    %3967 = vmatpush1.msra.mxu0 0.0
    %3968 = vmatprep.subr.mxu0 0.0
    %3969 = vmatpush1.msra.mxu0 0.0
    %3970 = vmatprep.subr.mxu0 0.0
    %3971 = vmatpush1.msra.mxu0 0.0
    %3972 = vmatprep.subr.mxu0 0.0
    %3973 = vmatpush1.msra.mxu0 0.0
    %3974 = vmatprep.subr.mxu0 0.0
    %3975 = vmatpush1.msra.mxu0 0.0
    %3976 = vmatprep.subr.mxu0 0.0
    %3977 = vmatpush1.msra.mxu0 0.0
    %3978 = vmatprep.subr.mxu0 0.0
    %3979 = vmatpush1.msra.mxu0 0.0
    %3980 = vmatprep.subr.mxu0 0.0
    %3981 = vmatpush1.msra.mxu0 0.0
    %3982 = vmatprep.subr.mxu0 0.0
    %3983 = vmatpush1.msra.mxu0 0.0
    %3984 = vmatprep.subr.mxu0 0.0
    %3985 = vmatpush1.msra.mxu0 0.0
    %3986 = vmatprep.subr.mxu0 0.0
    %3987 = vmatpush1.msra.mxu0 0.0
    %3988 = vmatprep.subr.mxu0 0.0
    %3989 = vmatpush1.msra.mxu0 0.0
    %3990 = vmatprep.subr.mxu0 0.0
    %3991 = vmatpush1.msra.mxu0 0.0
    %3992 = vmatprep.subr.mxu0 0.0
    %3993 = vmatpush1.msra.mxu0 0.0
    %3994 = vmatprep.subr.mxu0 0.0
    %3995 = vmatpush1.msra.mxu0 0.0
    %3996 = vmatprep.subr.mxu0 0.0
    %3997 = vmatpush1.msra.mxu0 0.0
    %3998 = vmatprep.subr.mxu0 0.0
    %3999 = vmatpush1.msra.mxu0 0.0
    %4000 = vmatprep.subr.mxu0 0.0
    %4001 = vmatpush1.msra.mxu0 0.0
    %4002 = vmatprep.subr.mxu0 0.0
    %4003 = vmatpush1.msra.mxu0 0.0
    %4004 = vmatprep.subr.mxu0 0.0
    %4005 = vmatpush1.msra.mxu0 0.0
    %4006 = vmatprep.mubr.f32.mxu0 0.0
    %v4007 = vand.u32 %v3859, 4294901760
    %4008 = vmatmul.mubr.f32.gmra.mrb[0].mxu0 %v4007
    %v4009 = vpop.f32.mrb[0].mxu0
    %v4010 = vadd.f32 %v3934, %v4009
    %v4011 = vpop.f32.mrb[0].mxu0
    %4012 = vdwg.mxu0
    %4013 = vmatprep.subr.mxu0 0.0
    %v4014 = vand.u32 %v1261, 4294901760
    %v4015 = vsub.f32 %v1261, %v4014
    %4016 = vmatpush1.msra.mxu0 %v4015
    %4017 = vmatprep.subr.mxu0 0.0
    %4018 = vmatpush1.msra.mxu0 0.0
    %4019 = vmatprep.subr.mxu0 0.0
    %4020 = vmatpush1.msra.mxu0 0.0
    %4021 = vmatprep.subr.mxu0 0.0
    %4022 = vmatpush1.msra.mxu0 0.0
    %4023 = vmatprep.subr.mxu0 0.0
    %4024 = vmatpush1.msra.mxu0 0.0
    %4025 = vmatprep.subr.mxu0 0.0
    %4026 = vmatpush1.msra.mxu0 0.0
    %4027 = vmatprep.subr.mxu0 0.0
    %4028 = vmatpush1.msra.mxu0 0.0
    %4029 = vmatprep.subr.mxu0 0.0
    %4030 = vmatpush1.msra.mxu0 0.0
    %4031 = vmatprep.subr.mxu0 0.0
    %4032 = vmatpush1.msra.mxu0 0.0
    %4033 = vmatprep.subr.mxu0 0.0
    %4034 = vmatpush1.msra.mxu0 0.0
    %4035 = vmatprep.subr.mxu0 0.0
    %4036 = vmatpush1.msra.mxu0 0.0
    %4037 = vmatprep.subr.mxu0 0.0
    %4038 = vmatpush1.msra.mxu0 0.0
    %4039 = vmatprep.subr.mxu0 0.0
    %4040 = vmatpush1.msra.mxu0 0.0
    %4041 = vmatprep.subr.mxu0 0.0
    %4042 = vmatpush1.msra.mxu0 0.0
    %4043 = vmatprep.subr.mxu0 0.0
    %4044 = vmatpush1.msra.mxu0 0.0
    %4045 = vmatprep.subr.mxu0 0.0
    %4046 = vmatpush1.msra.mxu0 0.0
    %4047 = vmatprep.subr.mxu0 0.0
    %4048 = vmatpush1.msra.mxu0 0.0
    %4049 = vmatprep.subr.mxu0 0.0
    %4050 = vmatpush1.msra.mxu0 0.0
    %4051 = vmatprep.subr.mxu0 0.0
    %4052 = vmatpush1.msra.mxu0 0.0
    %4053 = vmatprep.subr.mxu0 0.0
    %4054 = vmatpush1.msra.mxu0 0.0
    %4055 = vmatprep.subr.mxu0 0.0
    %4056 = vmatpush1.msra.mxu0 0.0
    %4057 = vmatprep.subr.mxu0 0.0
    %4058 = vmatpush1.msra.mxu0 0.0
    %4059 = vmatprep.subr.mxu0 0.0
    %4060 = vmatpush1.msra.mxu0 0.0
    %4061 = vmatprep.subr.mxu0 0.0
    %4062 = vmatpush1.msra.mxu0 0.0
    %4063 = vmatprep.subr.mxu0 0.0
    %4064 = vmatpush1.msra.mxu0 0.0
    %4065 = vmatprep.subr.mxu0 0.0
    %4066 = vmatpush1.msra.mxu0 0.0
    %4067 = vmatprep.subr.mxu0 0.0
    %4068 = vmatpush1.msra.mxu0 0.0
    %4069 = vmatprep.subr.mxu0 0.0
    %4070 = vmatpush1.msra.mxu0 0.0
    %4071 = vmatprep.subr.mxu0 0.0
    %4072 = vmatpush1.msra.mxu0 0.0
    %4073 = vmatprep.subr.mxu0 0.0
    %4074 = vmatpush1.msra.mxu0 0.0
    %4075 = vmatprep.subr.mxu0 0.0
    %4076 = vmatpush1.msra.mxu0 0.0
    %4077 = vmatprep.subr.mxu0 0.0
    %4078 = vmatpush1.msra.mxu0 0.0
    %4079 = vmatprep.mubr.f32.mxu0 0.0
    %v4080 = vand.u32 %v3859, 4294901760
    %v4081 = vsub.f32 %v3859, %v4080
    %4082 = vmatmul.mubr.f32.gmra.mrb[0].mxu0 %v4081
    %v4083 = vpop.f32.mrb[0].mxu0
    %v4084 = vadd.f32 %v4010, %v4083
    %v4085 = vpop.f32.mrb[0].mxu0
    %4086 = vdwg.mxu0
    %4087 = vmatprep.subr.mxu0 0.0
    %v4088 = vand.u32 %v1261, 4294901760
    %4089 = vmatpush1.msra.mxu0 %v4088
    %4090 = vmatprep.subr.mxu0 0.0
    %4091 = vmatpush1.msra.mxu0 0.0
    %4092 = vmatprep.subr.mxu0 0.0
    %4093 = vmatpush1.msra.mxu0 0.0
    %4094 = vmatprep.subr.mxu0 0.0
    %4095 = vmatpush1.msra.mxu0 0.0
    %4096 = vmatprep.subr.mxu0 0.0
    %4097 = vmatpush1.msra.mxu0 0.0
    %4098 = vmatprep.subr.mxu0 0.0
    %4099 = vmatpush1.msra.mxu0 0.0
    %4100 = vmatprep.subr.mxu0 0.0
    %4101 = vmatpush1.msra.mxu0 0.0
    %4102 = vmatprep.subr.mxu0 0.0
    %4103 = vmatpush1.msra.mxu0 0.0
    %4104 = vmatprep.subr.mxu0 0.0
    %4105 = vmatpush1.msra.mxu0 0.0
    %4106 = vmatprep.subr.mxu0 0.0
    %4107 = vmatpush1.msra.mxu0 0.0
    %4108 = vmatprep.subr.mxu0 0.0
    %4109 = vmatpush1.msra.mxu0 0.0
    %4110 = vmatprep.subr.mxu0 0.0
    %4111 = vmatpush1.msra.mxu0 0.0
    %4112 = vmatprep.subr.mxu0 0.0
    %4113 = vmatpush1.msra.mxu0 0.0
    %4114 = vmatprep.subr.mxu0 0.0
    %4115 = vmatpush1.msra.mxu0 0.0
    %4116 = vmatprep.subr.mxu0 0.0
    %4117 = vmatpush1.msra.mxu0 0.0
    %4118 = vmatprep.subr.mxu0 0.0
    %4119 = vmatpush1.msra.mxu0 0.0
    %4120 = vmatprep.subr.mxu0 0.0
    %4121 = vmatpush1.msra.mxu0 0.0
    %4122 = vmatprep.subr.mxu0 0.0
    %4123 = vmatpush1.msra.mxu0 0.0
    %4124 = vmatprep.subr.mxu0 0.0
    %4125 = vmatpush1.msra.mxu0 0.0
    %4126 = vmatprep.subr.mxu0 0.0
    %4127 = vmatpush1.msra.mxu0 0.0
    %4128 = vmatprep.subr.mxu0 0.0
    %4129 = vmatpush1.msra.mxu0 0.0
    %4130 = vmatprep.subr.mxu0 0.0
    %4131 = vmatpush1.msra.mxu0 0.0
    %4132 = vmatprep.subr.mxu0 0.0
    %4133 = vmatpush1.msra.mxu0 0.0
    %4134 = vmatprep.subr.mxu0 0.0
    %4135 = vmatpush1.msra.mxu0 0.0
    %4136 = vmatprep.subr.mxu0 0.0
    %4137 = vmatpush1.msra.mxu0 0.0
    %4138 = vmatprep.subr.mxu0 0.0
    %4139 = vmatpush1.msra.mxu0 0.0
    %4140 = vmatprep.subr.mxu0 0.0
    %4141 = vmatpush1.msra.mxu0 0.0
    %4142 = vmatprep.subr.mxu0 0.0
    %4143 = vmatpush1.msra.mxu0 0.0
    %4144 = vmatprep.subr.mxu0 0.0
    %4145 = vmatpush1.msra.mxu0 0.0
    %4146 = vmatprep.subr.mxu0 0.0
    %4147 = vmatpush1.msra.mxu0 0.0
    %4148 = vmatprep.subr.mxu0 0.0
    %4149 = vmatpush1.msra.mxu0 0.0
    %4150 = vmatprep.subr.mxu0 0.0
    %4151 = vmatpush1.msra.mxu0 0.0
    %4152 = vmatprep.mubr.f32.mxu0 0.0
    %v4153 = vand.u32 %v3859, 4294901760
    %v4154 = vsub.f32 %v3859, %v4153
    %v4155 = vand.u32 %v4154, 4294901760
    %4156 = vmatmul.mubr.f32.gmra.mrb[0].mxu0 %v4155
    %v4157 = vpop.f32.mrb[0].mxu0
    %v4158 = vadd.f32 %v4084, %v4157
    %v4159 = vpop.f32.mrb[0].mxu0
    %4160 = vdwg.mxu0
    %4161 = vmatprep.subr.mxu0 0.0
    %v4162 = vand.u32 %v1261, 4294901760
    %v4163 = vsub.f32 %v1261, %v4162
    %v4164 = vand.u32 %v4163, 4294901760
    %4165 = vmatpush1.msra.mxu0 %v4164
    %4166 = vmatprep.subr.mxu0 0.0
    %4167 = vmatpush1.msra.mxu0 0.0
    %4168 = vmatprep.subr.mxu0 0.0
    %4169 = vmatpush1.msra.mxu0 0.0
    %4170 = vmatprep.subr.mxu0 0.0
    %4171 = vmatpush1.msra.mxu0 0.0
    %4172 = vmatprep.subr.mxu0 0.0
    %4173 = vmatpush1.msra.mxu0 0.0
    %4174 = vmatprep.subr.mxu0 0.0
    %4175 = vmatpush1.msra.mxu0 0.0
    %4176 = vmatprep.subr.mxu0 0.0
    %4177 = vmatpush1.msra.mxu0 0.0
    %4178 = vmatprep.subr.mxu0 0.0
    %4179 = vmatpush1.msra.mxu0 0.0
    %4180 = vmatprep.subr.mxu0 0.0
    %4181 = vmatpush1.msra.mxu0 0.0
    %4182 = vmatprep.subr.mxu0 0.0
    %4183 = vmatpush1.msra.mxu0 0.0
    %4184 = vmatprep.subr.mxu0 0.0
    %4185 = vmatpush1.msra.mxu0 0.0
    %4186 = vmatprep.subr.mxu0 0.0
    %4187 = vmatpush1.msra.mxu0 0.0
    %4188 = vmatprep.subr.mxu0 0.0
    %4189 = vmatpush1.msra.mxu0 0.0
    %4190 = vmatprep.subr.mxu0 0.0
    %4191 = vmatpush1.msra.mxu0 0.0
    %4192 = vmatprep.subr.mxu0 0.0
    %4193 = vmatpush1.msra.mxu0 0.0
    %4194 = vmatprep.subr.mxu0 0.0
    %4195 = vmatpush1.msra.mxu0 0.0
    %4196 = vmatprep.subr.mxu0 0.0
    %4197 = vmatpush1.msra.mxu0 0.0
    %4198 = vmatprep.subr.mxu0 0.0
    %4199 = vmatpush1.msra.mxu0 0.0
    %4200 = vmatprep.subr.mxu0 0.0
    %4201 = vmatpush1.msra.mxu0 0.0
    %4202 = vmatprep.subr.mxu0 0.0
    %4203 = vmatpush1.msra.mxu0 0.0
    %4204 = vmatprep.subr.mxu0 0.0
    %4205 = vmatpush1.msra.mxu0 0.0
    %4206 = vmatprep.subr.mxu0 0.0
    %4207 = vmatpush1.msra.mxu0 0.0
    %4208 = vmatprep.subr.mxu0 0.0
    %4209 = vmatpush1.msra.mxu0 0.0
    %4210 = vmatprep.subr.mxu0 0.0
    %4211 = vmatpush1.msra.mxu0 0.0
    %4212 = vmatprep.subr.mxu0 0.0
    %4213 = vmatpush1.msra.mxu0 0.0
    %4214 = vmatprep.subr.mxu0 0.0
    %4215 = vmatpush1.msra.mxu0 0.0
    %4216 = vmatprep.subr.mxu0 0.0
    %4217 = vmatpush1.msra.mxu0 0.0
    %4218 = vmatprep.subr.mxu0 0.0
    %4219 = vmatpush1.msra.mxu0 0.0
    %4220 = vmatprep.subr.mxu0 0.0
    %4221 = vmatpush1.msra.mxu0 0.0
    %4222 = vmatprep.subr.mxu0 0.0
    %4223 = vmatpush1.msra.mxu0 0.0
    %4224 = vmatprep.subr.mxu0 0.0
    %4225 = vmatpush1.msra.mxu0 0.0
    %4226 = vmatprep.subr.mxu0 0.0
    %4227 = vmatpush1.msra.mxu0 0.0
    %4228 = vmatprep.mubr.f32.mxu0 0.0
    %v4229 = vand.u32 %v3859, 4294901760
    %4230 = vmatmul.mubr.f32.gmra.mrb[0].mxu0 %v4229
    %v4231 = vpop.f32.mrb[0].mxu0
    %v4232 = vadd.f32 %v4158, %v4231
    %v4233 = vpop.f32.mrb[0].mxu0
    %4234 = vdwg.mxu0
    %4235 = vmatprep.subr.mxu0 0.0
    %v4236 = vand.u32 %v1261, 4294901760
    %4237 = vmatpush1.msra.mxu0 %v4236
    %4238 = vmatprep.subr.mxu0 0.0
    %4239 = vmatpush1.msra.mxu0 0.0
    %4240 = vmatprep.subr.mxu0 0.0
    %4241 = vmatpush1.msra.mxu0 0.0
    %4242 = vmatprep.subr.mxu0 0.0
    %4243 = vmatpush1.msra.mxu0 0.0
    %4244 = vmatprep.subr.mxu0 0.0
    %4245 = vmatpush1.msra.mxu0 0.0
    %4246 = vmatprep.subr.mxu0 0.0
    %4247 = vmatpush1.msra.mxu0 0.0
    %4248 = vmatprep.subr.mxu0 0.0
    %4249 = vmatpush1.msra.mxu0 0.0
    %4250 = vmatprep.subr.mxu0 0.0
    %4251 = vmatpush1.msra.mxu0 0.0
    %4252 = vmatprep.subr.mxu0 0.0
    %4253 = vmatpush1.msra.mxu0 0.0
    %4254 = vmatprep.subr.mxu0 0.0
    %4255 = vmatpush1.msra.mxu0 0.0
    %4256 = vmatprep.subr.mxu0 0.0
    %4257 = vmatpush1.msra.mxu0 0.0
    %4258 = vmatprep.subr.mxu0 0.0
    %4259 = vmatpush1.msra.mxu0 0.0
    %4260 = vmatprep.subr.mxu0 0.0
    %4261 = vmatpush1.msra.mxu0 0.0
    %4262 = vmatprep.subr.mxu0 0.0
    %4263 = vmatpush1.msra.mxu0 0.0
    %4264 = vmatprep.subr.mxu0 0.0
    %4265 = vmatpush1.msra.mxu0 0.0
    %4266 = vmatprep.subr.mxu0 0.0
    %4267 = vmatpush1.msra.mxu0 0.0
    %4268 = vmatprep.subr.mxu0 0.0
    %4269 = vmatpush1.msra.mxu0 0.0
    %4270 = vmatprep.subr.mxu0 0.0
    %4271 = vmatpush1.msra.mxu0 0.0
    %4272 = vmatprep.subr.mxu0 0.0
    %4273 = vmatpush1.msra.mxu0 0.0
    %4274 = vmatprep.subr.mxu0 0.0
    %4275 = vmatpush1.msra.mxu0 0.0
    %4276 = vmatprep.subr.mxu0 0.0
    %4277 = vmatpush1.msra.mxu0 0.0
    %4278 = vmatprep.subr.mxu0 0.0
    %4279 = vmatpush1.msra.mxu0 0.0
    %4280 = vmatprep.subr.mxu0 0.0
    %4281 = vmatpush1.msra.mxu0 0.0
    %4282 = vmatprep.subr.mxu0 0.0
    %4283 = vmatpush1.msra.mxu0 0.0
    %4284 = vmatprep.subr.mxu0 0.0
    %4285 = vmatpush1.msra.mxu0 0.0
    %4286 = vmatprep.subr.mxu0 0.0
    %4287 = vmatpush1.msra.mxu0 0.0
    %4288 = vmatprep.subr.mxu0 0.0
    %4289 = vmatpush1.msra.mxu0 0.0
    %4290 = vmatprep.subr.mxu0 0.0
    %4291 = vmatpush1.msra.mxu0 0.0
    %4292 = vmatprep.subr.mxu0 0.0
    %4293 = vmatpush1.msra.mxu0 0.0
    %4294 = vmatprep.subr.mxu0 0.0
    %4295 = vmatpush1.msra.mxu0 0.0
    %4296 = vmatprep.subr.mxu0 0.0
    %4297 = vmatpush1.msra.mxu0 0.0
    %4298 = vmatprep.subr.mxu0 0.0
    %4299 = vmatpush1.msra.mxu0 0.0
    %4300 = vmatprep.mubr.f32.mxu0 0.0
    %v4301 = vand.u32 %v3859, 4294901760
    %4302 = vmatmul.mubr.f32.gmra.mrb[0].mxu0 %v4301
    %v4303 = vpop.f32.mrb[0].mxu0
    %v4304 = vadd.f32 %v4232, %v4303
    %v4305 = vpop.f32.mrb[0].mxu0
    %4306 = vdwg.mxu0
    %v4307 = vlaneseq
    %v4308 = vshrl.u32 %v4307, 7
    %v4309 = vsub.s32 0, %v4308
    %v4310 = vrot.slane %v3855, %v4309
    %v4311 = vsub.f32 %v2392, %v4310
    %v4312 = vsub.f32 %v2393, %v4310
    %v4313 = vsub.f32 %v2394, %v4310
    %v4314 = vsub.f32 %v2395, %v4310
    %v4315 = vlaneseq
    %v4316 = vshrl.u32 %v4315, 7
    %v4317 = vsub.s32 0, %v4316
    %v4318 = vrot.slane %v4304, %v4317
    %v4319 = vmul.f32 %v4311, %v4318
    %v4320 = vmul.f32 %v4312, %v4318
    %v4321 = vmul.f32 %v4313, %v4318
    %v4322 = vmul.f32 %v4314, %v4318
    %4323 = vset.pattern.permute.xlu0 23
    %4324 = vperm.xlu0 %4323, %v75
    %v4325 = vpop.permute.xlu0 %4324
    %4327 = vset.pattern.permute.xlu0 23
    %4328 = vperm.xlu0 %4327, %v76
    %v4329 = vpop.permute.xlu0 %4328
    %4331 = vset.pattern.permute.xlu0 23
    %4332 = vperm.xlu0 %4331, %v77
    %v4333 = vpop.permute.xlu0 %4332
    %4335 = vset.pattern.permute.xlu0 23
    %4336 = vperm.xlu0 %4335, %v78
    %v4337 = vpop.permute.xlu0 %4336
    %v4339 = vmul.f32 %v4325, %v4319
    %v4340 = vmul.f32 %v4329, %v4320
    %v4341 = vmul.f32 %v4333, %v4321
    %v4342 = vmul.f32 %v4337, %v4322
    %4343 = vset.pattern.permute.xlu0 24
    %4344 = vperm.xlu0 %4343, %v75
    %v4345 = vpop.permute.xlu0 %4344
    %4347 = vset.pattern.permute.xlu0 24
    %4348 = vperm.xlu0 %4347, %v76
    %v4349 = vpop.permute.xlu0 %4348
    %4351 = vset.pattern.permute.xlu0 24
    %4352 = vperm.xlu0 %4351, %v77
    %v4353 = vpop.permute.xlu0 %4352
    %4355 = vset.pattern.permute.xlu0 24
    %4356 = vperm.xlu0 %4355, %v78
    %v4357 = vpop.permute.xlu0 %4356
    %v4359 = vadd.f32 %v4339, %v4345
    %v4360 = vadd.f32 %v4340, %v4349
    %v4361 = vadd.f32 %v4341, %v4353
    %v4362 = vadd.f32 %v4342, %v4357
    %4364 = vset.pattern.permute.xlu0 32
    %4365 = vperm.xlu0 %4364, %v79
    %v4366 = vpop.permute.xlu0 %4365
    %4369 = vset.pattern.permute.xlu0 32
    %4370 = vperm.xlu0 %4369, %v80
    %v4371 = vpop.permute.xlu0 %4370
    %4374 = vset.pattern.permute.xlu0 32
    %4375 = vperm.xlu0 %4374, %v81
    %v4376 = vpop.permute.xlu0 %4375
    %4379 = vset.pattern.permute.xlu0 32
    %4380 = vperm.xlu0 %4379, %v82
    %v4381 = vpop.permute.xlu0 %4380
    %v4383 = vsel %vm241, %v79, 0
    %v4385 = vsel %vm241, %v80, 0
    %v4387 = vsel %vm241, %v81, 0
    %v4389 = vsel %vm241, %v82, 0
    %4391 = vmatprep.subr.mxu0 0.0
    %4392 = vmatpush1.msra.mxu0 %v4359
    %4393 = vmatprep.subr.mxu0 0.0
    %4394 = vmatpush1.msra.mxu0 %v4360
    %4395 = vmatprep.subr.mxu0 0.0
    %4396 = vmatpush1.msra.mxu0 %v4361
    %4397 = vmatprep.subr.mxu0 0.0
    %4398 = vmatpush1.msra.mxu0 %v4362
    %4399 = vmatprep.subr.mxu0 0.0
    %4400 = vmatpush1.msra.mxu0 0.0
    %4401 = vmatprep.subr.mxu0 0.0
    %4402 = vmatpush1.msra.mxu0 0.0
    %4403 = vmatprep.subr.mxu0 0.0
    %4404 = vmatpush1.msra.mxu0 0.0
    %4405 = vmatprep.subr.mxu0 0.0
    %4406 = vmatpush1.msra.mxu0 0.0
    %4407 = vmatprep.subr.mxu0 0.0
    %4408 = vmatpush1.msra.mxu0 0.0
    %4409 = vmatprep.subr.mxu0 0.0
    %4410 = vmatpush1.msra.mxu0 0.0
    %4411 = vmatprep.subr.mxu0 0.0
    %4412 = vmatpush1.msra.mxu0 0.0
    %4413 = vmatprep.subr.mxu0 0.0
    %4414 = vmatpush1.msra.mxu0 0.0
    %4415 = vmatprep.subr.mxu0 0.0
    %4416 = vmatpush1.msra.mxu0 0.0
    %4417 = vmatprep.subr.mxu0 0.0
    %4418 = vmatpush1.msra.mxu0 0.0
    %4419 = vmatprep.subr.mxu0 0.0
    %4420 = vmatpush1.msra.mxu0 0.0
    %4421 = vmatprep.subr.mxu0 0.0
    %4422 = vmatpush1.msra.mxu0 0.0
    %4423 = vmatprep.subr.mxu0 0.0
    %4424 = vmatpush1.msra.mxu0 0.0
    %4425 = vmatprep.subr.mxu0 0.0
    %4426 = vmatpush1.msra.mxu0 0.0
    %4427 = vmatprep.subr.mxu0 0.0
    %4428 = vmatpush1.msra.mxu0 0.0
    %4429 = vmatprep.subr.mxu0 0.0
    %4430 = vmatpush1.msra.mxu0 0.0
    %4431 = vmatprep.subr.mxu0 0.0
    %4432 = vmatpush1.msra.mxu0 0.0
    %4433 = vmatprep.subr.mxu0 0.0
    %4434 = vmatpush1.msra.mxu0 0.0
    %4435 = vmatprep.subr.mxu0 0.0
    %4436 = vmatpush1.msra.mxu0 0.0
    %4437 = vmatprep.subr.mxu0 0.0
    %4438 = vmatpush1.msra.mxu0 0.0
    %4439 = vmatprep.subr.mxu0 0.0
    %4440 = vmatpush1.msra.mxu0 0.0
    %4441 = vmatprep.subr.mxu0 0.0
    %4442 = vmatpush1.msra.mxu0 0.0
    %4443 = vmatprep.subr.mxu0 0.0
    %4444 = vmatpush1.msra.mxu0 0.0
    %4445 = vmatprep.subr.mxu0 0.0
    %4446 = vmatpush1.msra.mxu0 0.0
    %4447 = vmatprep.subr.mxu0 0.0
    %4448 = vmatpush1.msra.mxu0 0.0
    %4449 = vmatprep.subr.mxu0 0.0
    %4450 = vmatpush1.msra.mxu0 0.0
    %4451 = vmatprep.subr.mxu0 0.0
    %4452 = vmatpush1.msra.mxu0 0.0
    %4453 = vmatprep.subr.mxu0 0.0
    %4454 = vmatpush1.msra.mxu0 0.0
    %4455 = vmatprep.mubr.f32.mxu0 0.0
    %4456 = vmatmul.mubr.f32.gmra.mrb[0].mxu0 %v4383
    %v4457 = vpop.f32.mrb[0].mxu0
    %v4458 = vadd.f32 %v4366, %v4457
    %v4459 = vpop.f32.mrb[0].mxu0
    %4460 = vmatprep.mubr.f32.mxu0 0.0
    %4461 = vmatmul.mubr.f32.gmra.mrb[0].mxu0 %v4385
    %v4462 = vpop.f32.mrb[0].mxu0
    %v4463 = vadd.f32 %v4371, %v4462
    %v4464 = vpop.f32.mrb[0].mxu0
    %4465 = vmatprep.mubr.f32.mxu0 0.0
    %4466 = vmatmul.mubr.f32.gmra.mrb[0].mxu0 %v4387
    %v4467 = vpop.f32.mrb[0].mxu0
    %v4468 = vadd.f32 %v4376, %v4467
    %v4469 = vpop.f32.mrb[0].mxu0
    %4470 = vmatprep.mubr.f32.mxu0 0.0
    %4471 = vmatmul.mubr.f32.gmra.mrb[0].mxu0 %v4389
    %v4472 = vpop.f32.mrb[0].mxu0
    %v4473 = vadd.f32 %v4381, %v4472
    %v4474 = vpop.f32.mrb[0].mxu0
    %4475 = vdwg.mxu0
    %v4476 = vadd.f32 %v4458, %v57
    %v4477 = vadd.f32 %v4463, %v58
    %4478 = vset.pattern.permute.xlu0 41
    %4479 = vperm.xlu0 %4478, %v75
    %v4480 = vpop.permute.xlu0 %4479
    %4482 = vset.pattern.permute.xlu0 41
    %4483 = vperm.xlu0 %4482, %v76
    %v4484 = vpop.permute.xlu0 %4483
    %4486 = vset.pattern.permute.xlu0 41
    %4487 = vperm.xlu0 %4486, %v77
    %v4488 = vpop.permute.xlu0 %4487
    %4490 = vset.pattern.permute.xlu0 41
    %4491 = vperm.xlu0 %4490, %v78
    %v4492 = vpop.permute.xlu0 %4491
    %4494 = vrot.lane.b32.xlu0 %v75, 103
    %v4495 = vpop.permute.xlu0 %4494
    %4496 = vrot.lane.b32.xlu0 %v76, 103
    %v4497 = vpop.permute.xlu0 %4496
    %4498 = vrot.lane.b32.xlu0 %v77, 103
    %v4499 = vpop.permute.xlu0 %4498
    %4500 = vrot.lane.b32.xlu0 %v78, 103
    %v4501 = vpop.permute.xlu0 %4500
    %v4502 = vsel %vm130, %v4495, 0
    %v4504 = vsel %vm130, %v4497, 0
    %v4506 = vsel %vm130, %v4499, 0
    %v4508 = vsel %vm130, %v4501, 0
    %4510 = vmatprep.subr.mxu0 0.0
    %4511 = vmatpush1.msra.mxu0 %v4476
    %4512 = vmatprep.subr.mxu0 0.0
    %4513 = vmatpush1.msra.mxu0 %v4477
    %4514 = vmatprep.subr.mxu0 0.0
    %4515 = vmatpush1.msra.mxu0 0.0
    %4516 = vmatprep.subr.mxu0 0.0
    %4517 = vmatpush1.msra.mxu0 0.0
    %4518 = vmatprep.subr.mxu0 0.0
    %4519 = vmatpush1.msra.mxu0 0.0
    %4520 = vmatprep.subr.mxu0 0.0
    %4521 = vmatpush1.msra.mxu0 0.0
    %4522 = vmatprep.subr.mxu0 0.0
    %4523 = vmatpush1.msra.mxu0 0.0
    %4524 = vmatprep.subr.mxu0 0.0
    %4525 = vmatpush1.msra.mxu0 0.0
    %4526 = vmatprep.subr.mxu0 0.0
    %4527 = vmatpush1.msra.mxu0 0.0
    %4528 = vmatprep.subr.mxu0 0.0
    %4529 = vmatpush1.msra.mxu0 0.0
    %4530 = vmatprep.subr.mxu0 0.0
    %4531 = vmatpush1.msra.mxu0 0.0
    %4532 = vmatprep.subr.mxu0 0.0
    %4533 = vmatpush1.msra.mxu0 0.0
    %4534 = vmatprep.subr.mxu0 0.0
    %4535 = vmatpush1.msra.mxu0 0.0
    %4536 = vmatprep.subr.mxu0 0.0
    %4537 = vmatpush1.msra.mxu0 0.0
    %4538 = vmatprep.subr.mxu0 0.0
    %4539 = vmatpush1.msra.mxu0 0.0
    %4540 = vmatprep.subr.mxu0 0.0
    %4541 = vmatpush1.msra.mxu0 0.0
    %4542 = vmatprep.subr.mxu0 0.0
    %4543 = vmatpush1.msra.mxu0 0.0
    %4544 = vmatprep.subr.mxu0 0.0
    %4545 = vmatpush1.msra.mxu0 0.0
    %4546 = vmatprep.subr.mxu0 0.0
    %4547 = vmatpush1.msra.mxu0 0.0
    %4548 = vmatprep.subr.mxu0 0.0
    %4549 = vmatpush1.msra.mxu0 0.0
    %4550 = vmatprep.subr.mxu0 0.0
    %4551 = vmatpush1.msra.mxu0 0.0
    %4552 = vmatprep.subr.mxu0 0.0
    %4553 = vmatpush1.msra.mxu0 0.0
    %4554 = vmatprep.subr.mxu0 0.0
    %4555 = vmatpush1.msra.mxu0 0.0
    %4556 = vmatprep.subr.mxu0 0.0
    %4557 = vmatpush1.msra.mxu0 0.0
    %4558 = vmatprep.subr.mxu0 0.0
    %4559 = vmatpush1.msra.mxu0 0.0
    %4560 = vmatprep.subr.mxu0 0.0
    %4561 = vmatpush1.msra.mxu0 0.0
    %4562 = vmatprep.subr.mxu0 0.0
    %4563 = vmatpush1.msra.mxu0 0.0
    %4564 = vmatprep.subr.mxu0 0.0
    %4565 = vmatpush1.msra.mxu0 0.0
    %4566 = vmatprep.subr.mxu0 0.0
    %4567 = vmatpush1.msra.mxu0 0.0
    %4568 = vmatprep.subr.mxu0 0.0
    %4569 = vmatpush1.msra.mxu0 0.0
    %4570 = vmatprep.subr.mxu0 0.0
    %4571 = vmatpush1.msra.mxu0 0.0
    %4572 = vmatprep.subr.mxu0 0.0
    %4573 = vmatpush1.msra.mxu0 0.0
    %4574 = vmatprep.mubr.f32.mxu0 0.0
    %4575 = vmatmul.mubr.f32.gmra.mrb[0].mxu0 %v4502
    %v4576 = vpop.f32.mrb[0].mxu0
    %v4577 = vadd.f32 %v4480, %v4576
    %v4578 = vpop.f32.mrb[0].mxu0
    %4579 = vmatprep.mubr.f32.mxu0 0.0
    %4580 = vmatmul.mubr.f32.gmra.mrb[0].mxu0 %v4504
    %v4581 = vpop.f32.mrb[0].mxu0
    %v4582 = vadd.f32 %v4484, %v4581
    %v4583 = vpop.f32.mrb[0].mxu0
    %4584 = vmatprep.mubr.f32.mxu0 0.0
    %4585 = vmatmul.mubr.f32.gmra.mrb[0].mxu0 %v4506
    %v4586 = vpop.f32.mrb[0].mxu0
    %v4587 = vadd.f32 %v4488, %v4586
    %v4588 = vpop.f32.mrb[0].mxu0
    %4589 = vmatprep.mubr.f32.mxu0 0.0
    %4590 = vmatmul.mubr.f32.gmra.mrb[0].mxu0 %v4508
    %v4591 = vpop.f32.mrb[0].mxu0
    %v4592 = vadd.f32 %v4492, %v4591
    %v4593 = vpop.f32.mrb[0].mxu0
    %4594 = vdwg.mxu0
    %v4595 = vmax.f32 %v4577, 0.0
    %v4596 = vmax.f32 %v4582, 0.0
    %v4597 = vmax.f32 %v4587, 0.0
    %v4598 = vmax.f32 %v4592, 0.0
    %v4599 = vmin.f32 %v4577, 0.0
    %v4600 = vmin.f32 %v4582, 0.0
    %v4601 = vmin.f32 %v4587, 0.0
    %v4602 = vmin.f32 %v4592, 0.0
    %v4603 = vstv %s107
    %v4604 = vmul.f32 %v4603, %v4599
    %v4605 = vmul.f32 %v4603, %v4600
    %v4606 = vmul.f32 %v4603, %v4601
    %v4607 = vmul.f32 %v4603, %v4602
    %v4608 = vadd.f32 %v4595, %v4604
    %v4609 = vadd.f32 %v4596, %v4605
    %v4610 = vadd.f32 %v4597, %v4606
    %v4611 = vadd.f32 %v4598, %v4607
    %v4612 = vsel %vm241, %v4608, 0.0
    %v4613 = vsel %vm241, %v4609, 0.0
    %v4614 = vadd.f32 %v4612, %v4613
    %v4615 = vsel %vm241, %v4610, 0.0
    %v4616 = vadd.f32 %v4614, %v4615
    %v4617 = vsel %vm241, %v4611, 0.0
    %v4618 = vadd.f32 %v4616, %v4617
    %v4619 = vrot.slane %v4618, 4
    %v4620 = vadd.f32 %v4618, %v4619
    %v4621 = vrot.slane %v4620, 2
    %v4622 = vadd.f32 %v4620, %v4621
    %v4623 = vrot.slane %v4622, 1
    %v4624 = vadd.f32 %v4622, %v4623
    %v4625 = vmul.f32 %v4608, %v4608
    %v4626 = vmul.f32 %v4609, %v4609
    %v4627 = vmul.f32 %v4610, %v4610
    %v4628 = vmul.f32 %v4611, %v4611
    %v4629 = vsel %vm241, %v4625, 0.0
    %v4630 = vsel %vm241, %v4626, 0.0
    %v4631 = vadd.f32 %v4629, %v4630
    %v4632 = vsel %vm241, %v4627, 0.0
    %v4633 = vadd.f32 %v4631, %v4632
    %v4634 = vsel %vm241, %v4628, 0.0
    %v4635 = vadd.f32 %v4633, %v4634
    %v4636 = vrot.slane %v4635, 4
    %v4637 = vadd.f32 %v4635, %v4636
    %v4638 = vrot.slane %v4637, 2
    %v4639 = vadd.f32 %v4637, %v4638
    %v4640 = vrot.slane %v4639, 1
    %v4641 = vadd.f32 %v4639, %v4640
    %v4643 = vsel %vm241, %v4624, 0
    %4645 = vmatprep.subr.mxu0 0.0
    %v4646 = vand.u32 %v61, 4294901760
    %4647 = vmatpush1.msra.mxu0 %v4646
    %4648 = vmatprep.subr.mxu0 0.0
    %v4649 = vand.u32 %v62, 4294901760
    %4650 = vmatpush1.msra.mxu0 %v4649
    %4651 = vmatprep.subr.mxu0 0.0
    %v4652 = vand.u32 %v63, 4294901760
    %4653 = vmatpush1.msra.mxu0 %v4652
    %4654 = vmatprep.subr.mxu0 0.0
    %v4655 = vand.u32 %v64, 4294901760
    %4656 = vmatpush1.msra.mxu0 %v4655
    %4657 = vmatprep.subr.mxu0 0.0
    %4658 = vmatpush1.msra.mxu0 0.0
    %4659 = vmatprep.subr.mxu0 0.0
    %4660 = vmatpush1.msra.mxu0 0.0
    %4661 = vmatprep.subr.mxu0 0.0
    %4662 = vmatpush1.msra.mxu0 0.0
    %4663 = vmatprep.subr.mxu0 0.0
    %4664 = vmatpush1.msra.mxu0 0.0
    %4665 = vmatprep.subr.mxu0 0.0
    %4666 = vmatpush1.msra.mxu0 0.0
    %4667 = vmatprep.subr.mxu0 0.0
    %4668 = vmatpush1.msra.mxu0 0.0
    %4669 = vmatprep.subr.mxu0 0.0
    %4670 = vmatpush1.msra.mxu0 0.0
    %4671 = vmatprep.subr.mxu0 0.0
    %4672 = vmatpush1.msra.mxu0 0.0
    %4673 = vmatprep.subr.mxu0 0.0
    %4674 = vmatpush1.msra.mxu0 0.0
    %4675 = vmatprep.subr.mxu0 0.0
    %4676 = vmatpush1.msra.mxu0 0.0
    %4677 = vmatprep.subr.mxu0 0.0
    %4678 = vmatpush1.msra.mxu0 0.0
    %4679 = vmatprep.subr.mxu0 0.0
    %4680 = vmatpush1.msra.mxu0 0.0
    %4681 = vmatprep.subr.mxu0 0.0
    %4682 = vmatpush1.msra.mxu0 0.0
    %4683 = vmatprep.subr.mxu0 0.0
    %4684 = vmatpush1.msra.mxu0 0.0
    %4685 = vmatprep.subr.mxu0 0.0
    %4686 = vmatpush1.msra.mxu0 0.0
    %4687 = vmatprep.subr.mxu0 0.0
    %4688 = vmatpush1.msra.mxu0 0.0
    %4689 = vmatprep.subr.mxu0 0.0
    %4690 = vmatpush1.msra.mxu0 0.0
    %4691 = vmatprep.subr.mxu0 0.0
    %4692 = vmatpush1.msra.mxu0 0.0
    %4693 = vmatprep.subr.mxu0 0.0
    %4694 = vmatpush1.msra.mxu0 0.0
    %4695 = vmatprep.subr.mxu0 0.0
    %4696 = vmatpush1.msra.mxu0 0.0
    %4697 = vmatprep.subr.mxu0 0.0
    %4698 = vmatpush1.msra.mxu0 0.0
    %4699 = vmatprep.subr.mxu0 0.0
    %4700 = vmatpush1.msra.mxu0 0.0
    %4701 = vmatprep.subr.mxu0 0.0
    %4702 = vmatpush1.msra.mxu0 0.0
    %4703 = vmatprep.subr.mxu0 0.0
    %4704 = vmatpush1.msra.mxu0 0.0
    %4705 = vmatprep.subr.mxu0 0.0
    %4706 = vmatpush1.msra.mxu0 0.0
    %4707 = vmatprep.subr.mxu0 0.0
    %4708 = vmatpush1.msra.mxu0 0.0
    %4709 = vmatprep.subr.mxu0 0.0
    %4710 = vmatpush1.msra.mxu0 0.0
    %4711 = vmatprep.subr.mxu0 0.0
    %4712 = vmatpush1.msra.mxu0 0.0
    %4713 = vmatprep.mubr.f32.mxu0 0.0
    %v4714 = vand.u32 %v4643, 4294901760
    %v4715 = vsub.f32 %v4643, %v4714
    %v4716 = vand.u32 %v4715, 4294901760
    %v4717 = vsub.f32 %v4715, %v4716
    %v4718 = vand.u32 %v4717, 4294901760
    %4719 = vmatmul.mubr.f32.gmra.mrb[0].mxu0 %v4718
    %v4720 = vpop.f32.mrb[0].mxu0
    %v4721 = vadd.f32 0.0, %v4720
    %v4722 = vpop.f32.mrb[0].mxu0
    %4723 = vdwg.mxu0
    %4724 = vmatprep.subr.mxu0 0.0
    %v4725 = vand.u32 %v61, 4294901760
    %v4726 = vsub.f32 %v61, %v4725
    %v4727 = vand.u32 %v4726, 4294901760
    %v4728 = vsub.f32 %v4726, %v4727
    %v4729 = vand.u32 %v4728, 4294901760
    %4730 = vmatpush1.msra.mxu0 %v4729
    %4731 = vmatprep.subr.mxu0 0.0
    %v4732 = vand.u32 %v62, 4294901760
    %v4733 = vsub.f32 %v62, %v4732
    %v4734 = vand.u32 %v4733, 4294901760
    %v4735 = vsub.f32 %v4733, %v4734
    %v4736 = vand.u32 %v4735, 4294901760
    %4737 = vmatpush1.msra.mxu0 %v4736
    %4738 = vmatprep.subr.mxu0 0.0
    %v4739 = vand.u32 %v63, 4294901760
    %v4740 = vsub.f32 %v63, %v4739
    %v4741 = vand.u32 %v4740, 4294901760
    %v4742 = vsub.f32 %v4740, %v4741
    %v4743 = vand.u32 %v4742, 4294901760
    %4744 = vmatpush1.msra.mxu0 %v4743
    %4745 = vmatprep.subr.mxu0 0.0
    %v4746 = vand.u32 %v64, 4294901760
    %v4747 = vsub.f32 %v64, %v4746
    %v4748 = vand.u32 %v4747, 4294901760
    %v4749 = vsub.f32 %v4747, %v4748
    %v4750 = vand.u32 %v4749, 4294901760
    %4751 = vmatpush1.msra.mxu0 %v4750
    %4752 = vmatprep.subr.mxu0 0.0
    %4753 = vmatpush1.msra.mxu0 0.0
    %4754 = vmatprep.subr.mxu0 0.0
    %4755 = vmatpush1.msra.mxu0 0.0
    %4756 = vmatprep.subr.mxu0 0.0
    %4757 = vmatpush1.msra.mxu0 0.0
    %4758 = vmatprep.subr.mxu0 0.0
    %4759 = vmatpush1.msra.mxu0 0.0
    %4760 = vmatprep.subr.mxu0 0.0
    %4761 = vmatpush1.msra.mxu0 0.0
    %4762 = vmatprep.subr.mxu0 0.0
    %4763 = vmatpush1.msra.mxu0 0.0
    %4764 = vmatprep.subr.mxu0 0.0
    %4765 = vmatpush1.msra.mxu0 0.0
    %4766 = vmatprep.subr.mxu0 0.0
    %4767 = vmatpush1.msra.mxu0 0.0
    %4768 = vmatprep.subr.mxu0 0.0
    %4769 = vmatpush1.msra.mxu0 0.0
    %4770 = vmatprep.subr.mxu0 0.0
    %4771 = vmatpush1.msra.mxu0 0.0
    %4772 = vmatprep.subr.mxu0 0.0
    %4773 = vmatpush1.msra.mxu0 0.0
    %4774 = vmatprep.subr.mxu0 0.0
    %4775 = vmatpush1.msra.mxu0 0.0
    %4776 = vmatprep.subr.mxu0 0.0
    %4777 = vmatpush1.msra.mxu0 0.0
    %4778 = vmatprep.subr.mxu0 0.0
    %4779 = vmatpush1.msra.mxu0 0.0
    %4780 = vmatprep.subr.mxu0 0.0
    %4781 = vmatpush1.msra.mxu0 0.0
    %4782 = vmatprep.subr.mxu0 0.0
    %4783 = vmatpush1.msra.mxu0 0.0
    %4784 = vmatprep.subr.mxu0 0.0
    %4785 = vmatpush1.msra.mxu0 0.0
    %4786 = vmatprep.subr.mxu0 0.0
    %4787 = vmatpush1.msra.mxu0 0.0
    %4788 = vmatprep.subr.mxu0 0.0
    %4789 = vmatpush1.msra.mxu0 0.0
    %4790 = vmatprep.subr.mxu0 0.0
    %4791 = vmatpush1.msra.mxu0 0.0
    %4792 = vmatprep.subr.mxu0 0.0
    %4793 = vmatpush1.msra.mxu0 0.0
    %4794 = vmatprep.subr.mxu0 0.0
    %4795 = vmatpush1.msra.mxu0 0.0
    %4796 = vmatprep.subr.mxu0 0.0
    %4797 = vmatpush1.msra.mxu0 0.0
    %4798 = vmatprep.subr.mxu0 0.0
    %4799 = vmatpush1.msra.mxu0 0.0
    %4800 = vmatprep.subr.mxu0 0.0
    %4801 = vmatpush1.msra.mxu0 0.0
    %4802 = vmatprep.subr.mxu0 0.0
    %4803 = vmatpush1.msra.mxu0 0.0
    %4804 = vmatprep.subr.mxu0 0.0
    %4805 = vmatpush1.msra.mxu0 0.0
    %4806 = vmatprep.subr.mxu0 0.0
    %4807 = vmatpush1.msra.mxu0 0.0
    %4808 = vmatprep.mubr.f32.mxu0 0.0
    %v4809 = vand.u32 %v4643, 4294901760
    %4810 = vmatmul.mubr.f32.gmra.mrb[0].mxu0 %v4809
    %v4811 = vpop.f32.mrb[0].mxu0
    %v4812 = vadd.f32 %v4721, %v4811
    %v4813 = vpop.f32.mrb[0].mxu0
    %4814 = vdwg.mxu0
    %4815 = vmatprep.subr.mxu0 0.0
    %v4816 = vand.u32 %v61, 4294901760
    %v4817 = vsub.f32 %v61, %v4816
    %4818 = vmatpush1.msra.mxu0 %v4817
    %4819 = vmatprep.subr.mxu0 0.0
    %v4820 = vand.u32 %v62, 4294901760
    %v4821 = vsub.f32 %v62, %v4820
    %4822 = vmatpush1.msra.mxu0 %v4821
    %4823 = vmatprep.subr.mxu0 0.0
    %v4824 = vand.u32 %v63, 4294901760
    %v4825 = vsub.f32 %v63, %v4824
    %4826 = vmatpush1.msra.mxu0 %v4825
    %4827 = vmatprep.subr.mxu0 0.0
    %v4828 = vand.u32 %v64, 4294901760
    %v4829 = vsub.f32 %v64, %v4828
    %4830 = vmatpush1.msra.mxu0 %v4829
    %4831 = vmatprep.subr.mxu0 0.0
    %4832 = vmatpush1.msra.mxu0 0.0
    %4833 = vmatprep.subr.mxu0 0.0
    %4834 = vmatpush1.msra.mxu0 0.0
    %4835 = vmatprep.subr.mxu0 0.0
    %4836 = vmatpush1.msra.mxu0 0.0
    %4837 = vmatprep.subr.mxu0 0.0
    %4838 = vmatpush1.msra.mxu0 0.0
    %4839 = vmatprep.subr.mxu0 0.0
    %4840 = vmatpush1.msra.mxu0 0.0
    %4841 = vmatprep.subr.mxu0 0.0
    %4842 = vmatpush1.msra.mxu0 0.0
    %4843 = vmatprep.subr.mxu0 0.0
    %4844 = vmatpush1.msra.mxu0 0.0
    %4845 = vmatprep.subr.mxu0 0.0
    %4846 = vmatpush1.msra.mxu0 0.0
    %4847 = vmatprep.subr.mxu0 0.0
    %4848 = vmatpush1.msra.mxu0 0.0
    %4849 = vmatprep.subr.mxu0 0.0
    %4850 = vmatpush1.msra.mxu0 0.0
    %4851 = vmatprep.subr.mxu0 0.0
    %4852 = vmatpush1.msra.mxu0 0.0
    %4853 = vmatprep.subr.mxu0 0.0
    %4854 = vmatpush1.msra.mxu0 0.0
    %4855 = vmatprep.subr.mxu0 0.0
    %4856 = vmatpush1.msra.mxu0 0.0
    %4857 = vmatprep.subr.mxu0 0.0
    %4858 = vmatpush1.msra.mxu0 0.0
    %4859 = vmatprep.subr.mxu0 0.0
    %4860 = vmatpush1.msra.mxu0 0.0
    %4861 = vmatprep.subr.mxu0 0.0
    %4862 = vmatpush1.msra.mxu0 0.0
    %4863 = vmatprep.subr.mxu0 0.0
    %4864 = vmatpush1.msra.mxu0 0.0
    %4865 = vmatprep.subr.mxu0 0.0
    %4866 = vmatpush1.msra.mxu0 0.0
    %4867 = vmatprep.subr.mxu0 0.0
    %4868 = vmatpush1.msra.mxu0 0.0
    %4869 = vmatprep.subr.mxu0 0.0
    %4870 = vmatpush1.msra.mxu0 0.0
    %4871 = vmatprep.subr.mxu0 0.0
    %4872 = vmatpush1.msra.mxu0 0.0
    %4873 = vmatprep.subr.mxu0 0.0
    %4874 = vmatpush1.msra.mxu0 0.0
    %4875 = vmatprep.subr.mxu0 0.0
    %4876 = vmatpush1.msra.mxu0 0.0
    %4877 = vmatprep.subr.mxu0 0.0
    %4878 = vmatpush1.msra.mxu0 0.0
    %4879 = vmatprep.subr.mxu0 0.0
    %4880 = vmatpush1.msra.mxu0 0.0
    %4881 = vmatprep.subr.mxu0 0.0
    %4882 = vmatpush1.msra.mxu0 0.0
    %4883 = vmatprep.subr.mxu0 0.0
    %4884 = vmatpush1.msra.mxu0 0.0
    %4885 = vmatprep.subr.mxu0 0.0
    %4886 = vmatpush1.msra.mxu0 0.0
    %4887 = vmatprep.mubr.f32.mxu0 0.0
    %v4888 = vand.u32 %v4643, 4294901760
    %v4889 = vsub.f32 %v4643, %v4888
    %4890 = vmatmul.mubr.f32.gmra.mrb[0].mxu0 %v4889
    %v4891 = vpop.f32.mrb[0].mxu0
    %v4892 = vadd.f32 %v4812, %v4891
    %v4893 = vpop.f32.mrb[0].mxu0
    %4894 = vdwg.mxu0
    %4895 = vmatprep.subr.mxu0 0.0
    %v4896 = vand.u32 %v61, 4294901760
    %4897 = vmatpush1.msra.mxu0 %v4896
    %4898 = vmatprep.subr.mxu0 0.0
    %v4899 = vand.u32 %v62, 4294901760
    %4900 = vmatpush1.msra.mxu0 %v4899
    %4901 = vmatprep.subr.mxu0 0.0
    %v4902 = vand.u32 %v63, 4294901760
    %4903 = vmatpush1.msra.mxu0 %v4902
    %4904 = vmatprep.subr.mxu0 0.0
    %v4905 = vand.u32 %v64, 4294901760
    %4906 = vmatpush1.msra.mxu0 %v4905
    %4907 = vmatprep.subr.mxu0 0.0
    %4908 = vmatpush1.msra.mxu0 0.0
    %4909 = vmatprep.subr.mxu0 0.0
    %4910 = vmatpush1.msra.mxu0 0.0
    %4911 = vmatprep.subr.mxu0 0.0
    %4912 = vmatpush1.msra.mxu0 0.0
    %4913 = vmatprep.subr.mxu0 0.0
    %4914 = vmatpush1.msra.mxu0 0.0
    %4915 = vmatprep.subr.mxu0 0.0
    %4916 = vmatpush1.msra.mxu0 0.0
    %4917 = vmatprep.subr.mxu0 0.0
    %4918 = vmatpush1.msra.mxu0 0.0
    %4919 = vmatprep.subr.mxu0 0.0
    %4920 = vmatpush1.msra.mxu0 0.0
    %4921 = vmatprep.subr.mxu0 0.0
    %4922 = vmatpush1.msra.mxu0 0.0
    %4923 = vmatprep.subr.mxu0 0.0
    %4924 = vmatpush1.msra.mxu0 0.0
    %4925 = vmatprep.subr.mxu0 0.0
    %4926 = vmatpush1.msra.mxu0 0.0
    %4927 = vmatprep.subr.mxu0 0.0
    %4928 = vmatpush1.msra.mxu0 0.0
    %4929 = vmatprep.subr.mxu0 0.0
    %4930 = vmatpush1.msra.mxu0 0.0
    %4931 = vmatprep.subr.mxu0 0.0
    %4932 = vmatpush1.msra.mxu0 0.0
    %4933 = vmatprep.subr.mxu0 0.0
    %4934 = vmatpush1.msra.mxu0 0.0
    %4935 = vmatprep.subr.mxu0 0.0
    %4936 = vmatpush1.msra.mxu0 0.0
    %4937 = vmatprep.subr.mxu0 0.0
    %4938 = vmatpush1.msra.mxu0 0.0
    %4939 = vmatprep.subr.mxu0 0.0
    %4940 = vmatpush1.msra.mxu0 0.0
    %4941 = vmatprep.subr.mxu0 0.0
    %4942 = vmatpush1.msra.mxu0 0.0
    %4943 = vmatprep.subr.mxu0 0.0
    %4944 = vmatpush1.msra.mxu0 0.0
    %4945 = vmatprep.subr.mxu0 0.0
    %4946 = vmatpush1.msra.mxu0 0.0
    %4947 = vmatprep.subr.mxu0 0.0
    %4948 = vmatpush1.msra.mxu0 0.0
    %4949 = vmatprep.subr.mxu0 0.0
    %4950 = vmatpush1.msra.mxu0 0.0
    %4951 = vmatprep.subr.mxu0 0.0
    %4952 = vmatpush1.msra.mxu0 0.0
    %4953 = vmatprep.subr.mxu0 0.0
    %4954 = vmatpush1.msra.mxu0 0.0
    %4955 = vmatprep.subr.mxu0 0.0
    %4956 = vmatpush1.msra.mxu0 0.0
    %4957 = vmatprep.subr.mxu0 0.0
    %4958 = vmatpush1.msra.mxu0 0.0
    %4959 = vmatprep.subr.mxu0 0.0
    %4960 = vmatpush1.msra.mxu0 0.0
    %4961 = vmatprep.subr.mxu0 0.0
    %4962 = vmatpush1.msra.mxu0 0.0
    %4963 = vmatprep.mubr.f32.mxu0 0.0
    %v4964 = vand.u32 %v4643, 4294901760
    %v4965 = vsub.f32 %v4643, %v4964
    %v4966 = vand.u32 %v4965, 4294901760
    %4967 = vmatmul.mubr.f32.gmra.mrb[0].mxu0 %v4966
    %v4968 = vpop.f32.mrb[0].mxu0
    %v4969 = vadd.f32 %v4892, %v4968
    %v4970 = vpop.f32.mrb[0].mxu0
    %4971 = vdwg.mxu0
    %4972 = vmatprep.subr.mxu0 0.0
    %v4973 = vand.u32 %v61, 4294901760
    %v4974 = vsub.f32 %v61, %v4973
    %v4975 = vand.u32 %v4974, 4294901760
    %4976 = vmatpush1.msra.mxu0 %v4975
    %4977 = vmatprep.subr.mxu0 0.0
    %v4978 = vand.u32 %v62, 4294901760
    %v4979 = vsub.f32 %v62, %v4978
    %v4980 = vand.u32 %v4979, 4294901760
    %4981 = vmatpush1.msra.mxu0 %v4980
    %4982 = vmatprep.subr.mxu0 0.0
    %v4983 = vand.u32 %v63, 4294901760
    %v4984 = vsub.f32 %v63, %v4983
    %v4985 = vand.u32 %v4984, 4294901760
    %4986 = vmatpush1.msra.mxu0 %v4985
    %4987 = vmatprep.subr.mxu0 0.0
    %v4988 = vand.u32 %v64, 4294901760
    %v4989 = vsub.f32 %v64, %v4988
    %v4990 = vand.u32 %v4989, 4294901760
    %4991 = vmatpush1.msra.mxu0 %v4990
    %4992 = vmatprep.subr.mxu0 0.0
    %4993 = vmatpush1.msra.mxu0 0.0
    %4994 = vmatprep.subr.mxu0 0.0
    %4995 = vmatpush1.msra.mxu0 0.0
    %4996 = vmatprep.subr.mxu0 0.0
    %4997 = vmatpush1.msra.mxu0 0.0
    %4998 = vmatprep.subr.mxu0 0.0
    %4999 = vmatpush1.msra.mxu0 0.0
    %5000 = vmatprep.subr.mxu0 0.0
    %5001 = vmatpush1.msra.mxu0 0.0
    %5002 = vmatprep.subr.mxu0 0.0
    %5003 = vmatpush1.msra.mxu0 0.0
    %5004 = vmatprep.subr.mxu0 0.0
    %5005 = vmatpush1.msra.mxu0 0.0
    %5006 = vmatprep.subr.mxu0 0.0
    %5007 = vmatpush1.msra.mxu0 0.0
    %5008 = vmatprep.subr.mxu0 0.0
    %5009 = vmatpush1.msra.mxu0 0.0
    %5010 = vmatprep.subr.mxu0 0.0
    %5011 = vmatpush1.msra.mxu0 0.0
    %5012 = vmatprep.subr.mxu0 0.0
    %5013 = vmatpush1.msra.mxu0 0.0
    %5014 = vmatprep.subr.mxu0 0.0
    %5015 = vmatpush1.msra.mxu0 0.0
    %5016 = vmatprep.subr.mxu0 0.0
    %5017 = vmatpush1.msra.mxu0 0.0
    %5018 = vmatprep.subr.mxu0 0.0
    %5019 = vmatpush1.msra.mxu0 0.0
    %5020 = vmatprep.subr.mxu0 0.0
    %5021 = vmatpush1.msra.mxu0 0.0
    %5022 = vmatprep.subr.mxu0 0.0
    %5023 = vmatpush1.msra.mxu0 0.0
    %5024 = vmatprep.subr.mxu0 0.0
    %5025 = vmatpush1.msra.mxu0 0.0
    %5026 = vmatprep.subr.mxu0 0.0
    %5027 = vmatpush1.msra.mxu0 0.0
    %5028 = vmatprep.subr.mxu0 0.0
    %5029 = vmatpush1.msra.mxu0 0.0
    %5030 = vmatprep.subr.mxu0 0.0
    %5031 = vmatpush1.msra.mxu0 0.0
    %5032 = vmatprep.subr.mxu0 0.0
    %5033 = vmatpush1.msra.mxu0 0.0
    %5034 = vmatprep.subr.mxu0 0.0
    %5035 = vmatpush1.msra.mxu0 0.0
    %5036 = vmatprep.subr.mxu0 0.0
    %5037 = vmatpush1.msra.mxu0 0.0
    %5038 = vmatprep.subr.mxu0 0.0
    %5039 = vmatpush1.msra.mxu0 0.0
    %5040 = vmatprep.subr.mxu0 0.0
    %5041 = vmatpush1.msra.mxu0 0.0
    %5042 = vmatprep.subr.mxu0 0.0
    %5043 = vmatpush1.msra.mxu0 0.0
    %5044 = vmatprep.subr.mxu0 0.0
    %5045 = vmatpush1.msra.mxu0 0.0
    %5046 = vmatprep.subr.mxu0 0.0
    %5047 = vmatpush1.msra.mxu0 0.0
    %5048 = vmatprep.mubr.f32.mxu0 0.0
    %v5049 = vand.u32 %v4643, 4294901760
    %5050 = vmatmul.mubr.f32.gmra.mrb[0].mxu0 %v5049
    %v5051 = vpop.f32.mrb[0].mxu0
    %v5052 = vadd.f32 %v4969, %v5051
    %v5053 = vpop.f32.mrb[0].mxu0
    %5054 = vdwg.mxu0
    %5055 = vmatprep.subr.mxu0 0.0
    %v5056 = vand.u32 %v61, 4294901760
    %5057 = vmatpush1.msra.mxu0 %v5056
    %5058 = vmatprep.subr.mxu0 0.0
    %v5059 = vand.u32 %v62, 4294901760
    %5060 = vmatpush1.msra.mxu0 %v5059
    %5061 = vmatprep.subr.mxu0 0.0
    %v5062 = vand.u32 %v63, 4294901760
    %5063 = vmatpush1.msra.mxu0 %v5062
    %5064 = vmatprep.subr.mxu0 0.0
    %v5065 = vand.u32 %v64, 4294901760
    %5066 = vmatpush1.msra.mxu0 %v5065
    %5067 = vmatprep.subr.mxu0 0.0
    %5068 = vmatpush1.msra.mxu0 0.0
    %5069 = vmatprep.subr.mxu0 0.0
    %5070 = vmatpush1.msra.mxu0 0.0
    %5071 = vmatprep.subr.mxu0 0.0
    %5072 = vmatpush1.msra.mxu0 0.0
    %5073 = vmatprep.subr.mxu0 0.0
    %5074 = vmatpush1.msra.mxu0 0.0
    %5075 = vmatprep.subr.mxu0 0.0
    %5076 = vmatpush1.msra.mxu0 0.0
    %5077 = vmatprep.subr.mxu0 0.0
    %5078 = vmatpush1.msra.mxu0 0.0
    %5079 = vmatprep.subr.mxu0 0.0
    %5080 = vmatpush1.msra.mxu0 0.0
    %5081 = vmatprep.subr.mxu0 0.0
    %5082 = vmatpush1.msra.mxu0 0.0
    %5083 = vmatprep.subr.mxu0 0.0
    %5084 = vmatpush1.msra.mxu0 0.0
    %5085 = vmatprep.subr.mxu0 0.0
    %5086 = vmatpush1.msra.mxu0 0.0
    %5087 = vmatprep.subr.mxu0 0.0
    %5088 = vmatpush1.msra.mxu0 0.0
    %5089 = vmatprep.subr.mxu0 0.0
    %5090 = vmatpush1.msra.mxu0 0.0
    %5091 = vmatprep.subr.mxu0 0.0
    %5092 = vmatpush1.msra.mxu0 0.0
    %5093 = vmatprep.subr.mxu0 0.0
    %5094 = vmatpush1.msra.mxu0 0.0
    %5095 = vmatprep.subr.mxu0 0.0
    %5096 = vmatpush1.msra.mxu0 0.0
    %5097 = vmatprep.subr.mxu0 0.0
    %5098 = vmatpush1.msra.mxu0 0.0
    %5099 = vmatprep.subr.mxu0 0.0
    %5100 = vmatpush1.msra.mxu0 0.0
    %5101 = vmatprep.subr.mxu0 0.0
    %5102 = vmatpush1.msra.mxu0 0.0
    %5103 = vmatprep.subr.mxu0 0.0
    %5104 = vmatpush1.msra.mxu0 0.0
    %5105 = vmatprep.subr.mxu0 0.0
    %5106 = vmatpush1.msra.mxu0 0.0
    %5107 = vmatprep.subr.mxu0 0.0
    %5108 = vmatpush1.msra.mxu0 0.0
    %5109 = vmatprep.subr.mxu0 0.0
    %5110 = vmatpush1.msra.mxu0 0.0
    %5111 = vmatprep.subr.mxu0 0.0
    %5112 = vmatpush1.msra.mxu0 0.0
    %5113 = vmatprep.subr.mxu0 0.0
    %5114 = vmatpush1.msra.mxu0 0.0
    %5115 = vmatprep.subr.mxu0 0.0
    %5116 = vmatpush1.msra.mxu0 0.0
    %5117 = vmatprep.subr.mxu0 0.0
    %5118 = vmatpush1.msra.mxu0 0.0
    %5119 = vmatprep.subr.mxu0 0.0
    %5120 = vmatpush1.msra.mxu0 0.0
    %5121 = vmatprep.subr.mxu0 0.0
    %5122 = vmatpush1.msra.mxu0 0.0
    %5123 = vmatprep.mubr.f32.mxu0 0.0
    %v5124 = vand.u32 %v4643, 4294901760
    %5125 = vmatmul.mubr.f32.gmra.mrb[0].mxu0 %v5124
    %v5126 = vpop.f32.mrb[0].mxu0
    %v5127 = vadd.f32 %v5052, %v5126
    %v5128 = vpop.f32.mrb[0].mxu0
    %5129 = vdwg.mxu0
    %v5130 = vmul.f32 %v5127, 0.001953125
    %v5132 = vsel %vm241, %v4641, 0
    %5134 = vmatprep.subr.mxu0 0.0
    %v5135 = vand.u32 %v61, 4294901760
    %5136 = vmatpush1.msra.mxu0 %v5135
    %5137 = vmatprep.subr.mxu0 0.0
    %v5138 = vand.u32 %v62, 4294901760
    %5139 = vmatpush1.msra.mxu0 %v5138
    %5140 = vmatprep.subr.mxu0 0.0
    %v5141 = vand.u32 %v63, 4294901760
    %5142 = vmatpush1.msra.mxu0 %v5141
    %5143 = vmatprep.subr.mxu0 0.0
    %v5144 = vand.u32 %v64, 4294901760
    %5145 = vmatpush1.msra.mxu0 %v5144
    %5146 = vmatprep.subr.mxu0 0.0
    %5147 = vmatpush1.msra.mxu0 0.0
    %5148 = vmatprep.subr.mxu0 0.0
    %5149 = vmatpush1.msra.mxu0 0.0
    %5150 = vmatprep.subr.mxu0 0.0
    %5151 = vmatpush1.msra.mxu0 0.0
    %5152 = vmatprep.subr.mxu0 0.0
    %5153 = vmatpush1.msra.mxu0 0.0
    %5154 = vmatprep.subr.mxu0 0.0
    %5155 = vmatpush1.msra.mxu0 0.0
    %5156 = vmatprep.subr.mxu0 0.0
    %5157 = vmatpush1.msra.mxu0 0.0
    %5158 = vmatprep.subr.mxu0 0.0
    %5159 = vmatpush1.msra.mxu0 0.0
    %5160 = vmatprep.subr.mxu0 0.0
    %5161 = vmatpush1.msra.mxu0 0.0
    %5162 = vmatprep.subr.mxu0 0.0
    %5163 = vmatpush1.msra.mxu0 0.0
    %5164 = vmatprep.subr.mxu0 0.0
    %5165 = vmatpush1.msra.mxu0 0.0
    %5166 = vmatprep.subr.mxu0 0.0
    %5167 = vmatpush1.msra.mxu0 0.0
    %5168 = vmatprep.subr.mxu0 0.0
    %5169 = vmatpush1.msra.mxu0 0.0
    %5170 = vmatprep.subr.mxu0 0.0
    %5171 = vmatpush1.msra.mxu0 0.0
    %5172 = vmatprep.subr.mxu0 0.0
    %5173 = vmatpush1.msra.mxu0 0.0
    %5174 = vmatprep.subr.mxu0 0.0
    %5175 = vmatpush1.msra.mxu0 0.0
    %5176 = vmatprep.subr.mxu0 0.0
    %5177 = vmatpush1.msra.mxu0 0.0
    %5178 = vmatprep.subr.mxu0 0.0
    %5179 = vmatpush1.msra.mxu0 0.0
    %5180 = vmatprep.subr.mxu0 0.0
    %5181 = vmatpush1.msra.mxu0 0.0
    %5182 = vmatprep.subr.mxu0 0.0
    %5183 = vmatpush1.msra.mxu0 0.0
    %5184 = vmatprep.subr.mxu0 0.0
    %5185 = vmatpush1.msra.mxu0 0.0
    %5186 = vmatprep.subr.mxu0 0.0
    %5187 = vmatpush1.msra.mxu0 0.0
    %5188 = vmatprep.subr.mxu0 0.0
    %5189 = vmatpush1.msra.mxu0 0.0
    %5190 = vmatprep.subr.mxu0 0.0
    %5191 = vmatpush1.msra.mxu0 0.0
    %5192 = vmatprep.subr.mxu0 0.0
    %5193 = vmatpush1.msra.mxu0 0.0
    %5194 = vmatprep.subr.mxu0 0.0
    %5195 = vmatpush1.msra.mxu0 0.0
    %5196 = vmatprep.subr.mxu0 0.0
    %5197 = vmatpush1.msra.mxu0 0.0
    %5198 = vmatprep.subr.mxu0 0.0
    %5199 = vmatpush1.msra.mxu0 0.0
    %5200 = vmatprep.subr.mxu0 0.0
    %5201 = vmatpush1.msra.mxu0 0.0
    %5202 = vmatprep.mubr.f32.mxu0 0.0
    %v5203 = vand.u32 %v5132, 4294901760
    %v5204 = vsub.f32 %v5132, %v5203
    %v5205 = vand.u32 %v5204, 4294901760
    %v5206 = vsub.f32 %v5204, %v5205
    %v5207 = vand.u32 %v5206, 4294901760
    %5208 = vmatmul.mubr.f32.gmra.mrb[0].mxu0 %v5207
    %v5209 = vpop.f32.mrb[0].mxu0
    %v5210 = vadd.f32 0.0, %v5209
    %v5211 = vpop.f32.mrb[0].mxu0
    %5212 = vdwg.mxu0
    %5213 = vmatprep.subr.mxu0 0.0
    %v5214 = vand.u32 %v61, 4294901760
    %v5215 = vsub.f32 %v61, %v5214
    %v5216 = vand.u32 %v5215, 4294901760
    %v5217 = vsub.f32 %v5215, %v5216
    %v5218 = vand.u32 %v5217, 4294901760
    %5219 = vmatpush1.msra.mxu0 %v5218
    %5220 = vmatprep.subr.mxu0 0.0
    %v5221 = vand.u32 %v62, 4294901760
    %v5222 = vsub.f32 %v62, %v5221
    %v5223 = vand.u32 %v5222, 4294901760
    %v5224 = vsub.f32 %v5222, %v5223
    %v5225 = vand.u32 %v5224, 4294901760
    %5226 = vmatpush1.msra.mxu0 %v5225
    %5227 = vmatprep.subr.mxu0 0.0
    %v5228 = vand.u32 %v63, 4294901760
    %v5229 = vsub.f32 %v63, %v5228
    %v5230 = vand.u32 %v5229, 4294901760
    %v5231 = vsub.f32 %v5229, %v5230
    %v5232 = vand.u32 %v5231, 4294901760
    %5233 = vmatpush1.msra.mxu0 %v5232
    %5234 = vmatprep.subr.mxu0 0.0
    %v5235 = vand.u32 %v64, 4294901760
    %v5236 = vsub.f32 %v64, %v5235
    %v5237 = vand.u32 %v5236, 4294901760
    %v5238 = vsub.f32 %v5236, %v5237
    %v5239 = vand.u32 %v5238, 4294901760
    %5240 = vmatpush1.msra.mxu0 %v5239
    %5241 = vmatprep.subr.mxu0 0.0
    %5242 = vmatpush1.msra.mxu0 0.0
    %5243 = vmatprep.subr.mxu0 0.0
    %5244 = vmatpush1.msra.mxu0 0.0
    %5245 = vmatprep.subr.mxu0 0.0
    %5246 = vmatpush1.msra.mxu0 0.0
    %5247 = vmatprep.subr.mxu0 0.0
    %5248 = vmatpush1.msra.mxu0 0.0
    %5249 = vmatprep.subr.mxu0 0.0
    %5250 = vmatpush1.msra.mxu0 0.0
    %5251 = vmatprep.subr.mxu0 0.0
    %5252 = vmatpush1.msra.mxu0 0.0
    %5253 = vmatprep.subr.mxu0 0.0
    %5254 = vmatpush1.msra.mxu0 0.0
    %5255 = vmatprep.subr.mxu0 0.0
    %5256 = vmatpush1.msra.mxu0 0.0
    %5257 = vmatprep.subr.mxu0 0.0
    %5258 = vmatpush1.msra.mxu0 0.0
    %5259 = vmatprep.subr.mxu0 0.0
    %5260 = vmatpush1.msra.mxu0 0.0
    %5261 = vmatprep.subr.mxu0 0.0
    %5262 = vmatpush1.msra.mxu0 0.0
    %5263 = vmatprep.subr.mxu0 0.0
    %5264 = vmatpush1.msra.mxu0 0.0
    %5265 = vmatprep.subr.mxu0 0.0
    %5266 = vmatpush1.msra.mxu0 0.0
    %5267 = vmatprep.subr.mxu0 0.0
    %5268 = vmatpush1.msra.mxu0 0.0
    %5269 = vmatprep.subr.mxu0 0.0
    %5270 = vmatpush1.msra.mxu0 0.0
    %5271 = vmatprep.subr.mxu0 0.0
    %5272 = vmatpush1.msra.mxu0 0.0
    %5273 = vmatprep.subr.mxu0 0.0
    %5274 = vmatpush1.msra.mxu0 0.0
    %5275 = vmatprep.subr.mxu0 0.0
    %5276 = vmatpush1.msra.mxu0 0.0
    %5277 = vmatprep.subr.mxu0 0.0
    %5278 = vmatpush1.msra.mxu0 0.0
    %5279 = vmatprep.subr.mxu0 0.0
    %5280 = vmatpush1.msra.mxu0 0.0
    %5281 = vmatprep.subr.mxu0 0.0
    %5282 = vmatpush1.msra.mxu0 0.0
    %5283 = vmatprep.subr.mxu0 0.0
    %5284 = vmatpush1.msra.mxu0 0.0
    %5285 = vmatprep.subr.mxu0 0.0
    %5286 = vmatpush1.msra.mxu0 0.0
    %5287 = vmatprep.subr.mxu0 0.0
    %5288 = vmatpush1.msra.mxu0 0.0
    %5289 = vmatprep.subr.mxu0 0.0
    %5290 = vmatpush1.msra.mxu0 0.0
    %5291 = vmatprep.subr.mxu0 0.0
    %5292 = vmatpush1.msra.mxu0 0.0
    %5293 = vmatprep.subr.mxu0 0.0
    %5294 = vmatpush1.msra.mxu0 0.0
    %5295 = vmatprep.subr.mxu0 0.0
    %5296 = vmatpush1.msra.mxu0 0.0
    %5297 = vmatprep.mubr.f32.mxu0 0.0
    %v5298 = vand.u32 %v5132, 4294901760
    %5299 = vmatmul.mubr.f32.gmra.mrb[0].mxu0 %v5298
    %v5300 = vpop.f32.mrb[0].mxu0
    %v5301 = vadd.f32 %v5210, %v5300
    %v5302 = vpop.f32.mrb[0].mxu0
    %5303 = vdwg.mxu0
    %5304 = vmatprep.subr.mxu0 0.0
    %v5305 = vand.u32 %v61, 4294901760
    %v5306 = vsub.f32 %v61, %v5305
    %5307 = vmatpush1.msra.mxu0 %v5306
    %5308 = vmatprep.subr.mxu0 0.0
    %v5309 = vand.u32 %v62, 4294901760
    %v5310 = vsub.f32 %v62, %v5309
    %5311 = vmatpush1.msra.mxu0 %v5310
    %5312 = vmatprep.subr.mxu0 0.0
    %v5313 = vand.u32 %v63, 4294901760
    %v5314 = vsub.f32 %v63, %v5313
    %5315 = vmatpush1.msra.mxu0 %v5314
    %5316 = vmatprep.subr.mxu0 0.0
    %v5317 = vand.u32 %v64, 4294901760
    %v5318 = vsub.f32 %v64, %v5317
    %5319 = vmatpush1.msra.mxu0 %v5318
    %5320 = vmatprep.subr.mxu0 0.0
    %5321 = vmatpush1.msra.mxu0 0.0
    %5322 = vmatprep.subr.mxu0 0.0
    %5323 = vmatpush1.msra.mxu0 0.0
    %5324 = vmatprep.subr.mxu0 0.0
    %5325 = vmatpush1.msra.mxu0 0.0
    %5326 = vmatprep.subr.mxu0 0.0
    %5327 = vmatpush1.msra.mxu0 0.0
    %5328 = vmatprep.subr.mxu0 0.0
    %5329 = vmatpush1.msra.mxu0 0.0
    %5330 = vmatprep.subr.mxu0 0.0
    %5331 = vmatpush1.msra.mxu0 0.0
    %5332 = vmatprep.subr.mxu0 0.0
    %5333 = vmatpush1.msra.mxu0 0.0
    %5334 = vmatprep.subr.mxu0 0.0
    %5335 = vmatpush1.msra.mxu0 0.0
    %5336 = vmatprep.subr.mxu0 0.0
    %5337 = vmatpush1.msra.mxu0 0.0
    %5338 = vmatprep.subr.mxu0 0.0
    %5339 = vmatpush1.msra.mxu0 0.0
    %5340 = vmatprep.subr.mxu0 0.0
    %5341 = vmatpush1.msra.mxu0 0.0
    %5342 = vmatprep.subr.mxu0 0.0
    %5343 = vmatpush1.msra.mxu0 0.0
    %5344 = vmatprep.subr.mxu0 0.0
    %5345 = vmatpush1.msra.mxu0 0.0
    %5346 = vmatprep.subr.mxu0 0.0
    %5347 = vmatpush1.msra.mxu0 0.0
    %5348 = vmatprep.subr.mxu0 0.0
    %5349 = vmatpush1.msra.mxu0 0.0
    %5350 = vmatprep.subr.mxu0 0.0
    %5351 = vmatpush1.msra.mxu0 0.0
    %5352 = vmatprep.subr.mxu0 0.0
    %5353 = vmatpush1.msra.mxu0 0.0
    %5354 = vmatprep.subr.mxu0 0.0
    %5355 = vmatpush1.msra.mxu0 0.0
    %5356 = vmatprep.subr.mxu0 0.0
    %5357 = vmatpush1.msra.mxu0 0.0
    %5358 = vmatprep.subr.mxu0 0.0
    %5359 = vmatpush1.msra.mxu0 0.0
    %5360 = vmatprep.subr.mxu0 0.0
    %5361 = vmatpush1.msra.mxu0 0.0
    %5362 = vmatprep.subr.mxu0 0.0
    %5363 = vmatpush1.msra.mxu0 0.0
    %5364 = vmatprep.subr.mxu0 0.0
    %5365 = vmatpush1.msra.mxu0 0.0
    %5366 = vmatprep.subr.mxu0 0.0
    %5367 = vmatpush1.msra.mxu0 0.0
    %5368 = vmatprep.subr.mxu0 0.0
    %5369 = vmatpush1.msra.mxu0 0.0
    %5370 = vmatprep.subr.mxu0 0.0
    %5371 = vmatpush1.msra.mxu0 0.0
    %5372 = vmatprep.subr.mxu0 0.0
    %5373 = vmatpush1.msra.mxu0 0.0
    %5374 = vmatprep.subr.mxu0 0.0
    %5375 = vmatpush1.msra.mxu0 0.0
    %5376 = vmatprep.mubr.f32.mxu0 0.0
    %v5377 = vand.u32 %v5132, 4294901760
    %v5378 = vsub.f32 %v5132, %v5377
    %5379 = vmatmul.mubr.f32.gmra.mrb[0].mxu0 %v5378
    %v5380 = vpop.f32.mrb[0].mxu0
    %v5381 = vadd.f32 %v5301, %v5380
    %v5382 = vpop.f32.mrb[0].mxu0
    %5383 = vdwg.mxu0
    %5384 = vmatprep.subr.mxu0 0.0
    %v5385 = vand.u32 %v61, 4294901760
    %5386 = vmatpush1.msra.mxu0 %v5385
    %5387 = vmatprep.subr.mxu0 0.0
    %v5388 = vand.u32 %v62, 4294901760
    %5389 = vmatpush1.msra.mxu0 %v5388
    %5390 = vmatprep.subr.mxu0 0.0
    %v5391 = vand.u32 %v63, 4294901760
    %5392 = vmatpush1.msra.mxu0 %v5391
    %5393 = vmatprep.subr.mxu0 0.0
    %v5394 = vand.u32 %v64, 4294901760
    %5395 = vmatpush1.msra.mxu0 %v5394
    %5396 = vmatprep.subr.mxu0 0.0
    %5397 = vmatpush1.msra.mxu0 0.0
    %5398 = vmatprep.subr.mxu0 0.0
    %5399 = vmatpush1.msra.mxu0 0.0
    %5400 = vmatprep.subr.mxu0 0.0
    %5401 = vmatpush1.msra.mxu0 0.0
    %5402 = vmatprep.subr.mxu0 0.0
    %5403 = vmatpush1.msra.mxu0 0.0
    %5404 = vmatprep.subr.mxu0 0.0
    %5405 = vmatpush1.msra.mxu0 0.0
    %5406 = vmatprep.subr.mxu0 0.0
    %5407 = vmatpush1.msra.mxu0 0.0
    %5408 = vmatprep.subr.mxu0 0.0
    %5409 = vmatpush1.msra.mxu0 0.0
    %5410 = vmatprep.subr.mxu0 0.0
    %5411 = vmatpush1.msra.mxu0 0.0
    %5412 = vmatprep.subr.mxu0 0.0
    %5413 = vmatpush1.msra.mxu0 0.0
    %5414 = vmatprep.subr.mxu0 0.0
    %5415 = vmatpush1.msra.mxu0 0.0
    %5416 = vmatprep.subr.mxu0 0.0
    %5417 = vmatpush1.msra.mxu0 0.0
    %5418 = vmatprep.subr.mxu0 0.0
    %5419 = vmatpush1.msra.mxu0 0.0
    %5420 = vmatprep.subr.mxu0 0.0
    %5421 = vmatpush1.msra.mxu0 0.0
    %5422 = vmatprep.subr.mxu0 0.0
    %5423 = vmatpush1.msra.mxu0 0.0
    %5424 = vmatprep.subr.mxu0 0.0
    %5425 = vmatpush1.msra.mxu0 0.0
    %5426 = vmatprep.subr.mxu0 0.0
    %5427 = vmatpush1.msra.mxu0 0.0
    %5428 = vmatprep.subr.mxu0 0.0
    %5429 = vmatpush1.msra.mxu0 0.0
    %5430 = vmatprep.subr.mxu0 0.0
    %5431 = vmatpush1.msra.mxu0 0.0
    %5432 = vmatprep.subr.mxu0 0.0
    %5433 = vmatpush1.msra.mxu0 0.0
    %5434 = vmatprep.subr.mxu0 0.0
    %5435 = vmatpush1.msra.mxu0 0.0
    %5436 = vmatprep.subr.mxu0 0.0
    %5437 = vmatpush1.msra.mxu0 0.0
    %5438 = vmatprep.subr.mxu0 0.0
    %5439 = vmatpush1.msra.mxu0 0.0
    %5440 = vmatprep.subr.mxu0 0.0
    %5441 = vmatpush1.msra.mxu0 0.0
    %5442 = vmatprep.subr.mxu0 0.0
    %5443 = vmatpush1.msra.mxu0 0.0
    %5444 = vmatprep.subr.mxu0 0.0
    %5445 = vmatpush1.msra.mxu0 0.0
    %5446 = vmatprep.subr.mxu0 0.0
    %5447 = vmatpush1.msra.mxu0 0.0
    %5448 = vmatprep.subr.mxu0 0.0
    %5449 = vmatpush1.msra.mxu0 0.0
    %5450 = vmatprep.subr.mxu0 0.0
    %5451 = vmatpush1.msra.mxu0 0.0
    %5452 = vmatprep.mubr.f32.mxu0 0.0
    %v5453 = vand.u32 %v5132, 4294901760
    %v5454 = vsub.f32 %v5132, %v5453
    %v5455 = vand.u32 %v5454, 4294901760
    %5456 = vmatmul.mubr.f32.gmra.mrb[0].mxu0 %v5455
    %v5457 = vpop.f32.mrb[0].mxu0
    %v5458 = vadd.f32 %v5381, %v5457
    %v5459 = vpop.f32.mrb[0].mxu0
    %5460 = vdwg.mxu0
    %5461 = vmatprep.subr.mxu0 0.0
    %v5462 = vand.u32 %v61, 4294901760
    %v5463 = vsub.f32 %v61, %v5462
    %v5464 = vand.u32 %v5463, 4294901760
    %5465 = vmatpush1.msra.mxu0 %v5464
    %5466 = vmatprep.subr.mxu0 0.0
    %v5467 = vand.u32 %v62, 4294901760
    %v5468 = vsub.f32 %v62, %v5467
    %v5469 = vand.u32 %v5468, 4294901760
    %5470 = vmatpush1.msra.mxu0 %v5469
    %5471 = vmatprep.subr.mxu0 0.0
    %v5472 = vand.u32 %v63, 4294901760
    %v5473 = vsub.f32 %v63, %v5472
    %v5474 = vand.u32 %v5473, 4294901760
    %5475 = vmatpush1.msra.mxu0 %v5474
    %5476 = vmatprep.subr.mxu0 0.0
    %v5477 = vand.u32 %v64, 4294901760
    %v5478 = vsub.f32 %v64, %v5477
    %v5479 = vand.u32 %v5478, 4294901760
    %5480 = vmatpush1.msra.mxu0 %v5479
    %5481 = vmatprep.subr.mxu0 0.0
    %5482 = vmatpush1.msra.mxu0 0.0
    %5483 = vmatprep.subr.mxu0 0.0
    %5484 = vmatpush1.msra.mxu0 0.0
    %5485 = vmatprep.subr.mxu0 0.0
    %5486 = vmatpush1.msra.mxu0 0.0
    %5487 = vmatprep.subr.mxu0 0.0
    %5488 = vmatpush1.msra.mxu0 0.0
    %5489 = vmatprep.subr.mxu0 0.0
    %5490 = vmatpush1.msra.mxu0 0.0
    %5491 = vmatprep.subr.mxu0 0.0
    %5492 = vmatpush1.msra.mxu0 0.0
    %5493 = vmatprep.subr.mxu0 0.0
    %5494 = vmatpush1.msra.mxu0 0.0
    %5495 = vmatprep.subr.mxu0 0.0
    %5496 = vmatpush1.msra.mxu0 0.0
    %5497 = vmatprep.subr.mxu0 0.0
    %5498 = vmatpush1.msra.mxu0 0.0
    %5499 = vmatprep.subr.mxu0 0.0
    %5500 = vmatpush1.msra.mxu0 0.0
    %5501 = vmatprep.subr.mxu0 0.0
    %5502 = vmatpush1.msra.mxu0 0.0
    %5503 = vmatprep.subr.mxu0 0.0
    %5504 = vmatpush1.msra.mxu0 0.0
    %5505 = vmatprep.subr.mxu0 0.0
    %5506 = vmatpush1.msra.mxu0 0.0
    %5507 = vmatprep.subr.mxu0 0.0
    %5508 = vmatpush1.msra.mxu0 0.0
    %5509 = vmatprep.subr.mxu0 0.0
    %5510 = vmatpush1.msra.mxu0 0.0
    %5511 = vmatprep.subr.mxu0 0.0
    %5512 = vmatpush1.msra.mxu0 0.0
    %5513 = vmatprep.subr.mxu0 0.0
    %5514 = vmatpush1.msra.mxu0 0.0
    %5515 = vmatprep.subr.mxu0 0.0
    %5516 = vmatpush1.msra.mxu0 0.0
    %5517 = vmatprep.subr.mxu0 0.0
    %5518 = vmatpush1.msra.mxu0 0.0
    %5519 = vmatprep.subr.mxu0 0.0
    %5520 = vmatpush1.msra.mxu0 0.0
    %5521 = vmatprep.subr.mxu0 0.0
    %5522 = vmatpush1.msra.mxu0 0.0
    %5523 = vmatprep.subr.mxu0 0.0
    %5524 = vmatpush1.msra.mxu0 0.0
    %5525 = vmatprep.subr.mxu0 0.0
    %5526 = vmatpush1.msra.mxu0 0.0
    %5527 = vmatprep.subr.mxu0 0.0
    %5528 = vmatpush1.msra.mxu0 0.0
    %5529 = vmatprep.subr.mxu0 0.0
    %5530 = vmatpush1.msra.mxu0 0.0
    %5531 = vmatprep.subr.mxu0 0.0
    %5532 = vmatpush1.msra.mxu0 0.0
    %5533 = vmatprep.subr.mxu0 0.0
    %5534 = vmatpush1.msra.mxu0 0.0
    %5535 = vmatprep.subr.mxu0 0.0
    %5536 = vmatpush1.msra.mxu0 0.0
    %5537 = vmatprep.mubr.f32.mxu0 0.0
    %v5538 = vand.u32 %v5132, 4294901760
    %5539 = vmatmul.mubr.f32.gmra.mrb[0].mxu0 %v5538
    %v5540 = vpop.f32.mrb[0].mxu0
    %v5541 = vadd.f32 %v5458, %v5540
    %v5542 = vpop.f32.mrb[0].mxu0
    %5543 = vdwg.mxu0
    %5544 = vmatprep.subr.mxu0 0.0
    %v5545 = vand.u32 %v61, 4294901760
    %5546 = vmatpush1.msra.mxu0 %v5545
    %5547 = vmatprep.subr.mxu0 0.0
    %v5548 = vand.u32 %v62, 4294901760
    %5549 = vmatpush1.msra.mxu0 %v5548
    %5550 = vmatprep.subr.mxu0 0.0
    %v5551 = vand.u32 %v63, 4294901760
    %5552 = vmatpush1.msra.mxu0 %v5551
    %5553 = vmatprep.subr.mxu0 0.0
    %v5554 = vand.u32 %v64, 4294901760
    %5555 = vmatpush1.msra.mxu0 %v5554
    %5556 = vmatprep.subr.mxu0 0.0
    %5557 = vmatpush1.msra.mxu0 0.0
    %5558 = vmatprep.subr.mxu0 0.0
    %5559 = vmatpush1.msra.mxu0 0.0
    %5560 = vmatprep.subr.mxu0 0.0
    %5561 = vmatpush1.msra.mxu0 0.0
    %5562 = vmatprep.subr.mxu0 0.0
    %5563 = vmatpush1.msra.mxu0 0.0
    %5564 = vmatprep.subr.mxu0 0.0
    %5565 = vmatpush1.msra.mxu0 0.0
    %5566 = vmatprep.subr.mxu0 0.0
    %5567 = vmatpush1.msra.mxu0 0.0
    %5568 = vmatprep.subr.mxu0 0.0
    %5569 = vmatpush1.msra.mxu0 0.0
    %5570 = vmatprep.subr.mxu0 0.0
    %5571 = vmatpush1.msra.mxu0 0.0
    %5572 = vmatprep.subr.mxu0 0.0
    %5573 = vmatpush1.msra.mxu0 0.0
    %5574 = vmatprep.subr.mxu0 0.0
    %5575 = vmatpush1.msra.mxu0 0.0
    %5576 = vmatprep.subr.mxu0 0.0
    %5577 = vmatpush1.msra.mxu0 0.0
    %5578 = vmatprep.subr.mxu0 0.0
    %5579 = vmatpush1.msra.mxu0 0.0
    %5580 = vmatprep.subr.mxu0 0.0
    %5581 = vmatpush1.msra.mxu0 0.0
    %5582 = vmatprep.subr.mxu0 0.0
    %5583 = vmatpush1.msra.mxu0 0.0
    %5584 = vmatprep.subr.mxu0 0.0
    %5585 = vmatpush1.msra.mxu0 0.0
    %5586 = vmatprep.subr.mxu0 0.0
    %5587 = vmatpush1.msra.mxu0 0.0
    %5588 = vmatprep.subr.mxu0 0.0
    %5589 = vmatpush1.msra.mxu0 0.0
    %5590 = vmatprep.subr.mxu0 0.0
    %5591 = vmatpush1.msra.mxu0 0.0
    %5592 = vmatprep.subr.mxu0 0.0
    %5593 = vmatpush1.msra.mxu0 0.0
    %5594 = vmatprep.subr.mxu0 0.0
    %5595 = vmatpush1.msra.mxu0 0.0
    %5596 = vmatprep.subr.mxu0 0.0
    %5597 = vmatpush1.msra.mxu0 0.0
    %5598 = vmatprep.subr.mxu0 0.0
    %5599 = vmatpush1.msra.mxu0 0.0
    %5600 = vmatprep.subr.mxu0 0.0
    %5601 = vmatpush1.msra.mxu0 0.0
    %5602 = vmatprep.subr.mxu0 0.0
    %5603 = vmatpush1.msra.mxu0 0.0
    %5604 = vmatprep.subr.mxu0 0.0
    %5605 = vmatpush1.msra.mxu0 0.0
    %5606 = vmatprep.subr.mxu0 0.0
    %5607 = vmatpush1.msra.mxu0 0.0
    %5608 = vmatprep.subr.mxu0 0.0
    %5609 = vmatpush1.msra.mxu0 0.0
    %5610 = vmatprep.subr.mxu0 0.0
    %5611 = vmatpush1.msra.mxu0 0.0
    %5612 = vmatprep.mubr.f32.mxu0 0.0
    %v5613 = vand.u32 %v5132, 4294901760
    %5614 = vmatmul.mubr.f32.gmra.mrb[0].mxu0 %v5613
    %v5615 = vpop.f32.mrb[0].mxu0
    %v5616 = vadd.f32 %v5541, %v5615
    %v5617 = vpop.f32.mrb[0].mxu0
    %5618 = vdwg.mxu0
    %v5619 = vmul.f32 %v5616, 0.001953125
    %v5620 = vmul.f32 %v5130, %v5130
    %v5621 = vsub.f32 %v5619, %v5620
    %v5622 = vmax.f32 %v5621, 0.0
    %v5623 = vadd.f32 %v5622, 1e-12
    %v5624 = vrsqrt.pop %v5623
    %v5626 = vsel %vm1255, %v5130, 0
    %5628 = vmatprep.subr.mxu0 0.0
    %v5629 = vand.u32 %v1261, 4294901760
    %5630 = vmatpush1.msra.mxu0 %v5629
    %5631 = vmatprep.subr.mxu0 0.0
    %5632 = vmatpush1.msra.mxu0 0.0
    %5633 = vmatprep.subr.mxu0 0.0
    %5634 = vmatpush1.msra.mxu0 0.0
    %5635 = vmatprep.subr.mxu0 0.0
    %5636 = vmatpush1.msra.mxu0 0.0
    %5637 = vmatprep.subr.mxu0 0.0
    %5638 = vmatpush1.msra.mxu0 0.0
    %5639 = vmatprep.subr.mxu0 0.0
    %5640 = vmatpush1.msra.mxu0 0.0
    %5641 = vmatprep.subr.mxu0 0.0
    %5642 = vmatpush1.msra.mxu0 0.0
    %5643 = vmatprep.subr.mxu0 0.0
    %5644 = vmatpush1.msra.mxu0 0.0
    %5645 = vmatprep.subr.mxu0 0.0
    %5646 = vmatpush1.msra.mxu0 0.0
    %5647 = vmatprep.subr.mxu0 0.0
    %5648 = vmatpush1.msra.mxu0 0.0
    %5649 = vmatprep.subr.mxu0 0.0
    %5650 = vmatpush1.msra.mxu0 0.0
    %5651 = vmatprep.subr.mxu0 0.0
    %5652 = vmatpush1.msra.mxu0 0.0
    %5653 = vmatprep.subr.mxu0 0.0
    %5654 = vmatpush1.msra.mxu0 0.0
    %5655 = vmatprep.subr.mxu0 0.0
    %5656 = vmatpush1.msra.mxu0 0.0
    %5657 = vmatprep.subr.mxu0 0.0
    %5658 = vmatpush1.msra.mxu0 0.0
    %5659 = vmatprep.subr.mxu0 0.0
    %5660 = vmatpush1.msra.mxu0 0.0
    %5661 = vmatprep.subr.mxu0 0.0
    %5662 = vmatpush1.msra.mxu0 0.0
    %5663 = vmatprep.subr.mxu0 0.0
    %5664 = vmatpush1.msra.mxu0 0.0
    %5665 = vmatprep.subr.mxu0 0.0
    %5666 = vmatpush1.msra.mxu0 0.0
    %5667 = vmatprep.subr.mxu0 0.0
    %5668 = vmatpush1.msra.mxu0 0.0
    %5669 = vmatprep.subr.mxu0 0.0
    %5670 = vmatpush1.msra.mxu0 0.0
    %5671 = vmatprep.subr.mxu0 0.0
    %5672 = vmatpush1.msra.mxu0 0.0
    %5673 = vmatprep.subr.mxu0 0.0
    %5674 = vmatpush1.msra.mxu0 0.0
    %5675 = vmatprep.subr.mxu0 0.0
    %5676 = vmatpush1.msra.mxu0 0.0
    %5677 = vmatprep.subr.mxu0 0.0
    %5678 = vmatpush1.msra.mxu0 0.0
    %5679 = vmatprep.subr.mxu0 0.0
    %5680 = vmatpush1.msra.mxu0 0.0
    %5681 = vmatprep.subr.mxu0 0.0
    %5682 = vmatpush1.msra.mxu0 0.0
    %5683 = vmatprep.subr.mxu0 0.0
    %5684 = vmatpush1.msra.mxu0 0.0
    %5685 = vmatprep.subr.mxu0 0.0
    %5686 = vmatpush1.msra.mxu0 0.0
    %5687 = vmatprep.subr.mxu0 0.0
    %5688 = vmatpush1.msra.mxu0 0.0
    %5689 = vmatprep.subr.mxu0 0.0
    %5690 = vmatpush1.msra.mxu0 0.0
    %5691 = vmatprep.subr.mxu0 0.0
    %5692 = vmatpush1.msra.mxu0 0.0
    %5693 = vmatprep.mubr.f32.mxu0 0.0
    %v5694 = vand.u32 %v5626, 4294901760
    %v5695 = vsub.f32 %v5626, %v5694
    %v5696 = vand.u32 %v5695, 4294901760
    %v5697 = vsub.f32 %v5695, %v5696
    %v5698 = vand.u32 %v5697, 4294901760
    %5699 = vmatmul.mubr.f32.gmra.mrb[0].mxu0 %v5698
    %v5700 = vpop.f32.mrb[0].mxu0
    %v5701 = vadd.f32 0.0, %v5700
    %v5702 = vpop.f32.mrb[0].mxu0
    %5703 = vdwg.mxu0
    %5704 = vmatprep.subr.mxu0 0.0
    %v5705 = vand.u32 %v1261, 4294901760
    %v5706 = vsub.f32 %v1261, %v5705
    %v5707 = vand.u32 %v5706, 4294901760
    %v5708 = vsub.f32 %v5706, %v5707
    %v5709 = vand.u32 %v5708, 4294901760
    %5710 = vmatpush1.msra.mxu0 %v5709
    %5711 = vmatprep.subr.mxu0 0.0
    %5712 = vmatpush1.msra.mxu0 0.0
    %5713 = vmatprep.subr.mxu0 0.0
    %5714 = vmatpush1.msra.mxu0 0.0
    %5715 = vmatprep.subr.mxu0 0.0
    %5716 = vmatpush1.msra.mxu0 0.0
    %5717 = vmatprep.subr.mxu0 0.0
    %5718 = vmatpush1.msra.mxu0 0.0
    %5719 = vmatprep.subr.mxu0 0.0
    %5720 = vmatpush1.msra.mxu0 0.0
    %5721 = vmatprep.subr.mxu0 0.0
    %5722 = vmatpush1.msra.mxu0 0.0
    %5723 = vmatprep.subr.mxu0 0.0
    %5724 = vmatpush1.msra.mxu0 0.0
    %5725 = vmatprep.subr.mxu0 0.0
    %5726 = vmatpush1.msra.mxu0 0.0
    %5727 = vmatprep.subr.mxu0 0.0
    %5728 = vmatpush1.msra.mxu0 0.0
    %5729 = vmatprep.subr.mxu0 0.0
    %5730 = vmatpush1.msra.mxu0 0.0
    %5731 = vmatprep.subr.mxu0 0.0
    %5732 = vmatpush1.msra.mxu0 0.0
    %5733 = vmatprep.subr.mxu0 0.0
    %5734 = vmatpush1.msra.mxu0 0.0
    %5735 = vmatprep.subr.mxu0 0.0
    %5736 = vmatpush1.msra.mxu0 0.0
    %5737 = vmatprep.subr.mxu0 0.0
    %5738 = vmatpush1.msra.mxu0 0.0
    %5739 = vmatprep.subr.mxu0 0.0
    %5740 = vmatpush1.msra.mxu0 0.0
    %5741 = vmatprep.subr.mxu0 0.0
    %5742 = vmatpush1.msra.mxu0 0.0
    %5743 = vmatprep.subr.mxu0 0.0
    %5744 = vmatpush1.msra.mxu0 0.0
    %5745 = vmatprep.subr.mxu0 0.0
    %5746 = vmatpush1.msra.mxu0 0.0
    %5747 = vmatprep.subr.mxu0 0.0
    %5748 = vmatpush1.msra.mxu0 0.0
    %5749 = vmatprep.subr.mxu0 0.0
    %5750 = vmatpush1.msra.mxu0 0.0
    %5751 = vmatprep.subr.mxu0 0.0
    %5752 = vmatpush1.msra.mxu0 0.0
    %5753 = vmatprep.subr.mxu0 0.0
    %5754 = vmatpush1.msra.mxu0 0.0
    %5755 = vmatprep.subr.mxu0 0.0
    %5756 = vmatpush1.msra.mxu0 0.0
    %5757 = vmatprep.subr.mxu0 0.0
    %5758 = vmatpush1.msra.mxu0 0.0
    %5759 = vmatprep.subr.mxu0 0.0
    %5760 = vmatpush1.msra.mxu0 0.0
    %5761 = vmatprep.subr.mxu0 0.0
    %5762 = vmatpush1.msra.mxu0 0.0
    %5763 = vmatprep.subr.mxu0 0.0
    %5764 = vmatpush1.msra.mxu0 0.0
    %5765 = vmatprep.subr.mxu0 0.0
    %5766 = vmatpush1.msra.mxu0 0.0
    %5767 = vmatprep.subr.mxu0 0.0
    %5768 = vmatpush1.msra.mxu0 0.0
    %5769 = vmatprep.subr.mxu0 0.0
    %5770 = vmatpush1.msra.mxu0 0.0
    %5771 = vmatprep.subr.mxu0 0.0
    %5772 = vmatpush1.msra.mxu0 0.0
    %5773 = vmatprep.mubr.f32.mxu0 0.0
    %v5774 = vand.u32 %v5626, 4294901760
    %5775 = vmatmul.mubr.f32.gmra.mrb[0].mxu0 %v5774
    %v5776 = vpop.f32.mrb[0].mxu0
    %v5777 = vadd.f32 %v5701, %v5776
    %v5778 = vpop.f32.mrb[0].mxu0
    %5779 = vdwg.mxu0
    %5780 = vmatprep.subr.mxu0 0.0
    %v5781 = vand.u32 %v1261, 4294901760
    %v5782 = vsub.f32 %v1261, %v5781
    %5783 = vmatpush1.msra.mxu0 %v5782
    %5784 = vmatprep.subr.mxu0 0.0
    %5785 = vmatpush1.msra.mxu0 0.0
    %5786 = vmatprep.subr.mxu0 0.0
    %5787 = vmatpush1.msra.mxu0 0.0
    %5788 = vmatprep.subr.mxu0 0.0
    %5789 = vmatpush1.msra.mxu0 0.0
    %5790 = vmatprep.subr.mxu0 0.0
    %5791 = vmatpush1.msra.mxu0 0.0
    %5792 = vmatprep.subr.mxu0 0.0
    %5793 = vmatpush1.msra.mxu0 0.0
    %5794 = vmatprep.subr.mxu0 0.0
    %5795 = vmatpush1.msra.mxu0 0.0
    %5796 = vmatprep.subr.mxu0 0.0
    %5797 = vmatpush1.msra.mxu0 0.0
    %5798 = vmatprep.subr.mxu0 0.0
    %5799 = vmatpush1.msra.mxu0 0.0
    %5800 = vmatprep.subr.mxu0 0.0
    %5801 = vmatpush1.msra.mxu0 0.0
    %5802 = vmatprep.subr.mxu0 0.0
    %5803 = vmatpush1.msra.mxu0 0.0
    %5804 = vmatprep.subr.mxu0 0.0
    %5805 = vmatpush1.msra.mxu0 0.0
    %5806 = vmatprep.subr.mxu0 0.0
    %5807 = vmatpush1.msra.mxu0 0.0
    %5808 = vmatprep.subr.mxu0 0.0
    %5809 = vmatpush1.msra.mxu0 0.0
    %5810 = vmatprep.subr.mxu0 0.0
    %5811 = vmatpush1.msra.mxu0 0.0
    %5812 = vmatprep.subr.mxu0 0.0
    %5813 = vmatpush1.msra.mxu0 0.0
    %5814 = vmatprep.subr.mxu0 0.0
    %5815 = vmatpush1.msra.mxu0 0.0
    %5816 = vmatprep.subr.mxu0 0.0
    %5817 = vmatpush1.msra.mxu0 0.0
    %5818 = vmatprep.subr.mxu0 0.0
    %5819 = vmatpush1.msra.mxu0 0.0
    %5820 = vmatprep.subr.mxu0 0.0
    %5821 = vmatpush1.msra.mxu0 0.0
    %5822 = vmatprep.subr.mxu0 0.0
    %5823 = vmatpush1.msra.mxu0 0.0
    %5824 = vmatprep.subr.mxu0 0.0
    %5825 = vmatpush1.msra.mxu0 0.0
    %5826 = vmatprep.subr.mxu0 0.0
    %5827 = vmatpush1.msra.mxu0 0.0
    %5828 = vmatprep.subr.mxu0 0.0
    %5829 = vmatpush1.msra.mxu0 0.0
    %5830 = vmatprep.subr.mxu0 0.0
    %5831 = vmatpush1.msra.mxu0 0.0
    %5832 = vmatprep.subr.mxu0 0.0
    %5833 = vmatpush1.msra.mxu0 0.0
    %5834 = vmatprep.subr.mxu0 0.0
    %5835 = vmatpush1.msra.mxu0 0.0
    %5836 = vmatprep.subr.mxu0 0.0
    %5837 = vmatpush1.msra.mxu0 0.0
    %5838 = vmatprep.subr.mxu0 0.0
    %5839 = vmatpush1.msra.mxu0 0.0
    %5840 = vmatprep.subr.mxu0 0.0
    %5841 = vmatpush1.msra.mxu0 0.0
    %5842 = vmatprep.subr.mxu0 0.0
    %5843 = vmatpush1.msra.mxu0 0.0
    %5844 = vmatprep.subr.mxu0 0.0
    %5845 = vmatpush1.msra.mxu0 0.0
    %5846 = vmatprep.mubr.f32.mxu0 0.0
    %v5847 = vand.u32 %v5626, 4294901760
    %v5848 = vsub.f32 %v5626, %v5847
    %5849 = vmatmul.mubr.f32.gmra.mrb[0].mxu0 %v5848
    %v5850 = vpop.f32.mrb[0].mxu0
    %v5851 = vadd.f32 %v5777, %v5850
    %v5852 = vpop.f32.mrb[0].mxu0
    %5853 = vdwg.mxu0
    %5854 = vmatprep.subr.mxu0 0.0
    %v5855 = vand.u32 %v1261, 4294901760
    %5856 = vmatpush1.msra.mxu0 %v5855
    %5857 = vmatprep.subr.mxu0 0.0
    %5858 = vmatpush1.msra.mxu0 0.0
    %5859 = vmatprep.subr.mxu0 0.0
    %5860 = vmatpush1.msra.mxu0 0.0
    %5861 = vmatprep.subr.mxu0 0.0
    %5862 = vmatpush1.msra.mxu0 0.0
    %5863 = vmatprep.subr.mxu0 0.0
    %5864 = vmatpush1.msra.mxu0 0.0
    %5865 = vmatprep.subr.mxu0 0.0
    %5866 = vmatpush1.msra.mxu0 0.0
    %5867 = vmatprep.subr.mxu0 0.0
    %5868 = vmatpush1.msra.mxu0 0.0
    %5869 = vmatprep.subr.mxu0 0.0
    %5870 = vmatpush1.msra.mxu0 0.0
    %5871 = vmatprep.subr.mxu0 0.0
    %5872 = vmatpush1.msra.mxu0 0.0
    %5873 = vmatprep.subr.mxu0 0.0
    %5874 = vmatpush1.msra.mxu0 0.0
    %5875 = vmatprep.subr.mxu0 0.0
    %5876 = vmatpush1.msra.mxu0 0.0
    %5877 = vmatprep.subr.mxu0 0.0
    %5878 = vmatpush1.msra.mxu0 0.0
    %5879 = vmatprep.subr.mxu0 0.0
    %5880 = vmatpush1.msra.mxu0 0.0
    %5881 = vmatprep.subr.mxu0 0.0
    %5882 = vmatpush1.msra.mxu0 0.0
    %5883 = vmatprep.subr.mxu0 0.0
    %5884 = vmatpush1.msra.mxu0 0.0
    %5885 = vmatprep.subr.mxu0 0.0
    %5886 = vmatpush1.msra.mxu0 0.0
    %5887 = vmatprep.subr.mxu0 0.0
    %5888 = vmatpush1.msra.mxu0 0.0
    %5889 = vmatprep.subr.mxu0 0.0
    %5890 = vmatpush1.msra.mxu0 0.0
    %5891 = vmatprep.subr.mxu0 0.0
    %5892 = vmatpush1.msra.mxu0 0.0
    %5893 = vmatprep.subr.mxu0 0.0
    %5894 = vmatpush1.msra.mxu0 0.0
    %5895 = vmatprep.subr.mxu0 0.0
    %5896 = vmatpush1.msra.mxu0 0.0
    %5897 = vmatprep.subr.mxu0 0.0
    %5898 = vmatpush1.msra.mxu0 0.0
    %5899 = vmatprep.subr.mxu0 0.0
    %5900 = vmatpush1.msra.mxu0 0.0
    %5901 = vmatprep.subr.mxu0 0.0
    %5902 = vmatpush1.msra.mxu0 0.0
    %5903 = vmatprep.subr.mxu0 0.0
    %5904 = vmatpush1.msra.mxu0 0.0
    %5905 = vmatprep.subr.mxu0 0.0
    %5906 = vmatpush1.msra.mxu0 0.0
    %5907 = vmatprep.subr.mxu0 0.0
    %5908 = vmatpush1.msra.mxu0 0.0
    %5909 = vmatprep.subr.mxu0 0.0
    %5910 = vmatpush1.msra.mxu0 0.0
    %5911 = vmatprep.subr.mxu0 0.0
    %5912 = vmatpush1.msra.mxu0 0.0
    %5913 = vmatprep.subr.mxu0 0.0
    %5914 = vmatpush1.msra.mxu0 0.0
    %5915 = vmatprep.subr.mxu0 0.0
    %5916 = vmatpush1.msra.mxu0 0.0
    %5917 = vmatprep.subr.mxu0 0.0
    %5918 = vmatpush1.msra.mxu0 0.0
    %5919 = vmatprep.mubr.f32.mxu0 0.0
    %v5920 = vand.u32 %v5626, 4294901760
    %v5921 = vsub.f32 %v5626, %v5920
    %v5922 = vand.u32 %v5921, 4294901760
    %5923 = vmatmul.mubr.f32.gmra.mrb[0].mxu0 %v5922
    %v5924 = vpop.f32.mrb[0].mxu0
    %v5925 = vadd.f32 %v5851, %v5924
    %v5926 = vpop.f32.mrb[0].mxu0
    %5927 = vdwg.mxu0
    %5928 = vmatprep.subr.mxu0 0.0
    %v5929 = vand.u32 %v1261, 4294901760
    %v5930 = vsub.f32 %v1261, %v5929
    %v5931 = vand.u32 %v5930, 4294901760
    %5932 = vmatpush1.msra.mxu0 %v5931
    %5933 = vmatprep.subr.mxu0 0.0
    %5934 = vmatpush1.msra.mxu0 0.0
    %5935 = vmatprep.subr.mxu0 0.0
    %5936 = vmatpush1.msra.mxu0 0.0
    %5937 = vmatprep.subr.mxu0 0.0
    %5938 = vmatpush1.msra.mxu0 0.0
    %5939 = vmatprep.subr.mxu0 0.0
    %5940 = vmatpush1.msra.mxu0 0.0
    %5941 = vmatprep.subr.mxu0 0.0
    %5942 = vmatpush1.msra.mxu0 0.0
    %5943 = vmatprep.subr.mxu0 0.0
    %5944 = vmatpush1.msra.mxu0 0.0
    %5945 = vmatprep.subr.mxu0 0.0
    %5946 = vmatpush1.msra.mxu0 0.0
    %5947 = vmatprep.subr.mxu0 0.0
    %5948 = vmatpush1.msra.mxu0 0.0
    %5949 = vmatprep.subr.mxu0 0.0
    %5950 = vmatpush1.msra.mxu0 0.0
    %5951 = vmatprep.subr.mxu0 0.0
    %5952 = vmatpush1.msra.mxu0 0.0
    %5953 = vmatprep.subr.mxu0 0.0
    %5954 = vmatpush1.msra.mxu0 0.0
    %5955 = vmatprep.subr.mxu0 0.0
    %5956 = vmatpush1.msra.mxu0 0.0
    %5957 = vmatprep.subr.mxu0 0.0
    %5958 = vmatpush1.msra.mxu0 0.0
    %5959 = vmatprep.subr.mxu0 0.0
    %5960 = vmatpush1.msra.mxu0 0.0
    %5961 = vmatprep.subr.mxu0 0.0
    %5962 = vmatpush1.msra.mxu0 0.0
    %5963 = vmatprep.subr.mxu0 0.0
    %5964 = vmatpush1.msra.mxu0 0.0
    %5965 = vmatprep.subr.mxu0 0.0
    %5966 = vmatpush1.msra.mxu0 0.0
    %5967 = vmatprep.subr.mxu0 0.0
    %5968 = vmatpush1.msra.mxu0 0.0
    %5969 = vmatprep.subr.mxu0 0.0
    %5970 = vmatpush1.msra.mxu0 0.0
    %5971 = vmatprep.subr.mxu0 0.0
    %5972 = vmatpush1.msra.mxu0 0.0
    %5973 = vmatprep.subr.mxu0 0.0
    %5974 = vmatpush1.msra.mxu0 0.0
    %5975 = vmatprep.subr.mxu0 0.0
    %5976 = vmatpush1.msra.mxu0 0.0
    %5977 = vmatprep.subr.mxu0 0.0
    %5978 = vmatpush1.msra.mxu0 0.0
    %5979 = vmatprep.subr.mxu0 0.0
    %5980 = vmatpush1.msra.mxu0 0.0
    %5981 = vmatprep.subr.mxu0 0.0
    %5982 = vmatpush1.msra.mxu0 0.0
    %5983 = vmatprep.subr.mxu0 0.0
    %5984 = vmatpush1.msra.mxu0 0.0
    %5985 = vmatprep.subr.mxu0 0.0
    %5986 = vmatpush1.msra.mxu0 0.0
    %5987 = vmatprep.subr.mxu0 0.0
    %5988 = vmatpush1.msra.mxu0 0.0
    %5989 = vmatprep.subr.mxu0 0.0
    %5990 = vmatpush1.msra.mxu0 0.0
    %5991 = vmatprep.subr.mxu0 0.0
    %5992 = vmatpush1.msra.mxu0 0.0
    %5993 = vmatprep.subr.mxu0 0.0
    %5994 = vmatpush1.msra.mxu0 0.0
    %5995 = vmatprep.mubr.f32.mxu0 0.0
    %v5996 = vand.u32 %v5626, 4294901760
    %5997 = vmatmul.mubr.f32.gmra.mrb[0].mxu0 %v5996
    %v5998 = vpop.f32.mrb[0].mxu0
    %v5999 = vadd.f32 %v5925, %v5998
    %v6000 = vpop.f32.mrb[0].mxu0
    %6001 = vdwg.mxu0
    %6002 = vmatprep.subr.mxu0 0.0
    %v6003 = vand.u32 %v1261, 4294901760
    %6004 = vmatpush1.msra.mxu0 %v6003
    %6005 = vmatprep.subr.mxu0 0.0
    %6006 = vmatpush1.msra.mxu0 0.0
    %6007 = vmatprep.subr.mxu0 0.0
    %6008 = vmatpush1.msra.mxu0 0.0
    %6009 = vmatprep.subr.mxu0 0.0
    %6010 = vmatpush1.msra.mxu0 0.0
    %6011 = vmatprep.subr.mxu0 0.0
    %6012 = vmatpush1.msra.mxu0 0.0
    %6013 = vmatprep.subr.mxu0 0.0
    %6014 = vmatpush1.msra.mxu0 0.0
    %6015 = vmatprep.subr.mxu0 0.0
    %6016 = vmatpush1.msra.mxu0 0.0
    %6017 = vmatprep.subr.mxu0 0.0
    %6018 = vmatpush1.msra.mxu0 0.0
    %6019 = vmatprep.subr.mxu0 0.0
    %6020 = vmatpush1.msra.mxu0 0.0
    %6021 = vmatprep.subr.mxu0 0.0
    %6022 = vmatpush1.msra.mxu0 0.0
    %6023 = vmatprep.subr.mxu0 0.0
    %6024 = vmatpush1.msra.mxu0 0.0
    %6025 = vmatprep.subr.mxu0 0.0
    %6026 = vmatpush1.msra.mxu0 0.0
    %6027 = vmatprep.subr.mxu0 0.0
    %6028 = vmatpush1.msra.mxu0 0.0
    %6029 = vmatprep.subr.mxu0 0.0
    %6030 = vmatpush1.msra.mxu0 0.0
    %6031 = vmatprep.subr.mxu0 0.0
    %6032 = vmatpush1.msra.mxu0 0.0
    %6033 = vmatprep.subr.mxu0 0.0
    %6034 = vmatpush1.msra.mxu0 0.0
    %6035 = vmatprep.subr.mxu0 0.0
    %6036 = vmatpush1.msra.mxu0 0.0
    %6037 = vmatprep.subr.mxu0 0.0
    %6038 = vmatpush1.msra.mxu0 0.0
    %6039 = vmatprep.subr.mxu0 0.0
    %6040 = vmatpush1.msra.mxu0 0.0
    %6041 = vmatprep.subr.mxu0 0.0
    %6042 = vmatpush1.msra.mxu0 0.0
    %6043 = vmatprep.subr.mxu0 0.0
    %6044 = vmatpush1.msra.mxu0 0.0
    %6045 = vmatprep.subr.mxu0 0.0
    %6046 = vmatpush1.msra.mxu0 0.0
    %6047 = vmatprep.subr.mxu0 0.0
    %6048 = vmatpush1.msra.mxu0 0.0
    %6049 = vmatprep.subr.mxu0 0.0
    %6050 = vmatpush1.msra.mxu0 0.0
    %6051 = vmatprep.subr.mxu0 0.0
    %6052 = vmatpush1.msra.mxu0 0.0
    %6053 = vmatprep.subr.mxu0 0.0
    %6054 = vmatpush1.msra.mxu0 0.0
    %6055 = vmatprep.subr.mxu0 0.0
    %6056 = vmatpush1.msra.mxu0 0.0
    %6057 = vmatprep.subr.mxu0 0.0
    %6058 = vmatpush1.msra.mxu0 0.0
    %6059 = vmatprep.subr.mxu0 0.0
    %6060 = vmatpush1.msra.mxu0 0.0
    %6061 = vmatprep.subr.mxu0 0.0
    %6062 = vmatpush1.msra.mxu0 0.0
    %6063 = vmatprep.subr.mxu0 0.0
    %6064 = vmatpush1.msra.mxu0 0.0
    %6065 = vmatprep.subr.mxu0 0.0
    %6066 = vmatpush1.msra.mxu0 0.0
    %6067 = vmatprep.mubr.f32.mxu0 0.0
    %v6068 = vand.u32 %v5626, 4294901760
    %6069 = vmatmul.mubr.f32.gmra.mrb[0].mxu0 %v6068
    %v6070 = vpop.f32.mrb[0].mxu0
    %v6071 = vadd.f32 %v5999, %v6070
    %v6072 = vpop.f32.mrb[0].mxu0
    %6073 = vdwg.mxu0
    %v6075 = vsel %vm1255, %v5624, 0
    %6077 = vmatprep.subr.mxu0 0.0
    %v6078 = vand.u32 %v1261, 4294901760
    %6079 = vmatpush1.msra.mxu0 %v6078
    %6080 = vmatprep.subr.mxu0 0.0
    %6081 = vmatpush1.msra.mxu0 0.0
    %6082 = vmatprep.subr.mxu0 0.0
    %6083 = vmatpush1.msra.mxu0 0.0
    %6084 = vmatprep.subr.mxu0 0.0
    %6085 = vmatpush1.msra.mxu0 0.0
    %6086 = vmatprep.subr.mxu0 0.0
    %6087 = vmatpush1.msra.mxu0 0.0
    %6088 = vmatprep.subr.mxu0 0.0
    %6089 = vmatpush1.msra.mxu0 0.0
    %6090 = vmatprep.subr.mxu0 0.0
    %6091 = vmatpush1.msra.mxu0 0.0
    %6092 = vmatprep.subr.mxu0 0.0
    %6093 = vmatpush1.msra.mxu0 0.0
    %6094 = vmatprep.subr.mxu0 0.0
    %6095 = vmatpush1.msra.mxu0 0.0
    %6096 = vmatprep.subr.mxu0 0.0
    %6097 = vmatpush1.msra.mxu0 0.0
    %6098 = vmatprep.subr.mxu0 0.0
    %6099 = vmatpush1.msra.mxu0 0.0
    %6100 = vmatprep.subr.mxu0 0.0
    %6101 = vmatpush1.msra.mxu0 0.0
    %6102 = vmatprep.subr.mxu0 0.0
    %6103 = vmatpush1.msra.mxu0 0.0
    %6104 = vmatprep.subr.mxu0 0.0
    %6105 = vmatpush1.msra.mxu0 0.0
    %6106 = vmatprep.subr.mxu0 0.0
    %6107 = vmatpush1.msra.mxu0 0.0
    %6108 = vmatprep.subr.mxu0 0.0
    %6109 = vmatpush1.msra.mxu0 0.0
    %6110 = vmatprep.subr.mxu0 0.0
    %6111 = vmatpush1.msra.mxu0 0.0
    %6112 = vmatprep.subr.mxu0 0.0
    %6113 = vmatpush1.msra.mxu0 0.0
    %6114 = vmatprep.subr.mxu0 0.0
    %6115 = vmatpush1.msra.mxu0 0.0
    %6116 = vmatprep.subr.mxu0 0.0
    %6117 = vmatpush1.msra.mxu0 0.0
    %6118 = vmatprep.subr.mxu0 0.0
    %6119 = vmatpush1.msra.mxu0 0.0
    %6120 = vmatprep.subr.mxu0 0.0
    %6121 = vmatpush1.msra.mxu0 0.0
    %6122 = vmatprep.subr.mxu0 0.0
    %6123 = vmatpush1.msra.mxu0 0.0
    %6124 = vmatprep.subr.mxu0 0.0
    %6125 = vmatpush1.msra.mxu0 0.0
    %6126 = vmatprep.subr.mxu0 0.0
    %6127 = vmatpush1.msra.mxu0 0.0
    %6128 = vmatprep.subr.mxu0 0.0
    %6129 = vmatpush1.msra.mxu0 0.0
    %6130 = vmatprep.subr.mxu0 0.0
    %6131 = vmatpush1.msra.mxu0 0.0
    %6132 = vmatprep.subr.mxu0 0.0
    %6133 = vmatpush1.msra.mxu0 0.0
    %6134 = vmatprep.subr.mxu0 0.0
    %6135 = vmatpush1.msra.mxu0 0.0
    %6136 = vmatprep.subr.mxu0 0.0
    %6137 = vmatpush1.msra.mxu0 0.0
    %6138 = vmatprep.subr.mxu0 0.0
    %6139 = vmatpush1.msra.mxu0 0.0
    %6140 = vmatprep.subr.mxu0 0.0
    %6141 = vmatpush1.msra.mxu0 0.0
    %6142 = vmatprep.mubr.f32.mxu0 0.0
    %v6143 = vand.u32 %v6075, 4294901760
    %v6144 = vsub.f32 %v6075, %v6143
    %v6145 = vand.u32 %v6144, 4294901760
    %v6146 = vsub.f32 %v6144, %v6145
    %v6147 = vand.u32 %v6146, 4294901760
    %6148 = vmatmul.mubr.f32.gmra.mrb[0].mxu0 %v6147
    %v6149 = vpop.f32.mrb[0].mxu0
    %v6150 = vadd.f32 0.0, %v6149
    %v6151 = vpop.f32.mrb[0].mxu0
    %6152 = vdwg.mxu0
    %6153 = vmatprep.subr.mxu0 0.0
    %v6154 = vand.u32 %v1261, 4294901760
    %v6155 = vsub.f32 %v1261, %v6154
    %v6156 = vand.u32 %v6155, 4294901760
    %v6157 = vsub.f32 %v6155, %v6156
    %v6158 = vand.u32 %v6157, 4294901760
    %6159 = vmatpush1.msra.mxu0 %v6158
    %6160 = vmatprep.subr.mxu0 0.0
    %6161 = vmatpush1.msra.mxu0 0.0
    %6162 = vmatprep.subr.mxu0 0.0
    %6163 = vmatpush1.msra.mxu0 0.0
    %6164 = vmatprep.subr.mxu0 0.0
    %6165 = vmatpush1.msra.mxu0 0.0
    %6166 = vmatprep.subr.mxu0 0.0
    %6167 = vmatpush1.msra.mxu0 0.0
    %6168 = vmatprep.subr.mxu0 0.0
    %6169 = vmatpush1.msra.mxu0 0.0
    %6170 = vmatprep.subr.mxu0 0.0
    %6171 = vmatpush1.msra.mxu0 0.0
    %6172 = vmatprep.subr.mxu0 0.0
    %6173 = vmatpush1.msra.mxu0 0.0
    %6174 = vmatprep.subr.mxu0 0.0
    %6175 = vmatpush1.msra.mxu0 0.0
    %6176 = vmatprep.subr.mxu0 0.0
    %6177 = vmatpush1.msra.mxu0 0.0
    %6178 = vmatprep.subr.mxu0 0.0
    %6179 = vmatpush1.msra.mxu0 0.0
    %6180 = vmatprep.subr.mxu0 0.0
    %6181 = vmatpush1.msra.mxu0 0.0
    %6182 = vmatprep.subr.mxu0 0.0
    %6183 = vmatpush1.msra.mxu0 0.0
    %6184 = vmatprep.subr.mxu0 0.0
    %6185 = vmatpush1.msra.mxu0 0.0
    %6186 = vmatprep.subr.mxu0 0.0
    %6187 = vmatpush1.msra.mxu0 0.0
    %6188 = vmatprep.subr.mxu0 0.0
    %6189 = vmatpush1.msra.mxu0 0.0
    %6190 = vmatprep.subr.mxu0 0.0
    %6191 = vmatpush1.msra.mxu0 0.0
    %6192 = vmatprep.subr.mxu0 0.0
    %6193 = vmatpush1.msra.mxu0 0.0
    %6194 = vmatprep.subr.mxu0 0.0
    %6195 = vmatpush1.msra.mxu0 0.0
    %6196 = vmatprep.subr.mxu0 0.0
    %6197 = vmatpush1.msra.mxu0 0.0
    %6198 = vmatprep.subr.mxu0 0.0
    %6199 = vmatpush1.msra.mxu0 0.0
    %6200 = vmatprep.subr.mxu0 0.0
    %6201 = vmatpush1.msra.mxu0 0.0
    %6202 = vmatprep.subr.mxu0 0.0
    %6203 = vmatpush1.msra.mxu0 0.0
    %6204 = vmatprep.subr.mxu0 0.0
    %6205 = vmatpush1.msra.mxu0 0.0
    %6206 = vmatprep.subr.mxu0 0.0
    %6207 = vmatpush1.msra.mxu0 0.0
    %6208 = vmatprep.subr.mxu0 0.0
    %6209 = vmatpush1.msra.mxu0 0.0
    %6210 = vmatprep.subr.mxu0 0.0
    %6211 = vmatpush1.msra.mxu0 0.0
    %6212 = vmatprep.subr.mxu0 0.0
    %6213 = vmatpush1.msra.mxu0 0.0
    %6214 = vmatprep.subr.mxu0 0.0
    %6215 = vmatpush1.msra.mxu0 0.0
    %6216 = vmatprep.subr.mxu0 0.0
    %6217 = vmatpush1.msra.mxu0 0.0
    %6218 = vmatprep.subr.mxu0 0.0
    %6219 = vmatpush1.msra.mxu0 0.0
    %6220 = vmatprep.subr.mxu0 0.0
    %6221 = vmatpush1.msra.mxu0 0.0
    %6222 = vmatprep.mubr.f32.mxu0 0.0
    %v6223 = vand.u32 %v6075, 4294901760
    %6224 = vmatmul.mubr.f32.gmra.mrb[0].mxu0 %v6223
    %v6225 = vpop.f32.mrb[0].mxu0
    %v6226 = vadd.f32 %v6150, %v6225
    %v6227 = vpop.f32.mrb[0].mxu0
    %6228 = vdwg.mxu0
    %6229 = vmatprep.subr.mxu0 0.0
    %v6230 = vand.u32 %v1261, 4294901760
    %v6231 = vsub.f32 %v1261, %v6230
    %6232 = vmatpush1.msra.mxu0 %v6231
    %6233 = vmatprep.subr.mxu0 0.0
    %6234 = vmatpush1.msra.mxu0 0.0
    %6235 = vmatprep.subr.mxu0 0.0
    %6236 = vmatpush1.msra.mxu0 0.0
    %6237 = vmatprep.subr.mxu0 0.0
    %6238 = vmatpush1.msra.mxu0 0.0
    %6239 = vmatprep.subr.mxu0 0.0
    %6240 = vmatpush1.msra.mxu0 0.0
    %6241 = vmatprep.subr.mxu0 0.0
    %6242 = vmatpush1.msra.mxu0 0.0
    %6243 = vmatprep.subr.mxu0 0.0
    %6244 = vmatpush1.msra.mxu0 0.0
    %6245 = vmatprep.subr.mxu0 0.0
    %6246 = vmatpush1.msra.mxu0 0.0
    %6247 = vmatprep.subr.mxu0 0.0
    %6248 = vmatpush1.msra.mxu0 0.0
    %6249 = vmatprep.subr.mxu0 0.0
    %6250 = vmatpush1.msra.mxu0 0.0
    %6251 = vmatprep.subr.mxu0 0.0
    %6252 = vmatpush1.msra.mxu0 0.0
    %6253 = vmatprep.subr.mxu0 0.0
    %6254 = vmatpush1.msra.mxu0 0.0
    %6255 = vmatprep.subr.mxu0 0.0
    %6256 = vmatpush1.msra.mxu0 0.0
    %6257 = vmatprep.subr.mxu0 0.0
    %6258 = vmatpush1.msra.mxu0 0.0
    %6259 = vmatprep.subr.mxu0 0.0
    %6260 = vmatpush1.msra.mxu0 0.0
    %6261 = vmatprep.subr.mxu0 0.0
    %6262 = vmatpush1.msra.mxu0 0.0
    %6263 = vmatprep.subr.mxu0 0.0
    %6264 = vmatpush1.msra.mxu0 0.0
    %6265 = vmatprep.subr.mxu0 0.0
    %6266 = vmatpush1.msra.mxu0 0.0
    %6267 = vmatprep.subr.mxu0 0.0
    %6268 = vmatpush1.msra.mxu0 0.0
    %6269 = vmatprep.subr.mxu0 0.0
    %6270 = vmatpush1.msra.mxu0 0.0
    %6271 = vmatprep.subr.mxu0 0.0
    %6272 = vmatpush1.msra.mxu0 0.0
    %6273 = vmatprep.subr.mxu0 0.0
    %6274 = vmatpush1.msra.mxu0 0.0
    %6275 = vmatprep.subr.mxu0 0.0
    %6276 = vmatpush1.msra.mxu0 0.0
    %6277 = vmatprep.subr.mxu0 0.0
    %6278 = vmatpush1.msra.mxu0 0.0
    %6279 = vmatprep.subr.mxu0 0.0
    %6280 = vmatpush1.msra.mxu0 0.0
    %6281 = vmatprep.subr.mxu0 0.0
    %6282 = vmatpush1.msra.mxu0 0.0
    %6283 = vmatprep.subr.mxu0 0.0
    %6284 = vmatpush1.msra.mxu0 0.0
    %6285 = vmatprep.subr.mxu0 0.0
    %6286 = vmatpush1.msra.mxu0 0.0
    %6287 = vmatprep.subr.mxu0 0.0
    %6288 = vmatpush1.msra.mxu0 0.0
    %6289 = vmatprep.subr.mxu0 0.0
    %6290 = vmatpush1.msra.mxu0 0.0
    %6291 = vmatprep.subr.mxu0 0.0
    %6292 = vmatpush1.msra.mxu0 0.0
    %6293 = vmatprep.subr.mxu0 0.0
    %6294 = vmatpush1.msra.mxu0 0.0
    %6295 = vmatprep.mubr.f32.mxu0 0.0
    %v6296 = vand.u32 %v6075, 4294901760
    %v6297 = vsub.f32 %v6075, %v6296
    %6298 = vmatmul.mubr.f32.gmra.mrb[0].mxu0 %v6297
    %v6299 = vpop.f32.mrb[0].mxu0
    %v6300 = vadd.f32 %v6226, %v6299
    %v6301 = vpop.f32.mrb[0].mxu0
    %6302 = vdwg.mxu0
    %6303 = vmatprep.subr.mxu0 0.0
    %v6304 = vand.u32 %v1261, 4294901760
    %6305 = vmatpush1.msra.mxu0 %v6304
    %6306 = vmatprep.subr.mxu0 0.0
    %6307 = vmatpush1.msra.mxu0 0.0
    %6308 = vmatprep.subr.mxu0 0.0
    %6309 = vmatpush1.msra.mxu0 0.0
    %6310 = vmatprep.subr.mxu0 0.0
    %6311 = vmatpush1.msra.mxu0 0.0
    %6312 = vmatprep.subr.mxu0 0.0
    %6313 = vmatpush1.msra.mxu0 0.0
    %6314 = vmatprep.subr.mxu0 0.0
    %6315 = vmatpush1.msra.mxu0 0.0
    %6316 = vmatprep.subr.mxu0 0.0
    %6317 = vmatpush1.msra.mxu0 0.0
    %6318 = vmatprep.subr.mxu0 0.0
    %6319 = vmatpush1.msra.mxu0 0.0
    %6320 = vmatprep.subr.mxu0 0.0
    %6321 = vmatpush1.msra.mxu0 0.0
    %6322 = vmatprep.subr.mxu0 0.0
    %6323 = vmatpush1.msra.mxu0 0.0
    %6324 = vmatprep.subr.mxu0 0.0
    %6325 = vmatpush1.msra.mxu0 0.0
    %6326 = vmatprep.subr.mxu0 0.0
    %6327 = vmatpush1.msra.mxu0 0.0
    %6328 = vmatprep.subr.mxu0 0.0
    %6329 = vmatpush1.msra.mxu0 0.0
    %6330 = vmatprep.subr.mxu0 0.0
    %6331 = vmatpush1.msra.mxu0 0.0
    %6332 = vmatprep.subr.mxu0 0.0
    %6333 = vmatpush1.msra.mxu0 0.0
    %6334 = vmatprep.subr.mxu0 0.0
    %6335 = vmatpush1.msra.mxu0 0.0
    %6336 = vmatprep.subr.mxu0 0.0
    %6337 = vmatpush1.msra.mxu0 0.0
    %6338 = vmatprep.subr.mxu0 0.0
    %6339 = vmatpush1.msra.mxu0 0.0
    %6340 = vmatprep.subr.mxu0 0.0
    %6341 = vmatpush1.msra.mxu0 0.0
    %6342 = vmatprep.subr.mxu0 0.0
    %6343 = vmatpush1.msra.mxu0 0.0
    %6344 = vmatprep.subr.mxu0 0.0
    %6345 = vmatpush1.msra.mxu0 0.0
    %6346 = vmatprep.subr.mxu0 0.0
    %6347 = vmatpush1.msra.mxu0 0.0
    %6348 = vmatprep.subr.mxu0 0.0
    %6349 = vmatpush1.msra.mxu0 0.0
    %6350 = vmatprep.subr.mxu0 0.0
    %6351 = vmatpush1.msra.mxu0 0.0
    %6352 = vmatprep.subr.mxu0 0.0
    %6353 = vmatpush1.msra.mxu0 0.0
    %6354 = vmatprep.subr.mxu0 0.0
    %6355 = vmatpush1.msra.mxu0 0.0
    %6356 = vmatprep.subr.mxu0 0.0
    %6357 = vmatpush1.msra.mxu0 0.0
    %6358 = vmatprep.subr.mxu0 0.0
    %6359 = vmatpush1.msra.mxu0 0.0
    %6360 = vmatprep.subr.mxu0 0.0
    %6361 = vmatpush1.msra.mxu0 0.0
    %6362 = vmatprep.subr.mxu0 0.0
    %6363 = vmatpush1.msra.mxu0 0.0
    %6364 = vmatprep.subr.mxu0 0.0
    %6365 = vmatpush1.msra.mxu0 0.0
    %6366 = vmatprep.subr.mxu0 0.0
    %6367 = vmatpush1.msra.mxu0 0.0
    %6368 = vmatprep.mubr.f32.mxu0 0.0
    %v6369 = vand.u32 %v6075, 4294901760
    %v6370 = vsub.f32 %v6075, %v6369
    %v6371 = vand.u32 %v6370, 4294901760
    %6372 = vmatmul.mubr.f32.gmra.mrb[0].mxu0 %v6371
    %v6373 = vpop.f32.mrb[0].mxu0
    %v6374 = vadd.f32 %v6300, %v6373
    %v6375 = vpop.f32.mrb[0].mxu0
    %6376 = vdwg.mxu0
    %6377 = vmatprep.subr.mxu0 0.0
    %v6378 = vand.u32 %v1261, 4294901760
    %v6379 = vsub.f32 %v1261, %v6378
    %v6380 = vand.u32 %v6379, 4294901760
    %6381 = vmatpush1.msra.mxu0 %v6380
    %6382 = vmatprep.subr.mxu0 0.0
    %6383 = vmatpush1.msra.mxu0 0.0
    %6384 = vmatprep.subr.mxu0 0.0
    %6385 = vmatpush1.msra.mxu0 0.0
    %6386 = vmatprep.subr.mxu0 0.0
    %6387 = vmatpush1.msra.mxu0 0.0
    %6388 = vmatprep.subr.mxu0 0.0
    %6389 = vmatpush1.msra.mxu0 0.0
    %6390 = vmatprep.subr.mxu0 0.0
    %6391 = vmatpush1.msra.mxu0 0.0
    %6392 = vmatprep.subr.mxu0 0.0
    %6393 = vmatpush1.msra.mxu0 0.0
    %6394 = vmatprep.subr.mxu0 0.0
    %6395 = vmatpush1.msra.mxu0 0.0
    %6396 = vmatprep.subr.mxu0 0.0
    %6397 = vmatpush1.msra.mxu0 0.0
    %6398 = vmatprep.subr.mxu0 0.0
    %6399 = vmatpush1.msra.mxu0 0.0
    %6400 = vmatprep.subr.mxu0 0.0
    %6401 = vmatpush1.msra.mxu0 0.0
    %6402 = vmatprep.subr.mxu0 0.0
    %6403 = vmatpush1.msra.mxu0 0.0
    %6404 = vmatprep.subr.mxu0 0.0
    %6405 = vmatpush1.msra.mxu0 0.0
    %6406 = vmatprep.subr.mxu0 0.0
    %6407 = vmatpush1.msra.mxu0 0.0
    %6408 = vmatprep.subr.mxu0 0.0
    %6409 = vmatpush1.msra.mxu0 0.0
    %6410 = vmatprep.subr.mxu0 0.0
    %6411 = vmatpush1.msra.mxu0 0.0
    %6412 = vmatprep.subr.mxu0 0.0
    %6413 = vmatpush1.msra.mxu0 0.0
    %6414 = vmatprep.subr.mxu0 0.0
    %6415 = vmatpush1.msra.mxu0 0.0
    %6416 = vmatprep.subr.mxu0 0.0
    %6417 = vmatpush1.msra.mxu0 0.0
    %6418 = vmatprep.subr.mxu0 0.0
    %6419 = vmatpush1.msra.mxu0 0.0
    %6420 = vmatprep.subr.mxu0 0.0
    %6421 = vmatpush1.msra.mxu0 0.0
    %6422 = vmatprep.subr.mxu0 0.0
    %6423 = vmatpush1.msra.mxu0 0.0
    %6424 = vmatprep.subr.mxu0 0.0
    %6425 = vmatpush1.msra.mxu0 0.0
    %6426 = vmatprep.subr.mxu0 0.0
    %6427 = vmatpush1.msra.mxu0 0.0
    %6428 = vmatprep.subr.mxu0 0.0
    %6429 = vmatpush1.msra.mxu0 0.0
    %6430 = vmatprep.subr.mxu0 0.0
    %6431 = vmatpush1.msra.mxu0 0.0
    %6432 = vmatprep.subr.mxu0 0.0
    %6433 = vmatpush1.msra.mxu0 0.0
    %6434 = vmatprep.subr.mxu0 0.0
    %6435 = vmatpush1.msra.mxu0 0.0
    %6436 = vmatprep.subr.mxu0 0.0
    %6437 = vmatpush1.msra.mxu0 0.0
    %6438 = vmatprep.subr.mxu0 0.0
    %6439 = vmatpush1.msra.mxu0 0.0
    %6440 = vmatprep.subr.mxu0 0.0
    %6441 = vmatpush1.msra.mxu0 0.0
    %6442 = vmatprep.subr.mxu0 0.0
    %6443 = vmatpush1.msra.mxu0 0.0
    %6444 = vmatprep.mubr.f32.mxu0 0.0
    %v6445 = vand.u32 %v6075, 4294901760
    %6446 = vmatmul.mubr.f32.gmra.mrb[0].mxu0 %v6445
    %v6447 = vpop.f32.mrb[0].mxu0
    %v6448 = vadd.f32 %v6374, %v6447
    %v6449 = vpop.f32.mrb[0].mxu0
    %6450 = vdwg.mxu0
    %6451 = vmatprep.subr.mxu0 0.0
    %v6452 = vand.u32 %v1261, 4294901760
    %6453 = vmatpush1.msra.mxu0 %v6452
    %6454 = vmatprep.subr.mxu0 0.0
    %6455 = vmatpush1.msra.mxu0 0.0
    %6456 = vmatprep.subr.mxu0 0.0
    %6457 = vmatpush1.msra.mxu0 0.0
    %6458 = vmatprep.subr.mxu0 0.0
    %6459 = vmatpush1.msra.mxu0 0.0
    %6460 = vmatprep.subr.mxu0 0.0
    %6461 = vmatpush1.msra.mxu0 0.0
    %6462 = vmatprep.subr.mxu0 0.0
    %6463 = vmatpush1.msra.mxu0 0.0
    %6464 = vmatprep.subr.mxu0 0.0
    %6465 = vmatpush1.msra.mxu0 0.0
    %6466 = vmatprep.subr.mxu0 0.0
    %6467 = vmatpush1.msra.mxu0 0.0
    %6468 = vmatprep.subr.mxu0 0.0
    %6469 = vmatpush1.msra.mxu0 0.0
    %6470 = vmatprep.subr.mxu0 0.0
    %6471 = vmatpush1.msra.mxu0 0.0
    %6472 = vmatprep.subr.mxu0 0.0
    %6473 = vmatpush1.msra.mxu0 0.0
    %6474 = vmatprep.subr.mxu0 0.0
    %6475 = vmatpush1.msra.mxu0 0.0
    %6476 = vmatprep.subr.mxu0 0.0
    %6477 = vmatpush1.msra.mxu0 0.0
    %6478 = vmatprep.subr.mxu0 0.0
    %6479 = vmatpush1.msra.mxu0 0.0
    %6480 = vmatprep.subr.mxu0 0.0
    %6481 = vmatpush1.msra.mxu0 0.0
    %6482 = vmatprep.subr.mxu0 0.0
    %6483 = vmatpush1.msra.mxu0 0.0
    %6484 = vmatprep.subr.mxu0 0.0
    %6485 = vmatpush1.msra.mxu0 0.0
    %6486 = vmatprep.subr.mxu0 0.0
    %6487 = vmatpush1.msra.mxu0 0.0
    %6488 = vmatprep.subr.mxu0 0.0
    %6489 = vmatpush1.msra.mxu0 0.0
    %6490 = vmatprep.subr.mxu0 0.0
    %6491 = vmatpush1.msra.mxu0 0.0
    %6492 = vmatprep.subr.mxu0 0.0
    %6493 = vmatpush1.msra.mxu0 0.0
    %6494 = vmatprep.subr.mxu0 0.0
    %6495 = vmatpush1.msra.mxu0 0.0
    %6496 = vmatprep.subr.mxu0 0.0
    %6497 = vmatpush1.msra.mxu0 0.0
    %6498 = vmatprep.subr.mxu0 0.0
    %6499 = vmatpush1.msra.mxu0 0.0
    %6500 = vmatprep.subr.mxu0 0.0
    %6501 = vmatpush1.msra.mxu0 0.0
    %6502 = vmatprep.subr.mxu0 0.0
    %6503 = vmatpush1.msra.mxu0 0.0
    %6504 = vmatprep.subr.mxu0 0.0
    %6505 = vmatpush1.msra.mxu0 0.0
    %6506 = vmatprep.subr.mxu0 0.0
    %6507 = vmatpush1.msra.mxu0 0.0
    %6508 = vmatprep.subr.mxu0 0.0
    %6509 = vmatpush1.msra.mxu0 0.0
    %6510 = vmatprep.subr.mxu0 0.0
    %6511 = vmatpush1.msra.mxu0 0.0
    %6512 = vmatprep.subr.mxu0 0.0
    %6513 = vmatpush1.msra.mxu0 0.0
    %6514 = vmatprep.subr.mxu0 0.0
    %6515 = vmatpush1.msra.mxu0 0.0
    %6516 = vmatprep.mubr.f32.mxu0 0.0
    %v6517 = vand.u32 %v6075, 4294901760
    %6518 = vmatmul.mubr.f32.gmra.mrb[0].mxu0 %v6517
    %v6519 = vpop.f32.mrb[0].mxu0
    %v6520 = vadd.f32 %v6448, %v6519
    %v6521 = vpop.f32.mrb[0].mxu0
    %6522 = vdwg.mxu0
    %v6523 = vlaneseq
    %v6524 = vshrl.u32 %v6523, 7
    %v6525 = vsub.s32 0, %v6524
    %v6526 = vrot.slane %v6071, %v6525
    %v6527 = vsub.f32 %v4608, %v6526
    %v6528 = vsub.f32 %v4609, %v6526
    %v6529 = vsub.f32 %v4610, %v6526
    %v6530 = vsub.f32 %v4611, %v6526
    %v6531 = vlaneseq
    %v6532 = vshrl.u32 %v6531, 7
    %v6533 = vsub.s32 0, %v6532
    %v6534 = vrot.slane %v6520, %v6533
    %v6535 = vmul.f32 %v6527, %v6534
    %v6536 = vmul.f32 %v6528, %v6534
    %v6537 = vmul.f32 %v6529, %v6534
    %v6538 = vmul.f32 %v6530, %v6534
    %6539 = vset.pattern.permute.xlu0 42
    %6540 = vperm.xlu0 %6539, %v75
    %v6541 = vpop.permute.xlu0 %6540
    %6543 = vset.pattern.permute.xlu0 42
    %6544 = vperm.xlu0 %6543, %v76
    %v6545 = vpop.permute.xlu0 %6544
    %6547 = vset.pattern.permute.xlu0 42
    %6548 = vperm.xlu0 %6547, %v77
    %v6549 = vpop.permute.xlu0 %6548
    %6551 = vset.pattern.permute.xlu0 42
    %6552 = vperm.xlu0 %6551, %v78
    %v6553 = vpop.permute.xlu0 %6552
    %v6555 = vmul.f32 %v6541, %v6535
    %v6556 = vmul.f32 %v6545, %v6536
    %v6557 = vmul.f32 %v6549, %v6537
    %v6558 = vmul.f32 %v6553, %v6538
    %6559 = vset.pattern.permute.xlu0 43
    %6560 = vperm.xlu0 %6559, %v75
    %v6561 = vpop.permute.xlu0 %6560
    %6563 = vset.pattern.permute.xlu0 43
    %6564 = vperm.xlu0 %6563, %v76
    %v6565 = vpop.permute.xlu0 %6564
    %6567 = vset.pattern.permute.xlu0 43
    %6568 = vperm.xlu0 %6567, %v77
    %v6569 = vpop.permute.xlu0 %6568
    %6571 = vset.pattern.permute.xlu0 43
    %6572 = vperm.xlu0 %6571, %v78
    %v6573 = vpop.permute.xlu0 %6572
    %v6575 = vadd.f32 %v6555, %v6561
    %v6576 = vadd.f32 %v6556, %v6565
    %v6577 = vadd.f32 %v6557, %v6569
    %v6578 = vadd.f32 %v6558, %v6573
    %6579 = vst.msk [vmem:[#allocation2 + $0x8] sm:$0xff] %vm241, %v6575
    %6580 = vst.msk [vmem:[#allocation2 + $0x18] sm:$0xff] %vm241, %v6576
    %6581 = vst.msk [vmem:[#allocation2 + $0x28] sm:$0xff] %vm241, %v6577
    %6582 = vst.msk [vmem:[#allocation2 + $0x38] sm:$0xff] %vm241, %v6578
    %v6583 = vld [vmem:[#allocation2] sm:$0xff]
    %v6584 = vld [vmem:[#allocation2 + $0x8] sm:$0xff]
    %v6585 = vld [vmem:[#allocation2 + $0x10] sm:$0xff]
    %v6586 = vld [vmem:[#allocation2 + $0x18] sm:$0xff]
    %v6587 = vld [vmem:[#allocation2 + $0x20] sm:$0xff]
    %v6588 = vld [vmem:[#allocation2 + $0x28] sm:$0xff]
    %v6589 = vld [vmem:[#allocation2 + $0x30] sm:$0xff]
    %v6590 = vld [vmem:[#allocation2 + $0x38] sm:$0xff]
    %v6591 = vlaneseq
    %v6592 = vshrl.u32 %v6591, 7
    %v6593 = vsub.s32 2, %v6592
    %v6594 = vrot.slane %v2227, %v6593
    %vm6595 = vcmp.eq.s32.totalorder %v6594, 1
    %6604 = vrot.lane.b32.xlu0 %v6583, 2
    %v6605 = vpop.permute.xlu0 %6604
    %6606 = vrot.lane.b32.xlu0 %v6584, 2
    %v6607 = vpop.permute.xlu0 %6606
    %6608 = vrot.lane.b32.xlu0 %v6585, 2
    %v6609 = vpop.permute.xlu0 %6608
    %6610 = vrot.lane.b32.xlu0 %v6586, 2
    %v6611 = vpop.permute.xlu0 %6610
    %6612 = vrot.lane.b32.xlu0 %v6587, 2
    %v6613 = vpop.permute.xlu0 %6612
    %6614 = vrot.lane.b32.xlu0 %v6588, 2
    %v6615 = vpop.permute.xlu0 %6614
    %6616 = vrot.lane.b32.xlu0 %v6589, 2
    %v6617 = vpop.permute.xlu0 %6616
    %6618 = vrot.lane.b32.xlu0 %v6590, 2
    %v6619 = vpop.permute.xlu0 %6618
    %v6620 = vsel %vm1255, %v6605, %v6607
    %v6621 = vsel %vm1255, %v6609, %v6611
    %v6622 = vsel %vm1255, %v6613, %v6615
    %v6623 = vsel %vm1255, %v6617, %v6619
    %v6628 = vsel %vm6595, %v6620, 0.0
    %v6629 = vsel %vm6595, %v6621, 0.0
    %v6630 = vsel %vm6595, %v6622, 0.0
    %v6631 = vsel %vm6595, %v6623, 0.0
    %v6632 = vlaneseq
    %v6633 = vshrl.u32 %v6632, 7
    %v6634 = vsub.s32 3, %v6633
    %v6635 = vrot.slane %v2227, %v6634
    %vm6636 = vcmp.eq.s32.totalorder %v6635, 1
    %6637 = vrot.lane.b32.xlu0 %v6584, 126
    %v6638 = vpop.permute.xlu0 %6637
    %6639 = vrot.lane.b32.xlu0 %v6586, 126
    %v6640 = vpop.permute.xlu0 %6639
    %6641 = vrot.lane.b32.xlu0 %v6588, 126
    %v6642 = vpop.permute.xlu0 %6641
    %6643 = vrot.lane.b32.xlu0 %v6590, 126
    %v6644 = vpop.permute.xlu0 %6643
    %v6649 = vsel %vm6636, %v6638, 0.0
    %v6650 = vsel %vm6636, %v6640, 0.0
    %v6651 = vsel %vm6636, %v6642, 0.0
    %v6652 = vsel %vm6636, %v6644, 0.0
    %6653 = vset.pattern.permute.xlu0 44
    %6654 = vperm.xlu0 %6653, %v75
    %v6655 = vpop.permute.xlu0 %6654
    %6657 = vset.pattern.permute.xlu0 44
    %6658 = vperm.xlu0 %6657, %v76
    %v6659 = vpop.permute.xlu0 %6658
    %6661 = vset.pattern.permute.xlu0 44
    %6662 = vperm.xlu0 %6661, %v77
    %v6663 = vpop.permute.xlu0 %6662
    %6665 = vset.pattern.permute.xlu0 44
    %6666 = vperm.xlu0 %6665, %v78
    %v6667 = vpop.permute.xlu0 %6666
    %v6669 = vmul.f32 %v6655, %v6628
    %v6670 = vmul.f32 %v6659, %v6629
    %v6671 = vmul.f32 %v6663, %v6630
    %v6672 = vmul.f32 %v6667, %v6631
    %6673 = vset.pattern.permute.xlu0 45
    %6674 = vperm.xlu0 %6673, %v75
    %v6675 = vpop.permute.xlu0 %6674
    %6677 = vset.pattern.permute.xlu0 45
    %6678 = vperm.xlu0 %6677, %v76
    %v6679 = vpop.permute.xlu0 %6678
    %6681 = vset.pattern.permute.xlu0 45
    %6682 = vperm.xlu0 %6681, %v77
    %v6683 = vpop.permute.xlu0 %6682
    %6685 = vset.pattern.permute.xlu0 45
    %6686 = vperm.xlu0 %6685, %v78
    %v6687 = vpop.permute.xlu0 %6686
    %v6689 = vmul.f32 %v6675, %v6575
    %v6690 = vmul.f32 %v6679, %v6576
    %v6691 = vmul.f32 %v6683, %v6577
    %v6692 = vmul.f32 %v6687, %v6578
    %v6693 = vadd.f32 %v6669, %v6689
    %v6694 = vadd.f32 %v6670, %v6690
    %v6695 = vadd.f32 %v6671, %v6691
    %v6696 = vadd.f32 %v6672, %v6692
    %6697 = vset.pattern.permute.xlu0 46
    %6698 = vperm.xlu0 %6697, %v75
    %v6699 = vpop.permute.xlu0 %6698
    %6701 = vset.pattern.permute.xlu0 46
    %6702 = vperm.xlu0 %6701, %v76
    %v6703 = vpop.permute.xlu0 %6702
    %6705 = vset.pattern.permute.xlu0 46
    %6706 = vperm.xlu0 %6705, %v77
    %v6707 = vpop.permute.xlu0 %6706
    %6709 = vset.pattern.permute.xlu0 46
    %6710 = vperm.xlu0 %6709, %v78
    %v6711 = vpop.permute.xlu0 %6710
    %v6713 = vmul.f32 %v6699, %v6649
    %v6714 = vmul.f32 %v6703, %v6650
    %v6715 = vmul.f32 %v6707, %v6651
    %v6716 = vmul.f32 %v6711, %v6652
    %v6717 = vadd.f32 %v6693, %v6713
    %v6718 = vadd.f32 %v6694, %v6714
    %v6719 = vadd.f32 %v6695, %v6715
    %v6720 = vadd.f32 %v6696, %v6716
    %6721 = vset.pattern.permute.xlu0 47
    %6722 = vperm.xlu0 %6721, %v75
    %v6723 = vpop.permute.xlu0 %6722
    %6725 = vset.pattern.permute.xlu0 47
    %6726 = vperm.xlu0 %6725, %v76
    %v6727 = vpop.permute.xlu0 %6726
    %6729 = vset.pattern.permute.xlu0 47
    %6730 = vperm.xlu0 %6729, %v77
    %v6731 = vpop.permute.xlu0 %6730
    %6733 = vset.pattern.permute.xlu0 47
    %6734 = vperm.xlu0 %6733, %v78
    %v6735 = vpop.permute.xlu0 %6734
    %v6737 = vadd.f32 %v6717, %v6723
    %v6738 = vadd.f32 %v6718, %v6727
    %v6739 = vadd.f32 %v6719, %v6731
    %v6740 = vadd.f32 %v6720, %v6735
    %v6741 = vmax.f32 %v6737, 0.0
    %v6742 = vmax.f32 %v6738, 0.0
    %v6743 = vmax.f32 %v6739, 0.0
    %v6744 = vmax.f32 %v6740, 0.0
    %v6745 = vmin.f32 %v6737, 0.0
    %v6746 = vmin.f32 %v6738, 0.0
    %v6747 = vmin.f32 %v6739, 0.0
    %v6748 = vmin.f32 %v6740, 0.0
    %v6749 = vstv %s108
    %v6750 = vmul.f32 %v6749, %v6745
    %v6751 = vmul.f32 %v6749, %v6746
    %v6752 = vmul.f32 %v6749, %v6747
    %v6753 = vmul.f32 %v6749, %v6748
    %v6754 = vadd.f32 %v6741, %v6750
    %v6755 = vadd.f32 %v6742, %v6751
    %v6756 = vadd.f32 %v6743, %v6752
    %v6757 = vadd.f32 %v6744, %v6753
    %v6758 = vsel %vm241, %v6754, 0.0
    %v6759 = vsel %vm241, %v6755, 0.0
    %v6760 = vadd.f32 %v6758, %v6759
    %v6761 = vsel %vm241, %v6756, 0.0
    %v6762 = vadd.f32 %v6760, %v6761
    %v6763 = vsel %vm241, %v6757, 0.0
    %v6764 = vadd.f32 %v6762, %v6763
    %v6765 = vrot.slane %v6764, 4
    %v6766 = vadd.f32 %v6764, %v6765
    %v6767 = vrot.slane %v6766, 2
    %v6768 = vadd.f32 %v6766, %v6767
    %v6769 = vrot.slane %v6768, 1
    %v6770 = vadd.f32 %v6768, %v6769
    %v6771 = vmul.f32 %v6754, %v6754
    %v6772 = vmul.f32 %v6755, %v6755
    %v6773 = vmul.f32 %v6756, %v6756
    %v6774 = vmul.f32 %v6757, %v6757
    %v6775 = vsel %vm241, %v6771, 0.0
    %v6776 = vsel %vm241, %v6772, 0.0
    %v6777 = vadd.f32 %v6775, %v6776
    %v6778 = vsel %vm241, %v6773, 0.0
    %v6779 = vadd.f32 %v6777, %v6778
    %v6780 = vsel %vm241, %v6774, 0.0
    %v6781 = vadd.f32 %v6779, %v6780
    %v6782 = vrot.slane %v6781, 4
    %v6783 = vadd.f32 %v6781, %v6782
    %v6784 = vrot.slane %v6783, 2
    %v6785 = vadd.f32 %v6783, %v6784
    %v6786 = vrot.slane %v6785, 1
    %v6787 = vadd.f32 %v6785, %v6786
    %v6789 = vsel %vm241, %v6770, 0
    %6791 = vmatprep.subr.mxu0 0.0
    %v6792 = vand.u32 %v61, 4294901760
    %6793 = vmatpush1.msra.mxu0 %v6792
    %6794 = vmatprep.subr.mxu0 0.0
    %v6795 = vand.u32 %v62, 4294901760
    %6796 = vmatpush1.msra.mxu0 %v6795
    %6797 = vmatprep.subr.mxu0 0.0
    %v6798 = vand.u32 %v63, 4294901760
    %6799 = vmatpush1.msra.mxu0 %v6798
    %6800 = vmatprep.subr.mxu0 0.0
    %v6801 = vand.u32 %v64, 4294901760
    %6802 = vmatpush1.msra.mxu0 %v6801
    %6803 = vmatprep.subr.mxu0 0.0
    %6804 = vmatpush1.msra.mxu0 0.0
    %6805 = vmatprep.subr.mxu0 0.0
    %6806 = vmatpush1.msra.mxu0 0.0
    %6807 = vmatprep.subr.mxu0 0.0
    %6808 = vmatpush1.msra.mxu0 0.0
    %6809 = vmatprep.subr.mxu0 0.0
    %6810 = vmatpush1.msra.mxu0 0.0
    %6811 = vmatprep.subr.mxu0 0.0
    %6812 = vmatpush1.msra.mxu0 0.0
    %6813 = vmatprep.subr.mxu0 0.0
    %6814 = vmatpush1.msra.mxu0 0.0
    %6815 = vmatprep.subr.mxu0 0.0
    %6816 = vmatpush1.msra.mxu0 0.0
    %6817 = vmatprep.subr.mxu0 0.0
    %6818 = vmatpush1.msra.mxu0 0.0
    %6819 = vmatprep.subr.mxu0 0.0
    %6820 = vmatpush1.msra.mxu0 0.0
    %6821 = vmatprep.subr.mxu0 0.0
    %6822 = vmatpush1.msra.mxu0 0.0
    %6823 = vmatprep.subr.mxu0 0.0
    %6824 = vmatpush1.msra.mxu0 0.0
    %6825 = vmatprep.subr.mxu0 0.0
    %6826 = vmatpush1.msra.mxu0 0.0
    %6827 = vmatprep.subr.mxu0 0.0
    %6828 = vmatpush1.msra.mxu0 0.0
    %6829 = vmatprep.subr.mxu0 0.0
    %6830 = vmatpush1.msra.mxu0 0.0
    %6831 = vmatprep.subr.mxu0 0.0
    %6832 = vmatpush1.msra.mxu0 0.0
    %6833 = vmatprep.subr.mxu0 0.0
    %6834 = vmatpush1.msra.mxu0 0.0
    %6835 = vmatprep.subr.mxu0 0.0
    %6836 = vmatpush1.msra.mxu0 0.0
    %6837 = vmatprep.subr.mxu0 0.0
    %6838 = vmatpush1.msra.mxu0 0.0
    %6839 = vmatprep.subr.mxu0 0.0
    %6840 = vmatpush1.msra.mxu0 0.0
    %6841 = vmatprep.subr.mxu0 0.0
    %6842 = vmatpush1.msra.mxu0 0.0
    %6843 = vmatprep.subr.mxu0 0.0
    %6844 = vmatpush1.msra.mxu0 0.0
    %6845 = vmatprep.subr.mxu0 0.0
    %6846 = vmatpush1.msra.mxu0 0.0
    %6847 = vmatprep.subr.mxu0 0.0
    %6848 = vmatpush1.msra.mxu0 0.0
    %6849 = vmatprep.subr.mxu0 0.0
    %6850 = vmatpush1.msra.mxu0 0.0
    %6851 = vmatprep.subr.mxu0 0.0
    %6852 = vmatpush1.msra.mxu0 0.0
    %6853 = vmatprep.subr.mxu0 0.0
    %6854 = vmatpush1.msra.mxu0 0.0
    %6855 = vmatprep.subr.mxu0 0.0
    %6856 = vmatpush1.msra.mxu0 0.0
    %6857 = vmatprep.subr.mxu0 0.0
    %6858 = vmatpush1.msra.mxu0 0.0
    %6859 = vmatprep.mubr.f32.mxu0 0.0
    %v6860 = vand.u32 %v6789, 4294901760
    %v6861 = vsub.f32 %v6789, %v6860
    %v6862 = vand.u32 %v6861, 4294901760
    %v6863 = vsub.f32 %v6861, %v6862
    %v6864 = vand.u32 %v6863, 4294901760
    %6865 = vmatmul.mubr.f32.gmra.mrb[0].mxu0 %v6864
    %v6866 = vpop.f32.mrb[0].mxu0
    %v6867 = vadd.f32 0.0, %v6866
    %v6868 = vpop.f32.mrb[0].mxu0
    %6869 = vdwg.mxu0
    %6870 = vmatprep.subr.mxu0 0.0
    %v6871 = vand.u32 %v61, 4294901760
    %v6872 = vsub.f32 %v61, %v6871
    %v6873 = vand.u32 %v6872, 4294901760
    %v6874 = vsub.f32 %v6872, %v6873
    %v6875 = vand.u32 %v6874, 4294901760
    %6876 = vmatpush1.msra.mxu0 %v6875
    %6877 = vmatprep.subr.mxu0 0.0
    %v6878 = vand.u32 %v62, 4294901760
    %v6879 = vsub.f32 %v62, %v6878
    %v6880 = vand.u32 %v6879, 4294901760
    %v6881 = vsub.f32 %v6879, %v6880
    %v6882 = vand.u32 %v6881, 4294901760
    %6883 = vmatpush1.msra.mxu0 %v6882
    %6884 = vmatprep.subr.mxu0 0.0
    %v6885 = vand.u32 %v63, 4294901760
    %v6886 = vsub.f32 %v63, %v6885
    %v6887 = vand.u32 %v6886, 4294901760
    %v6888 = vsub.f32 %v6886, %v6887
    %v6889 = vand.u32 %v6888, 4294901760
    %6890 = vmatpush1.msra.mxu0 %v6889
    %6891 = vmatprep.subr.mxu0 0.0
    %v6892 = vand.u32 %v64, 4294901760
    %v6893 = vsub.f32 %v64, %v6892
    %v6894 = vand.u32 %v6893, 4294901760
    %v6895 = vsub.f32 %v6893, %v6894
    %v6896 = vand.u32 %v6895, 4294901760
    %6897 = vmatpush1.msra.mxu0 %v6896
    %6898 = vmatprep.subr.mxu0 0.0
    %6899 = vmatpush1.msra.mxu0 0.0
    %6900 = vmatprep.subr.mxu0 0.0
    %6901 = vmatpush1.msra.mxu0 0.0
    %6902 = vmatprep.subr.mxu0 0.0
    %6903 = vmatpush1.msra.mxu0 0.0
    %6904 = vmatprep.subr.mxu0 0.0
    %6905 = vmatpush1.msra.mxu0 0.0
    %6906 = vmatprep.subr.mxu0 0.0
    %6907 = vmatpush1.msra.mxu0 0.0
    %6908 = vmatprep.subr.mxu0 0.0
    %6909 = vmatpush1.msra.mxu0 0.0
    %6910 = vmatprep.subr.mxu0 0.0
    %6911 = vmatpush1.msra.mxu0 0.0
    %6912 = vmatprep.subr.mxu0 0.0
    %6913 = vmatpush1.msra.mxu0 0.0
    %6914 = vmatprep.subr.mxu0 0.0
    %6915 = vmatpush1.msra.mxu0 0.0
    %6916 = vmatprep.subr.mxu0 0.0
    %6917 = vmatpush1.msra.mxu0 0.0
    %6918 = vmatprep.subr.mxu0 0.0
    %6919 = vmatpush1.msra.mxu0 0.0
    %6920 = vmatprep.subr.mxu0 0.0
    %6921 = vmatpush1.msra.mxu0 0.0
    %6922 = vmatprep.subr.mxu0 0.0
    %6923 = vmatpush1.msra.mxu0 0.0
    %6924 = vmatprep.subr.mxu0 0.0
    %6925 = vmatpush1.msra.mxu0 0.0
    %6926 = vmatprep.subr.mxu0 0.0
    %6927 = vmatpush1.msra.mxu0 0.0
    %6928 = vmatprep.subr.mxu0 0.0
    %6929 = vmatpush1.msra.mxu0 0.0
    %6930 = vmatprep.subr.mxu0 0.0
    %6931 = vmatpush1.msra.mxu0 0.0
    %6932 = vmatprep.subr.mxu0 0.0
    %6933 = vmatpush1.msra.mxu0 0.0
    %6934 = vmatprep.subr.mxu0 0.0
    %6935 = vmatpush1.msra.mxu0 0.0
    %6936 = vmatprep.subr.mxu0 0.0
    %6937 = vmatpush1.msra.mxu0 0.0
    %6938 = vmatprep.subr.mxu0 0.0
    %6939 = vmatpush1.msra.mxu0 0.0
    %6940 = vmatprep.subr.mxu0 0.0
    %6941 = vmatpush1.msra.mxu0 0.0
    %6942 = vmatprep.subr.mxu0 0.0
    %6943 = vmatpush1.msra.mxu0 0.0
    %6944 = vmatprep.subr.mxu0 0.0
    %6945 = vmatpush1.msra.mxu0 0.0
    %6946 = vmatprep.subr.mxu0 0.0
    %6947 = vmatpush1.msra.mxu0 0.0
    %6948 = vmatprep.subr.mxu0 0.0
    %6949 = vmatpush1.msra.mxu0 0.0
    %6950 = vmatprep.subr.mxu0 0.0
    %6951 = vmatpush1.msra.mxu0 0.0
    %6952 = vmatprep.subr.mxu0 0.0
    %6953 = vmatpush1.msra.mxu0 0.0
    %6954 = vmatprep.mubr.f32.mxu0 0.0
    %v6955 = vand.u32 %v6789, 4294901760
    %6956 = vmatmul.mubr.f32.gmra.mrb[0].mxu0 %v6955
    %v6957 = vpop.f32.mrb[0].mxu0
    %v6958 = vadd.f32 %v6867, %v6957
    %v6959 = vpop.f32.mrb[0].mxu0
    %6960 = vdwg.mxu0
    %6961 = vmatprep.subr.mxu0 0.0
    %v6962 = vand.u32 %v61, 4294901760
    %v6963 = vsub.f32 %v61, %v6962
    %6964 = vmatpush1.msra.mxu0 %v6963
    %6965 = vmatprep.subr.mxu0 0.0
    %v6966 = vand.u32 %v62, 4294901760
    %v6967 = vsub.f32 %v62, %v6966
    %6968 = vmatpush1.msra.mxu0 %v6967
    %6969 = vmatprep.subr.mxu0 0.0
    %v6970 = vand.u32 %v63, 4294901760
    %v6971 = vsub.f32 %v63, %v6970
    %6972 = vmatpush1.msra.mxu0 %v6971
    %6973 = vmatprep.subr.mxu0 0.0
    %v6974 = vand.u32 %v64, 4294901760
    %v6975 = vsub.f32 %v64, %v6974
    %6976 = vmatpush1.msra.mxu0 %v6975
    %6977 = vmatprep.subr.mxu0 0.0
    %6978 = vmatpush1.msra.mxu0 0.0
    %6979 = vmatprep.subr.mxu0 0.0
    %6980 = vmatpush1.msra.mxu0 0.0
    %6981 = vmatprep.subr.mxu0 0.0
    %6982 = vmatpush1.msra.mxu0 0.0
    %6983 = vmatprep.subr.mxu0 0.0
    %6984 = vmatpush1.msra.mxu0 0.0
    %6985 = vmatprep.subr.mxu0 0.0
    %6986 = vmatpush1.msra.mxu0 0.0
    %6987 = vmatprep.subr.mxu0 0.0
    %6988 = vmatpush1.msra.mxu0 0.0
    %6989 = vmatprep.subr.mxu0 0.0
    %6990 = vmatpush1.msra.mxu0 0.0
    %6991 = vmatprep.subr.mxu0 0.0
    %6992 = vmatpush1.msra.mxu0 0.0
    %6993 = vmatprep.subr.mxu0 0.0
    %6994 = vmatpush1.msra.mxu0 0.0
    %6995 = vmatprep.subr.mxu0 0.0
    %6996 = vmatpush1.msra.mxu0 0.0
    %6997 = vmatprep.subr.mxu0 0.0
    %6998 = vmatpush1.msra.mxu0 0.0
    %6999 = vmatprep.subr.mxu0 0.0
    %7000 = vmatpush1.msra.mxu0 0.0
    %7001 = vmatprep.subr.mxu0 0.0
    %7002 = vmatpush1.msra.mxu0 0.0
    %7003 = vmatprep.subr.mxu0 0.0
    %7004 = vmatpush1.msra.mxu0 0.0
    %7005 = vmatprep.subr.mxu0 0.0
    %7006 = vmatpush1.msra.mxu0 0.0
    %7007 = vmatprep.subr.mxu0 0.0
    %7008 = vmatpush1.msra.mxu0 0.0
    %7009 = vmatprep.subr.mxu0 0.0
    %7010 = vmatpush1.msra.mxu0 0.0
    %7011 = vmatprep.subr.mxu0 0.0
    %7012 = vmatpush1.msra.mxu0 0.0
    %7013 = vmatprep.subr.mxu0 0.0
    %7014 = vmatpush1.msra.mxu0 0.0
    %7015 = vmatprep.subr.mxu0 0.0
    %7016 = vmatpush1.msra.mxu0 0.0
    %7017 = vmatprep.subr.mxu0 0.0
    %7018 = vmatpush1.msra.mxu0 0.0
    %7019 = vmatprep.subr.mxu0 0.0
    %7020 = vmatpush1.msra.mxu0 0.0
    %7021 = vmatprep.subr.mxu0 0.0
    %7022 = vmatpush1.msra.mxu0 0.0
    %7023 = vmatprep.subr.mxu0 0.0
    %7024 = vmatpush1.msra.mxu0 0.0
    %7025 = vmatprep.subr.mxu0 0.0
    %7026 = vmatpush1.msra.mxu0 0.0
    %7027 = vmatprep.subr.mxu0 0.0
    %7028 = vmatpush1.msra.mxu0 0.0
    %7029 = vmatprep.subr.mxu0 0.0
    %7030 = vmatpush1.msra.mxu0 0.0
    %7031 = vmatprep.subr.mxu0 0.0
    %7032 = vmatpush1.msra.mxu0 0.0
    %7033 = vmatprep.mubr.f32.mxu0 0.0
    %v7034 = vand.u32 %v6789, 4294901760
    %v7035 = vsub.f32 %v6789, %v7034
    %7036 = vmatmul.mubr.f32.gmra.mrb[0].mxu0 %v7035
    %v7037 = vpop.f32.mrb[0].mxu0
    %v7038 = vadd.f32 %v6958, %v7037
    %v7039 = vpop.f32.mrb[0].mxu0
    %7040 = vdwg.mxu0
    %7041 = vmatprep.subr.mxu0 0.0
    %v7042 = vand.u32 %v61, 4294901760
    %7043 = vmatpush1.msra.mxu0 %v7042
    %7044 = vmatprep.subr.mxu0 0.0
    %v7045 = vand.u32 %v62, 4294901760
    %7046 = vmatpush1.msra.mxu0 %v7045
    %7047 = vmatprep.subr.mxu0 0.0
    %v7048 = vand.u32 %v63, 4294901760
    %7049 = vmatpush1.msra.mxu0 %v7048
    %7050 = vmatprep.subr.mxu0 0.0
    %v7051 = vand.u32 %v64, 4294901760
    %7052 = vmatpush1.msra.mxu0 %v7051
    %7053 = vmatprep.subr.mxu0 0.0
    %7054 = vmatpush1.msra.mxu0 0.0
    %7055 = vmatprep.subr.mxu0 0.0
    %7056 = vmatpush1.msra.mxu0 0.0
    %7057 = vmatprep.subr.mxu0 0.0
    %7058 = vmatpush1.msra.mxu0 0.0
    %7059 = vmatprep.subr.mxu0 0.0
    %7060 = vmatpush1.msra.mxu0 0.0
    %7061 = vmatprep.subr.mxu0 0.0
    %7062 = vmatpush1.msra.mxu0 0.0
    %7063 = vmatprep.subr.mxu0 0.0
    %7064 = vmatpush1.msra.mxu0 0.0
    %7065 = vmatprep.subr.mxu0 0.0
    %7066 = vmatpush1.msra.mxu0 0.0
    %7067 = vmatprep.subr.mxu0 0.0
    %7068 = vmatpush1.msra.mxu0 0.0
    %7069 = vmatprep.subr.mxu0 0.0
    %7070 = vmatpush1.msra.mxu0 0.0
    %7071 = vmatprep.subr.mxu0 0.0
    %7072 = vmatpush1.msra.mxu0 0.0
    %7073 = vmatprep.subr.mxu0 0.0
    %7074 = vmatpush1.msra.mxu0 0.0
    %7075 = vmatprep.subr.mxu0 0.0
    %7076 = vmatpush1.msra.mxu0 0.0
    %7077 = vmatprep.subr.mxu0 0.0
    %7078 = vmatpush1.msra.mxu0 0.0
    %7079 = vmatprep.subr.mxu0 0.0
    %7080 = vmatpush1.msra.mxu0 0.0
    %7081 = vmatprep.subr.mxu0 0.0
    %7082 = vmatpush1.msra.mxu0 0.0
    %7083 = vmatprep.subr.mxu0 0.0
    %7084 = vmatpush1.msra.mxu0 0.0
    %7085 = vmatprep.subr.mxu0 0.0
    %7086 = vmatpush1.msra.mxu0 0.0
    %7087 = vmatprep.subr.mxu0 0.0
    %7088 = vmatpush1.msra.mxu0 0.0
    %7089 = vmatprep.subr.mxu0 0.0
    %7090 = vmatpush1.msra.mxu0 0.0
    %7091 = vmatprep.subr.mxu0 0.0
    %7092 = vmatpush1.msra.mxu0 0.0
    %7093 = vmatprep.subr.mxu0 0.0
    %7094 = vmatpush1.msra.mxu0 0.0
    %7095 = vmatprep.subr.mxu0 0.0
    %7096 = vmatpush1.msra.mxu0 0.0
    %7097 = vmatprep.subr.mxu0 0.0
    %7098 = vmatpush1.msra.mxu0 0.0
    %7099 = vmatprep.subr.mxu0 0.0
    %7100 = vmatpush1.msra.mxu0 0.0
    %7101 = vmatprep.subr.mxu0 0.0
    %7102 = vmatpush1.msra.mxu0 0.0
    %7103 = vmatprep.subr.mxu0 0.0
    %7104 = vmatpush1.msra.mxu0 0.0
    %7105 = vmatprep.subr.mxu0 0.0
    %7106 = vmatpush1.msra.mxu0 0.0
    %7107 = vmatprep.subr.mxu0 0.0
    %7108 = vmatpush1.msra.mxu0 0.0
    %7109 = vmatprep.mubr.f32.mxu0 0.0
    %v7110 = vand.u32 %v6789, 4294901760
    %v7111 = vsub.f32 %v6789, %v7110
    %v7112 = vand.u32 %v7111, 4294901760
    %7113 = vmatmul.mubr.f32.gmra.mrb[0].mxu0 %v7112
    %v7114 = vpop.f32.mrb[0].mxu0
    %v7115 = vadd.f32 %v7038, %v7114
    %v7116 = vpop.f32.mrb[0].mxu0
    %7117 = vdwg.mxu0
    %7118 = vmatprep.subr.mxu0 0.0
    %v7119 = vand.u32 %v61, 4294901760
    %v7120 = vsub.f32 %v61, %v7119
    %v7121 = vand.u32 %v7120, 4294901760
    %7122 = vmatpush1.msra.mxu0 %v7121
    %7123 = vmatprep.subr.mxu0 0.0
    %v7124 = vand.u32 %v62, 4294901760
    %v7125 = vsub.f32 %v62, %v7124
    %v7126 = vand.u32 %v7125, 4294901760
    %7127 = vmatpush1.msra.mxu0 %v7126
    %7128 = vmatprep.subr.mxu0 0.0
    %v7129 = vand.u32 %v63, 4294901760
    %v7130 = vsub.f32 %v63, %v7129
    %v7131 = vand.u32 %v7130, 4294901760
    %7132 = vmatpush1.msra.mxu0 %v7131
    %7133 = vmatprep.subr.mxu0 0.0
    %v7134 = vand.u32 %v64, 4294901760
    %v7135 = vsub.f32 %v64, %v7134
    %v7136 = vand.u32 %v7135, 4294901760
    %7137 = vmatpush1.msra.mxu0 %v7136
    %7138 = vmatprep.subr.mxu0 0.0
    %7139 = vmatpush1.msra.mxu0 0.0
    %7140 = vmatprep.subr.mxu0 0.0
    %7141 = vmatpush1.msra.mxu0 0.0
    %7142 = vmatprep.subr.mxu0 0.0
    %7143 = vmatpush1.msra.mxu0 0.0
    %7144 = vmatprep.subr.mxu0 0.0
    %7145 = vmatpush1.msra.mxu0 0.0
    %7146 = vmatprep.subr.mxu0 0.0
    %7147 = vmatpush1.msra.mxu0 0.0
    %7148 = vmatprep.subr.mxu0 0.0
    %7149 = vmatpush1.msra.mxu0 0.0
    %7150 = vmatprep.subr.mxu0 0.0
    %7151 = vmatpush1.msra.mxu0 0.0
    %7152 = vmatprep.subr.mxu0 0.0
    %7153 = vmatpush1.msra.mxu0 0.0
    %7154 = vmatprep.subr.mxu0 0.0
    %7155 = vmatpush1.msra.mxu0 0.0
    %7156 = vmatprep.subr.mxu0 0.0
    %7157 = vmatpush1.msra.mxu0 0.0
    %7158 = vmatprep.subr.mxu0 0.0
    %7159 = vmatpush1.msra.mxu0 0.0
    %7160 = vmatprep.subr.mxu0 0.0
    %7161 = vmatpush1.msra.mxu0 0.0
    %7162 = vmatprep.subr.mxu0 0.0
    %7163 = vmatpush1.msra.mxu0 0.0
    %7164 = vmatprep.subr.mxu0 0.0
    %7165 = vmatpush1.msra.mxu0 0.0
    %7166 = vmatprep.subr.mxu0 0.0
    %7167 = vmatpush1.msra.mxu0 0.0
    %7168 = vmatprep.subr.mxu0 0.0
    %7169 = vmatpush1.msra.mxu0 0.0
    %7170 = vmatprep.subr.mxu0 0.0
    %7171 = vmatpush1.msra.mxu0 0.0
    %7172 = vmatprep.subr.mxu0 0.0
    %7173 = vmatpush1.msra.mxu0 0.0
    %7174 = vmatprep.subr.mxu0 0.0
    %7175 = vmatpush1.msra.mxu0 0.0
    %7176 = vmatprep.subr.mxu0 0.0
    %7177 = vmatpush1.msra.mxu0 0.0
    %7178 = vmatprep.subr.mxu0 0.0
    %7179 = vmatpush1.msra.mxu0 0.0
    %7180 = vmatprep.subr.mxu0 0.0
    %7181 = vmatpush1.msra.mxu0 0.0
    %7182 = vmatprep.subr.mxu0 0.0
    %7183 = vmatpush1.msra.mxu0 0.0
    %7184 = vmatprep.subr.mxu0 0.0
    %7185 = vmatpush1.msra.mxu0 0.0
    %7186 = vmatprep.subr.mxu0 0.0
    %7187 = vmatpush1.msra.mxu0 0.0
    %7188 = vmatprep.subr.mxu0 0.0
    %7189 = vmatpush1.msra.mxu0 0.0
    %7190 = vmatprep.subr.mxu0 0.0
    %7191 = vmatpush1.msra.mxu0 0.0
    %7192 = vmatprep.subr.mxu0 0.0
    %7193 = vmatpush1.msra.mxu0 0.0
    %7194 = vmatprep.mubr.f32.mxu0 0.0
    %v7195 = vand.u32 %v6789, 4294901760
    %7196 = vmatmul.mubr.f32.gmra.mrb[0].mxu0 %v7195
    %v7197 = vpop.f32.mrb[0].mxu0
    %v7198 = vadd.f32 %v7115, %v7197
    %v7199 = vpop.f32.mrb[0].mxu0
    %7200 = vdwg.mxu0
    %7201 = vmatprep.subr.mxu0 0.0
    %v7202 = vand.u32 %v61, 4294901760
    %7203 = vmatpush1.msra.mxu0 %v7202
    %7204 = vmatprep.subr.mxu0 0.0
    %v7205 = vand.u32 %v62, 4294901760
    %7206 = vmatpush1.msra.mxu0 %v7205
    %7207 = vmatprep.subr.mxu0 0.0
    %v7208 = vand.u32 %v63, 4294901760
    %7209 = vmatpush1.msra.mxu0 %v7208
    %7210 = vmatprep.subr.mxu0 0.0
    %v7211 = vand.u32 %v64, 4294901760
    %7212 = vmatpush1.msra.mxu0 %v7211
    %7213 = vmatprep.subr.mxu0 0.0
    %7214 = vmatpush1.msra.mxu0 0.0
    %7215 = vmatprep.subr.mxu0 0.0
    %7216 = vmatpush1.msra.mxu0 0.0
    %7217 = vmatprep.subr.mxu0 0.0
    %7218 = vmatpush1.msra.mxu0 0.0
    %7219 = vmatprep.subr.mxu0 0.0
    %7220 = vmatpush1.msra.mxu0 0.0
    %7221 = vmatprep.subr.mxu0 0.0
    %7222 = vmatpush1.msra.mxu0 0.0
    %7223 = vmatprep.subr.mxu0 0.0
    %7224 = vmatpush1.msra.mxu0 0.0
    %7225 = vmatprep.subr.mxu0 0.0
    %7226 = vmatpush1.msra.mxu0 0.0
    %7227 = vmatprep.subr.mxu0 0.0
    %7228 = vmatpush1.msra.mxu0 0.0
    %7229 = vmatprep.subr.mxu0 0.0
    %7230 = vmatpush1.msra.mxu0 0.0
    %7231 = vmatprep.subr.mxu0 0.0
    %7232 = vmatpush1.msra.mxu0 0.0
    %7233 = vmatprep.subr.mxu0 0.0
    %7234 = vmatpush1.msra.mxu0 0.0
    %7235 = vmatprep.subr.mxu0 0.0
    %7236 = vmatpush1.msra.mxu0 0.0
    %7237 = vmatprep.subr.mxu0 0.0
    %7238 = vmatpush1.msra.mxu0 0.0
    %7239 = vmatprep.subr.mxu0 0.0
    %7240 = vmatpush1.msra.mxu0 0.0
    %7241 = vmatprep.subr.mxu0 0.0
    %7242 = vmatpush1.msra.mxu0 0.0
    %7243 = vmatprep.subr.mxu0 0.0
    %7244 = vmatpush1.msra.mxu0 0.0
    %7245 = vmatprep.subr.mxu0 0.0
    %7246 = vmatpush1.msra.mxu0 0.0
    %7247 = vmatprep.subr.mxu0 0.0
    %7248 = vmatpush1.msra.mxu0 0.0
    %7249 = vmatprep.subr.mxu0 0.0
    %7250 = vmatpush1.msra.mxu0 0.0
    %7251 = vmatprep.subr.mxu0 0.0
    %7252 = vmatpush1.msra.mxu0 0.0
    %7253 = vmatprep.subr.mxu0 0.0
    %7254 = vmatpush1.msra.mxu0 0.0
    %7255 = vmatprep.subr.mxu0 0.0
    %7256 = vmatpush1.msra.mxu0 0.0
    %7257 = vmatprep.subr.mxu0 0.0
    %7258 = vmatpush1.msra.mxu0 0.0
    %7259 = vmatprep.subr.mxu0 0.0
    %7260 = vmatpush1.msra.mxu0 0.0
    %7261 = vmatprep.subr.mxu0 0.0
    %7262 = vmatpush1.msra.mxu0 0.0
    %7263 = vmatprep.subr.mxu0 0.0
    %7264 = vmatpush1.msra.mxu0 0.0
    %7265 = vmatprep.subr.mxu0 0.0
    %7266 = vmatpush1.msra.mxu0 0.0
    %7267 = vmatprep.subr.mxu0 0.0
    %7268 = vmatpush1.msra.mxu0 0.0
    %7269 = vmatprep.mubr.f32.mxu0 0.0
    %v7270 = vand.u32 %v6789, 4294901760
    %7271 = vmatmul.mubr.f32.gmra.mrb[0].mxu0 %v7270
    %v7272 = vpop.f32.mrb[0].mxu0
    %v7273 = vadd.f32 %v7198, %v7272
    %v7274 = vpop.f32.mrb[0].mxu0
    %7275 = vdwg.mxu0
    %v7276 = vmul.f32 %v7273, 0.001953125
    %v7278 = vsel %vm241, %v6787, 0
    %7280 = vmatprep.subr.mxu0 0.0
    %v7281 = vand.u32 %v61, 4294901760
    %7282 = vmatpush1.msra.mxu0 %v7281
    %7283 = vmatprep.subr.mxu0 0.0
    %v7284 = vand.u32 %v62, 4294901760
    %7285 = vmatpush1.msra.mxu0 %v7284
    %7286 = vmatprep.subr.mxu0 0.0
    %v7287 = vand.u32 %v63, 4294901760
    %7288 = vmatpush1.msra.mxu0 %v7287
    %7289 = vmatprep.subr.mxu0 0.0
    %v7290 = vand.u32 %v64, 4294901760
    %7291 = vmatpush1.msra.mxu0 %v7290
    %7292 = vmatprep.subr.mxu0 0.0
    %7293 = vmatpush1.msra.mxu0 0.0
    %7294 = vmatprep.subr.mxu0 0.0
    %7295 = vmatpush1.msra.mxu0 0.0
    %7296 = vmatprep.subr.mxu0 0.0
    %7297 = vmatpush1.msra.mxu0 0.0
    %7298 = vmatprep.subr.mxu0 0.0
    %7299 = vmatpush1.msra.mxu0 0.0
    %7300 = vmatprep.subr.mxu0 0.0
    %7301 = vmatpush1.msra.mxu0 0.0
    %7302 = vmatprep.subr.mxu0 0.0
    %7303 = vmatpush1.msra.mxu0 0.0
    %7304 = vmatprep.subr.mxu0 0.0
    %7305 = vmatpush1.msra.mxu0 0.0
    %7306 = vmatprep.subr.mxu0 0.0
    %7307 = vmatpush1.msra.mxu0 0.0
    %7308 = vmatprep.subr.mxu0 0.0
    %7309 = vmatpush1.msra.mxu0 0.0
    %7310 = vmatprep.subr.mxu0 0.0
    %7311 = vmatpush1.msra.mxu0 0.0
    %7312 = vmatprep.subr.mxu0 0.0
    %7313 = vmatpush1.msra.mxu0 0.0
    %7314 = vmatprep.subr.mxu0 0.0
    %7315 = vmatpush1.msra.mxu0 0.0
    %7316 = vmatprep.subr.mxu0 0.0
    %7317 = vmatpush1.msra.mxu0 0.0
    %7318 = vmatprep.subr.mxu0 0.0
    %7319 = vmatpush1.msra.mxu0 0.0
    %7320 = vmatprep.subr.mxu0 0.0
    %7321 = vmatpush1.msra.mxu0 0.0
    %7322 = vmatprep.subr.mxu0 0.0
    %7323 = vmatpush1.msra.mxu0 0.0
    %7324 = vmatprep.subr.mxu0 0.0
    %7325 = vmatpush1.msra.mxu0 0.0
    %7326 = vmatprep.subr.mxu0 0.0
    %7327 = vmatpush1.msra.mxu0 0.0
    %7328 = vmatprep.subr.mxu0 0.0
    %7329 = vmatpush1.msra.mxu0 0.0
    %7330 = vmatprep.subr.mxu0 0.0
    %7331 = vmatpush1.msra.mxu0 0.0
    %7332 = vmatprep.subr.mxu0 0.0
    %7333 = vmatpush1.msra.mxu0 0.0
    %7334 = vmatprep.subr.mxu0 0.0
    %7335 = vmatpush1.msra.mxu0 0.0
    %7336 = vmatprep.subr.mxu0 0.0
    %7337 = vmatpush1.msra.mxu0 0.0
    %7338 = vmatprep.subr.mxu0 0.0
    %7339 = vmatpush1.msra.mxu0 0.0
    %7340 = vmatprep.subr.mxu0 0.0
    %7341 = vmatpush1.msra.mxu0 0.0
    %7342 = vmatprep.subr.mxu0 0.0
    %7343 = vmatpush1.msra.mxu0 0.0
    %7344 = vmatprep.subr.mxu0 0.0
    %7345 = vmatpush1.msra.mxu0 0.0
    %7346 = vmatprep.subr.mxu0 0.0
    %7347 = vmatpush1.msra.mxu0 0.0
    %7348 = vmatprep.mubr.f32.mxu0 0.0
    %v7349 = vand.u32 %v7278, 4294901760
    %v7350 = vsub.f32 %v7278, %v7349
    %v7351 = vand.u32 %v7350, 4294901760
    %v7352 = vsub.f32 %v7350, %v7351
    %v7353 = vand.u32 %v7352, 4294901760
    %7354 = vmatmul.mubr.f32.gmra.mrb[0].mxu0 %v7353
    %v7355 = vpop.f32.mrb[0].mxu0
    %v7356 = vadd.f32 0.0, %v7355
    %v7357 = vpop.f32.mrb[0].mxu0
    %7358 = vdwg.mxu0
    %7359 = vmatprep.subr.mxu0 0.0
    %v7360 = vand.u32 %v61, 4294901760
    %v7361 = vsub.f32 %v61, %v7360
    %v7362 = vand.u32 %v7361, 4294901760
    %v7363 = vsub.f32 %v7361, %v7362
    %v7364 = vand.u32 %v7363, 4294901760
    %7365 = vmatpush1.msra.mxu0 %v7364
    %7366 = vmatprep.subr.mxu0 0.0
    %v7367 = vand.u32 %v62, 4294901760
    %v7368 = vsub.f32 %v62, %v7367
    %v7369 = vand.u32 %v7368, 4294901760
    %v7370 = vsub.f32 %v7368, %v7369
    %v7371 = vand.u32 %v7370, 4294901760
    %7372 = vmatpush1.msra.mxu0 %v7371
    %7373 = vmatprep.subr.mxu0 0.0
    %v7374 = vand.u32 %v63, 4294901760
    %v7375 = vsub.f32 %v63, %v7374
    %v7376 = vand.u32 %v7375, 4294901760
    %v7377 = vsub.f32 %v7375, %v7376
    %v7378 = vand.u32 %v7377, 4294901760
    %7379 = vmatpush1.msra.mxu0 %v7378
    %7380 = vmatprep.subr.mxu0 0.0
    %v7381 = vand.u32 %v64, 4294901760
    %v7382 = vsub.f32 %v64, %v7381
    %v7383 = vand.u32 %v7382, 4294901760
    %v7384 = vsub.f32 %v7382, %v7383
    %v7385 = vand.u32 %v7384, 4294901760
    %7386 = vmatpush1.msra.mxu0 %v7385
    %7387 = vmatprep.subr.mxu0 0.0
    %7388 = vmatpush1.msra.mxu0 0.0
    %7389 = vmatprep.subr.mxu0 0.0
    %7390 = vmatpush1.msra.mxu0 0.0
    %7391 = vmatprep.subr.mxu0 0.0
    %7392 = vmatpush1.msra.mxu0 0.0
    %7393 = vmatprep.subr.mxu0 0.0
    %7394 = vmatpush1.msra.mxu0 0.0
    %7395 = vmatprep.subr.mxu0 0.0
    %7396 = vmatpush1.msra.mxu0 0.0
    %7397 = vmatprep.subr.mxu0 0.0
    %7398 = vmatpush1.msra.mxu0 0.0
    %7399 = vmatprep.subr.mxu0 0.0
    %7400 = vmatpush1.msra.mxu0 0.0
    %7401 = vmatprep.subr.mxu0 0.0
    %7402 = vmatpush1.msra.mxu0 0.0
    %7403 = vmatprep.subr.mxu0 0.0
    %7404 = vmatpush1.msra.mxu0 0.0
    %7405 = vmatprep.subr.mxu0 0.0
    %7406 = vmatpush1.msra.mxu0 0.0
    %7407 = vmatprep.subr.mxu0 0.0
    %7408 = vmatpush1.msra.mxu0 0.0
    %7409 = vmatprep.subr.mxu0 0.0
    %7410 = vmatpush1.msra.mxu0 0.0
    %7411 = vmatprep.subr.mxu0 0.0
    %7412 = vmatpush1.msra.mxu0 0.0
    %7413 = vmatprep.subr.mxu0 0.0
    %7414 = vmatpush1.msra.mxu0 0.0
    %7415 = vmatprep.subr.mxu0 0.0
    %7416 = vmatpush1.msra.mxu0 0.0
    %7417 = vmatprep.subr.mxu0 0.0
    %7418 = vmatpush1.msra.mxu0 0.0
    %7419 = vmatprep.subr.mxu0 0.0
    %7420 = vmatpush1.msra.mxu0 0.0
    %7421 = vmatprep.subr.mxu0 0.0
    %7422 = vmatpush1.msra.mxu0 0.0
    %7423 = vmatprep.subr.mxu0 0.0
    %7424 = vmatpush1.msra.mxu0 0.0
    %7425 = vmatprep.subr.mxu0 0.0
    %7426 = vmatpush1.msra.mxu0 0.0
    %7427 = vmatprep.subr.mxu0 0.0
    %7428 = vmatpush1.msra.mxu0 0.0
    %7429 = vmatprep.subr.mxu0 0.0
    %7430 = vmatpush1.msra.mxu0 0.0
    %7431 = vmatprep.subr.mxu0 0.0
    %7432 = vmatpush1.msra.mxu0 0.0
    %7433 = vmatprep.subr.mxu0 0.0
    %7434 = vmatpush1.msra.mxu0 0.0
    %7435 = vmatprep.subr.mxu0 0.0
    %7436 = vmatpush1.msra.mxu0 0.0
    %7437 = vmatprep.subr.mxu0 0.0
    %7438 = vmatpush1.msra.mxu0 0.0
    %7439 = vmatprep.subr.mxu0 0.0
    %7440 = vmatpush1.msra.mxu0 0.0
    %7441 = vmatprep.subr.mxu0 0.0
    %7442 = vmatpush1.msra.mxu0 0.0
    %7443 = vmatprep.mubr.f32.mxu0 0.0
    %v7444 = vand.u32 %v7278, 4294901760
    %7445 = vmatmul.mubr.f32.gmra.mrb[0].mxu0 %v7444
    %v7446 = vpop.f32.mrb[0].mxu0
    %v7447 = vadd.f32 %v7356, %v7446
    %v7448 = vpop.f32.mrb[0].mxu0
    %7449 = vdwg.mxu0
    %7450 = vmatprep.subr.mxu0 0.0
    %v7451 = vand.u32 %v61, 4294901760
    %v7452 = vsub.f32 %v61, %v7451
    %7453 = vmatpush1.msra.mxu0 %v7452
    %7454 = vmatprep.subr.mxu0 0.0
    %v7455 = vand.u32 %v62, 4294901760
    %v7456 = vsub.f32 %v62, %v7455
    %7457 = vmatpush1.msra.mxu0 %v7456
    %7458 = vmatprep.subr.mxu0 0.0
    %v7459 = vand.u32 %v63, 4294901760
    %v7460 = vsub.f32 %v63, %v7459
    %7461 = vmatpush1.msra.mxu0 %v7460
    %7462 = vmatprep.subr.mxu0 0.0
    %v7463 = vand.u32 %v64, 4294901760
    %v7464 = vsub.f32 %v64, %v7463
    %7465 = vmatpush1.msra.mxu0 %v7464
    %7466 = vmatprep.subr.mxu0 0.0
    %7467 = vmatpush1.msra.mxu0 0.0
    %7468 = vmatprep.subr.mxu0 0.0
    %7469 = vmatpush1.msra.mxu0 0.0
    %7470 = vmatprep.subr.mxu0 0.0
    %7471 = vmatpush1.msra.mxu0 0.0
    %7472 = vmatprep.subr.mxu0 0.0
    %7473 = vmatpush1.msra.mxu0 0.0
    %7474 = vmatprep.subr.mxu0 0.0
    %7475 = vmatpush1.msra.mxu0 0.0
    %7476 = vmatprep.subr.mxu0 0.0
    %7477 = vmatpush1.msra.mxu0 0.0
    %7478 = vmatprep.subr.mxu0 0.0
    %7479 = vmatpush1.msra.mxu0 0.0
    %7480 = vmatprep.subr.mxu0 0.0
    %7481 = vmatpush1.msra.mxu0 0.0
    %7482 = vmatprep.subr.mxu0 0.0
    %7483 = vmatpush1.msra.mxu0 0.0
    %7484 = vmatprep.subr.mxu0 0.0
    %7485 = vmatpush1.msra.mxu0 0.0
    %7486 = vmatprep.subr.mxu0 0.0
    %7487 = vmatpush1.msra.mxu0 0.0
    %7488 = vmatprep.subr.mxu0 0.0
    %7489 = vmatpush1.msra.mxu0 0.0
    %7490 = vmatprep.subr.mxu0 0.0
    %7491 = vmatpush1.msra.mxu0 0.0
    %7492 = vmatprep.subr.mxu0 0.0
    %7493 = vmatpush1.msra.mxu0 0.0
    %7494 = vmatprep.subr.mxu0 0.0
    %7495 = vmatpush1.msra.mxu0 0.0
    %7496 = vmatprep.subr.mxu0 0.0
    %7497 = vmatpush1.msra.mxu0 0.0
    %7498 = vmatprep.subr.mxu0 0.0
    %7499 = vmatpush1.msra.mxu0 0.0
    %7500 = vmatprep.subr.mxu0 0.0
    %7501 = vmatpush1.msra.mxu0 0.0
    %7502 = vmatprep.subr.mxu0 0.0
    %7503 = vmatpush1.msra.mxu0 0.0
    %7504 = vmatprep.subr.mxu0 0.0
    %7505 = vmatpush1.msra.mxu0 0.0
    %7506 = vmatprep.subr.mxu0 0.0
    %7507 = vmatpush1.msra.mxu0 0.0
    %7508 = vmatprep.subr.mxu0 0.0
    %7509 = vmatpush1.msra.mxu0 0.0
    %7510 = vmatprep.subr.mxu0 0.0
    %7511 = vmatpush1.msra.mxu0 0.0
    %7512 = vmatprep.subr.mxu0 0.0
    %7513 = vmatpush1.msra.mxu0 0.0
    %7514 = vmatprep.subr.mxu0 0.0
    %7515 = vmatpush1.msra.mxu0 0.0
    %7516 = vmatprep.subr.mxu0 0.0
    %7517 = vmatpush1.msra.mxu0 0.0
    %7518 = vmatprep.subr.mxu0 0.0
    %7519 = vmatpush1.msra.mxu0 0.0
    %7520 = vmatprep.subr.mxu0 0.0
    %7521 = vmatpush1.msra.mxu0 0.0
    %7522 = vmatprep.mubr.f32.mxu0 0.0
    %v7523 = vand.u32 %v7278, 4294901760
    %v7524 = vsub.f32 %v7278, %v7523
    %7525 = vmatmul.mubr.f32.gmra.mrb[0].mxu0 %v7524
    %v7526 = vpop.f32.mrb[0].mxu0
    %v7527 = vadd.f32 %v7447, %v7526
    %v7528 = vpop.f32.mrb[0].mxu0
    %7529 = vdwg.mxu0
    %7530 = vmatprep.subr.mxu0 0.0
    %v7531 = vand.u32 %v61, 4294901760
    %7532 = vmatpush1.msra.mxu0 %v7531
    %7533 = vmatprep.subr.mxu0 0.0
    %v7534 = vand.u32 %v62, 4294901760
    %7535 = vmatpush1.msra.mxu0 %v7534
    %7536 = vmatprep.subr.mxu0 0.0
    %v7537 = vand.u32 %v63, 4294901760
    %7538 = vmatpush1.msra.mxu0 %v7537
    %7539 = vmatprep.subr.mxu0 0.0
    %v7540 = vand.u32 %v64, 4294901760
    %7541 = vmatpush1.msra.mxu0 %v7540
    %7542 = vmatprep.subr.mxu0 0.0
    %7543 = vmatpush1.msra.mxu0 0.0
    %7544 = vmatprep.subr.mxu0 0.0
    %7545 = vmatpush1.msra.mxu0 0.0
    %7546 = vmatprep.subr.mxu0 0.0
    %7547 = vmatpush1.msra.mxu0 0.0
    %7548 = vmatprep.subr.mxu0 0.0
    %7549 = vmatpush1.msra.mxu0 0.0
    %7550 = vmatprep.subr.mxu0 0.0
    %7551 = vmatpush1.msra.mxu0 0.0
    %7552 = vmatprep.subr.mxu0 0.0
    %7553 = vmatpush1.msra.mxu0 0.0
    %7554 = vmatprep.subr.mxu0 0.0
    %7555 = vmatpush1.msra.mxu0 0.0
    %7556 = vmatprep.subr.mxu0 0.0
    %7557 = vmatpush1.msra.mxu0 0.0
    %7558 = vmatprep.subr.mxu0 0.0
    %7559 = vmatpush1.msra.mxu0 0.0
    %7560 = vmatprep.subr.mxu0 0.0
    %7561 = vmatpush1.msra.mxu0 0.0
    %7562 = vmatprep.subr.mxu0 0.0
    %7563 = vmatpush1.msra.mxu0 0.0
    %7564 = vmatprep.subr.mxu0 0.0
    %7565 = vmatpush1.msra.mxu0 0.0
    %7566 = vmatprep.subr.mxu0 0.0
    %7567 = vmatpush1.msra.mxu0 0.0
    %7568 = vmatprep.subr.mxu0 0.0
    %7569 = vmatpush1.msra.mxu0 0.0
    %7570 = vmatprep.subr.mxu0 0.0
    %7571 = vmatpush1.msra.mxu0 0.0
    %7572 = vmatprep.subr.mxu0 0.0
    %7573 = vmatpush1.msra.mxu0 0.0
    %7574 = vmatprep.subr.mxu0 0.0
    %7575 = vmatpush1.msra.mxu0 0.0
    %7576 = vmatprep.subr.mxu0 0.0
    %7577 = vmatpush1.msra.mxu0 0.0
    %7578 = vmatprep.subr.mxu0 0.0
    %7579 = vmatpush1.msra.mxu0 0.0
    %7580 = vmatprep.subr.mxu0 0.0
    %7581 = vmatpush1.msra.mxu0 0.0
    %7582 = vmatprep.subr.mxu0 0.0
    %7583 = vmatpush1.msra.mxu0 0.0
    %7584 = vmatprep.subr.mxu0 0.0
    %7585 = vmatpush1.msra.mxu0 0.0
    %7586 = vmatprep.subr.mxu0 0.0
    %7587 = vmatpush1.msra.mxu0 0.0
    %7588 = vmatprep.subr.mxu0 0.0
    %7589 = vmatpush1.msra.mxu0 0.0
    %7590 = vmatprep.subr.mxu0 0.0
    %7591 = vmatpush1.msra.mxu0 0.0
    %7592 = vmatprep.subr.mxu0 0.0
    %7593 = vmatpush1.msra.mxu0 0.0
    %7594 = vmatprep.subr.mxu0 0.0
    %7595 = vmatpush1.msra.mxu0 0.0
    %7596 = vmatprep.subr.mxu0 0.0
    %7597 = vmatpush1.msra.mxu0 0.0
    %7598 = vmatprep.mubr.f32.mxu0 0.0
    %v7599 = vand.u32 %v7278, 4294901760
    %v7600 = vsub.f32 %v7278, %v7599
    %v7601 = vand.u32 %v7600, 4294901760
    %7602 = vmatmul.mubr.f32.gmra.mrb[0].mxu0 %v7601
    %v7603 = vpop.f32.mrb[0].mxu0
    %v7604 = vadd.f32 %v7527, %v7603
    %v7605 = vpop.f32.mrb[0].mxu0
    %7606 = vdwg.mxu0
    %7607 = vmatprep.subr.mxu0 0.0
    %v7608 = vand.u32 %v61, 4294901760
    %v7609 = vsub.f32 %v61, %v7608
    %v7610 = vand.u32 %v7609, 4294901760
    %7611 = vmatpush1.msra.mxu0 %v7610
    %7612 = vmatprep.subr.mxu0 0.0
    %v7613 = vand.u32 %v62, 4294901760
    %v7614 = vsub.f32 %v62, %v7613
    %v7615 = vand.u32 %v7614, 4294901760
    %7616 = vmatpush1.msra.mxu0 %v7615
    %7617 = vmatprep.subr.mxu0 0.0
    %v7618 = vand.u32 %v63, 4294901760
    %v7619 = vsub.f32 %v63, %v7618
    %v7620 = vand.u32 %v7619, 4294901760
    %7621 = vmatpush1.msra.mxu0 %v7620
    %7622 = vmatprep.subr.mxu0 0.0
    %v7623 = vand.u32 %v64, 4294901760
    %v7624 = vsub.f32 %v64, %v7623
    %v7625 = vand.u32 %v7624, 4294901760
    %7626 = vmatpush1.msra.mxu0 %v7625
    %7627 = vmatprep.subr.mxu0 0.0
    %7628 = vmatpush1.msra.mxu0 0.0
    %7629 = vmatprep.subr.mxu0 0.0
    %7630 = vmatpush1.msra.mxu0 0.0
    %7631 = vmatprep.subr.mxu0 0.0
    %7632 = vmatpush1.msra.mxu0 0.0
    %7633 = vmatprep.subr.mxu0 0.0
    %7634 = vmatpush1.msra.mxu0 0.0
    %7635 = vmatprep.subr.mxu0 0.0
    %7636 = vmatpush1.msra.mxu0 0.0
    %7637 = vmatprep.subr.mxu0 0.0
    %7638 = vmatpush1.msra.mxu0 0.0
    %7639 = vmatprep.subr.mxu0 0.0
    %7640 = vmatpush1.msra.mxu0 0.0
    %7641 = vmatprep.subr.mxu0 0.0
    %7642 = vmatpush1.msra.mxu0 0.0
    %7643 = vmatprep.subr.mxu0 0.0
    %7644 = vmatpush1.msra.mxu0 0.0
    %7645 = vmatprep.subr.mxu0 0.0
    %7646 = vmatpush1.msra.mxu0 0.0
    %7647 = vmatprep.subr.mxu0 0.0
    %7648 = vmatpush1.msra.mxu0 0.0
    %7649 = vmatprep.subr.mxu0 0.0
    %7650 = vmatpush1.msra.mxu0 0.0
    %7651 = vmatprep.subr.mxu0 0.0
    %7652 = vmatpush1.msra.mxu0 0.0
    %7653 = vmatprep.subr.mxu0 0.0
    %7654 = vmatpush1.msra.mxu0 0.0
    %7655 = vmatprep.subr.mxu0 0.0
    %7656 = vmatpush1.msra.mxu0 0.0
    %7657 = vmatprep.subr.mxu0 0.0
    %7658 = vmatpush1.msra.mxu0 0.0
    %7659 = vmatprep.subr.mxu0 0.0
    %7660 = vmatpush1.msra.mxu0 0.0
    %7661 = vmatprep.subr.mxu0 0.0
    %7662 = vmatpush1.msra.mxu0 0.0
    %7663 = vmatprep.subr.mxu0 0.0
    %7664 = vmatpush1.msra.mxu0 0.0
    %7665 = vmatprep.subr.mxu0 0.0
    %7666 = vmatpush1.msra.mxu0 0.0
    %7667 = vmatprep.subr.mxu0 0.0
    %7668 = vmatpush1.msra.mxu0 0.0
    %7669 = vmatprep.subr.mxu0 0.0
    %7670 = vmatpush1.msra.mxu0 0.0
    %7671 = vmatprep.subr.mxu0 0.0
    %7672 = vmatpush1.msra.mxu0 0.0
    %7673 = vmatprep.subr.mxu0 0.0
    %7674 = vmatpush1.msra.mxu0 0.0
    %7675 = vmatprep.subr.mxu0 0.0
    %7676 = vmatpush1.msra.mxu0 0.0
    %7677 = vmatprep.subr.mxu0 0.0
    %7678 = vmatpush1.msra.mxu0 0.0
    %7679 = vmatprep.subr.mxu0 0.0
    %7680 = vmatpush1.msra.mxu0 0.0
    %7681 = vmatprep.subr.mxu0 0.0
    %7682 = vmatpush1.msra.mxu0 0.0
    %7683 = vmatprep.mubr.f32.mxu0 0.0
    %v7684 = vand.u32 %v7278, 4294901760
    %7685 = vmatmul.mubr.f32.gmra.mrb[0].mxu0 %v7684
    %v7686 = vpop.f32.mrb[0].mxu0
    %v7687 = vadd.f32 %v7604, %v7686
    %v7688 = vpop.f32.mrb[0].mxu0
    %7689 = vdwg.mxu0
    %7690 = vmatprep.subr.mxu0 0.0
    %v7691 = vand.u32 %v61, 4294901760
    %7692 = vmatpush1.msra.mxu0 %v7691
    %7693 = vmatprep.subr.mxu0 0.0
    %v7694 = vand.u32 %v62, 4294901760
    %7695 = vmatpush1.msra.mxu0 %v7694
    %7696 = vmatprep.subr.mxu0 0.0
    %v7697 = vand.u32 %v63, 4294901760
    %7698 = vmatpush1.msra.mxu0 %v7697
    %7699 = vmatprep.subr.mxu0 0.0
    %v7700 = vand.u32 %v64, 4294901760
    %7701 = vmatpush1.msra.mxu0 %v7700
    %7702 = vmatprep.subr.mxu0 0.0
    %7703 = vmatpush1.msra.mxu0 0.0
    %7704 = vmatprep.subr.mxu0 0.0
    %7705 = vmatpush1.msra.mxu0 0.0
    %7706 = vmatprep.subr.mxu0 0.0
    %7707 = vmatpush1.msra.mxu0 0.0
    %7708 = vmatprep.subr.mxu0 0.0
    %7709 = vmatpush1.msra.mxu0 0.0
    %7710 = vmatprep.subr.mxu0 0.0
    %7711 = vmatpush1.msra.mxu0 0.0
    %7712 = vmatprep.subr.mxu0 0.0
    %7713 = vmatpush1.msra.mxu0 0.0
    %7714 = vmatprep.subr.mxu0 0.0
    %7715 = vmatpush1.msra.mxu0 0.0
    %7716 = vmatprep.subr.mxu0 0.0
    %7717 = vmatpush1.msra.mxu0 0.0
    %7718 = vmatprep.subr.mxu0 0.0
    %7719 = vmatpush1.msra.mxu0 0.0
    %7720 = vmatprep.subr.mxu0 0.0
    %7721 = vmatpush1.msra.mxu0 0.0
    %7722 = vmatprep.subr.mxu0 0.0
    %7723 = vmatpush1.msra.mxu0 0.0
    %7724 = vmatprep.subr.mxu0 0.0
    %7725 = vmatpush1.msra.mxu0 0.0
    %7726 = vmatprep.subr.mxu0 0.0
    %7727 = vmatpush1.msra.mxu0 0.0
    %7728 = vmatprep.subr.mxu0 0.0
    %7729 = vmatpush1.msra.mxu0 0.0
    %7730 = vmatprep.subr.mxu0 0.0
    %7731 = vmatpush1.msra.mxu0 0.0
    %7732 = vmatprep.subr.mxu0 0.0
    %7733 = vmatpush1.msra.mxu0 0.0
    %7734 = vmatprep.subr.mxu0 0.0
    %7735 = vmatpush1.msra.mxu0 0.0
    %7736 = vmatprep.subr.mxu0 0.0
    %7737 = vmatpush1.msra.mxu0 0.0
    %7738 = vmatprep.subr.mxu0 0.0
    %7739 = vmatpush1.msra.mxu0 0.0
    %7740 = vmatprep.subr.mxu0 0.0
    %7741 = vmatpush1.msra.mxu0 0.0
    %7742 = vmatprep.subr.mxu0 0.0
    %7743 = vmatpush1.msra.mxu0 0.0
    %7744 = vmatprep.subr.mxu0 0.0
    %7745 = vmatpush1.msra.mxu0 0.0
    %7746 = vmatprep.subr.mxu0 0.0
    %7747 = vmatpush1.msra.mxu0 0.0
    %7748 = vmatprep.subr.mxu0 0.0
    %7749 = vmatpush1.msra.mxu0 0.0
    %7750 = vmatprep.subr.mxu0 0.0
    %7751 = vmatpush1.msra.mxu0 0.0
    %7752 = vmatprep.subr.mxu0 0.0
    %7753 = vmatpush1.msra.mxu0 0.0
    %7754 = vmatprep.subr.mxu0 0.0
    %7755 = vmatpush1.msra.mxu0 0.0
    %7756 = vmatprep.subr.mxu0 0.0
    %7757 = vmatpush1.msra.mxu0 0.0
    %7758 = vmatprep.mubr.f32.mxu0 0.0
    %v7759 = vand.u32 %v7278, 4294901760
    %7760 = vmatmul.mubr.f32.gmra.mrb[0].mxu0 %v7759
    %v7761 = vpop.f32.mrb[0].mxu0
    %v7762 = vadd.f32 %v7687, %v7761
    %v7763 = vpop.f32.mrb[0].mxu0
    %7764 = vdwg.mxu0
    %v7765 = vmul.f32 %v7762, 0.001953125
    %v7766 = vmul.f32 %v7276, %v7276
    %v7767 = vsub.f32 %v7765, %v7766
    %v7768 = vmax.f32 %v7767, 0.0
    %v7769 = vadd.f32 %v7768, 1e-12
    %v7770 = vrsqrt.pop %v7769
    %v7772 = vsel %vm1255, %v7276, 0
    %7774 = vmatprep.subr.mxu0 0.0
    %v7775 = vand.u32 %v1261, 4294901760
    %7776 = vmatpush1.msra.mxu0 %v7775
    %7777 = vmatprep.subr.mxu0 0.0
    %7778 = vmatpush1.msra.mxu0 0.0
    %7779 = vmatprep.subr.mxu0 0.0
    %7780 = vmatpush1.msra.mxu0 0.0
    %7781 = vmatprep.subr.mxu0 0.0
    %7782 = vmatpush1.msra.mxu0 0.0
    %7783 = vmatprep.subr.mxu0 0.0
    %7784 = vmatpush1.msra.mxu0 0.0
    %7785 = vmatprep.subr.mxu0 0.0
    %7786 = vmatpush1.msra.mxu0 0.0
    %7787 = vmatprep.subr.mxu0 0.0
    %7788 = vmatpush1.msra.mxu0 0.0
    %7789 = vmatprep.subr.mxu0 0.0
    %7790 = vmatpush1.msra.mxu0 0.0
    %7791 = vmatprep.subr.mxu0 0.0
    %7792 = vmatpush1.msra.mxu0 0.0
    %7793 = vmatprep.subr.mxu0 0.0
    %7794 = vmatpush1.msra.mxu0 0.0
    %7795 = vmatprep.subr.mxu0 0.0
    %7796 = vmatpush1.msra.mxu0 0.0
    %7797 = vmatprep.subr.mxu0 0.0
    %7798 = vmatpush1.msra.mxu0 0.0
    %7799 = vmatprep.subr.mxu0 0.0
    %7800 = vmatpush1.msra.mxu0 0.0
    %7801 = vmatprep.subr.mxu0 0.0
    %7802 = vmatpush1.msra.mxu0 0.0
    %7803 = vmatprep.subr.mxu0 0.0
    %7804 = vmatpush1.msra.mxu0 0.0
    %7805 = vmatprep.subr.mxu0 0.0
    %7806 = vmatpush1.msra.mxu0 0.0
    %7807 = vmatprep.subr.mxu0 0.0
    %7808 = vmatpush1.msra.mxu0 0.0
    %7809 = vmatprep.subr.mxu0 0.0
    %7810 = vmatpush1.msra.mxu0 0.0
    %7811 = vmatprep.subr.mxu0 0.0
    %7812 = vmatpush1.msra.mxu0 0.0
    %7813 = vmatprep.subr.mxu0 0.0
    %7814 = vmatpush1.msra.mxu0 0.0
    %7815 = vmatprep.subr.mxu0 0.0
    %7816 = vmatpush1.msra.mxu0 0.0
    %7817 = vmatprep.subr.mxu0 0.0
    %7818 = vmatpush1.msra.mxu0 0.0
    %7819 = vmatprep.subr.mxu0 0.0
    %7820 = vmatpush1.msra.mxu0 0.0
    %7821 = vmatprep.subr.mxu0 0.0
    %7822 = vmatpush1.msra.mxu0 0.0
    %7823 = vmatprep.subr.mxu0 0.0
    %7824 = vmatpush1.msra.mxu0 0.0
    %7825 = vmatprep.subr.mxu0 0.0
    %7826 = vmatpush1.msra.mxu0 0.0
    %7827 = vmatprep.subr.mxu0 0.0
    %7828 = vmatpush1.msra.mxu0 0.0
    %7829 = vmatprep.subr.mxu0 0.0
    %7830 = vmatpush1.msra.mxu0 0.0
    %7831 = vmatprep.subr.mxu0 0.0
    %7832 = vmatpush1.msra.mxu0 0.0
    %7833 = vmatprep.subr.mxu0 0.0
    %7834 = vmatpush1.msra.mxu0 0.0
    %7835 = vmatprep.subr.mxu0 0.0
    %7836 = vmatpush1.msra.mxu0 0.0
    %7837 = vmatprep.subr.mxu0 0.0
    %7838 = vmatpush1.msra.mxu0 0.0
    %7839 = vmatprep.mubr.f32.mxu0 0.0
    %v7840 = vand.u32 %v7772, 4294901760
    %v7841 = vsub.f32 %v7772, %v7840
    %v7842 = vand.u32 %v7841, 4294901760
    %v7843 = vsub.f32 %v7841, %v7842
    %v7844 = vand.u32 %v7843, 4294901760
    %7845 = vmatmul.mubr.f32.gmra.mrb[0].mxu0 %v7844
    %v7846 = vpop.f32.mrb[0].mxu0
    %v7847 = vadd.f32 0.0, %v7846
    %v7848 = vpop.f32.mrb[0].mxu0
    %7849 = vdwg.mxu0
    %7850 = vmatprep.subr.mxu0 0.0
    %v7851 = vand.u32 %v1261, 4294901760
    %v7852 = vsub.f32 %v1261, %v7851
    %v7853 = vand.u32 %v7852, 4294901760
    %v7854 = vsub.f32 %v7852, %v7853
    %v7855 = vand.u32 %v7854, 4294901760
    %7856 = vmatpush1.msra.mxu0 %v7855
    %7857 = vmatprep.subr.mxu0 0.0
    %7858 = vmatpush1.msra.mxu0 0.0
    %7859 = vmatprep.subr.mxu0 0.0
    %7860 = vmatpush1.msra.mxu0 0.0
    %7861 = vmatprep.subr.mxu0 0.0
    %7862 = vmatpush1.msra.mxu0 0.0
    %7863 = vmatprep.subr.mxu0 0.0
    %7864 = vmatpush1.msra.mxu0 0.0
    %7865 = vmatprep.subr.mxu0 0.0
    %7866 = vmatpush1.msra.mxu0 0.0
    %7867 = vmatprep.subr.mxu0 0.0
    %7868 = vmatpush1.msra.mxu0 0.0
    %7869 = vmatprep.subr.mxu0 0.0
    %7870 = vmatpush1.msra.mxu0 0.0
    %7871 = vmatprep.subr.mxu0 0.0
    %7872 = vmatpush1.msra.mxu0 0.0
    %7873 = vmatprep.subr.mxu0 0.0
    %7874 = vmatpush1.msra.mxu0 0.0
    %7875 = vmatprep.subr.mxu0 0.0
    %7876 = vmatpush1.msra.mxu0 0.0
    %7877 = vmatprep.subr.mxu0 0.0
    %7878 = vmatpush1.msra.mxu0 0.0
    %7879 = vmatprep.subr.mxu0 0.0
    %7880 = vmatpush1.msra.mxu0 0.0
    %7881 = vmatprep.subr.mxu0 0.0
    %7882 = vmatpush1.msra.mxu0 0.0
    %7883 = vmatprep.subr.mxu0 0.0
    %7884 = vmatpush1.msra.mxu0 0.0
    %7885 = vmatprep.subr.mxu0 0.0
    %7886 = vmatpush1.msra.mxu0 0.0
    %7887 = vmatprep.subr.mxu0 0.0
    %7888 = vmatpush1.msra.mxu0 0.0
    %7889 = vmatprep.subr.mxu0 0.0
    %7890 = vmatpush1.msra.mxu0 0.0
    %7891 = vmatprep.subr.mxu0 0.0
    %7892 = vmatpush1.msra.mxu0 0.0
    %7893 = vmatprep.subr.mxu0 0.0
    %7894 = vmatpush1.msra.mxu0 0.0
    %7895 = vmatprep.subr.mxu0 0.0
    %7896 = vmatpush1.msra.mxu0 0.0
    %7897 = vmatprep.subr.mxu0 0.0
    %7898 = vmatpush1.msra.mxu0 0.0
    %7899 = vmatprep.subr.mxu0 0.0
    %7900 = vmatpush1.msra.mxu0 0.0
    %7901 = vmatprep.subr.mxu0 0.0
    %7902 = vmatpush1.msra.mxu0 0.0
    %7903 = vmatprep.subr.mxu0 0.0
    %7904 = vmatpush1.msra.mxu0 0.0
    %7905 = vmatprep.subr.mxu0 0.0
    %7906 = vmatpush1.msra.mxu0 0.0
    %7907 = vmatprep.subr.mxu0 0.0
    %7908 = vmatpush1.msra.mxu0 0.0
    %7909 = vmatprep.subr.mxu0 0.0
    %7910 = vmatpush1.msra.mxu0 0.0
    %7911 = vmatprep.subr.mxu0 0.0
    %7912 = vmatpush1.msra.mxu0 0.0
    %7913 = vmatprep.subr.mxu0 0.0
    %7914 = vmatpush1.msra.mxu0 0.0
    %7915 = vmatprep.subr.mxu0 0.0
    %7916 = vmatpush1.msra.mxu0 0.0
    %7917 = vmatprep.subr.mxu0 0.0
    %7918 = vmatpush1.msra.mxu0 0.0
    %7919 = vmatprep.mubr.f32.mxu0 0.0
    %v7920 = vand.u32 %v7772, 4294901760
    %7921 = vmatmul.mubr.f32.gmra.mrb[0].mxu0 %v7920
    %v7922 = vpop.f32.mrb[0].mxu0
    %v7923 = vadd.f32 %v7847, %v7922
    %v7924 = vpop.f32.mrb[0].mxu0
    %7925 = vdwg.mxu0
    %7926 = vmatprep.subr.mxu0 0.0
    %v7927 = vand.u32 %v1261, 4294901760
    %v7928 = vsub.f32 %v1261, %v7927
    %7929 = vmatpush1.msra.mxu0 %v7928
    %7930 = vmatprep.subr.mxu0 0.0
    %7931 = vmatpush1.msra.mxu0 0.0
    %7932 = vmatprep.subr.mxu0 0.0
    %7933 = vmatpush1.msra.mxu0 0.0
    %7934 = vmatprep.subr.mxu0 0.0
    %7935 = vmatpush1.msra.mxu0 0.0
    %7936 = vmatprep.subr.mxu0 0.0
    %7937 = vmatpush1.msra.mxu0 0.0
    %7938 = vmatprep.subr.mxu0 0.0
    %7939 = vmatpush1.msra.mxu0 0.0
    %7940 = vmatprep.subr.mxu0 0.0
    %7941 = vmatpush1.msra.mxu0 0.0
    %7942 = vmatprep.subr.mxu0 0.0
    %7943 = vmatpush1.msra.mxu0 0.0
    %7944 = vmatprep.subr.mxu0 0.0
    %7945 = vmatpush1.msra.mxu0 0.0
    %7946 = vmatprep.subr.mxu0 0.0
    %7947 = vmatpush1.msra.mxu0 0.0
    %7948 = vmatprep.subr.mxu0 0.0
    %7949 = vmatpush1.msra.mxu0 0.0
    %7950 = vmatprep.subr.mxu0 0.0
    %7951 = vmatpush1.msra.mxu0 0.0
    %7952 = vmatprep.subr.mxu0 0.0
    %7953 = vmatpush1.msra.mxu0 0.0
    %7954 = vmatprep.subr.mxu0 0.0
    %7955 = vmatpush1.msra.mxu0 0.0
    %7956 = vmatprep.subr.mxu0 0.0
    %7957 = vmatpush1.msra.mxu0 0.0
    %7958 = vmatprep.subr.mxu0 0.0
    %7959 = vmatpush1.msra.mxu0 0.0
    %7960 = vmatprep.subr.mxu0 0.0
    %7961 = vmatpush1.msra.mxu0 0.0
    %7962 = vmatprep.subr.mxu0 0.0
    %7963 = vmatpush1.msra.mxu0 0.0
    %7964 = vmatprep.subr.mxu0 0.0
    %7965 = vmatpush1.msra.mxu0 0.0
    %7966 = vmatprep.subr.mxu0 0.0
    %7967 = vmatpush1.msra.mxu0 0.0
    %7968 = vmatprep.subr.mxu0 0.0
    %7969 = vmatpush1.msra.mxu0 0.0
    %7970 = vmatprep.subr.mxu0 0.0
    %7971 = vmatpush1.msra.mxu0 0.0
    %7972 = vmatprep.subr.mxu0 0.0
    %7973 = vmatpush1.msra.mxu0 0.0
    %7974 = vmatprep.subr.mxu0 0.0
    %7975 = vmatpush1.msra.mxu0 0.0
    %7976 = vmatprep.subr.mxu0 0.0
    %7977 = vmatpush1.msra.mxu0 0.0
    %7978 = vmatprep.subr.mxu0 0.0
    %7979 = vmatpush1.msra.mxu0 0.0
    %7980 = vmatprep.subr.mxu0 0.0
    %7981 = vmatpush1.msra.mxu0 0.0
    %7982 = vmatprep.subr.mxu0 0.0
    %7983 = vmatpush1.msra.mxu0 0.0
    %7984 = vmatprep.subr.mxu0 0.0
    %7985 = vmatpush1.msra.mxu0 0.0
    %7986 = vmatprep.subr.mxu0 0.0
    %7987 = vmatpush1.msra.mxu0 0.0
    %7988 = vmatprep.subr.mxu0 0.0
    %7989 = vmatpush1.msra.mxu0 0.0
    %7990 = vmatprep.subr.mxu0 0.0
    %7991 = vmatpush1.msra.mxu0 0.0
    %7992 = vmatprep.mubr.f32.mxu0 0.0
    %v7993 = vand.u32 %v7772, 4294901760
    %v7994 = vsub.f32 %v7772, %v7993
    %7995 = vmatmul.mubr.f32.gmra.mrb[0].mxu0 %v7994
    %v7996 = vpop.f32.mrb[0].mxu0
    %v7997 = vadd.f32 %v7923, %v7996
    %v7998 = vpop.f32.mrb[0].mxu0
    %7999 = vdwg.mxu0
    %8000 = vmatprep.subr.mxu0 0.0
    %v8001 = vand.u32 %v1261, 4294901760
    %8002 = vmatpush1.msra.mxu0 %v8001
    %8003 = vmatprep.subr.mxu0 0.0
    %8004 = vmatpush1.msra.mxu0 0.0
    %8005 = vmatprep.subr.mxu0 0.0
    %8006 = vmatpush1.msra.mxu0 0.0
    %8007 = vmatprep.subr.mxu0 0.0
    %8008 = vmatpush1.msra.mxu0 0.0
    %8009 = vmatprep.subr.mxu0 0.0
    %8010 = vmatpush1.msra.mxu0 0.0
    %8011 = vmatprep.subr.mxu0 0.0
    %8012 = vmatpush1.msra.mxu0 0.0
    %8013 = vmatprep.subr.mxu0 0.0
    %8014 = vmatpush1.msra.mxu0 0.0
    %8015 = vmatprep.subr.mxu0 0.0
    %8016 = vmatpush1.msra.mxu0 0.0
    %8017 = vmatprep.subr.mxu0 0.0
    %8018 = vmatpush1.msra.mxu0 0.0
    %8019 = vmatprep.subr.mxu0 0.0
    %8020 = vmatpush1.msra.mxu0 0.0
    %8021 = vmatprep.subr.mxu0 0.0
    %8022 = vmatpush1.msra.mxu0 0.0
    %8023 = vmatprep.subr.mxu0 0.0
    %8024 = vmatpush1.msra.mxu0 0.0
    %8025 = vmatprep.subr.mxu0 0.0
    %8026 = vmatpush1.msra.mxu0 0.0
    %8027 = vmatprep.subr.mxu0 0.0
    %8028 = vmatpush1.msra.mxu0 0.0
    %8029 = vmatprep.subr.mxu0 0.0
    %8030 = vmatpush1.msra.mxu0 0.0
    %8031 = vmatprep.subr.mxu0 0.0
    %8032 = vmatpush1.msra.mxu0 0.0
    %8033 = vmatprep.subr.mxu0 0.0
    %8034 = vmatpush1.msra.mxu0 0.0
    %8035 = vmatprep.subr.mxu0 0.0
    %8036 = vmatpush1.msra.mxu0 0.0
    %8037 = vmatprep.subr.mxu0 0.0
    %8038 = vmatpush1.msra.mxu0 0.0
    %8039 = vmatprep.subr.mxu0 0.0
    %8040 = vmatpush1.msra.mxu0 0.0
    %8041 = vmatprep.subr.mxu0 0.0
    %8042 = vmatpush1.msra.mxu0 0.0
    %8043 = vmatprep.subr.mxu0 0.0
    %8044 = vmatpush1.msra.mxu0 0.0
    %8045 = vmatprep.subr.mxu0 0.0
    %8046 = vmatpush1.msra.mxu0 0.0
    %8047 = vmatprep.subr.mxu0 0.0
    %8048 = vmatpush1.msra.mxu0 0.0
    %8049 = vmatprep.subr.mxu0 0.0
    %8050 = vmatpush1.msra.mxu0 0.0
    %8051 = vmatprep.subr.mxu0 0.0
    %8052 = vmatpush1.msra.mxu0 0.0
    %8053 = vmatprep.subr.mxu0 0.0
    %8054 = vmatpush1.msra.mxu0 0.0
    %8055 = vmatprep.subr.mxu0 0.0
    %8056 = vmatpush1.msra.mxu0 0.0
    %8057 = vmatprep.subr.mxu0 0.0
    %8058 = vmatpush1.msra.mxu0 0.0
    %8059 = vmatprep.subr.mxu0 0.0
    %8060 = vmatpush1.msra.mxu0 0.0
    %8061 = vmatprep.subr.mxu0 0.0
    %8062 = vmatpush1.msra.mxu0 0.0
    %8063 = vmatprep.subr.mxu0 0.0
    %8064 = vmatpush1.msra.mxu0 0.0
    %8065 = vmatprep.mubr.f32.mxu0 0.0
    %v8066 = vand.u32 %v7772, 4294901760
    %v8067 = vsub.f32 %v7772, %v8066
    %v8068 = vand.u32 %v8067, 4294901760
    %8069 = vmatmul.mubr.f32.gmra.mrb[0].mxu0 %v8068
    %v8070 = vpop.f32.mrb[0].mxu0
    %v8071 = vadd.f32 %v7997, %v8070
    %v8072 = vpop.f32.mrb[0].mxu0
    %8073 = vdwg.mxu0
    %8074 = vmatprep.subr.mxu0 0.0
    %v8075 = vand.u32 %v1261, 4294901760
    %v8076 = vsub.f32 %v1261, %v8075
    %v8077 = vand.u32 %v8076, 4294901760
    %8078 = vmatpush1.msra.mxu0 %v8077
    %8079 = vmatprep.subr.mxu0 0.0
    %8080 = vmatpush1.msra.mxu0 0.0
    %8081 = vmatprep.subr.mxu0 0.0
    %8082 = vmatpush1.msra.mxu0 0.0
    %8083 = vmatprep.subr.mxu0 0.0
    %8084 = vmatpush1.msra.mxu0 0.0
    %8085 = vmatprep.subr.mxu0 0.0
    %8086 = vmatpush1.msra.mxu0 0.0
    %8087 = vmatprep.subr.mxu0 0.0
    %8088 = vmatpush1.msra.mxu0 0.0
    %8089 = vmatprep.subr.mxu0 0.0
    %8090 = vmatpush1.msra.mxu0 0.0
    %8091 = vmatprep.subr.mxu0 0.0
    %8092 = vmatpush1.msra.mxu0 0.0
    %8093 = vmatprep.subr.mxu0 0.0
    %8094 = vmatpush1.msra.mxu0 0.0
    %8095 = vmatprep.subr.mxu0 0.0
    %8096 = vmatpush1.msra.mxu0 0.0
    %8097 = vmatprep.subr.mxu0 0.0
    %8098 = vmatpush1.msra.mxu0 0.0
    %8099 = vmatprep.subr.mxu0 0.0
    %8100 = vmatpush1.msra.mxu0 0.0
    %8101 = vmatprep.subr.mxu0 0.0
    %8102 = vmatpush1.msra.mxu0 0.0
    %8103 = vmatprep.subr.mxu0 0.0
    %8104 = vmatpush1.msra.mxu0 0.0
    %8105 = vmatprep.subr.mxu0 0.0
    %8106 = vmatpush1.msra.mxu0 0.0
    %8107 = vmatprep.subr.mxu0 0.0
    %8108 = vmatpush1.msra.mxu0 0.0
    %8109 = vmatprep.subr.mxu0 0.0
    %8110 = vmatpush1.msra.mxu0 0.0
    %8111 = vmatprep.subr.mxu0 0.0
    %8112 = vmatpush1.msra.mxu0 0.0
    %8113 = vmatprep.subr.mxu0 0.0
    %8114 = vmatpush1.msra.mxu0 0.0
    %8115 = vmatprep.subr.mxu0 0.0
    %8116 = vmatpush1.msra.mxu0 0.0
    %8117 = vmatprep.subr.mxu0 0.0
    %8118 = vmatpush1.msra.mxu0 0.0
    %8119 = vmatprep.subr.mxu0 0.0
    %8120 = vmatpush1.msra.mxu0 0.0
    %8121 = vmatprep.subr.mxu0 0.0
    %8122 = vmatpush1.msra.mxu0 0.0
    %8123 = vmatprep.subr.mxu0 0.0
    %8124 = vmatpush1.msra.mxu0 0.0
    %8125 = vmatprep.subr.mxu0 0.0
    %8126 = vmatpush1.msra.mxu0 0.0
    %8127 = vmatprep.subr.mxu0 0.0
    %8128 = vmatpush1.msra.mxu0 0.0
    %8129 = vmatprep.subr.mxu0 0.0
    %8130 = vmatpush1.msra.mxu0 0.0
    %8131 = vmatprep.subr.mxu0 0.0
    %8132 = vmatpush1.msra.mxu0 0.0
    %8133 = vmatprep.subr.mxu0 0.0
    %8134 = vmatpush1.msra.mxu0 0.0
    %8135 = vmatprep.subr.mxu0 0.0
    %8136 = vmatpush1.msra.mxu0 0.0
    %8137 = vmatprep.subr.mxu0 0.0
    %8138 = vmatpush1.msra.mxu0 0.0
    %8139 = vmatprep.subr.mxu0 0.0
    %8140 = vmatpush1.msra.mxu0 0.0
    %8141 = vmatprep.mubr.f32.mxu0 0.0
    %v8142 = vand.u32 %v7772, 4294901760
    %8143 = vmatmul.mubr.f32.gmra.mrb[0].mxu0 %v8142
    %v8144 = vpop.f32.mrb[0].mxu0
    %v8145 = vadd.f32 %v8071, %v8144
    %v8146 = vpop.f32.mrb[0].mxu0
    %8147 = vdwg.mxu0
    %8148 = vmatprep.subr.mxu0 0.0
    %v8149 = vand.u32 %v1261, 4294901760
    %8150 = vmatpush1.msra.mxu0 %v8149
    %8151 = vmatprep.subr.mxu0 0.0
    %8152 = vmatpush1.msra.mxu0 0.0
    %8153 = vmatprep.subr.mxu0 0.0
    %8154 = vmatpush1.msra.mxu0 0.0
    %8155 = vmatprep.subr.mxu0 0.0
    %8156 = vmatpush1.msra.mxu0 0.0
    %8157 = vmatprep.subr.mxu0 0.0
    %8158 = vmatpush1.msra.mxu0 0.0
    %8159 = vmatprep.subr.mxu0 0.0
    %8160 = vmatpush1.msra.mxu0 0.0
    %8161 = vmatprep.subr.mxu0 0.0
    %8162 = vmatpush1.msra.mxu0 0.0
    %8163 = vmatprep.subr.mxu0 0.0
    %8164 = vmatpush1.msra.mxu0 0.0
    %8165 = vmatprep.subr.mxu0 0.0
    %8166 = vmatpush1.msra.mxu0 0.0
    %8167 = vmatprep.subr.mxu0 0.0
    %8168 = vmatpush1.msra.mxu0 0.0
    %8169 = vmatprep.subr.mxu0 0.0
    %8170 = vmatpush1.msra.mxu0 0.0
    %8171 = vmatprep.subr.mxu0 0.0
    %8172 = vmatpush1.msra.mxu0 0.0
    %8173 = vmatprep.subr.mxu0 0.0
    %8174 = vmatpush1.msra.mxu0 0.0
    %8175 = vmatprep.subr.mxu0 0.0
    %8176 = vmatpush1.msra.mxu0 0.0
    %8177 = vmatprep.subr.mxu0 0.0
    %8178 = vmatpush1.msra.mxu0 0.0
    %8179 = vmatprep.subr.mxu0 0.0
    %8180 = vmatpush1.msra.mxu0 0.0
    %8181 = vmatprep.subr.mxu0 0.0
    %8182 = vmatpush1.msra.mxu0 0.0
    %8183 = vmatprep.subr.mxu0 0.0
    %8184 = vmatpush1.msra.mxu0 0.0
    %8185 = vmatprep.subr.mxu0 0.0
    %8186 = vmatpush1.msra.mxu0 0.0
    %8187 = vmatprep.subr.mxu0 0.0
    %8188 = vmatpush1.msra.mxu0 0.0
    %8189 = vmatprep.subr.mxu0 0.0
    %8190 = vmatpush1.msra.mxu0 0.0
    %8191 = vmatprep.subr.mxu0 0.0
    %8192 = vmatpush1.msra.mxu0 0.0
    %8193 = vmatprep.subr.mxu0 0.0
    %8194 = vmatpush1.msra.mxu0 0.0
    %8195 = vmatprep.subr.mxu0 0.0
    %8196 = vmatpush1.msra.mxu0 0.0
    %8197 = vmatprep.subr.mxu0 0.0
    %8198 = vmatpush1.msra.mxu0 0.0
    %8199 = vmatprep.subr.mxu0 0.0
    %8200 = vmatpush1.msra.mxu0 0.0
    %8201 = vmatprep.subr.mxu0 0.0
    %8202 = vmatpush1.msra.mxu0 0.0
    %8203 = vmatprep.subr.mxu0 0.0
    %8204 = vmatpush1.msra.mxu0 0.0
    %8205 = vmatprep.subr.mxu0 0.0
    %8206 = vmatpush1.msra.mxu0 0.0
    %8207 = vmatprep.subr.mxu0 0.0
    %8208 = vmatpush1.msra.mxu0 0.0
    %8209 = vmatprep.subr.mxu0 0.0
    %8210 = vmatpush1.msra.mxu0 0.0
    %8211 = vmatprep.subr.mxu0 0.0
    %8212 = vmatpush1.msra.mxu0 0.0
    %8213 = vmatprep.mubr.f32.mxu0 0.0
    %v8214 = vand.u32 %v7772, 4294901760
    %8215 = vmatmul.mubr.f32.gmra.mrb[0].mxu0 %v8214
    %v8216 = vpop.f32.mrb[0].mxu0
    %v8217 = vadd.f32 %v8145, %v8216
    %v8218 = vpop.f32.mrb[0].mxu0
    %8219 = vdwg.mxu0
    %v8221 = vsel %vm1255, %v7770, 0
    %8223 = vmatprep.subr.mxu0 0.0
    %v8224 = vand.u32 %v1261, 4294901760
    %8225 = vmatpush1.msra.mxu0 %v8224
    %8226 = vmatprep.subr.mxu0 0.0
    %8227 = vmatpush1.msra.mxu0 0.0
    %8228 = vmatprep.subr.mxu0 0.0
    %8229 = vmatpush1.msra.mxu0 0.0
    %8230 = vmatprep.subr.mxu0 0.0
    %8231 = vmatpush1.msra.mxu0 0.0
    %8232 = vmatprep.subr.mxu0 0.0
    %8233 = vmatpush1.msra.mxu0 0.0
    %8234 = vmatprep.subr.mxu0 0.0
    %8235 = vmatpush1.msra.mxu0 0.0
    %8236 = vmatprep.subr.mxu0 0.0
    %8237 = vmatpush1.msra.mxu0 0.0
    %8238 = vmatprep.subr.mxu0 0.0
    %8239 = vmatpush1.msra.mxu0 0.0
    %8240 = vmatprep.subr.mxu0 0.0
    %8241 = vmatpush1.msra.mxu0 0.0
    %8242 = vmatprep.subr.mxu0 0.0
    %8243 = vmatpush1.msra.mxu0 0.0
    %8244 = vmatprep.subr.mxu0 0.0
    %8245 = vmatpush1.msra.mxu0 0.0
    %8246 = vmatprep.subr.mxu0 0.0
    %8247 = vmatpush1.msra.mxu0 0.0
    %8248 = vmatprep.subr.mxu0 0.0
    %8249 = vmatpush1.msra.mxu0 0.0
    %8250 = vmatprep.subr.mxu0 0.0
    %8251 = vmatpush1.msra.mxu0 0.0
    %8252 = vmatprep.subr.mxu0 0.0
    %8253 = vmatpush1.msra.mxu0 0.0
    %8254 = vmatprep.subr.mxu0 0.0
    %8255 = vmatpush1.msra.mxu0 0.0
    %8256 = vmatprep.subr.mxu0 0.0
    %8257 = vmatpush1.msra.mxu0 0.0
    %8258 = vmatprep.subr.mxu0 0.0
    %8259 = vmatpush1.msra.mxu0 0.0
    %8260 = vmatprep.subr.mxu0 0.0
    %8261 = vmatpush1.msra.mxu0 0.0
    %8262 = vmatprep.subr.mxu0 0.0
    %8263 = vmatpush1.msra.mxu0 0.0
    %8264 = vmatprep.subr.mxu0 0.0
    %8265 = vmatpush1.msra.mxu0 0.0
    %8266 = vmatprep.subr.mxu0 0.0
    %8267 = vmatpush1.msra.mxu0 0.0
    %8268 = vmatprep.subr.mxu0 0.0
    %8269 = vmatpush1.msra.mxu0 0.0
    %8270 = vmatprep.subr.mxu0 0.0
    %8271 = vmatpush1.msra.mxu0 0.0
    %8272 = vmatprep.subr.mxu0 0.0
    %8273 = vmatpush1.msra.mxu0 0.0
    %8274 = vmatprep.subr.mxu0 0.0
    %8275 = vmatpush1.msra.mxu0 0.0
    %8276 = vmatprep.subr.mxu0 0.0
    %8277 = vmatpush1.msra.mxu0 0.0
    %8278 = vmatprep.subr.mxu0 0.0
    %8279 = vmatpush1.msra.mxu0 0.0
    %8280 = vmatprep.subr.mxu0 0.0
    %8281 = vmatpush1.msra.mxu0 0.0
    %8282 = vmatprep.subr.mxu0 0.0
    %8283 = vmatpush1.msra.mxu0 0.0
    %8284 = vmatprep.subr.mxu0 0.0
    %8285 = vmatpush1.msra.mxu0 0.0
    %8286 = vmatprep.subr.mxu0 0.0
    %8287 = vmatpush1.msra.mxu0 0.0
    %8288 = vmatprep.mubr.f32.mxu0 0.0
    %v8289 = vand.u32 %v8221, 4294901760
    %v8290 = vsub.f32 %v8221, %v8289
    %v8291 = vand.u32 %v8290, 4294901760
    %v8292 = vsub.f32 %v8290, %v8291
    %v8293 = vand.u32 %v8292, 4294901760
    %8294 = vmatmul.mubr.f32.gmra.mrb[0].mxu0 %v8293
    %v8295 = vpop.f32.mrb[0].mxu0
    %v8296 = vadd.f32 0.0, %v8295
    %v8297 = vpop.f32.mrb[0].mxu0
    %8298 = vdwg.mxu0
    %8299 = vmatprep.subr.mxu0 0.0
    %v8300 = vand.u32 %v1261, 4294901760
    %v8301 = vsub.f32 %v1261, %v8300
    %v8302 = vand.u32 %v8301, 4294901760
    %v8303 = vsub.f32 %v8301, %v8302
    %v8304 = vand.u32 %v8303, 4294901760
    %8305 = vmatpush1.msra.mxu0 %v8304
    %8306 = vmatprep.subr.mxu0 0.0
    %8307 = vmatpush1.msra.mxu0 0.0
    %8308 = vmatprep.subr.mxu0 0.0
    %8309 = vmatpush1.msra.mxu0 0.0
    %8310 = vmatprep.subr.mxu0 0.0
    %8311 = vmatpush1.msra.mxu0 0.0
    %8312 = vmatprep.subr.mxu0 0.0
    %8313 = vmatpush1.msra.mxu0 0.0
    %8314 = vmatprep.subr.mxu0 0.0
    %8315 = vmatpush1.msra.mxu0 0.0
    %8316 = vmatprep.subr.mxu0 0.0
    %8317 = vmatpush1.msra.mxu0 0.0
    %8318 = vmatprep.subr.mxu0 0.0
    %8319 = vmatpush1.msra.mxu0 0.0
    %8320 = vmatprep.subr.mxu0 0.0
    %8321 = vmatpush1.msra.mxu0 0.0
    %8322 = vmatprep.subr.mxu0 0.0
    %8323 = vmatpush1.msra.mxu0 0.0
    %8324 = vmatprep.subr.mxu0 0.0
    %8325 = vmatpush1.msra.mxu0 0.0
    %8326 = vmatprep.subr.mxu0 0.0
    %8327 = vmatpush1.msra.mxu0 0.0
    %8328 = vmatprep.subr.mxu0 0.0
    %8329 = vmatpush1.msra.mxu0 0.0
    %8330 = vmatprep.subr.mxu0 0.0
    %8331 = vmatpush1.msra.mxu0 0.0
    %8332 = vmatprep.subr.mxu0 0.0
    %8333 = vmatpush1.msra.mxu0 0.0
    %8334 = vmatprep.subr.mxu0 0.0
    %8335 = vmatpush1.msra.mxu0 0.0
    %8336 = vmatprep.subr.mxu0 0.0
    %8337 = vmatpush1.msra.mxu0 0.0
    %8338 = vmatprep.subr.mxu0 0.0
    %8339 = vmatpush1.msra.mxu0 0.0
    %8340 = vmatprep.subr.mxu0 0.0
    %8341 = vmatpush1.msra.mxu0 0.0
    %8342 = vmatprep.subr.mxu0 0.0
    %8343 = vmatpush1.msra.mxu0 0.0
    %8344 = vmatprep.subr.mxu0 0.0
    %8345 = vmatpush1.msra.mxu0 0.0
    %8346 = vmatprep.subr.mxu0 0.0
    %8347 = vmatpush1.msra.mxu0 0.0
    %8348 = vmatprep.subr.mxu0 0.0
    %8349 = vmatpush1.msra.mxu0 0.0
    %8350 = vmatprep.subr.mxu0 0.0
    %8351 = vmatpush1.msra.mxu0 0.0
    %8352 = vmatprep.subr.mxu0 0.0
    %8353 = vmatpush1.msra.mxu0 0.0
    %8354 = vmatprep.subr.mxu0 0.0
    %8355 = vmatpush1.msra.mxu0 0.0
    %8356 = vmatprep.subr.mxu0 0.0
    %8357 = vmatpush1.msra.mxu0 0.0
    %8358 = vmatprep.subr.mxu0 0.0
    %8359 = vmatpush1.msra.mxu0 0.0
    %8360 = vmatprep.subr.mxu0 0.0
    %8361 = vmatpush1.msra.mxu0 0.0
    %8362 = vmatprep.subr.mxu0 0.0
    %8363 = vmatpush1.msra.mxu0 0.0
    %8364 = vmatprep.subr.mxu0 0.0
    %8365 = vmatpush1.msra.mxu0 0.0
    %8366 = vmatprep.subr.mxu0 0.0
    %8367 = vmatpush1.msra.mxu0 0.0
    %8368 = vmatprep.mubr.f32.mxu0 0.0
    %v8369 = vand.u32 %v8221, 4294901760
    %8370 = vmatmul.mubr.f32.gmra.mrb[0].mxu0 %v8369
    %v8371 = vpop.f32.mrb[0].mxu0
    %v8372 = vadd.f32 %v8296, %v8371
    %v8373 = vpop.f32.mrb[0].mxu0
    %8374 = vdwg.mxu0
    %8375 = vmatprep.subr.mxu0 0.0
    %v8376 = vand.u32 %v1261, 4294901760
    %v8377 = vsub.f32 %v1261, %v8376
    %8378 = vmatpush1.msra.mxu0 %v8377
    %8379 = vmatprep.subr.mxu0 0.0
    %8380 = vmatpush1.msra.mxu0 0.0
    %8381 = vmatprep.subr.mxu0 0.0
    %8382 = vmatpush1.msra.mxu0 0.0
    %8383 = vmatprep.subr.mxu0 0.0
    %8384 = vmatpush1.msra.mxu0 0.0
    %8385 = vmatprep.subr.mxu0 0.0
    %8386 = vmatpush1.msra.mxu0 0.0
    %8387 = vmatprep.subr.mxu0 0.0
    %8388 = vmatpush1.msra.mxu0 0.0
    %8389 = vmatprep.subr.mxu0 0.0
    %8390 = vmatpush1.msra.mxu0 0.0
    %8391 = vmatprep.subr.mxu0 0.0
    %8392 = vmatpush1.msra.mxu0 0.0
    %8393 = vmatprep.subr.mxu0 0.0
    %8394 = vmatpush1.msra.mxu0 0.0
    %8395 = vmatprep.subr.mxu0 0.0
    %8396 = vmatpush1.msra.mxu0 0.0
    %8397 = vmatprep.subr.mxu0 0.0
    %8398 = vmatpush1.msra.mxu0 0.0
    %8399 = vmatprep.subr.mxu0 0.0
    %8400 = vmatpush1.msra.mxu0 0.0
    %8401 = vmatprep.subr.mxu0 0.0
    %8402 = vmatpush1.msra.mxu0 0.0
    %8403 = vmatprep.subr.mxu0 0.0
    %8404 = vmatpush1.msra.mxu0 0.0
    %8405 = vmatprep.subr.mxu0 0.0
    %8406 = vmatpush1.msra.mxu0 0.0
    %8407 = vmatprep.subr.mxu0 0.0
    %8408 = vmatpush1.msra.mxu0 0.0
    %8409 = vmatprep.subr.mxu0 0.0
    %8410 = vmatpush1.msra.mxu0 0.0
    %8411 = vmatprep.subr.mxu0 0.0
    %8412 = vmatpush1.msra.mxu0 0.0
    %8413 = vmatprep.subr.mxu0 0.0
    %8414 = vmatpush1.msra.mxu0 0.0
    %8415 = vmatprep.subr.mxu0 0.0
    %8416 = vmatpush1.msra.mxu0 0.0
    %8417 = vmatprep.subr.mxu0 0.0
    %8418 = vmatpush1.msra.mxu0 0.0
    %8419 = vmatprep.subr.mxu0 0.0
    %8420 = vmatpush1.msra.mxu0 0.0
    %8421 = vmatprep.subr.mxu0 0.0
    %8422 = vmatpush1.msra.mxu0 0.0
    %8423 = vmatprep.subr.mxu0 0.0
    %8424 = vmatpush1.msra.mxu0 0.0
    %8425 = vmatprep.subr.mxu0 0.0
    %8426 = vmatpush1.msra.mxu0 0.0
    %8427 = vmatprep.subr.mxu0 0.0
    %8428 = vmatpush1.msra.mxu0 0.0
    %8429 = vmatprep.subr.mxu0 0.0
    %8430 = vmatpush1.msra.mxu0 0.0
    %8431 = vmatprep.subr.mxu0 0.0
    %8432 = vmatpush1.msra.mxu0 0.0
    %8433 = vmatprep.subr.mxu0 0.0
    %8434 = vmatpush1.msra.mxu0 0.0
    %8435 = vmatprep.subr.mxu0 0.0
    %8436 = vmatpush1.msra.mxu0 0.0
    %8437 = vmatprep.subr.mxu0 0.0
    %8438 = vmatpush1.msra.mxu0 0.0
    %8439 = vmatprep.subr.mxu0 0.0
    %8440 = vmatpush1.msra.mxu0 0.0
    %8441 = vmatprep.mubr.f32.mxu0 0.0
    %v8442 = vand.u32 %v8221, 4294901760
    %v8443 = vsub.f32 %v8221, %v8442
    %8444 = vmatmul.mubr.f32.gmra.mrb[0].mxu0 %v8443
    %v8445 = vpop.f32.mrb[0].mxu0
    %v8446 = vadd.f32 %v8372, %v8445
    %v8447 = vpop.f32.mrb[0].mxu0
    %8448 = vdwg.mxu0
    %8449 = vmatprep.subr.mxu0 0.0
    %v8450 = vand.u32 %v1261, 4294901760
    %8451 = vmatpush1.msra.mxu0 %v8450
    %8452 = vmatprep.subr.mxu0 0.0
    %8453 = vmatpush1.msra.mxu0 0.0
    %8454 = vmatprep.subr.mxu0 0.0
    %8455 = vmatpush1.msra.mxu0 0.0
    %8456 = vmatprep.subr.mxu0 0.0
    %8457 = vmatpush1.msra.mxu0 0.0
    %8458 = vmatprep.subr.mxu0 0.0
    %8459 = vmatpush1.msra.mxu0 0.0
    %8460 = vmatprep.subr.mxu0 0.0
    %8461 = vmatpush1.msra.mxu0 0.0
    %8462 = vmatprep.subr.mxu0 0.0
    %8463 = vmatpush1.msra.mxu0 0.0
    %8464 = vmatprep.subr.mxu0 0.0
    %8465 = vmatpush1.msra.mxu0 0.0
    %8466 = vmatprep.subr.mxu0 0.0
    %8467 = vmatpush1.msra.mxu0 0.0
    %8468 = vmatprep.subr.mxu0 0.0
    %8469 = vmatpush1.msra.mxu0 0.0
    %8470 = vmatprep.subr.mxu0 0.0
    %8471 = vmatpush1.msra.mxu0 0.0
    %8472 = vmatprep.subr.mxu0 0.0
    %8473 = vmatpush1.msra.mxu0 0.0
    %8474 = vmatprep.subr.mxu0 0.0
    %8475 = vmatpush1.msra.mxu0 0.0
    %8476 = vmatprep.subr.mxu0 0.0
    %8477 = vmatpush1.msra.mxu0 0.0
    %8478 = vmatprep.subr.mxu0 0.0
    %8479 = vmatpush1.msra.mxu0 0.0
    %8480 = vmatprep.subr.mxu0 0.0
    %8481 = vmatpush1.msra.mxu0 0.0
    %8482 = vmatprep.subr.mxu0 0.0
    %8483 = vmatpush1.msra.mxu0 0.0
    %8484 = vmatprep.subr.mxu0 0.0
    %8485 = vmatpush1.msra.mxu0 0.0
    %8486 = vmatprep.subr.mxu0 0.0
    %8487 = vmatpush1.msra.mxu0 0.0
    %8488 = vmatprep.subr.mxu0 0.0
    %8489 = vmatpush1.msra.mxu0 0.0
    %8490 = vmatprep.subr.mxu0 0.0
    %8491 = vmatpush1.msra.mxu0 0.0
    %8492 = vmatprep.subr.mxu0 0.0
    %8493 = vmatpush1.msra.mxu0 0.0
    %8494 = vmatprep.subr.mxu0 0.0
    %8495 = vmatpush1.msra.mxu0 0.0
    %8496 = vmatprep.subr.mxu0 0.0
    %8497 = vmatpush1.msra.mxu0 0.0
    %8498 = vmatprep.subr.mxu0 0.0
    %8499 = vmatpush1.msra.mxu0 0.0
    %8500 = vmatprep.subr.mxu0 0.0
    %8501 = vmatpush1.msra.mxu0 0.0
    %8502 = vmatprep.subr.mxu0 0.0
    %8503 = vmatpush1.msra.mxu0 0.0
    %8504 = vmatprep.subr.mxu0 0.0
    %8505 = vmatpush1.msra.mxu0 0.0
    %8506 = vmatprep.subr.mxu0 0.0
    %8507 = vmatpush1.msra.mxu0 0.0
    %8508 = vmatprep.subr.mxu0 0.0
    %8509 = vmatpush1.msra.mxu0 0.0
    %8510 = vmatprep.subr.mxu0 0.0
    %8511 = vmatpush1.msra.mxu0 0.0
    %8512 = vmatprep.subr.mxu0 0.0
    %8513 = vmatpush1.msra.mxu0 0.0
    %8514 = vmatprep.mubr.f32.mxu0 0.0
    %v8515 = vand.u32 %v8221, 4294901760
    %v8516 = vsub.f32 %v8221, %v8515
    %v8517 = vand.u32 %v8516, 4294901760
    %8518 = vmatmul.mubr.f32.gmra.mrb[0].mxu0 %v8517
    %v8519 = vpop.f32.mrb[0].mxu0
    %v8520 = vadd.f32 %v8446, %v8519
    %v8521 = vpop.f32.mrb[0].mxu0
    %8522 = vdwg.mxu0
    %8523 = vmatprep.subr.mxu0 0.0
    %v8524 = vand.u32 %v1261, 4294901760
    %v8525 = vsub.f32 %v1261, %v8524
    %v8526 = vand.u32 %v8525, 4294901760
    %8527 = vmatpush1.msra.mxu0 %v8526
    %8528 = vmatprep.subr.mxu0 0.0
    %8529 = vmatpush1.msra.mxu0 0.0
    %8530 = vmatprep.subr.mxu0 0.0
    %8531 = vmatpush1.msra.mxu0 0.0
    %8532 = vmatprep.subr.mxu0 0.0
    %8533 = vmatpush1.msra.mxu0 0.0
    %8534 = vmatprep.subr.mxu0 0.0
    %8535 = vmatpush1.msra.mxu0 0.0
    %8536 = vmatprep.subr.mxu0 0.0
    %8537 = vmatpush1.msra.mxu0 0.0
    %8538 = vmatprep.subr.mxu0 0.0
    %8539 = vmatpush1.msra.mxu0 0.0
    %8540 = vmatprep.subr.mxu0 0.0
    %8541 = vmatpush1.msra.mxu0 0.0
    %8542 = vmatprep.subr.mxu0 0.0
    %8543 = vmatpush1.msra.mxu0 0.0
    %8544 = vmatprep.subr.mxu0 0.0
    %8545 = vmatpush1.msra.mxu0 0.0
    %8546 = vmatprep.subr.mxu0 0.0
    %8547 = vmatpush1.msra.mxu0 0.0
    %8548 = vmatprep.subr.mxu0 0.0
    %8549 = vmatpush1.msra.mxu0 0.0
    %8550 = vmatprep.subr.mxu0 0.0
    %8551 = vmatpush1.msra.mxu0 0.0
    %8552 = vmatprep.subr.mxu0 0.0
    %8553 = vmatpush1.msra.mxu0 0.0
    %8554 = vmatprep.subr.mxu0 0.0
    %8555 = vmatpush1.msra.mxu0 0.0
    %8556 = vmatprep.subr.mxu0 0.0
    %8557 = vmatpush1.msra.mxu0 0.0
    %8558 = vmatprep.subr.mxu0 0.0
    %8559 = vmatpush1.msra.mxu0 0.0
    %8560 = vmatprep.subr.mxu0 0.0
    %8561 = vmatpush1.msra.mxu0 0.0
    %8562 = vmatprep.subr.mxu0 0.0
    %8563 = vmatpush1.msra.mxu0 0.0
    %8564 = vmatprep.subr.mxu0 0.0
    %8565 = vmatpush1.msra.mxu0 0.0
    %8566 = vmatprep.subr.mxu0 0.0
    %8567 = vmatpush1.msra.mxu0 0.0
    %8568 = vmatprep.subr.mxu0 0.0
    %8569 = vmatpush1.msra.mxu0 0.0
    %8570 = vmatprep.subr.mxu0 0.0
    %8571 = vmatpush1.msra.mxu0 0.0
    %8572 = vmatprep.subr.mxu0 0.0
    %8573 = vmatpush1.msra.mxu0 0.0
    %8574 = vmatprep.subr.mxu0 0.0
    %8575 = vmatpush1.msra.mxu0 0.0
    %8576 = vmatprep.subr.mxu0 0.0
    %8577 = vmatpush1.msra.mxu0 0.0
    %8578 = vmatprep.subr.mxu0 0.0
    %8579 = vmatpush1.msra.mxu0 0.0
    %8580 = vmatprep.subr.mxu0 0.0
    %8581 = vmatpush1.msra.mxu0 0.0
    %8582 = vmatprep.subr.mxu0 0.0
    %8583 = vmatpush1.msra.mxu0 0.0
    %8584 = vmatprep.subr.mxu0 0.0
    %8585 = vmatpush1.msra.mxu0 0.0
    %8586 = vmatprep.subr.mxu0 0.0
    %8587 = vmatpush1.msra.mxu0 0.0
    %8588 = vmatprep.subr.mxu0 0.0
    %8589 = vmatpush1.msra.mxu0 0.0
    %8590 = vmatprep.mubr.f32.mxu0 0.0
    %v8591 = vand.u32 %v8221, 4294901760
    %8592 = vmatmul.mubr.f32.gmra.mrb[0].mxu0 %v8591
    %v8593 = vpop.f32.mrb[0].mxu0
    %v8594 = vadd.f32 %v8520, %v8593
    %v8595 = vpop.f32.mrb[0].mxu0
    %8596 = vdwg.mxu0
    %8597 = vmatprep.subr.mxu0 0.0
    %v8598 = vand.u32 %v1261, 4294901760
    %8599 = vmatpush1.msra.mxu0 %v8598
    %8600 = vmatprep.subr.mxu0 0.0
    %8601 = vmatpush1.msra.mxu0 0.0
    %8602 = vmatprep.subr.mxu0 0.0
    %8603 = vmatpush1.msra.mxu0 0.0
    %8604 = vmatprep.subr.mxu0 0.0
    %8605 = vmatpush1.msra.mxu0 0.0
    %8606 = vmatprep.subr.mxu0 0.0
    %8607 = vmatpush1.msra.mxu0 0.0
    %8608 = vmatprep.subr.mxu0 0.0
    %8609 = vmatpush1.msra.mxu0 0.0
    %8610 = vmatprep.subr.mxu0 0.0
    %8611 = vmatpush1.msra.mxu0 0.0
    %8612 = vmatprep.subr.mxu0 0.0
    %8613 = vmatpush1.msra.mxu0 0.0
    %8614 = vmatprep.subr.mxu0 0.0
    %8615 = vmatpush1.msra.mxu0 0.0
    %8616 = vmatprep.subr.mxu0 0.0
    %8617 = vmatpush1.msra.mxu0 0.0
    %8618 = vmatprep.subr.mxu0 0.0
    %8619 = vmatpush1.msra.mxu0 0.0
    %8620 = vmatprep.subr.mxu0 0.0
    %8621 = vmatpush1.msra.mxu0 0.0
    %8622 = vmatprep.subr.mxu0 0.0
    %8623 = vmatpush1.msra.mxu0 0.0
    %8624 = vmatprep.subr.mxu0 0.0
    %8625 = vmatpush1.msra.mxu0 0.0
    %8626 = vmatprep.subr.mxu0 0.0
    %8627 = vmatpush1.msra.mxu0 0.0
    %8628 = vmatprep.subr.mxu0 0.0
    %8629 = vmatpush1.msra.mxu0 0.0
    %8630 = vmatprep.subr.mxu0 0.0
    %8631 = vmatpush1.msra.mxu0 0.0
    %8632 = vmatprep.subr.mxu0 0.0
    %8633 = vmatpush1.msra.mxu0 0.0
    %8634 = vmatprep.subr.mxu0 0.0
    %8635 = vmatpush1.msra.mxu0 0.0
    %8636 = vmatprep.subr.mxu0 0.0
    %8637 = vmatpush1.msra.mxu0 0.0
    %8638 = vmatprep.subr.mxu0 0.0
    %8639 = vmatpush1.msra.mxu0 0.0
    %8640 = vmatprep.subr.mxu0 0.0
    %8641 = vmatpush1.msra.mxu0 0.0
    %8642 = vmatprep.subr.mxu0 0.0
    %8643 = vmatpush1.msra.mxu0 0.0
    %8644 = vmatprep.subr.mxu0 0.0
    %8645 = vmatpush1.msra.mxu0 0.0
    %8646 = vmatprep.subr.mxu0 0.0
    %8647 = vmatpush1.msra.mxu0 0.0
    %8648 = vmatprep.subr.mxu0 0.0
    %8649 = vmatpush1.msra.mxu0 0.0
    %8650 = vmatprep.subr.mxu0 0.0
    %8651 = vmatpush1.msra.mxu0 0.0
    %8652 = vmatprep.subr.mxu0 0.0
    %8653 = vmatpush1.msra.mxu0 0.0
    %8654 = vmatprep.subr.mxu0 0.0
    %8655 = vmatpush1.msra.mxu0 0.0
    %8656 = vmatprep.subr.mxu0 0.0
    %8657 = vmatpush1.msra.mxu0 0.0
    %8658 = vmatprep.subr.mxu0 0.0
    %8659 = vmatpush1.msra.mxu0 0.0
    %8660 = vmatprep.subr.mxu0 0.0
    %8661 = vmatpush1.msra.mxu0 0.0
    %8662 = vmatprep.mubr.f32.mxu0 0.0
    %v8663 = vand.u32 %v8221, 4294901760
    %8664 = vmatmul.mubr.f32.gmra.mrb[0].mxu0 %v8663
    %v8665 = vpop.f32.mrb[0].mxu0
    %v8666 = vadd.f32 %v8594, %v8665
    %v8667 = vpop.f32.mrb[0].mxu0
    %8668 = vdwg.mxu0
    %v8669 = vlaneseq
    %v8670 = vshrl.u32 %v8669, 7
    %v8671 = vsub.s32 0, %v8670
    %v8672 = vrot.slane %v8217, %v8671
    %v8673 = vsub.f32 %v6754, %v8672
    %v8674 = vsub.f32 %v6755, %v8672
    %v8675 = vsub.f32 %v6756, %v8672
    %v8676 = vsub.f32 %v6757, %v8672
    %v8677 = vlaneseq
    %v8678 = vshrl.u32 %v8677, 7
    %v8679 = vsub.s32 0, %v8678
    %v8680 = vrot.slane %v8666, %v8679
    %v8681 = vmul.f32 %v8673, %v8680
    %v8682 = vmul.f32 %v8674, %v8680
    %v8683 = vmul.f32 %v8675, %v8680
    %v8684 = vmul.f32 %v8676, %v8680
    %8685 = vset.pattern.permute.xlu0 48
    %8686 = vperm.xlu0 %8685, %v75
    %v8687 = vpop.permute.xlu0 %8686
    %8689 = vset.pattern.permute.xlu0 48
    %8690 = vperm.xlu0 %8689, %v76
    %v8691 = vpop.permute.xlu0 %8690
    %8693 = vset.pattern.permute.xlu0 48
    %8694 = vperm.xlu0 %8693, %v77
    %v8695 = vpop.permute.xlu0 %8694
    %8697 = vset.pattern.permute.xlu0 48
    %8698 = vperm.xlu0 %8697, %v78
    %v8699 = vpop.permute.xlu0 %8698
    %v8701 = vmul.f32 %v8687, %v8681
    %v8702 = vmul.f32 %v8691, %v8682
    %v8703 = vmul.f32 %v8695, %v8683
    %v8704 = vmul.f32 %v8699, %v8684
    %8705 = vset.pattern.permute.xlu0 49
    %8706 = vperm.xlu0 %8705, %v75
    %v8707 = vpop.permute.xlu0 %8706
    %8709 = vset.pattern.permute.xlu0 49
    %8710 = vperm.xlu0 %8709, %v76
    %v8711 = vpop.permute.xlu0 %8710
    %8713 = vset.pattern.permute.xlu0 49
    %8714 = vperm.xlu0 %8713, %v77
    %v8715 = vpop.permute.xlu0 %8714
    %8717 = vset.pattern.permute.xlu0 49
    %8718 = vperm.xlu0 %8717, %v78
    %v8719 = vpop.permute.xlu0 %8718
    %v8721 = vadd.f32 %v8701, %v8707
    %v8722 = vadd.f32 %v8702, %v8711
    %v8723 = vadd.f32 %v8703, %v8715
    %v8724 = vadd.f32 %v8704, %v8719
    %8726 = vset.pattern.permute.xlu0 32
    %8727 = vperm.xlu0 %8726, %v83
    %v8728 = vpop.permute.xlu0 %8727
    %8731 = vset.pattern.permute.xlu0 32
    %8732 = vperm.xlu0 %8731, %v84
    %v8733 = vpop.permute.xlu0 %8732
    %v8735 = vsel %vm241, %v83, 0
    %v8737 = vsel %vm241, %v84, 0
    %8739 = vmatprep.subr.mxu0 0.0
    %8740 = vmatpush1.msra.mxu0 %v8721
    %8741 = vmatprep.subr.mxu0 0.0
    %8742 = vmatpush1.msra.mxu0 %v8722
    %8743 = vmatprep.subr.mxu0 0.0
    %8744 = vmatpush1.msra.mxu0 %v8723
    %8745 = vmatprep.subr.mxu0 0.0
    %8746 = vmatpush1.msra.mxu0 %v8724
    %8747 = vmatprep.subr.mxu0 0.0
    %8748 = vmatpush1.msra.mxu0 0.0
    %8749 = vmatprep.subr.mxu0 0.0
    %8750 = vmatpush1.msra.mxu0 0.0
    %8751 = vmatprep.subr.mxu0 0.0
    %8752 = vmatpush1.msra.mxu0 0.0
    %8753 = vmatprep.subr.mxu0 0.0
    %8754 = vmatpush1.msra.mxu0 0.0
    %8755 = vmatprep.subr.mxu0 0.0
    %8756 = vmatpush1.msra.mxu0 0.0
    %8757 = vmatprep.subr.mxu0 0.0
    %8758 = vmatpush1.msra.mxu0 0.0
    %8759 = vmatprep.subr.mxu0 0.0
    %8760 = vmatpush1.msra.mxu0 0.0
    %8761 = vmatprep.subr.mxu0 0.0
    %8762 = vmatpush1.msra.mxu0 0.0
    %8763 = vmatprep.subr.mxu0 0.0
    %8764 = vmatpush1.msra.mxu0 0.0
    %8765 = vmatprep.subr.mxu0 0.0
    %8766 = vmatpush1.msra.mxu0 0.0
    %8767 = vmatprep.subr.mxu0 0.0
    %8768 = vmatpush1.msra.mxu0 0.0
    %8769 = vmatprep.subr.mxu0 0.0
    %8770 = vmatpush1.msra.mxu0 0.0
    %8771 = vmatprep.subr.mxu0 0.0
    %8772 = vmatpush1.msra.mxu0 0.0
    %8773 = vmatprep.subr.mxu0 0.0
    %8774 = vmatpush1.msra.mxu0 0.0
    %8775 = vmatprep.subr.mxu0 0.0
    %8776 = vmatpush1.msra.mxu0 0.0
    %8777 = vmatprep.subr.mxu0 0.0
    %8778 = vmatpush1.msra.mxu0 0.0
    %8779 = vmatprep.subr.mxu0 0.0
    %8780 = vmatpush1.msra.mxu0 0.0
    %8781 = vmatprep.subr.mxu0 0.0
    %8782 = vmatpush1.msra.mxu0 0.0
    %8783 = vmatprep.subr.mxu0 0.0
    %8784 = vmatpush1.msra.mxu0 0.0
    %8785 = vmatprep.subr.mxu0 0.0
    %8786 = vmatpush1.msra.mxu0 0.0
    %8787 = vmatprep.subr.mxu0 0.0
    %8788 = vmatpush1.msra.mxu0 0.0
    %8789 = vmatprep.subr.mxu0 0.0
    %8790 = vmatpush1.msra.mxu0 0.0
    %8791 = vmatprep.subr.mxu0 0.0
    %8792 = vmatpush1.msra.mxu0 0.0
    %8793 = vmatprep.subr.mxu0 0.0
    %8794 = vmatpush1.msra.mxu0 0.0
    %8795 = vmatprep.subr.mxu0 0.0
    %8796 = vmatpush1.msra.mxu0 0.0
    %8797 = vmatprep.subr.mxu0 0.0
    %8798 = vmatpush1.msra.mxu0 0.0
    %8799 = vmatprep.subr.mxu0 0.0
    %8800 = vmatpush1.msra.mxu0 0.0
    %8801 = vmatprep.subr.mxu0 0.0
    %8802 = vmatpush1.msra.mxu0 0.0
    %8803 = vmatprep.mubr.f32.mxu0 0.0
    %8804 = vmatmul.mubr.f32.gmra.mrb[0].mxu0 %v8735
    %v8805 = vpop.f32.mrb[0].mxu0
    %v8806 = vadd.f32 %v8728, %v8805
    %v8807 = vpop.f32.mrb[0].mxu0
    %8808 = vmatprep.mubr.f32.mxu0 0.0
    %8809 = vmatmul.mubr.f32.gmra.mrb[0].mxu0 %v8737
    %v8810 = vpop.f32.mrb[0].mxu0
    %v8811 = vadd.f32 %v8733, %v8810
    %v8812 = vpop.f32.mrb[0].mxu0
    %8813 = vdwg.mxu0
    %v8814 = vadd.f32 %v4468, %v8806
    %v8815 = vadd.f32 %v4473, %v8811
    %8816 = vst.msk [vmem:[#allocation3] sm:$0xff] %vm130, %v8814
    %8817 = vst.msk [vmem:[#allocation3 + $0x8] sm:$0xff] %vm130, %v8815
    %8820 = vrot.lane.b32.xlu0 %v8814, 1
    %v8821 = vpop.permute.xlu0 %8820
    %8822 = vrot.lane.b32.xlu0 %v8815, 1
    %v8823 = vpop.permute.xlu0 %8822
    %vm8826 = vcmask 138248
    %8827 = vst.msk [vmem:[#allocation3 + $0x10] sm:$0xff] %vm8826, %v8821
    %8828 = vst.msk [vmem:[#allocation3 + $0x18] sm:$0xff] %vm8826, %v8823
    %vm8829 = vcmask 269448
    %8830 = vst.msk [vmem:[#allocation3] sm:$0xff] %vm8829, %v8821
    %8831 = vst.msk [vmem:[#allocation3 + $0x8] sm:$0xff] %vm8829, %v8823
    %8832 = vrot.lane.b32.xlu0 %v8814, 2
    %v8833 = vpop.permute.xlu0 %8832
    %8834 = vrot.lane.b32.xlu0 %v8815, 2
    %v8835 = vpop.permute.xlu0 %8834
    %vm8838 = vcmask 277648
    %8839 = vst.msk [vmem:[#allocation3 + $0x10] sm:$0xff] %vm8838, %v8833
    %8840 = vst.msk [vmem:[#allocation3 + $0x18] sm:$0xff] %vm8838, %v8835
    %vm8841 = vcmp.gt.f32.partialorder %v71, 0.5
    %vm8842 = vcmp.gt.f32.partialorder %v72, 0.5
    %vm8843 = vcmp.gt.f32.partialorder %v73, 0.5
    %vm8844 = vcmp.gt.f32.partialorder %v74, 0.5
    %v8845 = vld [vmem:[#allocation3] sm:$0xff]
    %v8846 = vld [vmem:[#allocation3 + $0x8] sm:$0xff]
    %v8847 = vld [vmem:[#allocation3 + $0x10] sm:$0xff]
    %v8848 = vld [vmem:[#allocation3 + $0x18] sm:$0xff]
    %v8849 = vsel %vm8841, %v8845, 0.0
    %v8850 = vsel %vm8842, %v8846, 0.0
    %v8851 = vsel %vm8843, %v8847, 0.0
    %v8852 = vsel %vm8844, %v8848, 0.0
    %v8854 = vsel %vm241, %v85, 0
    %v8857 = vsel %vm241, %v86, 0
    %v8860 = vsel %vm241, %v87, 0
    %v8863 = vsel %vm241, %v88, 0
    %v8866 = vsel %vm241, %v89, 0
    %v8869 = vsel %vm241, %v90, 0
    %v8872 = vsel %vm241, %v91, 0
    %v8875 = vsel %vm241, %v92, 0
    %v8878 = vsel %vm241, %v93, 0
    %v8881 = vsel %vm241, %v94, 0
    %v8884 = vsel %vm241, %v95, 0
    %v8887 = vsel %vm241, %v96, 0
    %v8890 = vsel %vm241, %v97, 0
    %v8893 = vsel %vm241, %v98, 0
    %v8896 = vsel %vm241, %v99, 0
    %v8899 = vsel %vm241, %v100, 0
    %8901 = vmatprep.subr.mxu0 0.0
    %8902 = vmatpush1.msra.mxu0 %v8849
    %8903 = vmatprep.subr.mxu0 0.0
    %8904 = vmatpush1.msra.mxu0 %v8850
    %8905 = vmatprep.subr.mxu0 0.0
    %8906 = vmatpush1.msra.mxu0 %v8851
    %8907 = vmatprep.subr.mxu0 0.0
    %8908 = vmatpush1.msra.mxu0 %v8852
    %8909 = vmatprep.subr.mxu0 0.0
    %8910 = vmatpush1.msra.mxu0 0.0
    %8911 = vmatprep.subr.mxu0 0.0
    %8912 = vmatpush1.msra.mxu0 0.0
    %8913 = vmatprep.subr.mxu0 0.0
    %8914 = vmatpush1.msra.mxu0 0.0
    %8915 = vmatprep.subr.mxu0 0.0
    %8916 = vmatpush1.msra.mxu0 0.0
    %8917 = vmatprep.subr.mxu0 0.0
    %8918 = vmatpush1.msra.mxu0 0.0
    %8919 = vmatprep.subr.mxu0 0.0
    %8920 = vmatpush1.msra.mxu0 0.0
    %8921 = vmatprep.subr.mxu0 0.0
    %8922 = vmatpush1.msra.mxu0 0.0
    %8923 = vmatprep.subr.mxu0 0.0
    %8924 = vmatpush1.msra.mxu0 0.0
    %8925 = vmatprep.subr.mxu0 0.0
    %8926 = vmatpush1.msra.mxu0 0.0
    %8927 = vmatprep.subr.mxu0 0.0
    %8928 = vmatpush1.msra.mxu0 0.0
    %8929 = vmatprep.subr.mxu0 0.0
    %8930 = vmatpush1.msra.mxu0 0.0
    %8931 = vmatprep.subr.mxu0 0.0
    %8932 = vmatpush1.msra.mxu0 0.0
    %8933 = vmatprep.subr.mxu0 0.0
    %8934 = vmatpush1.msra.mxu0 0.0
    %8935 = vmatprep.subr.mxu0 0.0
    %8936 = vmatpush1.msra.mxu0 0.0
    %8937 = vmatprep.subr.mxu0 0.0
    %8938 = vmatpush1.msra.mxu0 0.0
    %8939 = vmatprep.subr.mxu0 0.0
    %8940 = vmatpush1.msra.mxu0 0.0
    %8941 = vmatprep.subr.mxu0 0.0
    %8942 = vmatpush1.msra.mxu0 0.0
    %8943 = vmatprep.subr.mxu0 0.0
    %8944 = vmatpush1.msra.mxu0 0.0
    %8945 = vmatprep.subr.mxu0 0.0
    %8946 = vmatpush1.msra.mxu0 0.0
    %8947 = vmatprep.subr.mxu0 0.0
    %8948 = vmatpush1.msra.mxu0 0.0
    %8949 = vmatprep.subr.mxu0 0.0
    %8950 = vmatpush1.msra.mxu0 0.0
    %8951 = vmatprep.subr.mxu0 0.0
    %8952 = vmatpush1.msra.mxu0 0.0
    %8953 = vmatprep.subr.mxu0 0.0
    %8954 = vmatpush1.msra.mxu0 0.0
    %8955 = vmatprep.subr.mxu0 0.0
    %8956 = vmatpush1.msra.mxu0 0.0
    %8957 = vmatprep.subr.mxu0 0.0
    %8958 = vmatpush1.msra.mxu0 0.0
    %8959 = vmatprep.subr.mxu0 0.0
    %8960 = vmatpush1.msra.mxu0 0.0
    %8961 = vmatprep.subr.mxu0 0.0
    %8962 = vmatpush1.msra.mxu0 0.0
    %8963 = vmatprep.subr.mxu0 0.0
    %8964 = vmatpush1.msra.mxu0 0.0
    %8965 = vmatprep.mubr.f32.mxu0 0.0
    %8966 = vmatmul.mubr.f32.gmra.mrb[0].mxu0 %v8854
    %v8967 = vpop.f32.mrb[0].mxu0
    %v8968 = vadd.f32 0.0, %v8967
    %v8969 = vpop.f32.mrb[0].mxu0
    %8970 = vmatprep.mubr.f32.mxu0 0.0
    %8971 = vmatmul.mubr.f32.gmra.mrb[0].mxu0 %v8857
    %v8972 = vpop.f32.mrb[0].mxu0
    %v8973 = vadd.f32 0.0, %v8972
    %v8974 = vpop.f32.mrb[0].mxu0
    %8975 = vmatprep.mubr.f32.mxu0 0.0
    %8976 = vmatmul.mubr.f32.gmra.mrb[0].mxu0 %v8860
    %v8977 = vpop.f32.mrb[0].mxu0
    %v8978 = vadd.f32 0.0, %v8977
    %v8979 = vpop.f32.mrb[0].mxu0
    %8980 = vmatprep.mubr.f32.mxu0 0.0
    %8981 = vmatmul.mubr.f32.gmra.mrb[0].mxu0 %v8863
    %v8982 = vpop.f32.mrb[0].mxu0
    %v8983 = vadd.f32 0.0, %v8982
    %v8984 = vpop.f32.mrb[0].mxu0
    %8985 = vmatprep.mubr.f32.mxu0 0.0
    %8986 = vmatmul.mubr.f32.gmra.mrb[0].mxu0 %v8866
    %v8987 = vpop.f32.mrb[0].mxu0
    %v8988 = vadd.f32 0.0, %v8987
    %v8989 = vpop.f32.mrb[0].mxu0
    %8990 = vmatprep.mubr.f32.mxu0 0.0
    %8991 = vmatmul.mubr.f32.gmra.mrb[0].mxu0 %v8869
    %v8992 = vpop.f32.mrb[0].mxu0
    %v8993 = vadd.f32 0.0, %v8992
    %v8994 = vpop.f32.mrb[0].mxu0
    %8995 = vmatprep.mubr.f32.mxu0 0.0
    %8996 = vmatmul.mubr.f32.gmra.mrb[0].mxu0 %v8872
    %v8997 = vpop.f32.mrb[0].mxu0
    %v8998 = vadd.f32 0.0, %v8997
    %v8999 = vpop.f32.mrb[0].mxu0
    %9000 = vmatprep.mubr.f32.mxu0 0.0
    %9001 = vmatmul.mubr.f32.gmra.mrb[0].mxu0 %v8875
    %v9002 = vpop.f32.mrb[0].mxu0
    %v9003 = vadd.f32 0.0, %v9002
    %v9004 = vpop.f32.mrb[0].mxu0
    %9005 = vmatprep.mubr.f32.mxu0 0.0
    %9006 = vmatmul.mubr.f32.gmra.mrb[0].mxu0 %v8878
    %v9007 = vpop.f32.mrb[0].mxu0
    %v9008 = vadd.f32 0.0, %v9007
    %v9009 = vpop.f32.mrb[0].mxu0
    %9010 = vmatprep.mubr.f32.mxu0 0.0
    %9011 = vmatmul.mubr.f32.gmra.mrb[0].mxu0 %v8881
    %v9012 = vpop.f32.mrb[0].mxu0
    %v9013 = vadd.f32 0.0, %v9012
    %v9014 = vpop.f32.mrb[0].mxu0
    %9015 = vmatprep.mubr.f32.mxu0 0.0
    %9016 = vmatmul.mubr.f32.gmra.mrb[0].mxu0 %v8884
    %v9017 = vpop.f32.mrb[0].mxu0
    %v9018 = vadd.f32 0.0, %v9017
    %v9019 = vpop.f32.mrb[0].mxu0
    %9020 = vmatprep.mubr.f32.mxu0 0.0
    %9021 = vmatmul.mubr.f32.gmra.mrb[0].mxu0 %v8887
    %v9022 = vpop.f32.mrb[0].mxu0
    %v9023 = vadd.f32 0.0, %v9022
    %v9024 = vpop.f32.mrb[0].mxu0
    %9025 = vmatprep.mubr.f32.mxu0 0.0
    %9026 = vmatmul.mubr.f32.gmra.mrb[0].mxu0 %v8890
    %v9027 = vpop.f32.mrb[0].mxu0
    %v9028 = vadd.f32 0.0, %v9027
    %v9029 = vpop.f32.mrb[0].mxu0
    %9030 = vmatprep.mubr.f32.mxu0 0.0
    %9031 = vmatmul.mubr.f32.gmra.mrb[0].mxu0 %v8893
    %v9032 = vpop.f32.mrb[0].mxu0
    %v9033 = vadd.f32 0.0, %v9032
    %v9034 = vpop.f32.mrb[0].mxu0
    %9035 = vmatprep.mubr.f32.mxu0 0.0
    %9036 = vmatmul.mubr.f32.gmra.mrb[0].mxu0 %v8896
    %v9037 = vpop.f32.mrb[0].mxu0
    %v9038 = vadd.f32 0.0, %v9037
    %v9039 = vpop.f32.mrb[0].mxu0
    %9040 = vmatprep.mubr.f32.mxu0 0.0
    %9041 = vmatmul.mubr.f32.gmra.mrb[0].mxu0 %v8899
    %v9042 = vpop.f32.mrb[0].mxu0
    %v9043 = vadd.f32 0.0, %v9042
    %v9044 = vpop.f32.mrb[0].mxu0
    %9045 = vdwg.mxu0
    %vm9046 = vcmask 277504
    %v9047 = vsel %vm9046, %v8968, 0.0
    %v9048 = vsel %vm9046, %v8973, 0.0
    %v9049 = vadd.f32 %v9047, %v9048
    %v9050 = vsel %vm9046, %v8978, 0.0
    %v9051 = vadd.f32 %v9049, %v9050
    %v9052 = vsel %vm9046, %v8983, 0.0
    %v9053 = vadd.f32 %v9051, %v9052
    %v9054 = vsel %vm9046, %v8988, 0.0
    %v9055 = vadd.f32 %v9053, %v9054
    %v9056 = vsel %vm9046, %v8993, 0.0
    %v9057 = vadd.f32 %v9055, %v9056
    %v9058 = vsel %vm9046, %v8998, 0.0
    %v9059 = vadd.f32 %v9057, %v9058
    %v9060 = vsel %vm9046, %v9003, 0.0
    %v9061 = vadd.f32 %v9059, %v9060
    %v9062 = vsel %vm9046, %v9008, 0.0
    %v9063 = vadd.f32 %v9061, %v9062
    %v9064 = vsel %vm9046, %v9013, 0.0
    %v9065 = vadd.f32 %v9063, %v9064
    %v9066 = vsel %vm9046, %v9018, 0.0
    %v9067 = vadd.f32 %v9065, %v9066
    %v9068 = vsel %vm9046, %v9023, 0.0
    %v9069 = vadd.f32 %v9067, %v9068
    %v9070 = vsel %vm9046, %v9028, 0.0
    %v9071 = vadd.f32 %v9069, %v9070
    %v9072 = vsel %vm9046, %v9033, 0.0
    %v9073 = vadd.f32 %v9071, %v9072
    %v9074 = vsel %vm9046, %v9038, 0.0
    %v9075 = vadd.f32 %v9073, %v9074
    %v9076 = vsel %vm9046, %v9043, 0.0
    %v9077 = vadd.f32 %v9075, %v9076
    %v9078 = vrot.slane %v9077, 4
    %v9079 = vadd.f32 %v9077, %v9078
    %v9080 = vrot.slane %v9079, 2
    %v9081 = vadd.f32 %v9079, %v9080
    %v9082 = vrot.slane %v9081, 1
    %v9083 = vadd.f32 %v9081, %v9082
    %v9084 = vmul.f32 %v8968, %v8968
    %v9085 = vmul.f32 %v8973, %v8973
    %v9086 = vmul.f32 %v8978, %v8978
    %v9087 = vmul.f32 %v8983, %v8983
    %v9088 = vmul.f32 %v8988, %v8988
    %v9089 = vmul.f32 %v8993, %v8993
    %v9090 = vmul.f32 %v8998, %v8998
    %v9091 = vmul.f32 %v9003, %v9003
    %v9092 = vmul.f32 %v9008, %v9008
    %v9093 = vmul.f32 %v9013, %v9013
    %v9094 = vmul.f32 %v9018, %v9018
    %v9095 = vmul.f32 %v9023, %v9023
    %v9096 = vmul.f32 %v9028, %v9028
    %v9097 = vmul.f32 %v9033, %v9033
    %v9098 = vmul.f32 %v9038, %v9038
    %v9099 = vmul.f32 %v9043, %v9043
    %v9100 = vsel %vm9046, %v9084, 0.0
    %v9101 = vsel %vm9046, %v9085, 0.0
    %v9102 = vadd.f32 %v9100, %v9101
    %v9103 = vsel %vm9046, %v9086, 0.0
    %v9104 = vadd.f32 %v9102, %v9103
    %v9105 = vsel %vm9046, %v9087, 0.0
    %v9106 = vadd.f32 %v9104, %v9105
    %v9107 = vsel %vm9046, %v9088, 0.0
    %v9108 = vadd.f32 %v9106, %v9107
    %v9109 = vsel %vm9046, %v9089, 0.0
    %v9110 = vadd.f32 %v9108, %v9109
    %v9111 = vsel %vm9046, %v9090, 0.0
    %v9112 = vadd.f32 %v9110, %v9111
    %v9113 = vsel %vm9046, %v9091, 0.0
    %v9114 = vadd.f32 %v9112, %v9113
    %v9115 = vsel %vm9046, %v9092, 0.0
    %v9116 = vadd.f32 %v9114, %v9115
    %v9117 = vsel %vm9046, %v9093, 0.0
    %v9118 = vadd.f32 %v9116, %v9117
    %v9119 = vsel %vm9046, %v9094, 0.0
    %v9120 = vadd.f32 %v9118, %v9119
    %v9121 = vsel %vm9046, %v9095, 0.0
    %v9122 = vadd.f32 %v9120, %v9121
    %v9123 = vsel %vm9046, %v9096, 0.0
    %v9124 = vadd.f32 %v9122, %v9123
    %v9125 = vsel %vm9046, %v9097, 0.0
    %v9126 = vadd.f32 %v9124, %v9125
    %v9127 = vsel %vm9046, %v9098, 0.0
    %v9128 = vadd.f32 %v9126, %v9127
    %v9129 = vsel %vm9046, %v9099, 0.0
    %v9130 = vadd.f32 %v9128, %v9129
    %v9131 = vrot.slane %v9130, 4
    %v9132 = vadd.f32 %v9130, %v9131
    %v9133 = vrot.slane %v9132, 2
    %v9134 = vadd.f32 %v9132, %v9133
    %v9135 = vrot.slane %v9134, 1
    %v9136 = vadd.f32 %v9134, %v9135
    %v9138 = vsel %vm9046, %v9083, 0
    %v9141 = vsel %vm1259, %v70, 0
    %9143 = vmatprep.subr.mxu0 0.0
    %v9144 = vand.u32 %v66, 4294901760
    %9145 = vmatpush1.msra.mxu0 %v9144
    %9146 = vmatprep.subr.mxu0 0.0
    %v9147 = vand.u32 %v67, 4294901760
    %9148 = vmatpush1.msra.mxu0 %v9147
    %9149 = vmatprep.subr.mxu0 0.0
    %v9150 = vand.u32 %v68, 4294901760
    %9151 = vmatpush1.msra.mxu0 %v9150
    %9152 = vmatprep.subr.mxu0 0.0
    %v9153 = vand.u32 %v69, 4294901760
    %9154 = vmatpush1.msra.mxu0 %v9153
    %9155 = vmatprep.subr.mxu0 0.0
    %v9156 = vand.u32 %v9141, 4294901760
    %9157 = vmatpush1.msra.mxu0 %v9156
    %9158 = vmatprep.subr.mxu0 0.0
    %9159 = vmatpush1.msra.mxu0 0.0
    %9160 = vmatprep.subr.mxu0 0.0
    %9161 = vmatpush1.msra.mxu0 0.0
    %9162 = vmatprep.subr.mxu0 0.0
    %9163 = vmatpush1.msra.mxu0 0.0
    %9164 = vmatprep.subr.mxu0 0.0
    %9165 = vmatpush1.msra.mxu0 0.0
    %9166 = vmatprep.subr.mxu0 0.0
    %9167 = vmatpush1.msra.mxu0 0.0
    %9168 = vmatprep.subr.mxu0 0.0
    %9169 = vmatpush1.msra.mxu0 0.0
    %9170 = vmatprep.subr.mxu0 0.0
    %9171 = vmatpush1.msra.mxu0 0.0
    %9172 = vmatprep.subr.mxu0 0.0
    %9173 = vmatpush1.msra.mxu0 0.0
    %9174 = vmatprep.subr.mxu0 0.0
    %9175 = vmatpush1.msra.mxu0 0.0
    %9176 = vmatprep.subr.mxu0 0.0
    %9177 = vmatpush1.msra.mxu0 0.0
    %9178 = vmatprep.subr.mxu0 0.0
    %9179 = vmatpush1.msra.mxu0 0.0
    %9180 = vmatprep.subr.mxu0 0.0
    %9181 = vmatpush1.msra.mxu0 0.0
    %9182 = vmatprep.subr.mxu0 0.0
    %9183 = vmatpush1.msra.mxu0 0.0
    %9184 = vmatprep.subr.mxu0 0.0
    %9185 = vmatpush1.msra.mxu0 0.0
    %9186 = vmatprep.subr.mxu0 0.0
    %9187 = vmatpush1.msra.mxu0 0.0
    %9188 = vmatprep.subr.mxu0 0.0
    %9189 = vmatpush1.msra.mxu0 0.0
    %9190 = vmatprep.subr.mxu0 0.0
    %9191 = vmatpush1.msra.mxu0 0.0
    %9192 = vmatprep.subr.mxu0 0.0
    %9193 = vmatpush1.msra.mxu0 0.0
    %9194 = vmatprep.subr.mxu0 0.0
    %9195 = vmatpush1.msra.mxu0 0.0
    %9196 = vmatprep.subr.mxu0 0.0
    %9197 = vmatpush1.msra.mxu0 0.0
    %9198 = vmatprep.subr.mxu0 0.0
    %9199 = vmatpush1.msra.mxu0 0.0
    %9200 = vmatprep.subr.mxu0 0.0
    %9201 = vmatpush1.msra.mxu0 0.0
    %9202 = vmatprep.subr.mxu0 0.0
    %9203 = vmatpush1.msra.mxu0 0.0
    %9204 = vmatprep.subr.mxu0 0.0
    %9205 = vmatpush1.msra.mxu0 0.0
    %9206 = vmatprep.subr.mxu0 0.0
    %9207 = vmatpush1.msra.mxu0 0.0
    %9208 = vmatprep.subr.mxu0 0.0
    %9209 = vmatpush1.msra.mxu0 0.0
    %9210 = vmatprep.subr.mxu0 0.0
    %9211 = vmatpush1.msra.mxu0 0.0
    %9212 = vmatprep.mubr.f32.mxu0 0.0
    %v9213 = vand.u32 %v9138, 4294901760
    %v9214 = vsub.f32 %v9138, %v9213
    %v9215 = vand.u32 %v9214, 4294901760
    %v9216 = vsub.f32 %v9214, %v9215
    %v9217 = vand.u32 %v9216, 4294901760
    %9218 = vmatmul.mubr.f32.gmra.mrb[0].mxu0 %v9217
    %v9219 = vpop.f32.mrb[0].mxu0
    %v9220 = vadd.f32 0.0, %v9219
    %v9221 = vpop.f32.mrb[0].mxu0
    %9222 = vdwg.mxu0
    %9223 = vmatprep.subr.mxu0 0.0
    %v9224 = vand.u32 %v66, 4294901760
    %v9225 = vsub.f32 %v66, %v9224
    %v9226 = vand.u32 %v9225, 4294901760
    %v9227 = vsub.f32 %v9225, %v9226
    %v9228 = vand.u32 %v9227, 4294901760
    %9229 = vmatpush1.msra.mxu0 %v9228
    %9230 = vmatprep.subr.mxu0 0.0
    %v9231 = vand.u32 %v67, 4294901760
    %v9232 = vsub.f32 %v67, %v9231
    %v9233 = vand.u32 %v9232, 4294901760
    %v9234 = vsub.f32 %v9232, %v9233
    %v9235 = vand.u32 %v9234, 4294901760
    %9236 = vmatpush1.msra.mxu0 %v9235
    %9237 = vmatprep.subr.mxu0 0.0
    %v9238 = vand.u32 %v68, 4294901760
    %v9239 = vsub.f32 %v68, %v9238
    %v9240 = vand.u32 %v9239, 4294901760
    %v9241 = vsub.f32 %v9239, %v9240
    %v9242 = vand.u32 %v9241, 4294901760
    %9243 = vmatpush1.msra.mxu0 %v9242
    %9244 = vmatprep.subr.mxu0 0.0
    %v9245 = vand.u32 %v69, 4294901760
    %v9246 = vsub.f32 %v69, %v9245
    %v9247 = vand.u32 %v9246, 4294901760
    %v9248 = vsub.f32 %v9246, %v9247
    %v9249 = vand.u32 %v9248, 4294901760
    %9250 = vmatpush1.msra.mxu0 %v9249
    %9251 = vmatprep.subr.mxu0 0.0
    %v9252 = vand.u32 %v9141, 4294901760
    %v9253 = vsub.f32 %v9141, %v9252
    %v9254 = vand.u32 %v9253, 4294901760
    %v9255 = vsub.f32 %v9253, %v9254
    %v9256 = vand.u32 %v9255, 4294901760
    %9257 = vmatpush1.msra.mxu0 %v9256
    %9258 = vmatprep.subr.mxu0 0.0
    %9259 = vmatpush1.msra.mxu0 0.0
    %9260 = vmatprep.subr.mxu0 0.0
    %9261 = vmatpush1.msra.mxu0 0.0
    %9262 = vmatprep.subr.mxu0 0.0
    %9263 = vmatpush1.msra.mxu0 0.0
    %9264 = vmatprep.subr.mxu0 0.0
    %9265 = vmatpush1.msra.mxu0 0.0
    %9266 = vmatprep.subr.mxu0 0.0
    %9267 = vmatpush1.msra.mxu0 0.0
    %9268 = vmatprep.subr.mxu0 0.0
    %9269 = vmatpush1.msra.mxu0 0.0
    %9270 = vmatprep.subr.mxu0 0.0
    %9271 = vmatpush1.msra.mxu0 0.0
    %9272 = vmatprep.subr.mxu0 0.0
    %9273 = vmatpush1.msra.mxu0 0.0
    %9274 = vmatprep.subr.mxu0 0.0
    %9275 = vmatpush1.msra.mxu0 0.0
    %9276 = vmatprep.subr.mxu0 0.0
    %9277 = vmatpush1.msra.mxu0 0.0
    %9278 = vmatprep.subr.mxu0 0.0
    %9279 = vmatpush1.msra.mxu0 0.0
    %9280 = vmatprep.subr.mxu0 0.0
    %9281 = vmatpush1.msra.mxu0 0.0
    %9282 = vmatprep.subr.mxu0 0.0
    %9283 = vmatpush1.msra.mxu0 0.0
    %9284 = vmatprep.subr.mxu0 0.0
    %9285 = vmatpush1.msra.mxu0 0.0
    %9286 = vmatprep.subr.mxu0 0.0
    %9287 = vmatpush1.msra.mxu0 0.0
    %9288 = vmatprep.subr.mxu0 0.0
    %9289 = vmatpush1.msra.mxu0 0.0
    %9290 = vmatprep.subr.mxu0 0.0
    %9291 = vmatpush1.msra.mxu0 0.0
    %9292 = vmatprep.subr.mxu0 0.0
    %9293 = vmatpush1.msra.mxu0 0.0
    %9294 = vmatprep.subr.mxu0 0.0
    %9295 = vmatpush1.msra.mxu0 0.0
    %9296 = vmatprep.subr.mxu0 0.0
    %9297 = vmatpush1.msra.mxu0 0.0
    %9298 = vmatprep.subr.mxu0 0.0
    %9299 = vmatpush1.msra.mxu0 0.0
    %9300 = vmatprep.subr.mxu0 0.0
    %9301 = vmatpush1.msra.mxu0 0.0
    %9302 = vmatprep.subr.mxu0 0.0
    %9303 = vmatpush1.msra.mxu0 0.0
    %9304 = vmatprep.subr.mxu0 0.0
    %9305 = vmatpush1.msra.mxu0 0.0
    %9306 = vmatprep.subr.mxu0 0.0
    %9307 = vmatpush1.msra.mxu0 0.0
    %9308 = vmatprep.subr.mxu0 0.0
    %9309 = vmatpush1.msra.mxu0 0.0
    %9310 = vmatprep.subr.mxu0 0.0
    %9311 = vmatpush1.msra.mxu0 0.0
    %9312 = vmatprep.mubr.f32.mxu0 0.0
    %v9313 = vand.u32 %v9138, 4294901760
    %9314 = vmatmul.mubr.f32.gmra.mrb[0].mxu0 %v9313
    %v9315 = vpop.f32.mrb[0].mxu0
    %v9316 = vadd.f32 %v9220, %v9315
    %v9317 = vpop.f32.mrb[0].mxu0
    %9318 = vdwg.mxu0
    %9319 = vmatprep.subr.mxu0 0.0
    %v9320 = vand.u32 %v66, 4294901760
    %v9321 = vsub.f32 %v66, %v9320
    %9322 = vmatpush1.msra.mxu0 %v9321
    %9323 = vmatprep.subr.mxu0 0.0
    %v9324 = vand.u32 %v67, 4294901760
    %v9325 = vsub.f32 %v67, %v9324
    %9326 = vmatpush1.msra.mxu0 %v9325
    %9327 = vmatprep.subr.mxu0 0.0
    %v9328 = vand.u32 %v68, 4294901760
    %v9329 = vsub.f32 %v68, %v9328
    %9330 = vmatpush1.msra.mxu0 %v9329
    %9331 = vmatprep.subr.mxu0 0.0
    %v9332 = vand.u32 %v69, 4294901760
    %v9333 = vsub.f32 %v69, %v9332
    %9334 = vmatpush1.msra.mxu0 %v9333
    %9335 = vmatprep.subr.mxu0 0.0
    %v9336 = vand.u32 %v9141, 4294901760
    %v9337 = vsub.f32 %v9141, %v9336
    %9338 = vmatpush1.msra.mxu0 %v9337
    %9339 = vmatprep.subr.mxu0 0.0
    %9340 = vmatpush1.msra.mxu0 0.0
    %9341 = vmatprep.subr.mxu0 0.0
    %9342 = vmatpush1.msra.mxu0 0.0
    %9343 = vmatprep.subr.mxu0 0.0
    %9344 = vmatpush1.msra.mxu0 0.0
    %9345 = vmatprep.subr.mxu0 0.0
    %9346 = vmatpush1.msra.mxu0 0.0
    %9347 = vmatprep.subr.mxu0 0.0
    %9348 = vmatpush1.msra.mxu0 0.0
    %9349 = vmatprep.subr.mxu0 0.0
    %9350 = vmatpush1.msra.mxu0 0.0
    %9351 = vmatprep.subr.mxu0 0.0
    %9352 = vmatpush1.msra.mxu0 0.0
    %9353 = vmatprep.subr.mxu0 0.0
    %9354 = vmatpush1.msra.mxu0 0.0
    %9355 = vmatprep.subr.mxu0 0.0
    %9356 = vmatpush1.msra.mxu0 0.0
    %9357 = vmatprep.subr.mxu0 0.0
    %9358 = vmatpush1.msra.mxu0 0.0
    %9359 = vmatprep.subr.mxu0 0.0
    %9360 = vmatpush1.msra.mxu0 0.0
    %9361 = vmatprep.subr.mxu0 0.0
    %9362 = vmatpush1.msra.mxu0 0.0
    %9363 = vmatprep.subr.mxu0 0.0
    %9364 = vmatpush1.msra.mxu0 0.0
    %9365 = vmatprep.subr.mxu0 0.0
    %9366 = vmatpush1.msra.mxu0 0.0
    %9367 = vmatprep.subr.mxu0 0.0
    %9368 = vmatpush1.msra.mxu0 0.0
    %9369 = vmatprep.subr.mxu0 0.0
    %9370 = vmatpush1.msra.mxu0 0.0
    %9371 = vmatprep.subr.mxu0 0.0
    %9372 = vmatpush1.msra.mxu0 0.0
    %9373 = vmatprep.subr.mxu0 0.0
    %9374 = vmatpush1.msra.mxu0 0.0
    %9375 = vmatprep.subr.mxu0 0.0
    %9376 = vmatpush1.msra.mxu0 0.0
    %9377 = vmatprep.subr.mxu0 0.0
    %9378 = vmatpush1.msra.mxu0 0.0
    %9379 = vmatprep.subr.mxu0 0.0
    %9380 = vmatpush1.msra.mxu0 0.0
    %9381 = vmatprep.subr.mxu0 0.0
    %9382 = vmatpush1.msra.mxu0 0.0
    %9383 = vmatprep.subr.mxu0 0.0
    %9384 = vmatpush1.msra.mxu0 0.0
    %9385 = vmatprep.subr.mxu0 0.0
    %9386 = vmatpush1.msra.mxu0 0.0
    %9387 = vmatprep.subr.mxu0 0.0
    %9388 = vmatpush1.msra.mxu0 0.0
    %9389 = vmatprep.subr.mxu0 0.0
    %9390 = vmatpush1.msra.mxu0 0.0
    %9391 = vmatprep.subr.mxu0 0.0
    %9392 = vmatpush1.msra.mxu0 0.0
    %9393 = vmatprep.mubr.f32.mxu0 0.0
    %v9394 = vand.u32 %v9138, 4294901760
    %v9395 = vsub.f32 %v9138, %v9394
    %9396 = vmatmul.mubr.f32.gmra.mrb[0].mxu0 %v9395
    %v9397 = vpop.f32.mrb[0].mxu0
    %v9398 = vadd.f32 %v9316, %v9397
    %v9399 = vpop.f32.mrb[0].mxu0
    %9400 = vdwg.mxu0
    %9401 = vmatprep.subr.mxu0 0.0
    %v9402 = vand.u32 %v66, 4294901760
    %9403 = vmatpush1.msra.mxu0 %v9402
    %9404 = vmatprep.subr.mxu0 0.0
    %v9405 = vand.u32 %v67, 4294901760
    %9406 = vmatpush1.msra.mxu0 %v9405
    %9407 = vmatprep.subr.mxu0 0.0
    %v9408 = vand.u32 %v68, 4294901760
    %9409 = vmatpush1.msra.mxu0 %v9408
    %9410 = vmatprep.subr.mxu0 0.0
    %v9411 = vand.u32 %v69, 4294901760
    %9412 = vmatpush1.msra.mxu0 %v9411
    %9413 = vmatprep.subr.mxu0 0.0
    %v9414 = vand.u32 %v9141, 4294901760
    %9415 = vmatpush1.msra.mxu0 %v9414
    %9416 = vmatprep.subr.mxu0 0.0
    %9417 = vmatpush1.msra.mxu0 0.0
    %9418 = vmatprep.subr.mxu0 0.0
    %9419 = vmatpush1.msra.mxu0 0.0
    %9420 = vmatprep.subr.mxu0 0.0
    %9421 = vmatpush1.msra.mxu0 0.0
    %9422 = vmatprep.subr.mxu0 0.0
    %9423 = vmatpush1.msra.mxu0 0.0
    %9424 = vmatprep.subr.mxu0 0.0
    %9425 = vmatpush1.msra.mxu0 0.0
    %9426 = vmatprep.subr.mxu0 0.0
    %9427 = vmatpush1.msra.mxu0 0.0
    %9428 = vmatprep.subr.mxu0 0.0
    %9429 = vmatpush1.msra.mxu0 0.0
    %9430 = vmatprep.subr.mxu0 0.0
    %9431 = vmatpush1.msra.mxu0 0.0
    %9432 = vmatprep.subr.mxu0 0.0
    %9433 = vmatpush1.msra.mxu0 0.0
    %9434 = vmatprep.subr.mxu0 0.0
    %9435 = vmatpush1.msra.mxu0 0.0
    %9436 = vmatprep.subr.mxu0 0.0
    %9437 = vmatpush1.msra.mxu0 0.0
    %9438 = vmatprep.subr.mxu0 0.0
    %9439 = vmatpush1.msra.mxu0 0.0
    %9440 = vmatprep.subr.mxu0 0.0
    %9441 = vmatpush1.msra.mxu0 0.0
    %9442 = vmatprep.subr.mxu0 0.0
    %9443 = vmatpush1.msra.mxu0 0.0
    %9444 = vmatprep.subr.mxu0 0.0
    %9445 = vmatpush1.msra.mxu0 0.0
    %9446 = vmatprep.subr.mxu0 0.0
    %9447 = vmatpush1.msra.mxu0 0.0
    %9448 = vmatprep.subr.mxu0 0.0
    %9449 = vmatpush1.msra.mxu0 0.0
    %9450 = vmatprep.subr.mxu0 0.0
    %9451 = vmatpush1.msra.mxu0 0.0
    %9452 = vmatprep.subr.mxu0 0.0
    %9453 = vmatpush1.msra.mxu0 0.0
    %9454 = vmatprep.subr.mxu0 0.0
    %9455 = vmatpush1.msra.mxu0 0.0
    %9456 = vmatprep.subr.mxu0 0.0
    %9457 = vmatpush1.msra.mxu0 0.0
    %9458 = vmatprep.subr.mxu0 0.0
    %9459 = vmatpush1.msra.mxu0 0.0
    %9460 = vmatprep.subr.mxu0 0.0
    %9461 = vmatpush1.msra.mxu0 0.0
    %9462 = vmatprep.subr.mxu0 0.0
    %9463 = vmatpush1.msra.mxu0 0.0
    %9464 = vmatprep.subr.mxu0 0.0
    %9465 = vmatpush1.msra.mxu0 0.0
    %9466 = vmatprep.subr.mxu0 0.0
    %9467 = vmatpush1.msra.mxu0 0.0
    %9468 = vmatprep.subr.mxu0 0.0
    %9469 = vmatpush1.msra.mxu0 0.0
    %9470 = vmatprep.mubr.f32.mxu0 0.0
    %v9471 = vand.u32 %v9138, 4294901760
    %v9472 = vsub.f32 %v9138, %v9471
    %v9473 = vand.u32 %v9472, 4294901760
    %9474 = vmatmul.mubr.f32.gmra.mrb[0].mxu0 %v9473
    %v9475 = vpop.f32.mrb[0].mxu0
    %v9476 = vadd.f32 %v9398, %v9475
    %v9477 = vpop.f32.mrb[0].mxu0
    %9478 = vdwg.mxu0
    %9479 = vmatprep.subr.mxu0 0.0
    %v9480 = vand.u32 %v66, 4294901760
    %v9481 = vsub.f32 %v66, %v9480
    %v9482 = vand.u32 %v9481, 4294901760
    %9483 = vmatpush1.msra.mxu0 %v9482
    %9484 = vmatprep.subr.mxu0 0.0
    %v9485 = vand.u32 %v67, 4294901760
    %v9486 = vsub.f32 %v67, %v9485
    %v9487 = vand.u32 %v9486, 4294901760
    %9488 = vmatpush1.msra.mxu0 %v9487
    %9489 = vmatprep.subr.mxu0 0.0
    %v9490 = vand.u32 %v68, 4294901760
    %v9491 = vsub.f32 %v68, %v9490
    %v9492 = vand.u32 %v9491, 4294901760
    %9493 = vmatpush1.msra.mxu0 %v9492
    %9494 = vmatprep.subr.mxu0 0.0
    %v9495 = vand.u32 %v69, 4294901760
    %v9496 = vsub.f32 %v69, %v9495
    %v9497 = vand.u32 %v9496, 4294901760
    %9498 = vmatpush1.msra.mxu0 %v9497
    %9499 = vmatprep.subr.mxu0 0.0
    %v9500 = vand.u32 %v9141, 4294901760
    %v9501 = vsub.f32 %v9141, %v9500
    %v9502 = vand.u32 %v9501, 4294901760
    %9503 = vmatpush1.msra.mxu0 %v9502
    %9504 = vmatprep.subr.mxu0 0.0
    %9505 = vmatpush1.msra.mxu0 0.0
    %9506 = vmatprep.subr.mxu0 0.0
    %9507 = vmatpush1.msra.mxu0 0.0
    %9508 = vmatprep.subr.mxu0 0.0
    %9509 = vmatpush1.msra.mxu0 0.0
    %9510 = vmatprep.subr.mxu0 0.0
    %9511 = vmatpush1.msra.mxu0 0.0
    %9512 = vmatprep.subr.mxu0 0.0
    %9513 = vmatpush1.msra.mxu0 0.0
    %9514 = vmatprep.subr.mxu0 0.0
    %9515 = vmatpush1.msra.mxu0 0.0
    %9516 = vmatprep.subr.mxu0 0.0
    %9517 = vmatpush1.msra.mxu0 0.0
    %9518 = vmatprep.subr.mxu0 0.0
    %9519 = vmatpush1.msra.mxu0 0.0
    %9520 = vmatprep.subr.mxu0 0.0
    %9521 = vmatpush1.msra.mxu0 0.0
    %9522 = vmatprep.subr.mxu0 0.0
    %9523 = vmatpush1.msra.mxu0 0.0
    %9524 = vmatprep.subr.mxu0 0.0
    %9525 = vmatpush1.msra.mxu0 0.0
    %9526 = vmatprep.subr.mxu0 0.0
    %9527 = vmatpush1.msra.mxu0 0.0
    %9528 = vmatprep.subr.mxu0 0.0
    %9529 = vmatpush1.msra.mxu0 0.0
    %9530 = vmatprep.subr.mxu0 0.0
    %9531 = vmatpush1.msra.mxu0 0.0
    %9532 = vmatprep.subr.mxu0 0.0
    %9533 = vmatpush1.msra.mxu0 0.0
    %9534 = vmatprep.subr.mxu0 0.0
    %9535 = vmatpush1.msra.mxu0 0.0
    %9536 = vmatprep.subr.mxu0 0.0
    %9537 = vmatpush1.msra.mxu0 0.0
    %9538 = vmatprep.subr.mxu0 0.0
    %9539 = vmatpush1.msra.mxu0 0.0
    %9540 = vmatprep.subr.mxu0 0.0
    %9541 = vmatpush1.msra.mxu0 0.0
    %9542 = vmatprep.subr.mxu0 0.0
    %9543 = vmatpush1.msra.mxu0 0.0
    %9544 = vmatprep.subr.mxu0 0.0
    %9545 = vmatpush1.msra.mxu0 0.0
    %9546 = vmatprep.subr.mxu0 0.0
    %9547 = vmatpush1.msra.mxu0 0.0
    %9548 = vmatprep.subr.mxu0 0.0
    %9549 = vmatpush1.msra.mxu0 0.0
    %9550 = vmatprep.subr.mxu0 0.0
    %9551 = vmatpush1.msra.mxu0 0.0
    %9552 = vmatprep.subr.mxu0 0.0
    %9553 = vmatpush1.msra.mxu0 0.0
    %9554 = vmatprep.subr.mxu0 0.0
    %9555 = vmatpush1.msra.mxu0 0.0
    %9556 = vmatprep.subr.mxu0 0.0
    %9557 = vmatpush1.msra.mxu0 0.0
    %9558 = vmatprep.mubr.f32.mxu0 0.0
    %v9559 = vand.u32 %v9138, 4294901760
    %9560 = vmatmul.mubr.f32.gmra.mrb[0].mxu0 %v9559
    %v9561 = vpop.f32.mrb[0].mxu0
    %v9562 = vadd.f32 %v9476, %v9561
    %v9563 = vpop.f32.mrb[0].mxu0
    %9564 = vdwg.mxu0
    %9565 = vmatprep.subr.mxu0 0.0
    %v9566 = vand.u32 %v66, 4294901760
    %9567 = vmatpush1.msra.mxu0 %v9566
    %9568 = vmatprep.subr.mxu0 0.0
    %v9569 = vand.u32 %v67, 4294901760
    %9570 = vmatpush1.msra.mxu0 %v9569
    %9571 = vmatprep.subr.mxu0 0.0
    %v9572 = vand.u32 %v68, 4294901760
    %9573 = vmatpush1.msra.mxu0 %v9572
    %9574 = vmatprep.subr.mxu0 0.0
    %v9575 = vand.u32 %v69, 4294901760
    %9576 = vmatpush1.msra.mxu0 %v9575
    %9577 = vmatprep.subr.mxu0 0.0
    %v9578 = vand.u32 %v9141, 4294901760
    %9579 = vmatpush1.msra.mxu0 %v9578
    %9580 = vmatprep.subr.mxu0 0.0
    %9581 = vmatpush1.msra.mxu0 0.0
    %9582 = vmatprep.subr.mxu0 0.0
    %9583 = vmatpush1.msra.mxu0 0.0
    %9584 = vmatprep.subr.mxu0 0.0
    %9585 = vmatpush1.msra.mxu0 0.0
    %9586 = vmatprep.subr.mxu0 0.0
    %9587 = vmatpush1.msra.mxu0 0.0
    %9588 = vmatprep.subr.mxu0 0.0
    %9589 = vmatpush1.msra.mxu0 0.0
    %9590 = vmatprep.subr.mxu0 0.0
    %9591 = vmatpush1.msra.mxu0 0.0
    %9592 = vmatprep.subr.mxu0 0.0
    %9593 = vmatpush1.msra.mxu0 0.0
    %9594 = vmatprep.subr.mxu0 0.0
    %9595 = vmatpush1.msra.mxu0 0.0
    %9596 = vmatprep.subr.mxu0 0.0
    %9597 = vmatpush1.msra.mxu0 0.0
    %9598 = vmatprep.subr.mxu0 0.0
    %9599 = vmatpush1.msra.mxu0 0.0
    %9600 = vmatprep.subr.mxu0 0.0
    %9601 = vmatpush1.msra.mxu0 0.0
    %9602 = vmatprep.subr.mxu0 0.0
    %9603 = vmatpush1.msra.mxu0 0.0
    %9604 = vmatprep.subr.mxu0 0.0
    %9605 = vmatpush1.msra.mxu0 0.0
    %9606 = vmatprep.subr.mxu0 0.0
    %9607 = vmatpush1.msra.mxu0 0.0
    %9608 = vmatprep.subr.mxu0 0.0
    %9609 = vmatpush1.msra.mxu0 0.0
    %9610 = vmatprep.subr.mxu0 0.0
    %9611 = vmatpush1.msra.mxu0 0.0
    %9612 = vmatprep.subr.mxu0 0.0
    %9613 = vmatpush1.msra.mxu0 0.0
    %9614 = vmatprep.subr.mxu0 0.0
    %9615 = vmatpush1.msra.mxu0 0.0
    %9616 = vmatprep.subr.mxu0 0.0
    %9617 = vmatpush1.msra.mxu0 0.0
    %9618 = vmatprep.subr.mxu0 0.0
    %9619 = vmatpush1.msra.mxu0 0.0
    %9620 = vmatprep.subr.mxu0 0.0
    %9621 = vmatpush1.msra.mxu0 0.0
    %9622 = vmatprep.subr.mxu0 0.0
    %9623 = vmatpush1.msra.mxu0 0.0
    %9624 = vmatprep.subr.mxu0 0.0
    %9625 = vmatpush1.msra.mxu0 0.0
    %9626 = vmatprep.subr.mxu0 0.0
    %9627 = vmatpush1.msra.mxu0 0.0
    %9628 = vmatprep.subr.mxu0 0.0
    %9629 = vmatpush1.msra.mxu0 0.0
    %9630 = vmatprep.subr.mxu0 0.0
    %9631 = vmatpush1.msra.mxu0 0.0
    %9632 = vmatprep.subr.mxu0 0.0
    %9633 = vmatpush1.msra.mxu0 0.0
    %9634 = vmatprep.mubr.f32.mxu0 0.0
    %v9635 = vand.u32 %v9138, 4294901760
    %9636 = vmatmul.mubr.f32.gmra.mrb[0].mxu0 %v9635
    %v9637 = vpop.f32.mrb[0].mxu0
    %v9638 = vadd.f32 %v9562, %v9637
    %v9639 = vpop.f32.mrb[0].mxu0
    %9640 = vdwg.mxu0
    %v9641 = vmul.f32 %v9638, 0.00045955883
    %v9643 = vsel %vm9046, %v9136, 0
    %9645 = vmatprep.subr.mxu0 0.0
    %v9646 = vand.u32 %v66, 4294901760
    %9647 = vmatpush1.msra.mxu0 %v9646
    %9648 = vmatprep.subr.mxu0 0.0
    %v9649 = vand.u32 %v67, 4294901760
    %9650 = vmatpush1.msra.mxu0 %v9649
    %9651 = vmatprep.subr.mxu0 0.0
    %v9652 = vand.u32 %v68, 4294901760
    %9653 = vmatpush1.msra.mxu0 %v9652
    %9654 = vmatprep.subr.mxu0 0.0
    %v9655 = vand.u32 %v69, 4294901760
    %9656 = vmatpush1.msra.mxu0 %v9655
    %9657 = vmatprep.subr.mxu0 0.0
    %v9658 = vand.u32 %v9141, 4294901760
    %9659 = vmatpush1.msra.mxu0 %v9658
    %9660 = vmatprep.subr.mxu0 0.0
    %9661 = vmatpush1.msra.mxu0 0.0
    %9662 = vmatprep.subr.mxu0 0.0
    %9663 = vmatpush1.msra.mxu0 0.0
    %9664 = vmatprep.subr.mxu0 0.0
    %9665 = vmatpush1.msra.mxu0 0.0
    %9666 = vmatprep.subr.mxu0 0.0
    %9667 = vmatpush1.msra.mxu0 0.0
    %9668 = vmatprep.subr.mxu0 0.0
    %9669 = vmatpush1.msra.mxu0 0.0
    %9670 = vmatprep.subr.mxu0 0.0
    %9671 = vmatpush1.msra.mxu0 0.0
    %9672 = vmatprep.subr.mxu0 0.0
    %9673 = vmatpush1.msra.mxu0 0.0
    %9674 = vmatprep.subr.mxu0 0.0
    %9675 = vmatpush1.msra.mxu0 0.0
    %9676 = vmatprep.subr.mxu0 0.0
    %9677 = vmatpush1.msra.mxu0 0.0
    %9678 = vmatprep.subr.mxu0 0.0
    %9679 = vmatpush1.msra.mxu0 0.0
    %9680 = vmatprep.subr.mxu0 0.0
    %9681 = vmatpush1.msra.mxu0 0.0
    %9682 = vmatprep.subr.mxu0 0.0
    %9683 = vmatpush1.msra.mxu0 0.0
    %9684 = vmatprep.subr.mxu0 0.0
    %9685 = vmatpush1.msra.mxu0 0.0
    %9686 = vmatprep.subr.mxu0 0.0
    %9687 = vmatpush1.msra.mxu0 0.0
    %9688 = vmatprep.subr.mxu0 0.0
    %9689 = vmatpush1.msra.mxu0 0.0
    %9690 = vmatprep.subr.mxu0 0.0
    %9691 = vmatpush1.msra.mxu0 0.0
    %9692 = vmatprep.subr.mxu0 0.0
    %9693 = vmatpush1.msra.mxu0 0.0
    %9694 = vmatprep.subr.mxu0 0.0
    %9695 = vmatpush1.msra.mxu0 0.0
    %9696 = vmatprep.subr.mxu0 0.0
    %9697 = vmatpush1.msra.mxu0 0.0
    %9698 = vmatprep.subr.mxu0 0.0
    %9699 = vmatpush1.msra.mxu0 0.0
    %9700 = vmatprep.subr.mxu0 0.0
    %9701 = vmatpush1.msra.mxu0 0.0
    %9702 = vmatprep.subr.mxu0 0.0
    %9703 = vmatpush1.msra.mxu0 0.0
    %9704 = vmatprep.subr.mxu0 0.0
    %9705 = vmatpush1.msra.mxu0 0.0
    %9706 = vmatprep.subr.mxu0 0.0
    %9707 = vmatpush1.msra.mxu0 0.0
    %9708 = vmatprep.subr.mxu0 0.0
    %9709 = vmatpush1.msra.mxu0 0.0
    %9710 = vmatprep.subr.mxu0 0.0
    %9711 = vmatpush1.msra.mxu0 0.0
    %9712 = vmatprep.subr.mxu0 0.0
    %9713 = vmatpush1.msra.mxu0 0.0
    %9714 = vmatprep.mubr.f32.mxu0 0.0
    %v9715 = vand.u32 %v9643, 4294901760
    %v9716 = vsub.f32 %v9643, %v9715
    %v9717 = vand.u32 %v9716, 4294901760
    %v9718 = vsub.f32 %v9716, %v9717
    %v9719 = vand.u32 %v9718, 4294901760
    %9720 = vmatmul.mubr.f32.gmra.mrb[0].mxu0 %v9719
    %v9721 = vpop.f32.mrb[0].mxu0
    %v9722 = vadd.f32 0.0, %v9721
    %v9723 = vpop.f32.mrb[0].mxu0
    %9724 = vdwg.mxu0
    %9725 = vmatprep.subr.mxu0 0.0
    %v9726 = vand.u32 %v66, 4294901760
    %v9727 = vsub.f32 %v66, %v9726
    %v9728 = vand.u32 %v9727, 4294901760
    %v9729 = vsub.f32 %v9727, %v9728
    %v9730 = vand.u32 %v9729, 4294901760
    %9731 = vmatpush1.msra.mxu0 %v9730
    %9732 = vmatprep.subr.mxu0 0.0
    %v9733 = vand.u32 %v67, 4294901760
    %v9734 = vsub.f32 %v67, %v9733
    %v9735 = vand.u32 %v9734, 4294901760
    %v9736 = vsub.f32 %v9734, %v9735
    %v9737 = vand.u32 %v9736, 4294901760
    %9738 = vmatpush1.msra.mxu0 %v9737
    %9739 = vmatprep.subr.mxu0 0.0
    %v9740 = vand.u32 %v68, 4294901760
    %v9741 = vsub.f32 %v68, %v9740
    %v9742 = vand.u32 %v9741, 4294901760
    %v9743 = vsub.f32 %v9741, %v9742
    %v9744 = vand.u32 %v9743, 4294901760
    %9745 = vmatpush1.msra.mxu0 %v9744
    %9746 = vmatprep.subr.mxu0 0.0
    %v9747 = vand.u32 %v69, 4294901760
    %v9748 = vsub.f32 %v69, %v9747
    %v9749 = vand.u32 %v9748, 4294901760
    %v9750 = vsub.f32 %v9748, %v9749
    %v9751 = vand.u32 %v9750, 4294901760
    %9752 = vmatpush1.msra.mxu0 %v9751
    %9753 = vmatprep.subr.mxu0 0.0
    %v9754 = vand.u32 %v9141, 4294901760
    %v9755 = vsub.f32 %v9141, %v9754
    %v9756 = vand.u32 %v9755, 4294901760
    %v9757 = vsub.f32 %v9755, %v9756
    %v9758 = vand.u32 %v9757, 4294901760
    %9759 = vmatpush1.msra.mxu0 %v9758
    %9760 = vmatprep.subr.mxu0 0.0
    %9761 = vmatpush1.msra.mxu0 0.0
    %9762 = vmatprep.subr.mxu0 0.0
    %9763 = vmatpush1.msra.mxu0 0.0
    %9764 = vmatprep.subr.mxu0 0.0
    %9765 = vmatpush1.msra.mxu0 0.0
    %9766 = vmatprep.subr.mxu0 0.0
    %9767 = vmatpush1.msra.mxu0 0.0
    %9768 = vmatprep.subr.mxu0 0.0
    %9769 = vmatpush1.msra.mxu0 0.0
    %9770 = vmatprep.subr.mxu0 0.0
    %9771 = vmatpush1.msra.mxu0 0.0
    %9772 = vmatprep.subr.mxu0 0.0
    %9773 = vmatpush1.msra.mxu0 0.0
    %9774 = vmatprep.subr.mxu0 0.0
    %9775 = vmatpush1.msra.mxu0 0.0
    %9776 = vmatprep.subr.mxu0 0.0
    %9777 = vmatpush1.msra.mxu0 0.0
    %9778 = vmatprep.subr.mxu0 0.0
    %9779 = vmatpush1.msra.mxu0 0.0
    %9780 = vmatprep.subr.mxu0 0.0
    %9781 = vmatpush1.msra.mxu0 0.0
    %9782 = vmatprep.subr.mxu0 0.0
    %9783 = vmatpush1.msra.mxu0 0.0
    %9784 = vmatprep.subr.mxu0 0.0
    %9785 = vmatpush1.msra.mxu0 0.0
    %9786 = vmatprep.subr.mxu0 0.0
    %9787 = vmatpush1.msra.mxu0 0.0
    %9788 = vmatprep.subr.mxu0 0.0
    %9789 = vmatpush1.msra.mxu0 0.0
    %9790 = vmatprep.subr.mxu0 0.0
    %9791 = vmatpush1.msra.mxu0 0.0
    %9792 = vmatprep.subr.mxu0 0.0
    %9793 = vmatpush1.msra.mxu0 0.0
    %9794 = vmatprep.subr.mxu0 0.0
    %9795 = vmatpush1.msra.mxu0 0.0
    %9796 = vmatprep.subr.mxu0 0.0
    %9797 = vmatpush1.msra.mxu0 0.0
    %9798 = vmatprep.subr.mxu0 0.0
    %9799 = vmatpush1.msra.mxu0 0.0
    %9800 = vmatprep.subr.mxu0 0.0
    %9801 = vmatpush1.msra.mxu0 0.0
    %9802 = vmatprep.subr.mxu0 0.0
    %9803 = vmatpush1.msra.mxu0 0.0
    %9804 = vmatprep.subr.mxu0 0.0
    %9805 = vmatpush1.msra.mxu0 0.0
    %9806 = vmatprep.subr.mxu0 0.0
    %9807 = vmatpush1.msra.mxu0 0.0
    %9808 = vmatprep.subr.mxu0 0.0
    %9809 = vmatpush1.msra.mxu0 0.0
    %9810 = vmatprep.subr.mxu0 0.0
    %9811 = vmatpush1.msra.mxu0 0.0
    %9812 = vmatprep.subr.mxu0 0.0
    %9813 = vmatpush1.msra.mxu0 0.0
    %9814 = vmatprep.mubr.f32.mxu0 0.0
    %v9815 = vand.u32 %v9643, 4294901760
    %9816 = vmatmul.mubr.f32.gmra.mrb[0].mxu0 %v9815
    %v9817 = vpop.f32.mrb[0].mxu0
    %v9818 = vadd.f32 %v9722, %v9817
    %v9819 = vpop.f32.mrb[0].mxu0
    %9820 = vdwg.mxu0
    %9821 = vmatprep.subr.mxu0 0.0
    %v9822 = vand.u32 %v66, 4294901760
    %v9823 = vsub.f32 %v66, %v9822
    %9824 = vmatpush1.msra.mxu0 %v9823
    %9825 = vmatprep.subr.mxu0 0.0
    %v9826 = vand.u32 %v67, 4294901760
    %v9827 = vsub.f32 %v67, %v9826
    %9828 = vmatpush1.msra.mxu0 %v9827
    %9829 = vmatprep.subr.mxu0 0.0
    %v9830 = vand.u32 %v68, 4294901760
    %v9831 = vsub.f32 %v68, %v9830
    %9832 = vmatpush1.msra.mxu0 %v9831
    %9833 = vmatprep.subr.mxu0 0.0
    %v9834 = vand.u32 %v69, 4294901760
    %v9835 = vsub.f32 %v69, %v9834
    %9836 = vmatpush1.msra.mxu0 %v9835
    %9837 = vmatprep.subr.mxu0 0.0
    %v9838 = vand.u32 %v9141, 4294901760
    %v9839 = vsub.f32 %v9141, %v9838
    %9840 = vmatpush1.msra.mxu0 %v9839
    %9841 = vmatprep.subr.mxu0 0.0
    %9842 = vmatpush1.msra.mxu0 0.0
    %9843 = vmatprep.subr.mxu0 0.0
    %9844 = vmatpush1.msra.mxu0 0.0
    %9845 = vmatprep.subr.mxu0 0.0
    %9846 = vmatpush1.msra.mxu0 0.0
    %9847 = vmatprep.subr.mxu0 0.0
    %9848 = vmatpush1.msra.mxu0 0.0
    %9849 = vmatprep.subr.mxu0 0.0
    %9850 = vmatpush1.msra.mxu0 0.0
    %9851 = vmatprep.subr.mxu0 0.0
    %9852 = vmatpush1.msra.mxu0 0.0
    %9853 = vmatprep.subr.mxu0 0.0
    %9854 = vmatpush1.msra.mxu0 0.0
    %9855 = vmatprep.subr.mxu0 0.0
    %9856 = vmatpush1.msra.mxu0 0.0
    %9857 = vmatprep.subr.mxu0 0.0
    %9858 = vmatpush1.msra.mxu0 0.0
    %9859 = vmatprep.subr.mxu0 0.0
    %9860 = vmatpush1.msra.mxu0 0.0
    %9861 = vmatprep.subr.mxu0 0.0
    %9862 = vmatpush1.msra.mxu0 0.0
    %9863 = vmatprep.subr.mxu0 0.0
    %9864 = vmatpush1.msra.mxu0 0.0
    %9865 = vmatprep.subr.mxu0 0.0
    %9866 = vmatpush1.msra.mxu0 0.0
    %9867 = vmatprep.subr.mxu0 0.0
    %9868 = vmatpush1.msra.mxu0 0.0
    %9869 = vmatprep.subr.mxu0 0.0
    %9870 = vmatpush1.msra.mxu0 0.0
    %9871 = vmatprep.subr.mxu0 0.0
    %9872 = vmatpush1.msra.mxu0 0.0
    %9873 = vmatprep.subr.mxu0 0.0
    %9874 = vmatpush1.msra.mxu0 0.0
    %9875 = vmatprep.subr.mxu0 0.0
    %9876 = vmatpush1.msra.mxu0 0.0
    %9877 = vmatprep.subr.mxu0 0.0
    %9878 = vmatpush1.msra.mxu0 0.0
    %9879 = vmatprep.subr.mxu0 0.0
    %9880 = vmatpush1.msra.mxu0 0.0
    %9881 = vmatprep.subr.mxu0 0.0
    %9882 = vmatpush1.msra.mxu0 0.0
    %9883 = vmatprep.subr.mxu0 0.0
    %9884 = vmatpush1.msra.mxu0 0.0
    %9885 = vmatprep.subr.mxu0 0.0
    %9886 = vmatpush1.msra.mxu0 0.0
    %9887 = vmatprep.subr.mxu0 0.0
    %9888 = vmatpush1.msra.mxu0 0.0
    %9889 = vmatprep.subr.mxu0 0.0
    %9890 = vmatpush1.msra.mxu0 0.0
    %9891 = vmatprep.subr.mxu0 0.0
    %9892 = vmatpush1.msra.mxu0 0.0
    %9893 = vmatprep.subr.mxu0 0.0
    %9894 = vmatpush1.msra.mxu0 0.0
    %9895 = vmatprep.mubr.f32.mxu0 0.0
    %v9896 = vand.u32 %v9643, 4294901760
    %v9897 = vsub.f32 %v9643, %v9896
    %9898 = vmatmul.mubr.f32.gmra.mrb[0].mxu0 %v9897
    %v9899 = vpop.f32.mrb[0].mxu0
    %v9900 = vadd.f32 %v9818, %v9899
    %v9901 = vpop.f32.mrb[0].mxu0
    %9902 = vdwg.mxu0
    %9903 = vmatprep.subr.mxu0 0.0
    %v9904 = vand.u32 %v66, 4294901760
    %9905 = vmatpush1.msra.mxu0 %v9904
    %9906 = vmatprep.subr.mxu0 0.0
    %v9907 = vand.u32 %v67, 4294901760
    %9908 = vmatpush1.msra.mxu0 %v9907
    %9909 = vmatprep.subr.mxu0 0.0
    %v9910 = vand.u32 %v68, 4294901760
    %9911 = vmatpush1.msra.mxu0 %v9910
    %9912 = vmatprep.subr.mxu0 0.0
    %v9913 = vand.u32 %v69, 4294901760
    %9914 = vmatpush1.msra.mxu0 %v9913
    %9915 = vmatprep.subr.mxu0 0.0
    %v9916 = vand.u32 %v9141, 4294901760
    %9917 = vmatpush1.msra.mxu0 %v9916
    %9918 = vmatprep.subr.mxu0 0.0
    %9919 = vmatpush1.msra.mxu0 0.0
    %9920 = vmatprep.subr.mxu0 0.0
    %9921 = vmatpush1.msra.mxu0 0.0
    %9922 = vmatprep.subr.mxu0 0.0
    %9923 = vmatpush1.msra.mxu0 0.0
    %9924 = vmatprep.subr.mxu0 0.0
    %9925 = vmatpush1.msra.mxu0 0.0
    %9926 = vmatprep.subr.mxu0 0.0
    %9927 = vmatpush1.msra.mxu0 0.0
    %9928 = vmatprep.subr.mxu0 0.0
    %9929 = vmatpush1.msra.mxu0 0.0
    %9930 = vmatprep.subr.mxu0 0.0
    %9931 = vmatpush1.msra.mxu0 0.0
    %9932 = vmatprep.subr.mxu0 0.0
    %9933 = vmatpush1.msra.mxu0 0.0
    %9934 = vmatprep.subr.mxu0 0.0
    %9935 = vmatpush1.msra.mxu0 0.0
    %9936 = vmatprep.subr.mxu0 0.0
    %9937 = vmatpush1.msra.mxu0 0.0
    %9938 = vmatprep.subr.mxu0 0.0
    %9939 = vmatpush1.msra.mxu0 0.0
    %9940 = vmatprep.subr.mxu0 0.0
    %9941 = vmatpush1.msra.mxu0 0.0
    %9942 = vmatprep.subr.mxu0 0.0
    %9943 = vmatpush1.msra.mxu0 0.0
    %9944 = vmatprep.subr.mxu0 0.0
    %9945 = vmatpush1.msra.mxu0 0.0
    %9946 = vmatprep.subr.mxu0 0.0
    %9947 = vmatpush1.msra.mxu0 0.0
    %9948 = vmatprep.subr.mxu0 0.0
    %9949 = vmatpush1.msra.mxu0 0.0
    %9950 = vmatprep.subr.mxu0 0.0
    %9951 = vmatpush1.msra.mxu0 0.0
    %9952 = vmatprep.subr.mxu0 0.0
    %9953 = vmatpush1.msra.mxu0 0.0
    %9954 = vmatprep.subr.mxu0 0.0
    %9955 = vmatpush1.msra.mxu0 0.0
    %9956 = vmatprep.subr.mxu0 0.0
    %9957 = vmatpush1.msra.mxu0 0.0
    %9958 = vmatprep.subr.mxu0 0.0
    %9959 = vmatpush1.msra.mxu0 0.0
    %9960 = vmatprep.subr.mxu0 0.0
    %9961 = vmatpush1.msra.mxu0 0.0
    %9962 = vmatprep.subr.mxu0 0.0
    %9963 = vmatpush1.msra.mxu0 0.0
    %9964 = vmatprep.subr.mxu0 0.0
    %9965 = vmatpush1.msra.mxu0 0.0
    %9966 = vmatprep.subr.mxu0 0.0
    %9967 = vmatpush1.msra.mxu0 0.0
    %9968 = vmatprep.subr.mxu0 0.0
    %9969 = vmatpush1.msra.mxu0 0.0
    %9970 = vmatprep.subr.mxu0 0.0
    %9971 = vmatpush1.msra.mxu0 0.0
    %9972 = vmatprep.mubr.f32.mxu0 0.0
    %v9973 = vand.u32 %v9643, 4294901760
    %v9974 = vsub.f32 %v9643, %v9973
    %v9975 = vand.u32 %v9974, 4294901760
    %9976 = vmatmul.mubr.f32.gmra.mrb[0].mxu0 %v9975
    %v9977 = vpop.f32.mrb[0].mxu0
    %v9978 = vadd.f32 %v9900, %v9977
    %v9979 = vpop.f32.mrb[0].mxu0
    %9980 = vdwg.mxu0
    %9981 = vmatprep.subr.mxu0 0.0
    %v9982 = vand.u32 %v66, 4294901760
    %v9983 = vsub.f32 %v66, %v9982
    %v9984 = vand.u32 %v9983, 4294901760
    %9985 = vmatpush1.msra.mxu0 %v9984
    %9986 = vmatprep.subr.mxu0 0.0
    %v9987 = vand.u32 %v67, 4294901760
    %v9988 = vsub.f32 %v67, %v9987
    %v9989 = vand.u32 %v9988, 4294901760
    %9990 = vmatpush1.msra.mxu0 %v9989
    %9991 = vmatprep.subr.mxu0 0.0
    %v9992 = vand.u32 %v68, 4294901760
    %v9993 = vsub.f32 %v68, %v9992
    %v9994 = vand.u32 %v9993, 4294901760
    %9995 = vmatpush1.msra.mxu0 %v9994
    %9996 = vmatprep.subr.mxu0 0.0
    %v9997 = vand.u32 %v69, 4294901760
    %v9998 = vsub.f32 %v69, %v9997
    %v9999 = vand.u32 %v9998, 4294901760
    %10000 = vmatpush1.msra.mxu0 %v9999
    %10001 = vmatprep.subr.mxu0 0.0
    %v10002 = vand.u32 %v9141, 4294901760
    %v10003 = vsub.f32 %v9141, %v10002
    %v10004 = vand.u32 %v10003, 4294901760
    %10005 = vmatpush1.msra.mxu0 %v10004
    %10006 = vmatprep.subr.mxu0 0.0
    %10007 = vmatpush1.msra.mxu0 0.0
    %10008 = vmatprep.subr.mxu0 0.0
    %10009 = vmatpush1.msra.mxu0 0.0
    %10010 = vmatprep.subr.mxu0 0.0
    %10011 = vmatpush1.msra.mxu0 0.0
    %10012 = vmatprep.subr.mxu0 0.0
    %10013 = vmatpush1.msra.mxu0 0.0
    %10014 = vmatprep.subr.mxu0 0.0
    %10015 = vmatpush1.msra.mxu0 0.0
    %10016 = vmatprep.subr.mxu0 0.0
    %10017 = vmatpush1.msra.mxu0 0.0
    %10018 = vmatprep.subr.mxu0 0.0
    %10019 = vmatpush1.msra.mxu0 0.0
    %10020 = vmatprep.subr.mxu0 0.0
    %10021 = vmatpush1.msra.mxu0 0.0
    %10022 = vmatprep.subr.mxu0 0.0
    %10023 = vmatpush1.msra.mxu0 0.0
    %10024 = vmatprep.subr.mxu0 0.0
    %10025 = vmatpush1.msra.mxu0 0.0
    %10026 = vmatprep.subr.mxu0 0.0
    %10027 = vmatpush1.msra.mxu0 0.0
    %10028 = vmatprep.subr.mxu0 0.0
    %10029 = vmatpush1.msra.mxu0 0.0
    %10030 = vmatprep.subr.mxu0 0.0
    %10031 = vmatpush1.msra.mxu0 0.0
    %10032 = vmatprep.subr.mxu0 0.0
    %10033 = vmatpush1.msra.mxu0 0.0
    %10034 = vmatprep.subr.mxu0 0.0
    %10035 = vmatpush1.msra.mxu0 0.0
    %10036 = vmatprep.subr.mxu0 0.0
    %10037 = vmatpush1.msra.mxu0 0.0
    %10038 = vmatprep.subr.mxu0 0.0
    %10039 = vmatpush1.msra.mxu0 0.0
    %10040 = vmatprep.subr.mxu0 0.0
    %10041 = vmatpush1.msra.mxu0 0.0
    %10042 = vmatprep.subr.mxu0 0.0
    %10043 = vmatpush1.msra.mxu0 0.0
    %10044 = vmatprep.subr.mxu0 0.0
    %10045 = vmatpush1.msra.mxu0 0.0
    %10046 = vmatprep.subr.mxu0 0.0
    %10047 = vmatpush1.msra.mxu0 0.0
    %10048 = vmatprep.subr.mxu0 0.0
    %10049 = vmatpush1.msra.mxu0 0.0
    %10050 = vmatprep.subr.mxu0 0.0
    %10051 = vmatpush1.msra.mxu0 0.0
    %10052 = vmatprep.subr.mxu0 0.0
    %10053 = vmatpush1.msra.mxu0 0.0
    %10054 = vmatprep.subr.mxu0 0.0
    %10055 = vmatpush1.msra.mxu0 0.0
    %10056 = vmatprep.subr.mxu0 0.0
    %10057 = vmatpush1.msra.mxu0 0.0
    %10058 = vmatprep.subr.mxu0 0.0
    %10059 = vmatpush1.msra.mxu0 0.0
    %10060 = vmatprep.mubr.f32.mxu0 0.0
    %v10061 = vand.u32 %v9643, 4294901760
    %10062 = vmatmul.mubr.f32.gmra.mrb[0].mxu0 %v10061
    %v10063 = vpop.f32.mrb[0].mxu0
    %v10064 = vadd.f32 %v9978, %v10063
    %v10065 = vpop.f32.mrb[0].mxu0
    %10066 = vdwg.mxu0
    %10067 = vmatprep.subr.mxu0 0.0
    %v10068 = vand.u32 %v66, 4294901760
    %10069 = vmatpush1.msra.mxu0 %v10068
    %10070 = vmatprep.subr.mxu0 0.0
    %v10071 = vand.u32 %v67, 4294901760
    %10072 = vmatpush1.msra.mxu0 %v10071
    %10073 = vmatprep.subr.mxu0 0.0
    %v10074 = vand.u32 %v68, 4294901760
    %10075 = vmatpush1.msra.mxu0 %v10074
    %10076 = vmatprep.subr.mxu0 0.0
    %v10077 = vand.u32 %v69, 4294901760
    %10078 = vmatpush1.msra.mxu0 %v10077
    %10079 = vmatprep.subr.mxu0 0.0
    %v10080 = vand.u32 %v9141, 4294901760
    %10081 = vmatpush1.msra.mxu0 %v10080
    %10082 = vmatprep.subr.mxu0 0.0
    %10083 = vmatpush1.msra.mxu0 0.0
    %10084 = vmatprep.subr.mxu0 0.0
    %10085 = vmatpush1.msra.mxu0 0.0
    %10086 = vmatprep.subr.mxu0 0.0
    %10087 = vmatpush1.msra.mxu0 0.0
    %10088 = vmatprep.subr.mxu0 0.0
    %10089 = vmatpush1.msra.mxu0 0.0
    %10090 = vmatprep.subr.mxu0 0.0
    %10091 = vmatpush1.msra.mxu0 0.0
    %10092 = vmatprep.subr.mxu0 0.0
    %10093 = vmatpush1.msra.mxu0 0.0
    %10094 = vmatprep.subr.mxu0 0.0
    %10095 = vmatpush1.msra.mxu0 0.0
    %10096 = vmatprep.subr.mxu0 0.0
    %10097 = vmatpush1.msra.mxu0 0.0
    %10098 = vmatprep.subr.mxu0 0.0
    %10099 = vmatpush1.msra.mxu0 0.0
    %10100 = vmatprep.subr.mxu0 0.0
    %10101 = vmatpush1.msra.mxu0 0.0
    %10102 = vmatprep.subr.mxu0 0.0
    %10103 = vmatpush1.msra.mxu0 0.0
    %10104 = vmatprep.subr.mxu0 0.0
    %10105 = vmatpush1.msra.mxu0 0.0
    %10106 = vmatprep.subr.mxu0 0.0
    %10107 = vmatpush1.msra.mxu0 0.0
    %10108 = vmatprep.subr.mxu0 0.0
    %10109 = vmatpush1.msra.mxu0 0.0
    %10110 = vmatprep.subr.mxu0 0.0
    %10111 = vmatpush1.msra.mxu0 0.0
    %10112 = vmatprep.subr.mxu0 0.0
    %10113 = vmatpush1.msra.mxu0 0.0
    %10114 = vmatprep.subr.mxu0 0.0
    %10115 = vmatpush1.msra.mxu0 0.0
    %10116 = vmatprep.subr.mxu0 0.0
    %10117 = vmatpush1.msra.mxu0 0.0
    %10118 = vmatprep.subr.mxu0 0.0
    %10119 = vmatpush1.msra.mxu0 0.0
    %10120 = vmatprep.subr.mxu0 0.0
    %10121 = vmatpush1.msra.mxu0 0.0
    %10122 = vmatprep.subr.mxu0 0.0
    %10123 = vmatpush1.msra.mxu0 0.0
    %10124 = vmatprep.subr.mxu0 0.0
    %10125 = vmatpush1.msra.mxu0 0.0
    %10126 = vmatprep.subr.mxu0 0.0
    %10127 = vmatpush1.msra.mxu0 0.0
    %10128 = vmatprep.subr.mxu0 0.0
    %10129 = vmatpush1.msra.mxu0 0.0
    %10130 = vmatprep.subr.mxu0 0.0
    %10131 = vmatpush1.msra.mxu0 0.0
    %10132 = vmatprep.subr.mxu0 0.0
    %10133 = vmatpush1.msra.mxu0 0.0
    %10134 = vmatprep.subr.mxu0 0.0
    %10135 = vmatpush1.msra.mxu0 0.0
    %10136 = vmatprep.mubr.f32.mxu0 0.0
    %v10137 = vand.u32 %v9643, 4294901760
    %10138 = vmatmul.mubr.f32.gmra.mrb[0].mxu0 %v10137
    %v10139 = vpop.f32.mrb[0].mxu0
    %v10140 = vadd.f32 %v10064, %v10139
    %v10141 = vpop.f32.mrb[0].mxu0
    %10142 = vdwg.mxu0
    %v10143 = vmul.f32 %v10140, 0.00045955883
    %v10144 = vmul.f32 %v9641, %v9641
    %v10145 = vsub.f32 %v10143, %v10144
    %v10146 = vmax.f32 %v10145, 0.0
    %v10147 = vadd.f32 %v10146, 1e-05
    %v10148 = vrsqrt.pop %v10147
    %v10150 = vsel %vm1255, %v9641, 0
    %v10153 = vsel %vm1259, %v65, 0
    %10155 = vmatprep.subr.mxu0 0.0
    %v10156 = vand.u32 %v10153, 4294901760
    %10157 = vmatpush1.msra.mxu0 %v10156
    %10158 = vmatprep.subr.mxu0 0.0
    %10159 = vmatpush1.msra.mxu0 0.0
    %10160 = vmatprep.subr.mxu0 0.0
    %10161 = vmatpush1.msra.mxu0 0.0
    %10162 = vmatprep.subr.mxu0 0.0
    %10163 = vmatpush1.msra.mxu0 0.0
    %10164 = vmatprep.subr.mxu0 0.0
    %10165 = vmatpush1.msra.mxu0 0.0
    %10166 = vmatprep.subr.mxu0 0.0
    %10167 = vmatpush1.msra.mxu0 0.0
    %10168 = vmatprep.subr.mxu0 0.0
    %10169 = vmatpush1.msra.mxu0 0.0
    %10170 = vmatprep.subr.mxu0 0.0
    %10171 = vmatpush1.msra.mxu0 0.0
    %10172 = vmatprep.subr.mxu0 0.0
    %10173 = vmatpush1.msra.mxu0 0.0
    %10174 = vmatprep.subr.mxu0 0.0
    %10175 = vmatpush1.msra.mxu0 0.0
    %10176 = vmatprep.subr.mxu0 0.0
    %10177 = vmatpush1.msra.mxu0 0.0
    %10178 = vmatprep.subr.mxu0 0.0
    %10179 = vmatpush1.msra.mxu0 0.0
    %10180 = vmatprep.subr.mxu0 0.0
    %10181 = vmatpush1.msra.mxu0 0.0
    %10182 = vmatprep.subr.mxu0 0.0
    %10183 = vmatpush1.msra.mxu0 0.0
    %10184 = vmatprep.subr.mxu0 0.0
    %10185 = vmatpush1.msra.mxu0 0.0
    %10186 = vmatprep.subr.mxu0 0.0
    %10187 = vmatpush1.msra.mxu0 0.0
    %10188 = vmatprep.subr.mxu0 0.0
    %10189 = vmatpush1.msra.mxu0 0.0
    %10190 = vmatprep.subr.mxu0 0.0
    %10191 = vmatpush1.msra.mxu0 0.0
    %10192 = vmatprep.subr.mxu0 0.0
    %10193 = vmatpush1.msra.mxu0 0.0
    %10194 = vmatprep.subr.mxu0 0.0
    %10195 = vmatpush1.msra.mxu0 0.0
    %10196 = vmatprep.subr.mxu0 0.0
    %10197 = vmatpush1.msra.mxu0 0.0
    %10198 = vmatprep.subr.mxu0 0.0
    %10199 = vmatpush1.msra.mxu0 0.0
    %10200 = vmatprep.subr.mxu0 0.0
    %10201 = vmatpush1.msra.mxu0 0.0
    %10202 = vmatprep.subr.mxu0 0.0
    %10203 = vmatpush1.msra.mxu0 0.0
    %10204 = vmatprep.subr.mxu0 0.0
    %10205 = vmatpush1.msra.mxu0 0.0
    %10206 = vmatprep.subr.mxu0 0.0
    %10207 = vmatpush1.msra.mxu0 0.0
    %10208 = vmatprep.subr.mxu0 0.0
    %10209 = vmatpush1.msra.mxu0 0.0
    %10210 = vmatprep.subr.mxu0 0.0
    %10211 = vmatpush1.msra.mxu0 0.0
    %10212 = vmatprep.subr.mxu0 0.0
    %10213 = vmatpush1.msra.mxu0 0.0
    %10214 = vmatprep.subr.mxu0 0.0
    %10215 = vmatpush1.msra.mxu0 0.0
    %10216 = vmatprep.subr.mxu0 0.0
    %10217 = vmatpush1.msra.mxu0 0.0
    %10218 = vmatprep.subr.mxu0 0.0
    %10219 = vmatpush1.msra.mxu0 0.0
    %10220 = vmatprep.mubr.f32.mxu0 0.0
    %v10221 = vand.u32 %v10150, 4294901760
    %v10222 = vsub.f32 %v10150, %v10221
    %v10223 = vand.u32 %v10222, 4294901760
    %v10224 = vsub.f32 %v10222, %v10223
    %v10225 = vand.u32 %v10224, 4294901760
    %10226 = vmatmul.mubr.f32.gmra.mrb[0].mxu0 %v10225
    %v10227 = vpop.f32.mrb[0].mxu0
    %v10228 = vadd.f32 0.0, %v10227
    %v10229 = vpop.f32.mrb[0].mxu0
    %10230 = vdwg.mxu0
    %10231 = vmatprep.subr.mxu0 0.0
    %v10232 = vand.u32 %v10153, 4294901760
    %v10233 = vsub.f32 %v10153, %v10232
    %v10234 = vand.u32 %v10233, 4294901760
    %v10235 = vsub.f32 %v10233, %v10234
    %v10236 = vand.u32 %v10235, 4294901760
    %10237 = vmatpush1.msra.mxu0 %v10236
    %10238 = vmatprep.subr.mxu0 0.0
    %10239 = vmatpush1.msra.mxu0 0.0
    %10240 = vmatprep.subr.mxu0 0.0
    %10241 = vmatpush1.msra.mxu0 0.0
    %10242 = vmatprep.subr.mxu0 0.0
    %10243 = vmatpush1.msra.mxu0 0.0
    %10244 = vmatprep.subr.mxu0 0.0
    %10245 = vmatpush1.msra.mxu0 0.0
    %10246 = vmatprep.subr.mxu0 0.0
    %10247 = vmatpush1.msra.mxu0 0.0
    %10248 = vmatprep.subr.mxu0 0.0
    %10249 = vmatpush1.msra.mxu0 0.0
    %10250 = vmatprep.subr.mxu0 0.0
    %10251 = vmatpush1.msra.mxu0 0.0
    %10252 = vmatprep.subr.mxu0 0.0
    %10253 = vmatpush1.msra.mxu0 0.0
    %10254 = vmatprep.subr.mxu0 0.0
    %10255 = vmatpush1.msra.mxu0 0.0
    %10256 = vmatprep.subr.mxu0 0.0
    %10257 = vmatpush1.msra.mxu0 0.0
    %10258 = vmatprep.subr.mxu0 0.0
    %10259 = vmatpush1.msra.mxu0 0.0
    %10260 = vmatprep.subr.mxu0 0.0
    %10261 = vmatpush1.msra.mxu0 0.0
    %10262 = vmatprep.subr.mxu0 0.0
    %10263 = vmatpush1.msra.mxu0 0.0
    %10264 = vmatprep.subr.mxu0 0.0
    %10265 = vmatpush1.msra.mxu0 0.0
    %10266 = vmatprep.subr.mxu0 0.0
    %10267 = vmatpush1.msra.mxu0 0.0
    %10268 = vmatprep.subr.mxu0 0.0
    %10269 = vmatpush1.msra.mxu0 0.0
    %10270 = vmatprep.subr.mxu0 0.0
    %10271 = vmatpush1.msra.mxu0 0.0
    %10272 = vmatprep.subr.mxu0 0.0
    %10273 = vmatpush1.msra.mxu0 0.0
    %10274 = vmatprep.subr.mxu0 0.0
    %10275 = vmatpush1.msra.mxu0 0.0
    %10276 = vmatprep.subr.mxu0 0.0
    %10277 = vmatpush1.msra.mxu0 0.0
    %10278 = vmatprep.subr.mxu0 0.0
    %10279 = vmatpush1.msra.mxu0 0.0
    %10280 = vmatprep.subr.mxu0 0.0
    %10281 = vmatpush1.msra.mxu0 0.0
    %10282 = vmatprep.subr.mxu0 0.0
    %10283 = vmatpush1.msra.mxu0 0.0
    %10284 = vmatprep.subr.mxu0 0.0
    %10285 = vmatpush1.msra.mxu0 0.0
    %10286 = vmatprep.subr.mxu0 0.0
    %10287 = vmatpush1.msra.mxu0 0.0
    %10288 = vmatprep.subr.mxu0 0.0
    %10289 = vmatpush1.msra.mxu0 0.0
    %10290 = vmatprep.subr.mxu0 0.0
    %10291 = vmatpush1.msra.mxu0 0.0
    %10292 = vmatprep.subr.mxu0 0.0
    %10293 = vmatpush1.msra.mxu0 0.0
    %10294 = vmatprep.subr.mxu0 0.0
    %10295 = vmatpush1.msra.mxu0 0.0
    %10296 = vmatprep.subr.mxu0 0.0
    %10297 = vmatpush1.msra.mxu0 0.0
    %10298 = vmatprep.subr.mxu0 0.0
    %10299 = vmatpush1.msra.mxu0 0.0
    %10300 = vmatprep.mubr.f32.mxu0 0.0
    %v10301 = vand.u32 %v10150, 4294901760
    %10302 = vmatmul.mubr.f32.gmra.mrb[0].mxu0 %v10301
    %v10303 = vpop.f32.mrb[0].mxu0
    %v10304 = vadd.f32 %v10228, %v10303
    %v10305 = vpop.f32.mrb[0].mxu0
    %10306 = vdwg.mxu0
    %10307 = vmatprep.subr.mxu0 0.0
    %v10308 = vand.u32 %v10153, 4294901760
    %v10309 = vsub.f32 %v10153, %v10308
    %10310 = vmatpush1.msra.mxu0 %v10309
    %10311 = vmatprep.subr.mxu0 0.0
    %10312 = vmatpush1.msra.mxu0 0.0
    %10313 = vmatprep.subr.mxu0 0.0
    %10314 = vmatpush1.msra.mxu0 0.0
    %10315 = vmatprep.subr.mxu0 0.0
    %10316 = vmatpush1.msra.mxu0 0.0
    %10317 = vmatprep.subr.mxu0 0.0
    %10318 = vmatpush1.msra.mxu0 0.0
    %10319 = vmatprep.subr.mxu0 0.0
    %10320 = vmatpush1.msra.mxu0 0.0
    %10321 = vmatprep.subr.mxu0 0.0
    %10322 = vmatpush1.msra.mxu0 0.0
    %10323 = vmatprep.subr.mxu0 0.0
    %10324 = vmatpush1.msra.mxu0 0.0
    %10325 = vmatprep.subr.mxu0 0.0
    %10326 = vmatpush1.msra.mxu0 0.0
    %10327 = vmatprep.subr.mxu0 0.0
    %10328 = vmatpush1.msra.mxu0 0.0
    %10329 = vmatprep.subr.mxu0 0.0
    %10330 = vmatpush1.msra.mxu0 0.0
    %10331 = vmatprep.subr.mxu0 0.0
    %10332 = vmatpush1.msra.mxu0 0.0
    %10333 = vmatprep.subr.mxu0 0.0
    %10334 = vmatpush1.msra.mxu0 0.0
    %10335 = vmatprep.subr.mxu0 0.0
    %10336 = vmatpush1.msra.mxu0 0.0
    %10337 = vmatprep.subr.mxu0 0.0
    %10338 = vmatpush1.msra.mxu0 0.0
    %10339 = vmatprep.subr.mxu0 0.0
    %10340 = vmatpush1.msra.mxu0 0.0
    %10341 = vmatprep.subr.mxu0 0.0
    %10342 = vmatpush1.msra.mxu0 0.0
    %10343 = vmatprep.subr.mxu0 0.0
    %10344 = vmatpush1.msra.mxu0 0.0
    %10345 = vmatprep.subr.mxu0 0.0
    %10346 = vmatpush1.msra.mxu0 0.0
    %10347 = vmatprep.subr.mxu0 0.0
    %10348 = vmatpush1.msra.mxu0 0.0
    %10349 = vmatprep.subr.mxu0 0.0
    %10350 = vmatpush1.msra.mxu0 0.0
    %10351 = vmatprep.subr.mxu0 0.0
    %10352 = vmatpush1.msra.mxu0 0.0
    %10353 = vmatprep.subr.mxu0 0.0
    %10354 = vmatpush1.msra.mxu0 0.0
    %10355 = vmatprep.subr.mxu0 0.0
    %10356 = vmatpush1.msra.mxu0 0.0
    %10357 = vmatprep.subr.mxu0 0.0
    %10358 = vmatpush1.msra.mxu0 0.0
    %10359 = vmatprep.subr.mxu0 0.0
    %10360 = vmatpush1.msra.mxu0 0.0
    %10361 = vmatprep.subr.mxu0 0.0
    %10362 = vmatpush1.msra.mxu0 0.0
    %10363 = vmatprep.subr.mxu0 0.0
    %10364 = vmatpush1.msra.mxu0 0.0
    %10365 = vmatprep.subr.mxu0 0.0
    %10366 = vmatpush1.msra.mxu0 0.0
    %10367 = vmatprep.subr.mxu0 0.0
    %10368 = vmatpush1.msra.mxu0 0.0
    %10369 = vmatprep.subr.mxu0 0.0
    %10370 = vmatpush1.msra.mxu0 0.0
    %10371 = vmatprep.subr.mxu0 0.0
    %10372 = vmatpush1.msra.mxu0 0.0
    %10373 = vmatprep.mubr.f32.mxu0 0.0
    %v10374 = vand.u32 %v10150, 4294901760
    %v10375 = vsub.f32 %v10150, %v10374
    %10376 = vmatmul.mubr.f32.gmra.mrb[0].mxu0 %v10375
    %v10377 = vpop.f32.mrb[0].mxu0
    %v10378 = vadd.f32 %v10304, %v10377
    %v10379 = vpop.f32.mrb[0].mxu0
    %10380 = vdwg.mxu0
    %10381 = vmatprep.subr.mxu0 0.0
    %v10382 = vand.u32 %v10153, 4294901760
    %10383 = vmatpush1.msra.mxu0 %v10382
    %10384 = vmatprep.subr.mxu0 0.0
    %10385 = vmatpush1.msra.mxu0 0.0
    %10386 = vmatprep.subr.mxu0 0.0
    %10387 = vmatpush1.msra.mxu0 0.0
    %10388 = vmatprep.subr.mxu0 0.0
    %10389 = vmatpush1.msra.mxu0 0.0
    %10390 = vmatprep.subr.mxu0 0.0
    %10391 = vmatpush1.msra.mxu0 0.0
    %10392 = vmatprep.subr.mxu0 0.0
    %10393 = vmatpush1.msra.mxu0 0.0
    %10394 = vmatprep.subr.mxu0 0.0
    %10395 = vmatpush1.msra.mxu0 0.0
    %10396 = vmatprep.subr.mxu0 0.0
    %10397 = vmatpush1.msra.mxu0 0.0
    %10398 = vmatprep.subr.mxu0 0.0
    %10399 = vmatpush1.msra.mxu0 0.0
    %10400 = vmatprep.subr.mxu0 0.0
    %10401 = vmatpush1.msra.mxu0 0.0
    %10402 = vmatprep.subr.mxu0 0.0
    %10403 = vmatpush1.msra.mxu0 0.0
    %10404 = vmatprep.subr.mxu0 0.0
    %10405 = vmatpush1.msra.mxu0 0.0
    %10406 = vmatprep.subr.mxu0 0.0
    %10407 = vmatpush1.msra.mxu0 0.0
    %10408 = vmatprep.subr.mxu0 0.0
    %10409 = vmatpush1.msra.mxu0 0.0
    %10410 = vmatprep.subr.mxu0 0.0
    %10411 = vmatpush1.msra.mxu0 0.0
    %10412 = vmatprep.subr.mxu0 0.0
    %10413 = vmatpush1.msra.mxu0 0.0
    %10414 = vmatprep.subr.mxu0 0.0
    %10415 = vmatpush1.msra.mxu0 0.0
    %10416 = vmatprep.subr.mxu0 0.0
    %10417 = vmatpush1.msra.mxu0 0.0
    %10418 = vmatprep.subr.mxu0 0.0
    %10419 = vmatpush1.msra.mxu0 0.0
    %10420 = vmatprep.subr.mxu0 0.0
    %10421 = vmatpush1.msra.mxu0 0.0
    %10422 = vmatprep.subr.mxu0 0.0
    %10423 = vmatpush1.msra.mxu0 0.0
    %10424 = vmatprep.subr.mxu0 0.0
    %10425 = vmatpush1.msra.mxu0 0.0
    %10426 = vmatprep.subr.mxu0 0.0
    %10427 = vmatpush1.msra.mxu0 0.0
    %10428 = vmatprep.subr.mxu0 0.0
    %10429 = vmatpush1.msra.mxu0 0.0
    %10430 = vmatprep.subr.mxu0 0.0
    %10431 = vmatpush1.msra.mxu0 0.0
    %10432 = vmatprep.subr.mxu0 0.0
    %10433 = vmatpush1.msra.mxu0 0.0
    %10434 = vmatprep.subr.mxu0 0.0
    %10435 = vmatpush1.msra.mxu0 0.0
    %10436 = vmatprep.subr.mxu0 0.0
    %10437 = vmatpush1.msra.mxu0 0.0
    %10438 = vmatprep.subr.mxu0 0.0
    %10439 = vmatpush1.msra.mxu0 0.0
    %10440 = vmatprep.subr.mxu0 0.0
    %10441 = vmatpush1.msra.mxu0 0.0
    %10442 = vmatprep.subr.mxu0 0.0
    %10443 = vmatpush1.msra.mxu0 0.0
    %10444 = vmatprep.subr.mxu0 0.0
    %10445 = vmatpush1.msra.mxu0 0.0
    %10446 = vmatprep.mubr.f32.mxu0 0.0
    %v10447 = vand.u32 %v10150, 4294901760
    %v10448 = vsub.f32 %v10150, %v10447
    %v10449 = vand.u32 %v10448, 4294901760
    %10450 = vmatmul.mubr.f32.gmra.mrb[0].mxu0 %v10449
    %v10451 = vpop.f32.mrb[0].mxu0
    %v10452 = vadd.f32 %v10378, %v10451
    %v10453 = vpop.f32.mrb[0].mxu0
    %10454 = vdwg.mxu0
    %10455 = vmatprep.subr.mxu0 0.0
    %v10456 = vand.u32 %v10153, 4294901760
    %v10457 = vsub.f32 %v10153, %v10456
    %v10458 = vand.u32 %v10457, 4294901760
    %10459 = vmatpush1.msra.mxu0 %v10458
    %10460 = vmatprep.subr.mxu0 0.0
    %10461 = vmatpush1.msra.mxu0 0.0
    %10462 = vmatprep.subr.mxu0 0.0
    %10463 = vmatpush1.msra.mxu0 0.0
    %10464 = vmatprep.subr.mxu0 0.0
    %10465 = vmatpush1.msra.mxu0 0.0
    %10466 = vmatprep.subr.mxu0 0.0
    %10467 = vmatpush1.msra.mxu0 0.0
    %10468 = vmatprep.subr.mxu0 0.0
    %10469 = vmatpush1.msra.mxu0 0.0
    %10470 = vmatprep.subr.mxu0 0.0
    %10471 = vmatpush1.msra.mxu0 0.0
    %10472 = vmatprep.subr.mxu0 0.0
    %10473 = vmatpush1.msra.mxu0 0.0
    %10474 = vmatprep.subr.mxu0 0.0
    %10475 = vmatpush1.msra.mxu0 0.0
    %10476 = vmatprep.subr.mxu0 0.0
    %10477 = vmatpush1.msra.mxu0 0.0
    %10478 = vmatprep.subr.mxu0 0.0
    %10479 = vmatpush1.msra.mxu0 0.0
    %10480 = vmatprep.subr.mxu0 0.0
    %10481 = vmatpush1.msra.mxu0 0.0
    %10482 = vmatprep.subr.mxu0 0.0
    %10483 = vmatpush1.msra.mxu0 0.0
    %10484 = vmatprep.subr.mxu0 0.0
    %10485 = vmatpush1.msra.mxu0 0.0
    %10486 = vmatprep.subr.mxu0 0.0
    %10487 = vmatpush1.msra.mxu0 0.0
    %10488 = vmatprep.subr.mxu0 0.0
    %10489 = vmatpush1.msra.mxu0 0.0
    %10490 = vmatprep.subr.mxu0 0.0
    %10491 = vmatpush1.msra.mxu0 0.0
    %10492 = vmatprep.subr.mxu0 0.0
    %10493 = vmatpush1.msra.mxu0 0.0
    %10494 = vmatprep.subr.mxu0 0.0
    %10495 = vmatpush1.msra.mxu0 0.0
    %10496 = vmatprep.subr.mxu0 0.0
    %10497 = vmatpush1.msra.mxu0 0.0
    %10498 = vmatprep.subr.mxu0 0.0
    %10499 = vmatpush1.msra.mxu0 0.0
    %10500 = vmatprep.subr.mxu0 0.0
    %10501 = vmatpush1.msra.mxu0 0.0
    %10502 = vmatprep.subr.mxu0 0.0
    %10503 = vmatpush1.msra.mxu0 0.0
    %10504 = vmatprep.subr.mxu0 0.0
    %10505 = vmatpush1.msra.mxu0 0.0
    %10506 = vmatprep.subr.mxu0 0.0
    %10507 = vmatpush1.msra.mxu0 0.0
    %10508 = vmatprep.subr.mxu0 0.0
    %10509 = vmatpush1.msra.mxu0 0.0
    %10510 = vmatprep.subr.mxu0 0.0
    %10511 = vmatpush1.msra.mxu0 0.0
    %10512 = vmatprep.subr.mxu0 0.0
    %10513 = vmatpush1.msra.mxu0 0.0
    %10514 = vmatprep.subr.mxu0 0.0
    %10515 = vmatpush1.msra.mxu0 0.0
    %10516 = vmatprep.subr.mxu0 0.0
    %10517 = vmatpush1.msra.mxu0 0.0
    %10518 = vmatprep.subr.mxu0 0.0
    %10519 = vmatpush1.msra.mxu0 0.0
    %10520 = vmatprep.subr.mxu0 0.0
    %10521 = vmatpush1.msra.mxu0 0.0
    %10522 = vmatprep.mubr.f32.mxu0 0.0
    %v10523 = vand.u32 %v10150, 4294901760
    %10524 = vmatmul.mubr.f32.gmra.mrb[0].mxu0 %v10523
    %v10525 = vpop.f32.mrb[0].mxu0
    %v10526 = vadd.f32 %v10452, %v10525
    %v10527 = vpop.f32.mrb[0].mxu0
    %10528 = vdwg.mxu0
    %10529 = vmatprep.subr.mxu0 0.0
    %v10530 = vand.u32 %v10153, 4294901760
    %10531 = vmatpush1.msra.mxu0 %v10530
    %10532 = vmatprep.subr.mxu0 0.0
    %10533 = vmatpush1.msra.mxu0 0.0
    %10534 = vmatprep.subr.mxu0 0.0
    %10535 = vmatpush1.msra.mxu0 0.0
    %10536 = vmatprep.subr.mxu0 0.0
    %10537 = vmatpush1.msra.mxu0 0.0
    %10538 = vmatprep.subr.mxu0 0.0
    %10539 = vmatpush1.msra.mxu0 0.0
    %10540 = vmatprep.subr.mxu0 0.0
    %10541 = vmatpush1.msra.mxu0 0.0
    %10542 = vmatprep.subr.mxu0 0.0
    %10543 = vmatpush1.msra.mxu0 0.0
    %10544 = vmatprep.subr.mxu0 0.0
    %10545 = vmatpush1.msra.mxu0 0.0
    %10546 = vmatprep.subr.mxu0 0.0
    %10547 = vmatpush1.msra.mxu0 0.0
    %10548 = vmatprep.subr.mxu0 0.0
    %10549 = vmatpush1.msra.mxu0 0.0
    %10550 = vmatprep.subr.mxu0 0.0
    %10551 = vmatpush1.msra.mxu0 0.0
    %10552 = vmatprep.subr.mxu0 0.0
    %10553 = vmatpush1.msra.mxu0 0.0
    %10554 = vmatprep.subr.mxu0 0.0
    %10555 = vmatpush1.msra.mxu0 0.0
    %10556 = vmatprep.subr.mxu0 0.0
    %10557 = vmatpush1.msra.mxu0 0.0
    %10558 = vmatprep.subr.mxu0 0.0
    %10559 = vmatpush1.msra.mxu0 0.0
    %10560 = vmatprep.subr.mxu0 0.0
    %10561 = vmatpush1.msra.mxu0 0.0
    %10562 = vmatprep.subr.mxu0 0.0
    %10563 = vmatpush1.msra.mxu0 0.0
    %10564 = vmatprep.subr.mxu0 0.0
    %10565 = vmatpush1.msra.mxu0 0.0
    %10566 = vmatprep.subr.mxu0 0.0
    %10567 = vmatpush1.msra.mxu0 0.0
    %10568 = vmatprep.subr.mxu0 0.0
    %10569 = vmatpush1.msra.mxu0 0.0
    %10570 = vmatprep.subr.mxu0 0.0
    %10571 = vmatpush1.msra.mxu0 0.0
    %10572 = vmatprep.subr.mxu0 0.0
    %10573 = vmatpush1.msra.mxu0 0.0
    %10574 = vmatprep.subr.mxu0 0.0
    %10575 = vmatpush1.msra.mxu0 0.0
    %10576 = vmatprep.subr.mxu0 0.0
    %10577 = vmatpush1.msra.mxu0 0.0
    %10578 = vmatprep.subr.mxu0 0.0
    %10579 = vmatpush1.msra.mxu0 0.0
    %10580 = vmatprep.subr.mxu0 0.0
    %10581 = vmatpush1.msra.mxu0 0.0
    %10582 = vmatprep.subr.mxu0 0.0
    %10583 = vmatpush1.msra.mxu0 0.0
    %10584 = vmatprep.subr.mxu0 0.0
    %10585 = vmatpush1.msra.mxu0 0.0
    %10586 = vmatprep.subr.mxu0 0.0
    %10587 = vmatpush1.msra.mxu0 0.0
    %10588 = vmatprep.subr.mxu0 0.0
    %10589 = vmatpush1.msra.mxu0 0.0
    %10590 = vmatprep.subr.mxu0 0.0
    %10591 = vmatpush1.msra.mxu0 0.0
    %10592 = vmatprep.subr.mxu0 0.0
    %10593 = vmatpush1.msra.mxu0 0.0
    %10594 = vmatprep.mubr.f32.mxu0 0.0
    %v10595 = vand.u32 %v10150, 4294901760
    %10596 = vmatmul.mubr.f32.gmra.mrb[0].mxu0 %v10595
    %v10597 = vpop.f32.mrb[0].mxu0
    %v10598 = vadd.f32 %v10526, %v10597
    %v10599 = vpop.f32.mrb[0].mxu0
    %10600 = vdwg.mxu0
    %v10602 = vsel %vm1255, %v10148, 0
    %10604 = vmatprep.subr.mxu0 0.0
    %v10605 = vand.u32 %v10153, 4294901760
    %10606 = vmatpush1.msra.mxu0 %v10605
    %10607 = vmatprep.subr.mxu0 0.0
    %10608 = vmatpush1.msra.mxu0 0.0
    %10609 = vmatprep.subr.mxu0 0.0
    %10610 = vmatpush1.msra.mxu0 0.0
    %10611 = vmatprep.subr.mxu0 0.0
    %10612 = vmatpush1.msra.mxu0 0.0
    %10613 = vmatprep.subr.mxu0 0.0
    %10614 = vmatpush1.msra.mxu0 0.0
    %10615 = vmatprep.subr.mxu0 0.0
    %10616 = vmatpush1.msra.mxu0 0.0
    %10617 = vmatprep.subr.mxu0 0.0
    %10618 = vmatpush1.msra.mxu0 0.0
    %10619 = vmatprep.subr.mxu0 0.0
    %10620 = vmatpush1.msra.mxu0 0.0
    %10621 = vmatprep.subr.mxu0 0.0
    %10622 = vmatpush1.msra.mxu0 0.0
    %10623 = vmatprep.subr.mxu0 0.0
    %10624 = vmatpush1.msra.mxu0 0.0
    %10625 = vmatprep.subr.mxu0 0.0
    %10626 = vmatpush1.msra.mxu0 0.0
    %10627 = vmatprep.subr.mxu0 0.0
    %10628 = vmatpush1.msra.mxu0 0.0
    %10629 = vmatprep.subr.mxu0 0.0
    %10630 = vmatpush1.msra.mxu0 0.0
    %10631 = vmatprep.subr.mxu0 0.0
    %10632 = vmatpush1.msra.mxu0 0.0
    %10633 = vmatprep.subr.mxu0 0.0
    %10634 = vmatpush1.msra.mxu0 0.0
    %10635 = vmatprep.subr.mxu0 0.0
    %10636 = vmatpush1.msra.mxu0 0.0
    %10637 = vmatprep.subr.mxu0 0.0
    %10638 = vmatpush1.msra.mxu0 0.0
    %10639 = vmatprep.subr.mxu0 0.0
    %10640 = vmatpush1.msra.mxu0 0.0
    %10641 = vmatprep.subr.mxu0 0.0
    %10642 = vmatpush1.msra.mxu0 0.0
    %10643 = vmatprep.subr.mxu0 0.0
    %10644 = vmatpush1.msra.mxu0 0.0
    %10645 = vmatprep.subr.mxu0 0.0
    %10646 = vmatpush1.msra.mxu0 0.0
    %10647 = vmatprep.subr.mxu0 0.0
    %10648 = vmatpush1.msra.mxu0 0.0
    %10649 = vmatprep.subr.mxu0 0.0
    %10650 = vmatpush1.msra.mxu0 0.0
    %10651 = vmatprep.subr.mxu0 0.0
    %10652 = vmatpush1.msra.mxu0 0.0
    %10653 = vmatprep.subr.mxu0 0.0
    %10654 = vmatpush1.msra.mxu0 0.0
    %10655 = vmatprep.subr.mxu0 0.0
    %10656 = vmatpush1.msra.mxu0 0.0
    %10657 = vmatprep.subr.mxu0 0.0
    %10658 = vmatpush1.msra.mxu0 0.0
    %10659 = vmatprep.subr.mxu0 0.0
    %10660 = vmatpush1.msra.mxu0 0.0
    %10661 = vmatprep.subr.mxu0 0.0
    %10662 = vmatpush1.msra.mxu0 0.0
    %10663 = vmatprep.subr.mxu0 0.0
    %10664 = vmatpush1.msra.mxu0 0.0
    %10665 = vmatprep.subr.mxu0 0.0
    %10666 = vmatpush1.msra.mxu0 0.0
    %10667 = vmatprep.subr.mxu0 0.0
    %10668 = vmatpush1.msra.mxu0 0.0
    %10669 = vmatprep.mubr.f32.mxu0 0.0
    %v10670 = vand.u32 %v10602, 4294901760
    %v10671 = vsub.f32 %v10602, %v10670
    %v10672 = vand.u32 %v10671, 4294901760
    %v10673 = vsub.f32 %v10671, %v10672
    %v10674 = vand.u32 %v10673, 4294901760
    %10675 = vmatmul.mubr.f32.gmra.mrb[0].mxu0 %v10674
    %v10676 = vpop.f32.mrb[0].mxu0
    %v10677 = vadd.f32 0.0, %v10676
    %v10678 = vpop.f32.mrb[0].mxu0
    %10679 = vdwg.mxu0
    %10680 = vmatprep.subr.mxu0 0.0
    %v10681 = vand.u32 %v10153, 4294901760
    %v10682 = vsub.f32 %v10153, %v10681
    %v10683 = vand.u32 %v10682, 4294901760
    %v10684 = vsub.f32 %v10682, %v10683
    %v10685 = vand.u32 %v10684, 4294901760
    %10686 = vmatpush1.msra.mxu0 %v10685
    %10687 = vmatprep.subr.mxu0 0.0
    %10688 = vmatpush1.msra.mxu0 0.0
    %10689 = vmatprep.subr.mxu0 0.0
    %10690 = vmatpush1.msra.mxu0 0.0
    %10691 = vmatprep.subr.mxu0 0.0
    %10692 = vmatpush1.msra.mxu0 0.0
    %10693 = vmatprep.subr.mxu0 0.0
    %10694 = vmatpush1.msra.mxu0 0.0
    %10695 = vmatprep.subr.mxu0 0.0
    %10696 = vmatpush1.msra.mxu0 0.0
    %10697 = vmatprep.subr.mxu0 0.0
    %10698 = vmatpush1.msra.mxu0 0.0
    %10699 = vmatprep.subr.mxu0 0.0
    %10700 = vmatpush1.msra.mxu0 0.0
    %10701 = vmatprep.subr.mxu0 0.0
    %10702 = vmatpush1.msra.mxu0 0.0
    %10703 = vmatprep.subr.mxu0 0.0
    %10704 = vmatpush1.msra.mxu0 0.0
    %10705 = vmatprep.subr.mxu0 0.0
    %10706 = vmatpush1.msra.mxu0 0.0
    %10707 = vmatprep.subr.mxu0 0.0
    %10708 = vmatpush1.msra.mxu0 0.0
    %10709 = vmatprep.subr.mxu0 0.0
    %10710 = vmatpush1.msra.mxu0 0.0
    %10711 = vmatprep.subr.mxu0 0.0
    %10712 = vmatpush1.msra.mxu0 0.0
    %10713 = vmatprep.subr.mxu0 0.0
    %10714 = vmatpush1.msra.mxu0 0.0
    %10715 = vmatprep.subr.mxu0 0.0
    %10716 = vmatpush1.msra.mxu0 0.0
    %10717 = vmatprep.subr.mxu0 0.0
    %10718 = vmatpush1.msra.mxu0 0.0
    %10719 = vmatprep.subr.mxu0 0.0
    %10720 = vmatpush1.msra.mxu0 0.0
    %10721 = vmatprep.subr.mxu0 0.0
    %10722 = vmatpush1.msra.mxu0 0.0
    %10723 = vmatprep.subr.mxu0 0.0
    %10724 = vmatpush1.msra.mxu0 0.0
    %10725 = vmatprep.subr.mxu0 0.0
    %10726 = vmatpush1.msra.mxu0 0.0
    %10727 = vmatprep.subr.mxu0 0.0
    %10728 = vmatpush1.msra.mxu0 0.0
    %10729 = vmatprep.subr.mxu0 0.0
    %10730 = vmatpush1.msra.mxu0 0.0
    %10731 = vmatprep.subr.mxu0 0.0
    %10732 = vmatpush1.msra.mxu0 0.0
    %10733 = vmatprep.subr.mxu0 0.0
    %10734 = vmatpush1.msra.mxu0 0.0
    %10735 = vmatprep.subr.mxu0 0.0
    %10736 = vmatpush1.msra.mxu0 0.0
    %10737 = vmatprep.subr.mxu0 0.0
    %10738 = vmatpush1.msra.mxu0 0.0
    %10739 = vmatprep.subr.mxu0 0.0
    %10740 = vmatpush1.msra.mxu0 0.0
    %10741 = vmatprep.subr.mxu0 0.0
    %10742 = vmatpush1.msra.mxu0 0.0
    %10743 = vmatprep.subr.mxu0 0.0
    %10744 = vmatpush1.msra.mxu0 0.0
    %10745 = vmatprep.subr.mxu0 0.0
    %10746 = vmatpush1.msra.mxu0 0.0
    %10747 = vmatprep.subr.mxu0 0.0
    %10748 = vmatpush1.msra.mxu0 0.0
    %10749 = vmatprep.mubr.f32.mxu0 0.0
    %v10750 = vand.u32 %v10602, 4294901760
    %10751 = vmatmul.mubr.f32.gmra.mrb[0].mxu0 %v10750
    %v10752 = vpop.f32.mrb[0].mxu0
    %v10753 = vadd.f32 %v10677, %v10752
    %v10754 = vpop.f32.mrb[0].mxu0
    %10755 = vdwg.mxu0
    %10756 = vmatprep.subr.mxu0 0.0
    %v10757 = vand.u32 %v10153, 4294901760
    %v10758 = vsub.f32 %v10153, %v10757
    %10759 = vmatpush1.msra.mxu0 %v10758
    %10760 = vmatprep.subr.mxu0 0.0
    %10761 = vmatpush1.msra.mxu0 0.0
    %10762 = vmatprep.subr.mxu0 0.0
    %10763 = vmatpush1.msra.mxu0 0.0
    %10764 = vmatprep.subr.mxu0 0.0
    %10765 = vmatpush1.msra.mxu0 0.0
    %10766 = vmatprep.subr.mxu0 0.0
    %10767 = vmatpush1.msra.mxu0 0.0
    %10768 = vmatprep.subr.mxu0 0.0
    %10769 = vmatpush1.msra.mxu0 0.0
    %10770 = vmatprep.subr.mxu0 0.0
    %10771 = vmatpush1.msra.mxu0 0.0
    %10772 = vmatprep.subr.mxu0 0.0
    %10773 = vmatpush1.msra.mxu0 0.0
    %10774 = vmatprep.subr.mxu0 0.0
    %10775 = vmatpush1.msra.mxu0 0.0
    %10776 = vmatprep.subr.mxu0 0.0
    %10777 = vmatpush1.msra.mxu0 0.0
    %10778 = vmatprep.subr.mxu0 0.0
    %10779 = vmatpush1.msra.mxu0 0.0
    %10780 = vmatprep.subr.mxu0 0.0
    %10781 = vmatpush1.msra.mxu0 0.0
    %10782 = vmatprep.subr.mxu0 0.0
    %10783 = vmatpush1.msra.mxu0 0.0
    %10784 = vmatprep.subr.mxu0 0.0
    %10785 = vmatpush1.msra.mxu0 0.0
    %10786 = vmatprep.subr.mxu0 0.0
    %10787 = vmatpush1.msra.mxu0 0.0
    %10788 = vmatprep.subr.mxu0 0.0
    %10789 = vmatpush1.msra.mxu0 0.0
    %10790 = vmatprep.subr.mxu0 0.0
    %10791 = vmatpush1.msra.mxu0 0.0
    %10792 = vmatprep.subr.mxu0 0.0
    %10793 = vmatpush1.msra.mxu0 0.0
    %10794 = vmatprep.subr.mxu0 0.0
    %10795 = vmatpush1.msra.mxu0 0.0
    %10796 = vmatprep.subr.mxu0 0.0
    %10797 = vmatpush1.msra.mxu0 0.0
    %10798 = vmatprep.subr.mxu0 0.0
    %10799 = vmatpush1.msra.mxu0 0.0
    %10800 = vmatprep.subr.mxu0 0.0
    %10801 = vmatpush1.msra.mxu0 0.0
    %10802 = vmatprep.subr.mxu0 0.0
    %10803 = vmatpush1.msra.mxu0 0.0
    %10804 = vmatprep.subr.mxu0 0.0
    %10805 = vmatpush1.msra.mxu0 0.0
    %10806 = vmatprep.subr.mxu0 0.0
    %10807 = vmatpush1.msra.mxu0 0.0
    %10808 = vmatprep.subr.mxu0 0.0
    %10809 = vmatpush1.msra.mxu0 0.0
    %10810 = vmatprep.subr.mxu0 0.0
    %10811 = vmatpush1.msra.mxu0 0.0
    %10812 = vmatprep.subr.mxu0 0.0
    %10813 = vmatpush1.msra.mxu0 0.0
    %10814 = vmatprep.subr.mxu0 0.0
    %10815 = vmatpush1.msra.mxu0 0.0
    %10816 = vmatprep.subr.mxu0 0.0
    %10817 = vmatpush1.msra.mxu0 0.0
    %10818 = vmatprep.subr.mxu0 0.0
    %10819 = vmatpush1.msra.mxu0 0.0
    %10820 = vmatprep.subr.mxu0 0.0
    %10821 = vmatpush1.msra.mxu0 0.0
    %10822 = vmatprep.mubr.f32.mxu0 0.0
    %v10823 = vand.u32 %v10602, 4294901760
    %v10824 = vsub.f32 %v10602, %v10823
    %10825 = vmatmul.mubr.f32.gmra.mrb[0].mxu0 %v10824
    %v10826 = vpop.f32.mrb[0].mxu0
    %v10827 = vadd.f32 %v10753, %v10826
    %v10828 = vpop.f32.mrb[0].mxu0
    %10829 = vdwg.mxu0
    %10830 = vmatprep.subr.mxu0 0.0
    %v10831 = vand.u32 %v10153, 4294901760
    %10832 = vmatpush1.msra.mxu0 %v10831
    %10833 = vmatprep.subr.mxu0 0.0
    %10834 = vmatpush1.msra.mxu0 0.0
    %10835 = vmatprep.subr.mxu0 0.0
    %10836 = vmatpush1.msra.mxu0 0.0
    %10837 = vmatprep.subr.mxu0 0.0
    %10838 = vmatpush1.msra.mxu0 0.0
    %10839 = vmatprep.subr.mxu0 0.0
    %10840 = vmatpush1.msra.mxu0 0.0
    %10841 = vmatprep.subr.mxu0 0.0
    %10842 = vmatpush1.msra.mxu0 0.0
    %10843 = vmatprep.subr.mxu0 0.0
    %10844 = vmatpush1.msra.mxu0 0.0
    %10845 = vmatprep.subr.mxu0 0.0
    %10846 = vmatpush1.msra.mxu0 0.0
    %10847 = vmatprep.subr.mxu0 0.0
    %10848 = vmatpush1.msra.mxu0 0.0
    %10849 = vmatprep.subr.mxu0 0.0
    %10850 = vmatpush1.msra.mxu0 0.0
    %10851 = vmatprep.subr.mxu0 0.0
    %10852 = vmatpush1.msra.mxu0 0.0
    %10853 = vmatprep.subr.mxu0 0.0
    %10854 = vmatpush1.msra.mxu0 0.0
    %10855 = vmatprep.subr.mxu0 0.0
    %10856 = vmatpush1.msra.mxu0 0.0
    %10857 = vmatprep.subr.mxu0 0.0
    %10858 = vmatpush1.msra.mxu0 0.0
    %10859 = vmatprep.subr.mxu0 0.0
    %10860 = vmatpush1.msra.mxu0 0.0
    %10861 = vmatprep.subr.mxu0 0.0
    %10862 = vmatpush1.msra.mxu0 0.0
    %10863 = vmatprep.subr.mxu0 0.0
    %10864 = vmatpush1.msra.mxu0 0.0
    %10865 = vmatprep.subr.mxu0 0.0
    %10866 = vmatpush1.msra.mxu0 0.0
    %10867 = vmatprep.subr.mxu0 0.0
    %10868 = vmatpush1.msra.mxu0 0.0
    %10869 = vmatprep.subr.mxu0 0.0
    %10870 = vmatpush1.msra.mxu0 0.0
    %10871 = vmatprep.subr.mxu0 0.0
    %10872 = vmatpush1.msra.mxu0 0.0
    %10873 = vmatprep.subr.mxu0 0.0
    %10874 = vmatpush1.msra.mxu0 0.0
    %10875 = vmatprep.subr.mxu0 0.0
    %10876 = vmatpush1.msra.mxu0 0.0
    %10877 = vmatprep.subr.mxu0 0.0
    %10878 = vmatpush1.msra.mxu0 0.0
    %10879 = vmatprep.subr.mxu0 0.0
    %10880 = vmatpush1.msra.mxu0 0.0
    %10881 = vmatprep.subr.mxu0 0.0
    %10882 = vmatpush1.msra.mxu0 0.0
    %10883 = vmatprep.subr.mxu0 0.0
    %10884 = vmatpush1.msra.mxu0 0.0
    %10885 = vmatprep.subr.mxu0 0.0
    %10886 = vmatpush1.msra.mxu0 0.0
    %10887 = vmatprep.subr.mxu0 0.0
    %10888 = vmatpush1.msra.mxu0 0.0
    %10889 = vmatprep.subr.mxu0 0.0
    %10890 = vmatpush1.msra.mxu0 0.0
    %10891 = vmatprep.subr.mxu0 0.0
    %10892 = vmatpush1.msra.mxu0 0.0
    %10893 = vmatprep.subr.mxu0 0.0
    %10894 = vmatpush1.msra.mxu0 0.0
    %10895 = vmatprep.mubr.f32.mxu0 0.0
    %v10896 = vand.u32 %v10602, 4294901760
    %v10897 = vsub.f32 %v10602, %v10896
    %v10898 = vand.u32 %v10897, 4294901760
    %10899 = vmatmul.mubr.f32.gmra.mrb[0].mxu0 %v10898
    %v10900 = vpop.f32.mrb[0].mxu0
    %v10901 = vadd.f32 %v10827, %v10900
    %v10902 = vpop.f32.mrb[0].mxu0
    %10903 = vdwg.mxu0
    %10904 = vmatprep.subr.mxu0 0.0
    %v10905 = vand.u32 %v10153, 4294901760
    %v10906 = vsub.f32 %v10153, %v10905
    %v10907 = vand.u32 %v10906, 4294901760
    %10908 = vmatpush1.msra.mxu0 %v10907
    %10909 = vmatprep.subr.mxu0 0.0
    %10910 = vmatpush1.msra.mxu0 0.0
    %10911 = vmatprep.subr.mxu0 0.0
    %10912 = vmatpush1.msra.mxu0 0.0
    %10913 = vmatprep.subr.mxu0 0.0
    %10914 = vmatpush1.msra.mxu0 0.0
    %10915 = vmatprep.subr.mxu0 0.0
    %10916 = vmatpush1.msra.mxu0 0.0
    %10917 = vmatprep.subr.mxu0 0.0
    %10918 = vmatpush1.msra.mxu0 0.0
    %10919 = vmatprep.subr.mxu0 0.0
    %10920 = vmatpush1.msra.mxu0 0.0
    %10921 = vmatprep.subr.mxu0 0.0
    %10922 = vmatpush1.msra.mxu0 0.0
    %10923 = vmatprep.subr.mxu0 0.0
    %10924 = vmatpush1.msra.mxu0 0.0
    %10925 = vmatprep.subr.mxu0 0.0
    %10926 = vmatpush1.msra.mxu0 0.0
    %10927 = vmatprep.subr.mxu0 0.0
    %10928 = vmatpush1.msra.mxu0 0.0
    %10929 = vmatprep.subr.mxu0 0.0
    %10930 = vmatpush1.msra.mxu0 0.0
    %10931 = vmatprep.subr.mxu0 0.0
    %10932 = vmatpush1.msra.mxu0 0.0
    %10933 = vmatprep.subr.mxu0 0.0
    %10934 = vmatpush1.msra.mxu0 0.0
    %10935 = vmatprep.subr.mxu0 0.0
    %10936 = vmatpush1.msra.mxu0 0.0
    %10937 = vmatprep.subr.mxu0 0.0
    %10938 = vmatpush1.msra.mxu0 0.0
    %10939 = vmatprep.subr.mxu0 0.0
    %10940 = vmatpush1.msra.mxu0 0.0
    %10941 = vmatprep.subr.mxu0 0.0
    %10942 = vmatpush1.msra.mxu0 0.0
    %10943 = vmatprep.subr.mxu0 0.0
    %10944 = vmatpush1.msra.mxu0 0.0
    %10945 = vmatprep.subr.mxu0 0.0
    %10946 = vmatpush1.msra.mxu0 0.0
    %10947 = vmatprep.subr.mxu0 0.0
    %10948 = vmatpush1.msra.mxu0 0.0
    %10949 = vmatprep.subr.mxu0 0.0
    %10950 = vmatpush1.msra.mxu0 0.0
    %10951 = vmatprep.subr.mxu0 0.0
    %10952 = vmatpush1.msra.mxu0 0.0
    %10953 = vmatprep.subr.mxu0 0.0
    %10954 = vmatpush1.msra.mxu0 0.0
    %10955 = vmatprep.subr.mxu0 0.0
    %10956 = vmatpush1.msra.mxu0 0.0
    %10957 = vmatprep.subr.mxu0 0.0
    %10958 = vmatpush1.msra.mxu0 0.0
    %10959 = vmatprep.subr.mxu0 0.0
    %10960 = vmatpush1.msra.mxu0 0.0
    %10961 = vmatprep.subr.mxu0 0.0
    %10962 = vmatpush1.msra.mxu0 0.0
    %10963 = vmatprep.subr.mxu0 0.0
    %10964 = vmatpush1.msra.mxu0 0.0
    %10965 = vmatprep.subr.mxu0 0.0
    %10966 = vmatpush1.msra.mxu0 0.0
    %10967 = vmatprep.subr.mxu0 0.0
    %10968 = vmatpush1.msra.mxu0 0.0
    %10969 = vmatprep.subr.mxu0 0.0
    %10970 = vmatpush1.msra.mxu0 0.0
    %10971 = vmatprep.mubr.f32.mxu0 0.0
    %v10972 = vand.u32 %v10602, 4294901760
    %10973 = vmatmul.mubr.f32.gmra.mrb[0].mxu0 %v10972
    %v10974 = vpop.f32.mrb[0].mxu0
    %v10975 = vadd.f32 %v10901, %v10974
    %v10976 = vpop.f32.mrb[0].mxu0
    %10977 = vdwg.mxu0
    %10978 = vmatprep.subr.mxu0 0.0
    %v10979 = vand.u32 %v10153, 4294901760
    %10980 = vmatpush1.msra.mxu0 %v10979
    %10981 = vmatprep.subr.mxu0 0.0
    %10982 = vmatpush1.msra.mxu0 0.0
    %10983 = vmatprep.subr.mxu0 0.0
    %10984 = vmatpush1.msra.mxu0 0.0
    %10985 = vmatprep.subr.mxu0 0.0
    %10986 = vmatpush1.msra.mxu0 0.0
    %10987 = vmatprep.subr.mxu0 0.0
    %10988 = vmatpush1.msra.mxu0 0.0
    %10989 = vmatprep.subr.mxu0 0.0
    %10990 = vmatpush1.msra.mxu0 0.0
    %10991 = vmatprep.subr.mxu0 0.0
    %10992 = vmatpush1.msra.mxu0 0.0
    %10993 = vmatprep.subr.mxu0 0.0
    %10994 = vmatpush1.msra.mxu0 0.0
    %10995 = vmatprep.subr.mxu0 0.0
    %10996 = vmatpush1.msra.mxu0 0.0
    %10997 = vmatprep.subr.mxu0 0.0
    %10998 = vmatpush1.msra.mxu0 0.0
    %10999 = vmatprep.subr.mxu0 0.0
    %11000 = vmatpush1.msra.mxu0 0.0
    %11001 = vmatprep.subr.mxu0 0.0
    %11002 = vmatpush1.msra.mxu0 0.0
    %11003 = vmatprep.subr.mxu0 0.0
    %11004 = vmatpush1.msra.mxu0 0.0
    %11005 = vmatprep.subr.mxu0 0.0
    %11006 = vmatpush1.msra.mxu0 0.0
    %11007 = vmatprep.subr.mxu0 0.0
    %11008 = vmatpush1.msra.mxu0 0.0
    %11009 = vmatprep.subr.mxu0 0.0
    %11010 = vmatpush1.msra.mxu0 0.0
    %11011 = vmatprep.subr.mxu0 0.0
    %11012 = vmatpush1.msra.mxu0 0.0
    %11013 = vmatprep.subr.mxu0 0.0
    %11014 = vmatpush1.msra.mxu0 0.0
    %11015 = vmatprep.subr.mxu0 0.0
    %11016 = vmatpush1.msra.mxu0 0.0
    %11017 = vmatprep.subr.mxu0 0.0
    %11018 = vmatpush1.msra.mxu0 0.0
    %11019 = vmatprep.subr.mxu0 0.0
    %11020 = vmatpush1.msra.mxu0 0.0
    %11021 = vmatprep.subr.mxu0 0.0
    %11022 = vmatpush1.msra.mxu0 0.0
    %11023 = vmatprep.subr.mxu0 0.0
    %11024 = vmatpush1.msra.mxu0 0.0
    %11025 = vmatprep.subr.mxu0 0.0
    %11026 = vmatpush1.msra.mxu0 0.0
    %11027 = vmatprep.subr.mxu0 0.0
    %11028 = vmatpush1.msra.mxu0 0.0
    %11029 = vmatprep.subr.mxu0 0.0
    %11030 = vmatpush1.msra.mxu0 0.0
    %11031 = vmatprep.subr.mxu0 0.0
    %11032 = vmatpush1.msra.mxu0 0.0
    %11033 = vmatprep.subr.mxu0 0.0
    %11034 = vmatpush1.msra.mxu0 0.0
    %11035 = vmatprep.subr.mxu0 0.0
    %11036 = vmatpush1.msra.mxu0 0.0
    %11037 = vmatprep.subr.mxu0 0.0
    %11038 = vmatpush1.msra.mxu0 0.0
    %11039 = vmatprep.subr.mxu0 0.0
    %11040 = vmatpush1.msra.mxu0 0.0
    %11041 = vmatprep.subr.mxu0 0.0
    %11042 = vmatpush1.msra.mxu0 0.0
    %11043 = vmatprep.mubr.f32.mxu0 0.0
    %v11044 = vand.u32 %v10602, 4294901760
    %11045 = vmatmul.mubr.f32.gmra.mrb[0].mxu0 %v11044
    %v11046 = vpop.f32.mrb[0].mxu0
    %v11047 = vadd.f32 %v10975, %v11046
    %v11048 = vpop.f32.mrb[0].mxu0
    %11049 = vdwg.mxu0
    %v11050 = vlaneseq
    %v11051 = vshrl.u32 %v11050, 7
    %v11052 = vsub.s32 0, %v11051
    %v11053 = vrot.slane %v10598, %v11052
    %v11054 = vsub.f32 %v8968, %v11053
    %v11055 = vsub.f32 %v8973, %v11053
    %v11056 = vsub.f32 %v8978, %v11053
    %v11057 = vsub.f32 %v8983, %v11053
    %v11058 = vsub.f32 %v8988, %v11053
    %v11059 = vsub.f32 %v8993, %v11053
    %v11060 = vsub.f32 %v8998, %v11053
    %v11061 = vsub.f32 %v9003, %v11053
    %v11062 = vsub.f32 %v9008, %v11053
    %v11063 = vsub.f32 %v9013, %v11053
    %v11064 = vsub.f32 %v9018, %v11053
    %v11065 = vsub.f32 %v9023, %v11053
    %v11066 = vsub.f32 %v9028, %v11053
    %v11067 = vsub.f32 %v9033, %v11053
    %v11068 = vsub.f32 %v9038, %v11053
    %v11069 = vsub.f32 %v9043, %v11053
    %v11070 = vlaneseq
    %v11071 = vshrl.u32 %v11070, 7
    %v11072 = vsub.s32 0, %v11071
    %v11073 = vrot.slane %v11047, %v11072
    %v11074 = vmul.f32 %v11054, %v11073
    %v11075 = vmul.f32 %v11055, %v11073
    %v11076 = vmul.f32 %v11056, %v11073
    %v11077 = vmul.f32 %v11057, %v11073
    %v11078 = vmul.f32 %v11058, %v11073
    %v11079 = vmul.f32 %v11059, %v11073
    %v11080 = vmul.f32 %v11060, %v11073
    %v11081 = vmul.f32 %v11061, %v11073
    %v11082 = vmul.f32 %v11062, %v11073
    %v11083 = vmul.f32 %v11063, %v11073
    %v11084 = vmul.f32 %v11064, %v11073
    %v11085 = vmul.f32 %v11065, %v11073
    %v11086 = vmul.f32 %v11066, %v11073
    %v11087 = vmul.f32 %v11067, %v11073
    %v11088 = vmul.f32 %v11068, %v11073
    %v11089 = vmul.f32 %v11069, %v11073
    %11090 = vset.pattern.permute.xlu0 32
    %11091 = vperm.xlu0 %11090, %v85
    %v11092 = vpop.permute.xlu0 %11091
    %11094 = vset.pattern.permute.xlu0 32
    %11095 = vperm.xlu0 %11094, %v86
    %v11096 = vpop.permute.xlu0 %11095
    %11098 = vset.pattern.permute.xlu0 32
    %11099 = vperm.xlu0 %11098, %v87
    %v11100 = vpop.permute.xlu0 %11099
    %11102 = vset.pattern.permute.xlu0 32
    %11103 = vperm.xlu0 %11102, %v88
    %v11104 = vpop.permute.xlu0 %11103
    %11106 = vset.pattern.permute.xlu0 32
    %11107 = vperm.xlu0 %11106, %v89
    %v11108 = vpop.permute.xlu0 %11107
    %11110 = vset.pattern.permute.xlu0 32
    %11111 = vperm.xlu0 %11110, %v90
    %v11112 = vpop.permute.xlu0 %11111
    %11114 = vset.pattern.permute.xlu0 32
    %11115 = vperm.xlu0 %11114, %v91
    %v11116 = vpop.permute.xlu0 %11115
    %11118 = vset.pattern.permute.xlu0 32
    %11119 = vperm.xlu0 %11118, %v92
    %v11120 = vpop.permute.xlu0 %11119
    %11122 = vset.pattern.permute.xlu0 32
    %11123 = vperm.xlu0 %11122, %v93
    %v11124 = vpop.permute.xlu0 %11123
    %11126 = vset.pattern.permute.xlu0 32
    %11127 = vperm.xlu0 %11126, %v94
    %v11128 = vpop.permute.xlu0 %11127
    %11130 = vset.pattern.permute.xlu0 32
    %11131 = vperm.xlu0 %11130, %v95
    %v11132 = vpop.permute.xlu0 %11131
    %11134 = vset.pattern.permute.xlu0 32
    %11135 = vperm.xlu0 %11134, %v96
    %v11136 = vpop.permute.xlu0 %11135
    %11138 = vset.pattern.permute.xlu0 32
    %11139 = vperm.xlu0 %11138, %v97
    %v11140 = vpop.permute.xlu0 %11139
    %11142 = vset.pattern.permute.xlu0 32
    %11143 = vperm.xlu0 %11142, %v98
    %v11144 = vpop.permute.xlu0 %11143
    %11146 = vset.pattern.permute.xlu0 32
    %11147 = vperm.xlu0 %11146, %v99
    %v11148 = vpop.permute.xlu0 %11147
    %11150 = vset.pattern.permute.xlu0 32
    %11151 = vperm.xlu0 %11150, %v100
    %v11152 = vpop.permute.xlu0 %11151
    %v11154 = vmul.f32 %v11092, %v11074
    %v11155 = vmul.f32 %v11096, %v11075
    %v11156 = vmul.f32 %v11100, %v11076
    %v11157 = vmul.f32 %v11104, %v11077
    %v11158 = vmul.f32 %v11108, %v11078
    %v11159 = vmul.f32 %v11112, %v11079
    %v11160 = vmul.f32 %v11116, %v11080
    %v11161 = vmul.f32 %v11120, %v11081
    %v11162 = vmul.f32 %v11124, %v11082
    %v11163 = vmul.f32 %v11128, %v11083
    %v11164 = vmul.f32 %v11132, %v11084
    %v11165 = vmul.f32 %v11136, %v11085
    %v11166 = vmul.f32 %v11140, %v11086
    %v11167 = vmul.f32 %v11144, %v11087
    %v11168 = vmul.f32 %v11148, %v11088
    %v11169 = vmul.f32 %v11152, %v11089
    %11170 = vset.pattern.permute.xlu0 33
    %11171 = vperm.xlu0 %11170, %v85
    %v11172 = vpop.permute.xlu0 %11171
    %11174 = vset.pattern.permute.xlu0 33
    %11175 = vperm.xlu0 %11174, %v86
    %v11176 = vpop.permute.xlu0 %11175
    %11178 = vset.pattern.permute.xlu0 33
    %11179 = vperm.xlu0 %11178, %v87
    %v11180 = vpop.permute.xlu0 %11179
    %11182 = vset.pattern.permute.xlu0 33
    %11183 = vperm.xlu0 %11182, %v88
    %v11184 = vpop.permute.xlu0 %11183
    %11186 = vset.pattern.permute.xlu0 33
    %11187 = vperm.xlu0 %11186, %v89
    %v11188 = vpop.permute.xlu0 %11187
    %11190 = vset.pattern.permute.xlu0 33
    %11191 = vperm.xlu0 %11190, %v90
    %v11192 = vpop.permute.xlu0 %11191
    %11194 = vset.pattern.permute.xlu0 33
    %11195 = vperm.xlu0 %11194, %v91
    %v11196 = vpop.permute.xlu0 %11195
    %11198 = vset.pattern.permute.xlu0 33
    %11199 = vperm.xlu0 %11198, %v92
    %v11200 = vpop.permute.xlu0 %11199
    %11202 = vset.pattern.permute.xlu0 33
    %11203 = vperm.xlu0 %11202, %v93
    %v11204 = vpop.permute.xlu0 %11203
    %11206 = vset.pattern.permute.xlu0 33
    %11207 = vperm.xlu0 %11206, %v94
    %v11208 = vpop.permute.xlu0 %11207
    %11210 = vset.pattern.permute.xlu0 33
    %11211 = vperm.xlu0 %11210, %v95
    %v11212 = vpop.permute.xlu0 %11211
    %11214 = vset.pattern.permute.xlu0 33
    %11215 = vperm.xlu0 %11214, %v96
    %v11216 = vpop.permute.xlu0 %11215
    %11218 = vset.pattern.permute.xlu0 33
    %11219 = vperm.xlu0 %11218, %v97
    %v11220 = vpop.permute.xlu0 %11219
    %11222 = vset.pattern.permute.xlu0 33
    %11223 = vperm.xlu0 %11222, %v98
    %v11224 = vpop.permute.xlu0 %11223
    %11226 = vset.pattern.permute.xlu0 33
    %11227 = vperm.xlu0 %11226, %v99
    %v11228 = vpop.permute.xlu0 %11227
    %11230 = vset.pattern.permute.xlu0 33
    %11231 = vperm.xlu0 %11230, %v100
    %v11232 = vpop.permute.xlu0 %11231
    %v11234 = vadd.f32 %v11154, %v11172
    %v11235 = vadd.f32 %v11155, %v11176
    %v11236 = vadd.f32 %v11156, %v11180
    %v11237 = vadd.f32 %v11157, %v11184
    %v11238 = vadd.f32 %v11158, %v11188
    %v11239 = vadd.f32 %v11159, %v11192
    %v11240 = vadd.f32 %v11160, %v11196
    %v11241 = vadd.f32 %v11161, %v11200
    %v11242 = vadd.f32 %v11162, %v11204
    %v11243 = vadd.f32 %v11163, %v11208
    %v11244 = vadd.f32 %v11164, %v11212
    %v11245 = vadd.f32 %v11165, %v11216
    %v11246 = vadd.f32 %v11166, %v11220
    %v11247 = vadd.f32 %v11167, %v11224
    %v11248 = vadd.f32 %v11168, %v11228
    %v11249 = vadd.f32 %v11169, %v11232
    %v11250 = vmax.f32 %v11234, 0.0
    %v11251 = vmax.f32 %v11235, 0.0
    %v11252 = vmax.f32 %v11236, 0.0
    %v11253 = vmax.f32 %v11237, 0.0
    %v11254 = vmax.f32 %v11238, 0.0
    %v11255 = vmax.f32 %v11239, 0.0
    %v11256 = vmax.f32 %v11240, 0.0
    %v11257 = vmax.f32 %v11241, 0.0
    %v11258 = vmax.f32 %v11242, 0.0
    %v11259 = vmax.f32 %v11243, 0.0
    %v11260 = vmax.f32 %v11244, 0.0
    %v11261 = vmax.f32 %v11245, 0.0
    %v11262 = vmax.f32 %v11246, 0.0
    %v11263 = vmax.f32 %v11247, 0.0
    %v11264 = vmax.f32 %v11248, 0.0
    %v11265 = vmax.f32 %v11249, 0.0
    %v11266 = vmin.f32 %v11234, 0.0
    %v11267 = vmin.f32 %v11235, 0.0
    %v11268 = vmin.f32 %v11236, 0.0
    %v11269 = vmin.f32 %v11237, 0.0
    %v11270 = vmin.f32 %v11238, 0.0
    %v11271 = vmin.f32 %v11239, 0.0
    %v11272 = vmin.f32 %v11240, 0.0
    %v11273 = vmin.f32 %v11241, 0.0
    %v11274 = vmin.f32 %v11242, 0.0
    %v11275 = vmin.f32 %v11243, 0.0
    %v11276 = vmin.f32 %v11244, 0.0
    %v11277 = vmin.f32 %v11245, 0.0
    %v11278 = vmin.f32 %v11246, 0.0
    %v11279 = vmin.f32 %v11247, 0.0
    %v11280 = vmin.f32 %v11248, 0.0
    %v11281 = vmin.f32 %v11249, 0.0
    %v11282 = vstv %s109
    %v11283 = vmul.f32 %v11282, %v11266
    %v11284 = vmul.f32 %v11282, %v11267
    %v11285 = vmul.f32 %v11282, %v11268
    %v11286 = vmul.f32 %v11282, %v11269
    %v11287 = vmul.f32 %v11282, %v11270
    %v11288 = vmul.f32 %v11282, %v11271
    %v11289 = vmul.f32 %v11282, %v11272
    %v11290 = vmul.f32 %v11282, %v11273
    %v11291 = vmul.f32 %v11282, %v11274
    %v11292 = vmul.f32 %v11282, %v11275
    %v11293 = vmul.f32 %v11282, %v11276
    %v11294 = vmul.f32 %v11282, %v11277
    %v11295 = vmul.f32 %v11282, %v11278
    %v11296 = vmul.f32 %v11282, %v11279
    %v11297 = vmul.f32 %v11282, %v11280
    %v11298 = vmul.f32 %v11282, %v11281
    %v11299 = vadd.f32 %v11250, %v11283
    %v11300 = vadd.f32 %v11251, %v11284
    %v11301 = vadd.f32 %v11252, %v11285
    %v11302 = vadd.f32 %v11253, %v11286
    %v11303 = vadd.f32 %v11254, %v11287
    %v11304 = vadd.f32 %v11255, %v11288
    %v11305 = vadd.f32 %v11256, %v11289
    %v11306 = vadd.f32 %v11257, %v11290
    %v11307 = vadd.f32 %v11258, %v11291
    %v11308 = vadd.f32 %v11259, %v11292
    %v11309 = vadd.f32 %v11260, %v11293
    %v11310 = vadd.f32 %v11261, %v11294
    %v11311 = vadd.f32 %v11262, %v11295
    %v11312 = vadd.f32 %v11263, %v11296
    %v11313 = vadd.f32 %v11264, %v11297
    %v11314 = vadd.f32 %v11265, %v11298
    %11315 = vmatprep.subr.mxu0 0.0
    %11316 = vmatpush1.msra.mxu0 %v11299
    %11317 = vmatprep.subr.mxu0 0.0
    %11318 = vmatpush1.msra.mxu0 %v11300
    %11319 = vmatprep.subr.mxu0 0.0
    %11320 = vmatpush1.msra.mxu0 %v11301
    %11321 = vmatprep.subr.mxu0 0.0
    %11322 = vmatpush1.msra.mxu0 %v11302
    %11323 = vmatprep.subr.mxu0 0.0
    %11324 = vmatpush1.msra.mxu0 %v11303
    %11325 = vmatprep.subr.mxu0 0.0
    %11326 = vmatpush1.msra.mxu0 %v11304
    %11327 = vmatprep.subr.mxu0 0.0
    %11328 = vmatpush1.msra.mxu0 %v11305
    %11329 = vmatprep.subr.mxu0 0.0
    %11330 = vmatpush1.msra.mxu0 %v11306
    %11331 = vmatprep.subr.mxu0 0.0
    %11332 = vmatpush1.msra.mxu0 %v11307
    %11333 = vmatprep.subr.mxu0 0.0
    %11334 = vmatpush1.msra.mxu0 %v11308
    %11335 = vmatprep.subr.mxu0 0.0
    %11336 = vmatpush1.msra.mxu0 %v11309
    %11337 = vmatprep.subr.mxu0 0.0
    %11338 = vmatpush1.msra.mxu0 %v11310
    %11339 = vmatprep.subr.mxu0 0.0
    %11340 = vmatpush1.msra.mxu0 %v11311
    %11341 = vmatprep.subr.mxu0 0.0
    %11342 = vmatpush1.msra.mxu0 %v11312
    %11343 = vmatprep.subr.mxu0 0.0
    %11344 = vmatpush1.msra.mxu0 %v11313
    %11345 = vmatprep.subr.mxu0 0.0
    %11346 = vmatpush1.msra.mxu0 %v11314
    %11347 = vmatprep.subr.mxu0 0.0
    %11348 = vmatpush1.msra.mxu0 0.0
    %11349 = vmatprep.subr.mxu0 0.0
    %11350 = vmatpush1.msra.mxu0 0.0
    %11351 = vmatprep.subr.mxu0 0.0
    %11352 = vmatpush1.msra.mxu0 0.0
    %11353 = vmatprep.subr.mxu0 0.0
    %11354 = vmatpush1.msra.mxu0 0.0
    %11355 = vmatprep.subr.mxu0 0.0
    %11356 = vmatpush1.msra.mxu0 0.0
    %11357 = vmatprep.subr.mxu0 0.0
    %11358 = vmatpush1.msra.mxu0 0.0
    %11359 = vmatprep.subr.mxu0 0.0
    %11360 = vmatpush1.msra.mxu0 0.0
    %11361 = vmatprep.subr.mxu0 0.0
    %11362 = vmatpush1.msra.mxu0 0.0
    %11363 = vmatprep.subr.mxu0 0.0
    %11364 = vmatpush1.msra.mxu0 0.0
    %11365 = vmatprep.subr.mxu0 0.0
    %11366 = vmatpush1.msra.mxu0 0.0
    %11367 = vmatprep.subr.mxu0 0.0
    %11368 = vmatpush1.msra.mxu0 0.0
    %11369 = vmatprep.subr.mxu0 0.0
    %11370 = vmatpush1.msra.mxu0 0.0
    %11371 = vmatprep.subr.mxu0 0.0
    %11372 = vmatpush1.msra.mxu0 0.0
    %11373 = vmatprep.subr.mxu0 0.0
    %11374 = vmatpush1.msra.mxu0 0.0
    %11375 = vmatprep.subr.mxu0 0.0
    %11376 = vmatpush1.msra.mxu0 0.0
    %11377 = vmatprep.subr.mxu0 0.0
    %11378 = vmatpush1.msra.mxu0 0.0
    %11379 = vmatprep.mubr.f32.mxu0 0.0
    %11380 = vmatmul.mubr.f32.gmra.mrb[0].mxu0 %v101
    %v11381 = vpop.f32.mrb[0].mxu0
    %v11382 = vadd.f32 0.0, %v11381
    %v11383 = vpop.f32.mrb[0].mxu0
    %11384 = vmatprep.mubr.f32.mxu0 0.0
    %11385 = vmatmul.mubr.f32.gmra.mrb[0].mxu0 %v102
    %v11386 = vpop.f32.mrb[0].mxu0
    %v11387 = vadd.f32 0.0, %v11386
    %v11388 = vpop.f32.mrb[0].mxu0
    %11389 = vmatprep.mubr.f32.mxu0 0.0
    %11390 = vmatmul.mubr.f32.gmra.mrb[0].mxu0 %v103
    %v11391 = vpop.f32.mrb[0].mxu0
    %v11392 = vadd.f32 0.0, %v11391
    %v11393 = vpop.f32.mrb[0].mxu0
    %11394 = vmatprep.mubr.f32.mxu0 0.0
    %11395 = vmatmul.mubr.f32.gmra.mrb[0].mxu0 %v104
    %v11396 = vpop.f32.mrb[0].mxu0
    %v11397 = vadd.f32 0.0, %v11396
    %v11398 = vpop.f32.mrb[0].mxu0
    %11399 = vdwg.mxu0
    %11400 = vst.msk [vmem:[%s13] sm:$0xff] %vm9046, %v11382
    %11401 = vst.msk [vmem:[%s13 + $0x8] sm:$0xff] %vm9046, %v11387
    %11402 = vst.msk [vmem:[%s13 + $0x10] sm:$0xff] %vm9046, %v11392
    %11403 = vst.msk [vmem:[%s13 + $0x18] sm:$0xff] %vm9046, %v11397
    // Predicated region
    $region58: #{_tstnn_decoder_impl.1} parent=1 // pred_check
      _
    $region59: #{_tstnn_decoder_impl.1} parent=1 // pred_check_branch
      %11405 = sbr.rel (0) target = $region61
    $region60: #{_tstnn_decoder_impl.1} parent=1 // pred_region
      _
    $region61: #{_tstnn_decoder_impl.1} parent=1 // pred_fallthru
      _
    // Predicated region
    $region62: #{_tstnn_decoder_impl.1} parent=1 // pred_check
      _
    $region63: #{_tstnn_decoder_impl.1} parent=1 // pred_check_branch
      %11407 = sbr.rel (0) target = $region65
    $region64: #{_tstnn_decoder_impl.1} parent=1 // pred_region
      _
    $region65: #{_tstnn_decoder_impl.1} parent=1 // pred_fallthru
      _
    %11408 = vsyncpa [#allocation5], 1

</llo_original>
